<compile_context>
chip_gen: v7x
topology: tpu7x:2x2x1
jax: 0.10.0
libtpu: 0.0.40
codegen_flags: <defaults>
</compile_context>

<pallas_src>
import jax
import jax.numpy as jnp
import numpy as np
from jax.experimental import pallas as pl
from jax.experimental.pallas import tpu as pltpu


# ----------------------------------------------------------------------------
# Fused kernel: grid over time chunks; LSTM state + full hidden sequence kept
# in VMEM scratch; conv/BN/linear head executed on the last grid step.
# ----------------------------------------------------------------------------
def _disc_kernel(x_ref, wih1_ref, b1_ref, whh1_ref, w2_ref, b2_ref,
                 cw1_ref, cb1_ref, g1_ref, be1_ref,
                 cw2_ref, cb2_ref, g2_ref, be2_ref, wf_ref, bf_ref,
                 out_ref,
                 xg_ref, h1_ref, c1_ref, h2_ref, c2_ref, hall_ref):
    Tc, B, D = x_ref.shape
    H = whh1_ref.shape[0]
    T = hall_ref.shape[1]

    @pl.when(pl.program_id(0) == 0)
    def _init():
        h1_ref[...] = jnp.zeros_like(h1_ref)
        c1_ref[...] = jnp.zeros_like(c1_ref)
        h2_ref[...] = jnp.zeros_like(h2_ref)
        c2_ref[...] = jnp.zeros_like(c2_ref)

    # ---- Hoisted layer-1 input projection, written to time-major scratch ----
    if D <= 8:
        # Tiny input_dim: D broadcast-FMAs on the VPU (an MXU matmul with
        # K=D would be >96% systolic padding).
        x3 = x_ref[...]                                      # (Tc, B, D)
        acc = x3[:, :, 0:1] * wih1_ref[0:1, :]
        for d in range(1, D):
            acc = acc + x3[:, :, d:d + 1] * wih1_ref[d:d + 1, :]
        xg_ref[...] = acc + b1_ref[...]
    else:
        for s in range(Tc):
            xg_ref[s] = (jnp.dot(x_ref[s], wih1_ref[...],
                                 preferred_element_type=jnp.float32)
                         + b1_ref[...])

    def gates_to_hc(g, c_prev):
        # H is a multiple of 128, so each gate slice is vreg-aligned.
        i = jax.nn.sigmoid(g[:, 0 * H:1 * H])
        f = jax.nn.sigmoid(g[:, 1 * H:2 * H])
        gg = jnp.tanh(g[:, 2 * H:3 * H])
        o = jax.nn.sigmoid(g[:, 3 * H:4 * H])
        c_new = f * c_prev + i * gg
        return o * jnp.tanh(c_new), c_new

    # ---- Serialized recurrence: state carried in registers over the chunk ----
    h1, c1 = h1_ref[...], c1_ref[...]
    h2, c2 = h2_ref[...], c2_ref[...]
    hs = []
    # TODO(synk): switch to lax.fori_loop(..., unroll=4..8) if the time chunk
    # is ever raised beyond ~32 (a long static unroll risks vreg spills).
    for s in range(Tc):
        g1 = xg_ref[s] + jnp.dot(h1, whh1_ref[...],
                                 preferred_element_type=jnp.float32)
        h1, c1 = gates_to_hc(g1, c1)
        # Fused layer-2 matmul: [h1, h2_prev] @ [wih2; whh2], K = 2H = 256.
        g2 = (jnp.dot(jnp.concatenate([h1, h2], axis=-1), w2_ref[...],
                      preferred_element_type=jnp.float32) + b2_ref[...])
        h2, c2 = gates_to_hc(g2, c2)
        hs.append(h2)
    h1_ref[...], c1_ref[...] = h1, c1
    h2_ref[...], c2_ref[...] = h2, c2

    # One unmasked (B, Tc, H) tile store per chunk, batch-first layout.
    t0 = pl.multiple_of(pl.program_id(0) * Tc, Tc)
    hall_ref[:, pl.ds(t0, Tc), :] = jnp.stack(hs, axis=1)

    # ---- Head: Conv/BN/LeakyReLU x2 + Linear + Sigmoid on the last step -----
    # TODO(synk): for production B*T, tile the head over rows with a two-pass
    # grid-accumulated BatchNorm (v7x has only 64 MiB VMEM); at these sizes the
    # whole sequence fits comfortably in VMEM.
    @pl.when(pl.program_id(0) == pl.num_programs(0) - 1)
    def _head():
        eps = 1e-5
        hseq = hall_ref[...]                                 # (B, T, H)

        def conv3_same(xin, w_ref, b_ref):
            # Per-tap matmuls + time-shifted adds (no (B,T,3*Cin) lane concat).
            Cin = xin.shape[-1]
            Cout = w_ref.shape[-1]
            z = jnp.zeros((B, 1, Cin), jnp.float32)
            xl = jnp.concatenate([z, xin[:, :T - 1, :]], axis=1)   # x[t-1]
            xr = jnp.concatenate([xin[:, 1:, :], z], axis=1)       # x[t+1]
            y = (jnp.dot(xl.reshape(B * T, Cin), w_ref[0],
                         preferred_element_type=jnp.float32)
                 + jnp.dot(xin.reshape(B * T, Cin), w_ref[1],
                           preferred_element_type=jnp.float32)
                 + jnp.dot(xr.reshape(B * T, Cin), w_ref[2],
                           preferred_element_type=jnp.float32))
            return y.reshape(B, T, Cout) + b_ref[...]

        def bn_lrelu(xin, g_ref, be_ref):
            # Training-mode BatchNorm1d (biased variance), single-pass stats.
            n = xin.shape[0] * xin.shape[1]
            s = jnp.sum(xin, axis=(0, 1), keepdims=True)
            ss = jnp.sum(xin * xin, axis=(0, 1), keepdims=True)
            mean = s * (1.0 / n)
            var = ss * (1.0 / n) - mean * mean
            xn = ((xin - mean) * jax.lax.rsqrt(var + eps)
                  * g_ref[...] + be_ref[...])
            return jnp.where(xn > 0, xn, 0.2 * xn)

        a1 = bn_lrelu(conv3_same(hseq, cw1_ref, cb1_ref), g1_ref, be1_ref)
        a2 = bn_lrelu(conv3_same(a1, cw2_ref, cb2_ref), g2_ref, be2_ref)
        # Linear(H -> 1) as broadcast-multiply + lane reduction.
        logit = jnp.sum(a2 * wf_ref[...], axis=-1) + bf_ref[...]   # (B, T)
        out_ref[...] = jax.nn.sigmoid(logit)


def _pick_time_chunk(T):
    # Chunk must divide T and be a multiple of 8 (unless it is the whole T).
    for c in (32, 16, 8):
        if T % c == 0:
            return c
    return T


def discriminator_forward(x, params):
    """x: (B, T, input_dim) batch-first.  Returns (B*T,) like PyTorch .view(-1)."""
    lp, hp = params["lstm"], params["head"]
    B, T, D = x.shape
    H = lp["whh1"].shape[0]
    tc = _pick_time_chunk(T)

    x_tm = jnp.transpose(x.astype(jnp.float32), (1, 0, 2))        # (T, B, D)
    w2s = jnp.concatenate([lp["wih2"], lp["whh2"]], axis=0)       # (2H, 4H)

    def vmem():
        return pl.BlockSpec(memory_space=pltpu.MemorySpace.VMEM)

    # TODO(synk): on v7x, add a leading "parallel" batch grid axis so the two
    # TensorCores each run half the batch (gate on pltpu.get_tpu_info()).
    out = pl.pallas_call(
        _disc_kernel,
        out_shape=jax.ShapeDtypeStruct((B, T), jnp.float32),
        grid=(T // tc,),
        in_specs=[pl.BlockSpec((tc, B, D), lambda t: (t, 0, 0))]
                 + [vmem() for _ in range(15)],
        out_specs=pl.BlockSpec((B, T), lambda t: (0, 0)),
        scratch_shapes=[
            pltpu.VMEM((tc, B, 4 * H), jnp.float32),   # hoisted input proj
            pltpu.VMEM((B, H), jnp.float32),           # h1
            pltpu.VMEM((B, H), jnp.float32),           # c1
            pltpu.VMEM((B, H), jnp.float32),           # h2
            pltpu.VMEM((B, H), jnp.float32),           # c2
            pltpu.VMEM((B, T, H), jnp.float32),        # full LSTM output
        ],
        compiler_params=pltpu.CompilerParams(
            dimension_semantics=("arbitrary",)),
    )(x_tm, lp["wih1"], lp["b1"], lp["whh1"], w2s, lp["b2"],
      hp["w1"], hp["b1"], hp["g1"], hp["be1"],
      hp["w2"], hp["b2"], hp["g2"], hp["be2"], hp["wf"], hp["bf"])
    return out.reshape(-1)


# ----------------------------------------------------------------------------
# Parameter init + pure-JAX reference.
# ----------------------------------------------------------------------------
def init_params(key, input_dim, hidden_dim):
    H = hidden_dim
    ks = jax.random.split(key, 12)

    def rnd(k, shape):
        return jax.random.normal(k, shape, jnp.float32) * 0.1

    lstm = dict(
        wih1=rnd(ks[0], (input_dim, 4 * H)),   # = W_ih(l0).T
        whh1=rnd(ks[1], (H, 4 * H)),           # = W_hh(l0).T
        b1=rnd(ks[2], (1, 4 * H)),             # = b_ih(l0) + b_hh(l0)
        wih2=rnd(ks[3], (H, 4 * H)),
        whh2=rnd(ks[4], (H, 4 * H)),
        b2=rnd(ks[5], (1, 4 * H)),
    )
    head = dict(
        w1=rnd(ks[6], (3, H, 2 * H)),          # conv1 weight, (tap, in, out)
        b1=rnd(ks[7], (1, 2 * H)),
        g1=jnp.ones((1, 2 * H), jnp.float32),  # BatchNorm default init
        be1=jnp.zeros((1, 2 * H), jnp.float32),
        w2=rnd(ks[8], (3, 2 * H, H)),
        b2=rnd(ks[9], (1, H)),
        g2=jnp.ones((1, H), jnp.float32),
        be2=jnp.zeros((1, H), jnp.float32),
        wf=rnd(ks[10], (1, H)),
        bf=rnd(ks[11], (1, 1)),
    )
    return dict(lstm=lstm, head=head)


def reference_forward(x, params):
    lp, hp = params["lstm"], params["head"]
    B, T, _ = x.shape
    H = lp["whh1"].shape[0]

    def lstm_layer(inp, wih, whh, b):
        def step(carry, x_t):
            h, c = carry
            gates = x_t @ wih + h @ whh + b
            i, f, g, o = jnp.split(gates, 4, axis=-1)
            c = jax.nn.sigmoid(f) * c + jax.nn.sigmoid(i) * jnp.tanh(g)
            h = jax.nn.sigmoid(o) * jnp.tanh(c)
            return (h, c), h
        init = (jnp.zeros((B, H)), jnp.zeros((B, H)))
        _, hs = jax.lax.scan(step, init, jnp.transpose(inp, (1, 0, 2)))
        return jnp.transpose(hs, (1, 0, 2))

    h = lstm_layer(x, lp["wih1"], lp["whh1"], lp["b1"])
    h = lstm_layer(h, lp["wih2"], lp["whh2"], lp["b2"])

    def conv(xv, w, b):
        xp = jnp.pad(xv, ((0, 0), (1, 1), (0, 0)))
        y = sum(jnp.einsum("btc,co->bto", xp[:, k:k + T, :], w[k]) for k in range(3))
        return y + b

    def bn(xv, g, be):
        m = xv.mean(axis=(0, 1), keepdims=True)
        v = ((xv - m) ** 2).mean(axis=(0, 1), keepdims=True)
        return (xv - m) / jnp.sqrt(v + 1e-5) * g + be

    lrelu = lambda v: jnp.where(v > 0, v, 0.2 * v)
    y = lrelu(bn(conv(h, hp["w1"], hp["b1"]), hp["g1"], hp["be1"]))
    y = lrelu(bn(conv(y, hp["w2"], hp["b2"]), hp["g2"], hp["be2"]))
    logit = jnp.sum(y * hp["wf"], axis=-1) + hp["bf"][0, 0]        # (B, T)
    return jax.nn.sigmoid(logit).reshape(-1)


if __name__ == "__main__":
    B, T, D, H = 2, 8, 4, 128    # batch, sequence_length, input_dim, hidden_dim
    key = jax.random.PRNGKey(0)
    kx, kp = jax.random.split(key)
    x = jax.random.normal(kx, (B, T, D), jnp.float32)
    params = init_params(kp, D, H)

    out = discriminator_forward(x, params)
    out = jax.block_until_ready(out)
    assert out.shape == (B * T,)

    # Reference at highest matmul precision; kernel runs default-precision MXU
    # matmuls with f32 accumulation, hence the relaxed tolerance.
    with jax.default_matmul_precision("highest"):
        ref = jax.block_until_ready(reference_forward(x, params))
    np.testing.assert_allclose(np.asarray(out), np.asarray(ref),
                               rtol=2e-2, atol=2e-2)
    print("KERNEL_OK")
</pallas_src>

<mosaic_0001>
module attributes {stable_mosaic.version = 11 : i64} {
  func.func @_disc_kernel(%arg0: i32, %arg1: memref<8x2x4xf32, #tpu.memory_space<vmem>>, %arg2: memref<4x512xf32, #tpu.memory_space<vmem>>, %arg3: memref<1x512xf32, #tpu.memory_space<vmem>>, %arg4: memref<128x512xf32, #tpu.memory_space<vmem>>, %arg5: memref<256x512xf32, #tpu.memory_space<vmem>>, %arg6: memref<1x512xf32, #tpu.memory_space<vmem>>, %arg7: memref<3x128x256xf32, #tpu.memory_space<vmem>>, %arg8: memref<1x256xf32, #tpu.memory_space<vmem>>, %arg9: memref<1x256xf32, #tpu.memory_space<vmem>>, %arg10: memref<1x256xf32, #tpu.memory_space<vmem>>, %arg11: memref<3x256x128xf32, #tpu.memory_space<vmem>>, %arg12: memref<1x128xf32, #tpu.memory_space<vmem>>, %arg13: memref<1x128xf32, #tpu.memory_space<vmem>>, %arg14: memref<1x128xf32, #tpu.memory_space<vmem>>, %arg15: memref<1x128xf32, #tpu.memory_space<vmem>>, %arg16: memref<1x1xf32, #tpu.memory_space<vmem>>, %arg17: memref<2x8xf32, #tpu.memory_space<vmem>>, %arg18: memref<8x2x512xf32, #tpu.memory_space<vmem>>, %arg19: memref<2x128xf32, #tpu.memory_space<vmem>>, %arg20: memref<2x128xf32, #tpu.memory_space<vmem>>, %arg21: memref<2x128xf32, #tpu.memory_space<vmem>>, %arg22: memref<2x128xf32, #tpu.memory_space<vmem>>, %arg23: memref<2x8x128xf32, #tpu.memory_space<vmem>>) attributes {dimension_semantics = [#tpu.dimension_semantics<arbitrary>], iteration_bounds = array<i64: 1>, scalar_prefetch = 0 : i64, scratch_operands = 6 : i64, tpu.core_type = #tpu.core_type<tc>, window_params = [{transform_indices = @transform_0, window_bounds = array<i64: 8, 2, 4>}, {pipeline_mode = #tpu.pipeline_mode<synchronous>, transform_indices = @transform_1, window_bounds = array<i64: 4, 512>}, {pipeline_mode = #tpu.pipeline_mode<synchronous>, transform_indices = @transform_2, window_bounds = array<i64: 1, 512>}, {pipeline_mode = #tpu.pipeline_mode<synchronous>, transform_indices = @transform_3, window_bounds = array<i64: 128, 512>}, {pipeline_mode = #tpu.pipeline_mode<synchronous>, transform_indices = @transform_4, window_bounds = array<i64: 256, 512>}, {pipeline_mode = #tpu.pipeline_mode<synchronous>, transform_indices = @transform_5, window_bounds = array<i64: 1, 512>}, {pipeline_mode = #tpu.pipeline_mode<synchronous>, transform_indices = @transform_6, window_bounds = array<i64: 3, 128, 256>}, {pipeline_mode = #tpu.pipeline_mode<synchronous>, transform_indices = @transform_7, window_bounds = array<i64: 1, 256>}, {pipeline_mode = #tpu.pipeline_mode<synchronous>, transform_indices = @transform_8, window_bounds = array<i64: 1, 256>}, {pipeline_mode = #tpu.pipeline_mode<synchronous>, transform_indices = @transform_9, window_bounds = array<i64: 1, 256>}, {pipeline_mode = #tpu.pipeline_mode<synchronous>, transform_indices = @transform_10, window_bounds = array<i64: 3, 256, 128>}, {pipeline_mode = #tpu.pipeline_mode<synchronous>, transform_indices = @transform_11, window_bounds = array<i64: 1, 128>}, {pipeline_mode = #tpu.pipeline_mode<synchronous>, transform_indices = @transform_12, window_bounds = array<i64: 1, 128>}, {pipeline_mode = #tpu.pipeline_mode<synchronous>, transform_indices = @transform_13, window_bounds = array<i64: 1, 128>}, {pipeline_mode = #tpu.pipeline_mode<synchronous>, transform_indices = @transform_14, window_bounds = array<i64: 1, 128>}, {pipeline_mode = #tpu.pipeline_mode<synchronous>, transform_indices = @transform_15, window_bounds = array<i64: 1, 1>}, {pipeline_mode = #tpu.pipeline_mode<synchronous>, transform_indices = @transform_16, window_bounds = array<i64: 2, 8>}]} {
    %c0_i32 = arith.constant 0 : i32
    %0 = arith.cmpi eq, %arg0, %c0_i32 : i32
    %1 = arith.extui %0 : i1 to i32
    %c0_i32_0 = arith.constant 0 : i32
    %2 = arith.cmpi ne, %1, %c0_i32_0 : i32
    scf.if %2 {
      %cst_164 = arith.constant 0.000000e+00 : f32
      %548 = vector.broadcast %cst_164 : f32 to vector<2x128xf32>
      %c0_165 = arith.constant 0 : index
      %c0_166 = arith.constant 0 : index
      %549 = vector.load %arg19[%c0_165, %c0_166] : memref<2x128xf32, #tpu.memory_space<vmem>>, vector<2x128xf32>
      tpu.vector_store %arg19[%c0_165, %c0_166], %548 {strides = array<i32>} : memref<2x128xf32, #tpu.memory_space<vmem>>, vector<2x128xf32>,
      %cst_167 = arith.constant 0.000000e+00 : f32
      %550 = vector.broadcast %cst_167 : f32 to vector<2x128xf32>
      %c0_168 = arith.constant 0 : index
      %c0_169 = arith.constant 0 : index
      %551 = vector.load %arg20[%c0_168, %c0_169] : memref<2x128xf32, #tpu.memory_space<vmem>>, vector<2x128xf32>
      tpu.vector_store %arg20[%c0_168, %c0_169], %550 {strides = array<i32>} : memref<2x128xf32, #tpu.memory_space<vmem>>, vector<2x128xf32>,
      %cst_170 = arith.constant 0.000000e+00 : f32
      %552 = vector.broadcast %cst_170 : f32 to vector<2x128xf32>
      %c0_171 = arith.constant 0 : index
      %c0_172 = arith.constant 0 : index
      %553 = vector.load %arg21[%c0_171, %c0_172] : memref<2x128xf32, #tpu.memory_space<vmem>>, vector<2x128xf32>
      tpu.vector_store %arg21[%c0_171, %c0_172], %552 {strides = array<i32>} : memref<2x128xf32, #tpu.memory_space<vmem>>, vector<2x128xf32>,
      %cst_173 = arith.constant 0.000000e+00 : f32
      %554 = vector.broadcast %cst_173 : f32 to vector<2x128xf32>
      %c0_174 = arith.constant 0 : index
      %c0_175 = arith.constant 0 : index
      %555 = vector.load %arg22[%c0_174, %c0_175] : memref<2x128xf32, #tpu.memory_space<vmem>>, vector<2x128xf32>
      tpu.vector_store %arg22[%c0_174, %c0_175], %554 {strides = array<i32>} : memref<2x128xf32, #tpu.memory_space<vmem>>, vector<2x128xf32>,
    } else {
    }
    %c0 = arith.constant 0 : index
    %c0_1 = arith.constant 0 : index
    %c0_2 = arith.constant 0 : index
    %3 = vector.load %arg1[%c0, %c0_1, %c0_2] : memref<8x2x4xf32, #tpu.memory_space<vmem>>, vector<8x2x4xf32>
    %4 = vector.extract_strided_slice %3 {offsets = [0, 0, 0], sizes = [8, 2, 1], strides = [1, 1, 1]} : vector<8x2x4xf32> to vector<8x2x1xf32>
    %c0_3 = arith.constant 0 : index
    %c0_4 = arith.constant 0 : index
    %5 = vector.load %arg2[%c0_3, %c0_4] : memref<4x512xf32, #tpu.memory_space<vmem>>, vector<1x512xf32>
    %6 = vector.shape_cast %5 : vector<1x512xf32> to vector<1x1x512xf32>
    %7 = vector.broadcast %4 : vector<8x2x1xf32> to vector<8x2x512xf32>
    %8 = vector.broadcast %6 : vector<1x1x512xf32> to vector<8x2x512xf32>
    %9 = arith.mulf %7, %8 : vector<8x2x512xf32>
    %10 = vector.extract_strided_slice %3 {offsets = [0, 0, 1], sizes = [8, 2, 1], strides = [1, 1, 1]} : vector<8x2x4xf32> to vector<8x2x1xf32>
    %c1 = arith.constant 1 : index
    %c0_5 = arith.constant 0 : index
    %11 = vector.load %arg2[%c1, %c0_5] : memref<4x512xf32, #tpu.memory_space<vmem>>, vector<1x512xf32>
    %12 = vector.shape_cast %11 : vector<1x512xf32> to vector<1x1x512xf32>
    %13 = vector.broadcast %10 : vector<8x2x1xf32> to vector<8x2x512xf32>
    %14 = vector.broadcast %12 : vector<1x1x512xf32> to vector<8x2x512xf32>
    %15 = arith.mulf %13, %14 : vector<8x2x512xf32>
    %16 = arith.addf %9, %15 : vector<8x2x512xf32>
    %17 = vector.extract_strided_slice %3 {offsets = [0, 0, 2], sizes = [8, 2, 1], strides = [1, 1, 1]} : vector<8x2x4xf32> to vector<8x2x1xf32>
    %c2 = arith.constant 2 : index
    %c0_6 = arith.constant 0 : index
    %18 = vector.load %arg2[%c2, %c0_6] : memref<4x512xf32, #tpu.memory_space<vmem>>, vector<1x512xf32>
    %19 = vector.shape_cast %18 : vector<1x512xf32> to vector<1x1x512xf32>
    %20 = vector.broadcast %17 : vector<8x2x1xf32> to vector<8x2x512xf32>
    %21 = vector.broadcast %19 : vector<1x1x512xf32> to vector<8x2x512xf32>
    %22 = arith.mulf %20, %21 : vector<8x2x512xf32>
    %23 = arith.addf %16, %22 : vector<8x2x512xf32>
    %24 = vector.extract_strided_slice %3 {offsets = [0, 0, 3], sizes = [8, 2, 1], strides = [1, 1, 1]} : vector<8x2x4xf32> to vector<8x2x1xf32>
    %c3 = arith.constant 3 : index
    %c0_7 = arith.constant 0 : index
    %25 = vector.load %arg2[%c3, %c0_7] : memref<4x512xf32, #tpu.memory_space<vmem>>, vector<1x512xf32>
    %26 = vector.shape_cast %25 : vector<1x512xf32> to vector<1x1x512xf32>
    %27 = vector.broadcast %24 : vector<8x2x1xf32> to vector<8x2x512xf32>
    %28 = vector.broadcast %26 : vector<1x1x512xf32> to vector<8x2x512xf32>
    %29 = arith.mulf %27, %28 : vector<8x2x512xf32>
    %30 = arith.addf %23, %29 : vector<8x2x512xf32>
    %c0_8 = arith.constant 0 : index
    %c0_9 = arith.constant 0 : index
    %31 = vector.load %arg3[%c0_8, %c0_9] : memref<1x512xf32, #tpu.memory_space<vmem>>, vector<1x512xf32>
    %32 = vector.shape_cast %31 : vector<1x512xf32> to vector<1x1x512xf32>
    %33 = vector.broadcast %32 : vector<1x1x512xf32> to vector<8x2x512xf32>
    %34 = arith.addf %30, %33 : vector<8x2x512xf32>
    %c0_10 = arith.constant 0 : index
    %c0_11 = arith.constant 0 : index
    %c0_12 = arith.constant 0 : index
    %35 = vector.load %arg18[%c0_10, %c0_11, %c0_12] : memref<8x2x512xf32, #tpu.memory_space<vmem>>, vector<8x2x512xf32>
    tpu.vector_store %arg18[%c0_10, %c0_11, %c0_12], %34 {strides = array<i32>} : memref<8x2x512xf32, #tpu.memory_space<vmem>>, vector<8x2x512xf32>,
    %c0_13 = arith.constant 0 : index
    %c0_14 = arith.constant 0 : index
    %36 = vector.load %arg19[%c0_13, %c0_14] : memref<2x128xf32, #tpu.memory_space<vmem>>, vector<2x128xf32>
    %c0_15 = arith.constant 0 : index
    %c0_16 = arith.constant 0 : index
    %37 = vector.load %arg20[%c0_15, %c0_16] : memref<2x128xf32, #tpu.memory_space<vmem>>, vector<2x128xf32>
    %c0_17 = arith.constant 0 : index
    %c0_18 = arith.constant 0 : index
    %38 = vector.load %arg21[%c0_17, %c0_18] : memref<2x128xf32, #tpu.memory_space<vmem>>, vector<2x128xf32>
    %c0_19 = arith.constant 0 : index
    %c0_20 = arith.constant 0 : index
    %39 = vector.load %arg22[%c0_19, %c0_20] : memref<2x128xf32, #tpu.memory_space<vmem>>, vector<2x128xf32>
    %c0_21 = arith.constant 0 : index
    %c0_22 = arith.constant 0 : index
    %c0_23 = arith.constant 0 : index
    %40 = vector.load %arg18[%c0_21, %c0_22, %c0_23] : memref<8x2x512xf32, #tpu.memory_space<vmem>>, vector<1x2x512xf32>
    %41 = vector.shape_cast %40 : vector<1x2x512xf32> to vector<2x512xf32>
    %c0_24 = arith.constant 0 : index
    %c0_25 = arith.constant 0 : index
    %42 = vector.load %arg4[%c0_24, %c0_25] : memref<128x512xf32, #tpu.memory_space<vmem>>, vector<128x512xf32>
    %cst = arith.constant dense<0.000000e+00> : vector<2x512xf32>
    %43 = tpu.matmul %36, %42, %cst {dimension_numbers = #tpu.dot_dimension_numbers<[1], [0], [0], [1], [0, 0, 1, 1], [], []>} : vector<2x128xf32>, vector<128x512xf32>, vector<2x512xf32> -> vector<2x512xf32>
    %44 = arith.addf %41, %43 : vector<2x512xf32>
    %45 = vector.extract_strided_slice %44 {offsets = [0, 0], sizes = [2, 128], strides = [1, 1]} : vector<2x512xf32> to vector<2x128xf32>
    %46 = arith.negf %45 : vector<2x128xf32>
    %47 = math.exp %46 : vector<2x128xf32>
    %cst_26 = arith.constant 1.000000e+00 : f32
    %48 = vector.broadcast %cst_26 : f32 to vector<2x128xf32>
    %49 = arith.addf %48, %47 : vector<2x128xf32>
    %50 = arith.divf %48, %49 : vector<2x128xf32>
    %51 = vector.extract_strided_slice %44 {offsets = [0, 128], sizes = [2, 128], strides = [1, 1]} : vector<2x512xf32> to vector<2x128xf32>
    %52 = arith.negf %51 : vector<2x128xf32>
    %53 = math.exp %52 : vector<2x128xf32>
    %cst_27 = arith.constant 1.000000e+00 : f32
    %54 = vector.broadcast %cst_27 : f32 to vector<2x128xf32>
    %55 = arith.addf %54, %53 : vector<2x128xf32>
    %56 = arith.divf %54, %55 : vector<2x128xf32>
    %57 = vector.extract_strided_slice %44 {offsets = [0, 256], sizes = [2, 128], strides = [1, 1]} : vector<2x512xf32> to vector<2x128xf32>
    %58 = math.tanh %57 : vector<2x128xf32>
    %59 = vector.extract_strided_slice %44 {offsets = [0, 384], sizes = [2, 128], strides = [1, 1]} : vector<2x512xf32> to vector<2x128xf32>
    %60 = arith.negf %59 : vector<2x128xf32>
    %61 = math.exp %60 : vector<2x128xf32>
    %cst_28 = arith.constant 1.000000e+00 : f32
    %62 = vector.broadcast %cst_28 : f32 to vector<2x128xf32>
    %63 = arith.addf %62, %61 : vector<2x128xf32>
    %64 = arith.divf %62, %63 : vector<2x128xf32>
    %65 = arith.mulf %56, %37 : vector<2x128xf32>
    %66 = arith.mulf %50, %58 : vector<2x128xf32>
    %67 = arith.addf %65, %66 : vector<2x128xf32>
    %68 = math.tanh %67 : vector<2x128xf32>
    %69 = arith.mulf %64, %68 : vector<2x128xf32>
    %70 = tpu.concatenate %69, %38 in 1 : vector<2x128xf32>, vector<2x128xf32> -> vector<2x256xf32>
    %c0_29 = arith.constant 0 : index
    %c0_30 = arith.constant 0 : index
    %71 = vector.load %arg5[%c0_29, %c0_30] : memref<256x512xf32, #tpu.memory_space<vmem>>, vector<256x512xf32>
    %cst_31 = arith.constant dense<0.000000e+00> : vector<2x512xf32>
    %72 = tpu.matmul %70, %71, %cst_31 {dimension_numbers = #tpu.dot_dimension_numbers<[1], [0], [0], [1], [0, 0, 1, 1], [], []>} : vector<2x256xf32>, vector<256x512xf32>, vector<2x512xf32> -> vector<2x512xf32>
    %c0_32 = arith.constant 0 : index
    %c0_33 = arith.constant 0 : index
    %73 = vector.load %arg6[%c0_32, %c0_33] : memref<1x512xf32, #tpu.memory_space<vmem>>, vector<1x512xf32>
    %74 = vector.broadcast %73 : vector<1x512xf32> to vector<2x512xf32>
    %75 = arith.addf %72, %74 : vector<2x512xf32>
    %76 = vector.extract_strided_slice %75 {offsets = [0, 0], sizes = [2, 128], strides = [1, 1]} : vector<2x512xf32> to vector<2x128xf32>
    %77 = arith.negf %76 : vector<2x128xf32>
    %78 = math.exp %77 : vector<2x128xf32>
    %cst_34 = arith.constant 1.000000e+00 : f32
    %79 = vector.broadcast %cst_34 : f32 to vector<2x128xf32>
    %80 = arith.addf %79, %78 : vector<2x128xf32>
    %81 = arith.divf %79, %80 : vector<2x128xf32>
    %82 = vector.extract_strided_slice %75 {offsets = [0, 128], sizes = [2, 128], strides = [1, 1]} : vector<2x512xf32> to vector<2x128xf32>
    %83 = arith.negf %82 : vector<2x128xf32>
    %84 = math.exp %83 : vector<2x128xf32>
    %cst_35 = arith.constant 1.000000e+00 : f32
    %85 = vector.broadcast %cst_35 : f32 to vector<2x128xf32>
    %86 = arith.addf %85, %84 : vector<2x128xf32>
    %87 = arith.divf %85, %86 : vector<2x128xf32>
    %88 = vector.extract_strided_slice %75 {offsets = [0, 256], sizes = [2, 128], strides = [1, 1]} : vector<2x512xf32> to vector<2x128xf32>
    %89 = math.tanh %88 : vector<2x128xf32>
    %90 = vector.extract_strided_slice %75 {offsets = [0, 384], sizes = [2, 128], strides = [1, 1]} : vector<2x512xf32> to vector<2x128xf32>
    %91 = arith.negf %90 : vector<2x128xf32>
    %92 = math.exp %91 : vector<2x128xf32>
    %cst_36 = arith.constant 1.000000e+00 : f32
    %93 = vector.broadcast %cst_36 : f32 to vector<2x128xf32>
    %94 = arith.addf %93, %92 : vector<2x128xf32>
    %95 = arith.divf %93, %94 : vector<2x128xf32>
    %96 = arith.mulf %87, %39 : vector<2x128xf32>
    %97 = arith.mulf %81, %89 : vector<2x128xf32>
    %98 = arith.addf %96, %97 : vector<2x128xf32>
    %99 = math.tanh %98 : vector<2x128xf32>
    %100 = arith.mulf %95, %99 : vector<2x128xf32>
    %c1_37 = arith.constant 1 : index
    %c0_38 = arith.constant 0 : index
    %c0_39 = arith.constant 0 : index
    %101 = vector.load %arg18[%c1_37, %c0_38, %c0_39] : memref<8x2x512xf32, #tpu.memory_space<vmem>>, vector<1x2x512xf32>
    %102 = vector.shape_cast %101 : vector<1x2x512xf32> to vector<2x512xf32>
    %c0_40 = arith.constant 0 : index
    %c0_41 = arith.constant 0 : index
    %103 = vector.load %arg4[%c0_40, %c0_41] : memref<128x512xf32, #tpu.memory_space<vmem>>, vector<128x512xf32>
    %cst_42 = arith.constant dense<0.000000e+00> : vector<2x512xf32>
    %104 = tpu.matmul %69, %103, %cst_42 {dimension_numbers = #tpu.dot_dimension_numbers<[1], [0], [0], [1], [0, 0, 1, 1], [], []>} : vector<2x128xf32>, vector<128x512xf32>, vector<2x512xf32> -> vector<2x512xf32>
    %105 = arith.addf %102, %104 : vector<2x512xf32>
    %106 = vector.extract_strided_slice %105 {offsets = [0, 0], sizes = [2, 128], strides = [1, 1]} : vector<2x512xf32> to vector<2x128xf32>
    %107 = arith.negf %106 : vector<2x128xf32>
    %108 = math.exp %107 : vector<2x128xf32>
    %cst_43 = arith.constant 1.000000e+00 : f32
    %109 = vector.broadcast %cst_43 : f32 to vector<2x128xf32>
    %110 = arith.addf %109, %108 : vector<2x128xf32>
    %111 = arith.divf %109, %110 : vector<2x128xf32>
    %112 = vector.extract_strided_slice %105 {offsets = [0, 128], sizes = [2, 128], strides = [1, 1]} : vector<2x512xf32> to vector<2x128xf32>
    %113 = arith.negf %112 : vector<2x128xf32>
    %114 = math.exp %113 : vector<2x128xf32>
    %cst_44 = arith.constant 1.000000e+00 : f32
    %115 = vector.broadcast %cst_44 : f32 to vector<2x128xf32>
    %116 = arith.addf %115, %114 : vector<2x128xf32>
    %117 = arith.divf %115, %116 : vector<2x128xf32>
    %118 = vector.extract_strided_slice %105 {offsets = [0, 256], sizes = [2, 128], strides = [1, 1]} : vector<2x512xf32> to vector<2x128xf32>
    %119 = math.tanh %118 : vector<2x128xf32>
    %120 = vector.extract_strided_slice %105 {offsets = [0, 384], sizes = [2, 128], strides = [1, 1]} : vector<2x512xf32> to vector<2x128xf32>
    %121 = arith.negf %120 : vector<2x128xf32>
    %122 = math.exp %121 : vector<2x128xf32>
    %cst_45 = arith.constant 1.000000e+00 : f32
    %123 = vector.broadcast %cst_45 : f32 to vector<2x128xf32>
    %124 = arith.addf %123, %122 : vector<2x128xf32>
    %125 = arith.divf %123, %124 : vector<2x128xf32>
    %126 = arith.mulf %117, %67 : vector<2x128xf32>
    %127 = arith.mulf %111, %119 : vector<2x128xf32>
    %128 = arith.addf %126, %127 : vector<2x128xf32>
    %129 = math.tanh %128 : vector<2x128xf32>
    %130 = arith.mulf %125, %129 : vector<2x128xf32>
    %131 = tpu.concatenate %130, %100 in 1 : vector<2x128xf32>, vector<2x128xf32> -> vector<2x256xf32>
    %c0_46 = arith.constant 0 : index
    %c0_47 = arith.constant 0 : index
    %132 = vector.load %arg5[%c0_46, %c0_47] : memref<256x512xf32, #tpu.memory_space<vmem>>, vector<256x512xf32>
    %cst_48 = arith.constant dense<0.000000e+00> : vector<2x512xf32>
    %133 = tpu.matmul %131, %132, %cst_48 {dimension_numbers = #tpu.dot_dimension_numbers<[1], [0], [0], [1], [0, 0, 1, 1], [], []>} : vector<2x256xf32>, vector<256x512xf32>, vector<2x512xf32> -> vector<2x512xf32>
    %c0_49 = arith.constant 0 : index
    %c0_50 = arith.constant 0 : index
    %134 = vector.load %arg6[%c0_49, %c0_50] : memref<1x512xf32, #tpu.memory_space<vmem>>, vector<1x512xf32>
    %135 = vector.broadcast %134 : vector<1x512xf32> to vector<2x512xf32>
    %136 = arith.addf %133, %135 : vector<2x512xf32>
    %137 = vector.extract_strided_slice %136 {offsets = [0, 0], sizes = [2, 128], strides = [1, 1]} : vector<2x512xf32> to vector<2x128xf32>
    %138 = arith.negf %137 : vector<2x128xf32>
    %139 = math.exp %138 : vector<2x128xf32>
    %cst_51 = arith.constant 1.000000e+00 : f32
    %140 = vector.broadcast %cst_51 : f32 to vector<2x128xf32>
    %141 = arith.addf %140, %139 : vector<2x128xf32>
    %142 = arith.divf %140, %141 : vector<2x128xf32>
    %143 = vector.extract_strided_slice %136 {offsets = [0, 128], sizes = [2, 128], strides = [1, 1]} : vector<2x512xf32> to vector<2x128xf32>
    %144 = arith.negf %143 : vector<2x128xf32>
    %145 = math.exp %144 : vector<2x128xf32>
    %cst_52 = arith.constant 1.000000e+00 : f32
    %146 = vector.broadcast %cst_52 : f32 to vector<2x128xf32>
    %147 = arith.addf %146, %145 : vector<2x128xf32>
    %148 = arith.divf %146, %147 : vector<2x128xf32>
    %149 = vector.extract_strided_slice %136 {offsets = [0, 256], sizes = [2, 128], strides = [1, 1]} : vector<2x512xf32> to vector<2x128xf32>
    %150 = math.tanh %149 : vector<2x128xf32>
    %151 = vector.extract_strided_slice %136 {offsets = [0, 384], sizes = [2, 128], strides = [1, 1]} : vector<2x512xf32> to vector<2x128xf32>
    %152 = arith.negf %151 : vector<2x128xf32>
    %153 = math.exp %152 : vector<2x128xf32>
    %cst_53 = arith.constant 1.000000e+00 : f32
    %154 = vector.broadcast %cst_53 : f32 to vector<2x128xf32>
    %155 = arith.addf %154, %153 : vector<2x128xf32>
    %156 = arith.divf %154, %155 : vector<2x128xf32>
    %157 = arith.mulf %148, %98 : vector<2x128xf32>
    %158 = arith.mulf %142, %150 : vector<2x128xf32>
    %159 = arith.addf %157, %158 : vector<2x128xf32>
    %160 = math.tanh %159 : vector<2x128xf32>
    %161 = arith.mulf %156, %160 : vector<2x128xf32>
    %c2_54 = arith.constant 2 : index
    %c0_55 = arith.constant 0 : index
    %c0_56 = arith.constant 0 : index
    %162 = vector.load %arg18[%c2_54, %c0_55, %c0_56] : memref<8x2x512xf32, #tpu.memory_space<vmem>>, vector<1x2x512xf32>
    %163 = vector.shape_cast %162 : vector<1x2x512xf32> to vector<2x512xf32>
    %c0_57 = arith.constant 0 : index
    %c0_58 = arith.constant 0 : index
    %164 = vector.load %arg4[%c0_57, %c0_58] : memref<128x512xf32, #tpu.memory_space<vmem>>, vector<128x512xf32>
    %cst_59 = arith.constant dense<0.000000e+00> : vector<2x512xf32>
    %165 = tpu.matmul %130, %164, %cst_59 {dimension_numbers = #tpu.dot_dimension_numbers<[1], [0], [0], [1], [0, 0, 1, 1], [], []>} : vector<2x128xf32>, vector<128x512xf32>, vector<2x512xf32> -> vector<2x512xf32>
    %166 = arith.addf %163, %165 : vector<2x512xf32>
    %167 = vector.extract_strided_slice %166 {offsets = [0, 0], sizes = [2, 128], strides = [1, 1]} : vector<2x512xf32> to vector<2x128xf32>
    %168 = arith.negf %167 : vector<2x128xf32>
    %169 = math.exp %168 : vector<2x128xf32>
    %cst_60 = arith.constant 1.000000e+00 : f32
    %170 = vector.broadcast %cst_60 : f32 to vector<2x128xf32>
    %171 = arith.addf %170, %169 : vector<2x128xf32>
    %172 = arith.divf %170, %171 : vector<2x128xf32>
    %173 = vector.extract_strided_slice %166 {offsets = [0, 128], sizes = [2, 128], strides = [1, 1]} : vector<2x512xf32> to vector<2x128xf32>
    %174 = arith.negf %173 : vector<2x128xf32>
    %175 = math.exp %174 : vector<2x128xf32>
    %cst_61 = arith.constant 1.000000e+00 : f32
    %176 = vector.broadcast %cst_61 : f32 to vector<2x128xf32>
    %177 = arith.addf %176, %175 : vector<2x128xf32>
    %178 = arith.divf %176, %177 : vector<2x128xf32>
    %179 = vector.extract_strided_slice %166 {offsets = [0, 256], sizes = [2, 128], strides = [1, 1]} : vector<2x512xf32> to vector<2x128xf32>
    %180 = math.tanh %179 : vector<2x128xf32>
    %181 = vector.extract_strided_slice %166 {offsets = [0, 384], sizes = [2, 128], strides = [1, 1]} : vector<2x512xf32> to vector<2x128xf32>
    %182 = arith.negf %181 : vector<2x128xf32>
    %183 = math.exp %182 : vector<2x128xf32>
    %cst_62 = arith.constant 1.000000e+00 : f32
    %184 = vector.broadcast %cst_62 : f32 to vector<2x128xf32>
    %185 = arith.addf %184, %183 : vector<2x128xf32>
    %186 = arith.divf %184, %185 : vector<2x128xf32>
    %187 = arith.mulf %178, %128 : vector<2x128xf32>
    %188 = arith.mulf %172, %180 : vector<2x128xf32>
    %189 = arith.addf %187, %188 : vector<2x128xf32>
    %190 = math.tanh %189 : vector<2x128xf32>
    %191 = arith.mulf %186, %190 : vector<2x128xf32>
    %192 = tpu.concatenate %191, %161 in 1 : vector<2x128xf32>, vector<2x128xf32> -> vector<2x256xf32>
    %c0_63 = arith.constant 0 : index
    %c0_64 = arith.constant 0 : index
    %193 = vector.load %arg5[%c0_63, %c0_64] : memref<256x512xf32, #tpu.memory_space<vmem>>, vector<256x512xf32>
    %cst_65 = arith.constant dense<0.000000e+00> : vector<2x512xf32>
    %194 = tpu.matmul %192, %193, %cst_65 {dimension_numbers = #tpu.dot_dimension_numbers<[1], [0], [0], [1], [0, 0, 1, 1], [], []>} : vector<2x256xf32>, vector<256x512xf32>, vector<2x512xf32> -> vector<2x512xf32>
    %c0_66 = arith.constant 0 : index
    %c0_67 = arith.constant 0 : index
    %195 = vector.load %arg6[%c0_66, %c0_67] : memref<1x512xf32, #tpu.memory_space<vmem>>, vector<1x512xf32>
    %196 = vector.broadcast %195 : vector<1x512xf32> to vector<2x512xf32>
    %197 = arith.addf %194, %196 : vector<2x512xf32>
    %198 = vector.extract_strided_slice %197 {offsets = [0, 0], sizes = [2, 128], strides = [1, 1]} : vector<2x512xf32> to vector<2x128xf32>
    %199 = arith.negf %198 : vector<2x128xf32>
    %200 = math.exp %199 : vector<2x128xf32>
    %cst_68 = arith.constant 1.000000e+00 : f32
    %201 = vector.broadcast %cst_68 : f32 to vector<2x128xf32>
    %202 = arith.addf %201, %200 : vector<2x128xf32>
    %203 = arith.divf %201, %202 : vector<2x128xf32>
    %204 = vector.extract_strided_slice %197 {offsets = [0, 128], sizes = [2, 128], strides = [1, 1]} : vector<2x512xf32> to vector<2x128xf32>
    %205 = arith.negf %204 : vector<2x128xf32>
    %206 = math.exp %205 : vector<2x128xf32>
    %cst_69 = arith.constant 1.000000e+00 : f32
    %207 = vector.broadcast %cst_69 : f32 to vector<2x128xf32>
    %208 = arith.addf %207, %206 : vector<2x128xf32>
    %209 = arith.divf %207, %208 : vector<2x128xf32>
    %210 = vector.extract_strided_slice %197 {offsets = [0, 256], sizes = [2, 128], strides = [1, 1]} : vector<2x512xf32> to vector<2x128xf32>
    %211 = math.tanh %210 : vector<2x128xf32>
    %212 = vector.extract_strided_slice %197 {offsets = [0, 384], sizes = [2, 128], strides = [1, 1]} : vector<2x512xf32> to vector<2x128xf32>
    %213 = arith.negf %212 : vector<2x128xf32>
    %214 = math.exp %213 : vector<2x128xf32>
    %cst_70 = arith.constant 1.000000e+00 : f32
    %215 = vector.broadcast %cst_70 : f32 to vector<2x128xf32>
    %216 = arith.addf %215, %214 : vector<2x128xf32>
    %217 = arith.divf %215, %216 : vector<2x128xf32>
    %218 = arith.mulf %209, %159 : vector<2x128xf32>
    %219 = arith.mulf %203, %211 : vector<2x128xf32>
    %220 = arith.addf %218, %219 : vector<2x128xf32>
    %221 = math.tanh %220 : vector<2x128xf32>
    %222 = arith.mulf %217, %221 : vector<2x128xf32>
    %c3_71 = arith.constant 3 : index
    %c0_72 = arith.constant 0 : index
    %c0_73 = arith.constant 0 : index
    %223 = vector.load %arg18[%c3_71, %c0_72, %c0_73] : memref<8x2x512xf32, #tpu.memory_space<vmem>>, vector<1x2x512xf32>
    %224 = vector.shape_cast %223 : vector<1x2x512xf32> to vector<2x512xf32>
    %c0_74 = arith.constant 0 : index
    %c0_75 = arith.constant 0 : index
    %225 = vector.load %arg4[%c0_74, %c0_75] : memref<128x512xf32, #tpu.memory_space<vmem>>, vector<128x512xf32>
    %cst_76 = arith.constant dense<0.000000e+00> : vector<2x512xf32>
    %226 = tpu.matmul %191, %225, %cst_76 {dimension_numbers = #tpu.dot_dimension_numbers<[1], [0], [0], [1], [0, 0, 1, 1], [], []>} : vector<2x128xf32>, vector<128x512xf32>, vector<2x512xf32> -> vector<2x512xf32>
    %227 = arith.addf %224, %226 : vector<2x512xf32>
    %228 = vector.extract_strided_slice %227 {offsets = [0, 0], sizes = [2, 128], strides = [1, 1]} : vector<2x512xf32> to vector<2x128xf32>
    %229 = arith.negf %228 : vector<2x128xf32>
    %230 = math.exp %229 : vector<2x128xf32>
    %cst_77 = arith.constant 1.000000e+00 : f32
    %231 = vector.broadcast %cst_77 : f32 to vector<2x128xf32>
    %232 = arith.addf %231, %230 : vector<2x128xf32>
    %233 = arith.divf %231, %232 : vector<2x128xf32>
    %234 = vector.extract_strided_slice %227 {offsets = [0, 128], sizes = [2, 128], strides = [1, 1]} : vector<2x512xf32> to vector<2x128xf32>
    %235 = arith.negf %234 : vector<2x128xf32>
    %236 = math.exp %235 : vector<2x128xf32>
    %cst_78 = arith.constant 1.000000e+00 : f32
    %237 = vector.broadcast %cst_78 : f32 to vector<2x128xf32>
    %238 = arith.addf %237, %236 : vector<2x128xf32>
    %239 = arith.divf %237, %238 : vector<2x128xf32>
    %240 = vector.extract_strided_slice %227 {offsets = [0, 256], sizes = [2, 128], strides = [1, 1]} : vector<2x512xf32> to vector<2x128xf32>
    %241 = math.tanh %240 : vector<2x128xf32>
    %242 = vector.extract_strided_slice %227 {offsets = [0, 384], sizes = [2, 128], strides = [1, 1]} : vector<2x512xf32> to vector<2x128xf32>
    %243 = arith.negf %242 : vector<2x128xf32>
    %244 = math.exp %243 : vector<2x128xf32>
    %cst_79 = arith.constant 1.000000e+00 : f32
    %245 = vector.broadcast %cst_79 : f32 to vector<2x128xf32>
    %246 = arith.addf %245, %244 : vector<2x128xf32>
    %247 = arith.divf %245, %246 : vector<2x128xf32>
    %248 = arith.mulf %239, %189 : vector<2x128xf32>
    %249 = arith.mulf %233, %241 : vector<2x128xf32>
    %250 = arith.addf %248, %249 : vector<2x128xf32>
    %251 = math.tanh %250 : vector<2x128xf32>
    %252 = arith.mulf %247, %251 : vector<2x128xf32>
    %253 = tpu.concatenate %252, %222 in 1 : vector<2x128xf32>, vector<2x128xf32> -> vector<2x256xf32>
    %c0_80 = arith.constant 0 : index
    %c0_81 = arith.constant 0 : index
    %254 = vector.load %arg5[%c0_80, %c0_81] : memref<256x512xf32, #tpu.memory_space<vmem>>, vector<256x512xf32>
    %cst_82 = arith.constant dense<0.000000e+00> : vector<2x512xf32>
    %255 = tpu.matmul %253, %254, %cst_82 {dimension_numbers = #tpu.dot_dimension_numbers<[1], [0], [0], [1], [0, 0, 1, 1], [], []>} : vector<2x256xf32>, vector<256x512xf32>, vector<2x512xf32> -> vector<2x512xf32>
    %c0_83 = arith.constant 0 : index
    %c0_84 = arith.constant 0 : index
    %256 = vector.load %arg6[%c0_83, %c0_84] : memref<1x512xf32, #tpu.memory_space<vmem>>, vector<1x512xf32>
    %257 = vector.broadcast %256 : vector<1x512xf32> to vector<2x512xf32>
    %258 = arith.addf %255, %257 : vector<2x512xf32>
    %259 = vector.extract_strided_slice %258 {offsets = [0, 0], sizes = [2, 128], strides = [1, 1]} : vector<2x512xf32> to vector<2x128xf32>
    %260 = arith.negf %259 : vector<2x128xf32>
    %261 = math.exp %260 : vector<2x128xf32>
    %cst_85 = arith.constant 1.000000e+00 : f32
    %262 = vector.broadcast %cst_85 : f32 to vector<2x128xf32>
    %263 = arith.addf %262, %261 : vector<2x128xf32>
    %264 = arith.divf %262, %263 : vector<2x128xf32>
    %265 = vector.extract_strided_slice %258 {offsets = [0, 128], sizes = [2, 128], strides = [1, 1]} : vector<2x512xf32> to vector<2x128xf32>
    %266 = arith.negf %265 : vector<2x128xf32>
    %267 = math.exp %266 : vector<2x128xf32>
    %cst_86 = arith.constant 1.000000e+00 : f32
    %268 = vector.broadcast %cst_86 : f32 to vector<2x128xf32>
    %269 = arith.addf %268, %267 : vector<2x128xf32>
    %270 = arith.divf %268, %269 : vector<2x128xf32>
    %271 = vector.extract_strided_slice %258 {offsets = [0, 256], sizes = [2, 128], strides = [1, 1]} : vector<2x512xf32> to vector<2x128xf32>
    %272 = math.tanh %271 : vector<2x128xf32>
    %273 = vector.extract_strided_slice %258 {offsets = [0, 384], sizes = [2, 128], strides = [1, 1]} : vector<2x512xf32> to vector<2x128xf32>
    %274 = arith.negf %273 : vector<2x128xf32>
    %275 = math.exp %274 : vector<2x128xf32>
    %cst_87 = arith.constant 1.000000e+00 : f32
    %276 = vector.broadcast %cst_87 : f32 to vector<2x128xf32>
    %277 = arith.addf %276, %275 : vector<2x128xf32>
    %278 = arith.divf %276, %277 : vector<2x128xf32>
    %279 = arith.mulf %270, %220 : vector<2x128xf32>
    %280 = arith.mulf %264, %272 : vector<2x128xf32>
    %281 = arith.addf %279, %280 : vector<2x128xf32>
    %282 = math.tanh %281 : vector<2x128xf32>
    %283 = arith.mulf %278, %282 : vector<2x128xf32>
    %c4 = arith.constant 4 : index
    %c0_88 = arith.constant 0 : index
    %c0_89 = arith.constant 0 : index
    %284 = vector.load %arg18[%c4, %c0_88, %c0_89] : memref<8x2x512xf32, #tpu.memory_space<vmem>>, vector<1x2x512xf32>
    %285 = vector.shape_cast %284 : vector<1x2x512xf32> to vector<2x512xf32>
    %c0_90 = arith.constant 0 : index
    %c0_91 = arith.constant 0 : index
    %286 = vector.load %arg4[%c0_90, %c0_91] : memref<128x512xf32, #tpu.memory_space<vmem>>, vector<128x512xf32>
    %cst_92 = arith.constant dense<0.000000e+00> : vector<2x512xf32>
    %287 = tpu.matmul %252, %286, %cst_92 {dimension_numbers = #tpu.dot_dimension_numbers<[1], [0], [0], [1], [0, 0, 1, 1], [], []>} : vector<2x128xf32>, vector<128x512xf32>, vector<2x512xf32> -> vector<2x512xf32>
    %288 = arith.addf %285, %287 : vector<2x512xf32>
    %289 = vector.extract_strided_slice %288 {offsets = [0, 0], sizes = [2, 128], strides = [1, 1]} : vector<2x512xf32> to vector<2x128xf32>
    %290 = arith.negf %289 : vector<2x128xf32>
    %291 = math.exp %290 : vector<2x128xf32>
    %cst_93 = arith.constant 1.000000e+00 : f32
    %292 = vector.broadcast %cst_93 : f32 to vector<2x128xf32>
    %293 = arith.addf %292, %291 : vector<2x128xf32>
    %294 = arith.divf %292, %293 : vector<2x128xf32>
    %295 = vector.extract_strided_slice %288 {offsets = [0, 128], sizes = [2, 128], strides = [1, 1]} : vector<2x512xf32> to vector<2x128xf32>
    %296 = arith.negf %295 : vector<2x128xf32>
    %297 = math.exp %296 : vector<2x128xf32>
    %cst_94 = arith.constant 1.000000e+00 : f32
    %298 = vector.broadcast %cst_94 : f32 to vector<2x128xf32>
    %299 = arith.addf %298, %297 : vector<2x128xf32>
    %300 = arith.divf %298, %299 : vector<2x128xf32>
    %301 = vector.extract_strided_slice %288 {offsets = [0, 256], sizes = [2, 128], strides = [1, 1]} : vector<2x512xf32> to vector<2x128xf32>
    %302 = math.tanh %301 : vector<2x128xf32>
    %303 = vector.extract_strided_slice %288 {offsets = [0, 384], sizes = [2, 128], strides = [1, 1]} : vector<2x512xf32> to vector<2x128xf32>
    %304 = arith.negf %303 : vector<2x128xf32>
    %305 = math.exp %304 : vector<2x128xf32>
    %cst_95 = arith.constant 1.000000e+00 : f32
    %306 = vector.broadcast %cst_95 : f32 to vector<2x128xf32>
    %307 = arith.addf %306, %305 : vector<2x128xf32>
    %308 = arith.divf %306, %307 : vector<2x128xf32>
    %309 = arith.mulf %300, %250 : vector<2x128xf32>
    %310 = arith.mulf %294, %302 : vector<2x128xf32>
    %311 = arith.addf %309, %310 : vector<2x128xf32>
    %312 = math.tanh %311 : vector<2x128xf32>
    %313 = arith.mulf %308, %312 : vector<2x128xf32>
    %314 = tpu.concatenate %313, %283 in 1 : vector<2x128xf32>, vector<2x128xf32> -> vector<2x256xf32>
    %c0_96 = arith.constant 0 : index
    %c0_97 = arith.constant 0 : index
    %315 = vector.load %arg5[%c0_96, %c0_97] : memref<256x512xf32, #tpu.memory_space<vmem>>, vector<256x512xf32>
    %cst_98 = arith.constant dense<0.000000e+00> : vector<2x512xf32>
    %316 = tpu.matmul %314, %315, %cst_98 {dimension_numbers = #tpu.dot_dimension_numbers<[1], [0], [0], [1], [0, 0, 1, 1], [], []>} : vector<2x256xf32>, vector<256x512xf32>, vector<2x512xf32> -> vector<2x512xf32>
    %c0_99 = arith.constant 0 : index
    %c0_100 = arith.constant 0 : index
    %317 = vector.load %arg6[%c0_99, %c0_100] : memref<1x512xf32, #tpu.memory_space<vmem>>, vector<1x512xf32>
    %318 = vector.broadcast %317 : vector<1x512xf32> to vector<2x512xf32>
    %319 = arith.addf %316, %318 : vector<2x512xf32>
    %320 = vector.extract_strided_slice %319 {offsets = [0, 0], sizes = [2, 128], strides = [1, 1]} : vector<2x512xf32> to vector<2x128xf32>
    %321 = arith.negf %320 : vector<2x128xf32>
    %322 = math.exp %321 : vector<2x128xf32>
    %cst_101 = arith.constant 1.000000e+00 : f32
    %323 = vector.broadcast %cst_101 : f32 to vector<2x128xf32>
    %324 = arith.addf %323, %322 : vector<2x128xf32>
    %325 = arith.divf %323, %324 : vector<2x128xf32>
    %326 = vector.extract_strided_slice %319 {offsets = [0, 128], sizes = [2, 128], strides = [1, 1]} : vector<2x512xf32> to vector<2x128xf32>
    %327 = arith.negf %326 : vector<2x128xf32>
    %328 = math.exp %327 : vector<2x128xf32>
    %cst_102 = arith.constant 1.000000e+00 : f32
    %329 = vector.broadcast %cst_102 : f32 to vector<2x128xf32>
    %330 = arith.addf %329, %328 : vector<2x128xf32>
    %331 = arith.divf %329, %330 : vector<2x128xf32>
    %332 = vector.extract_strided_slice %319 {offsets = [0, 256], sizes = [2, 128], strides = [1, 1]} : vector<2x512xf32> to vector<2x128xf32>
    %333 = math.tanh %332 : vector<2x128xf32>
    %334 = vector.extract_strided_slice %319 {offsets = [0, 384], sizes = [2, 128], strides = [1, 1]} : vector<2x512xf32> to vector<2x128xf32>
    %335 = arith.negf %334 : vector<2x128xf32>
    %336 = math.exp %335 : vector<2x128xf32>
    %cst_103 = arith.constant 1.000000e+00 : f32
    %337 = vector.broadcast %cst_103 : f32 to vector<2x128xf32>
    %338 = arith.addf %337, %336 : vector<2x128xf32>
    %339 = arith.divf %337, %338 : vector<2x128xf32>
    %340 = arith.mulf %331, %281 : vector<2x128xf32>
    %341 = arith.mulf %325, %333 : vector<2x128xf32>
    %342 = arith.addf %340, %341 : vector<2x128xf32>
    %343 = math.tanh %342 : vector<2x128xf32>
    %344 = arith.mulf %339, %343 : vector<2x128xf32>
    %c5 = arith.constant 5 : index
    %c0_104 = arith.constant 0 : index
    %c0_105 = arith.constant 0 : index
    %345 = vector.load %arg18[%c5, %c0_104, %c0_105] : memref<8x2x512xf32, #tpu.memory_space<vmem>>, vector<1x2x512xf32>
    %346 = vector.shape_cast %345 : vector<1x2x512xf32> to vector<2x512xf32>
    %c0_106 = arith.constant 0 : index
    %c0_107 = arith.constant 0 : index
    %347 = vector.load %arg4[%c0_106, %c0_107] : memref<128x512xf32, #tpu.memory_space<vmem>>, vector<128x512xf32>
    %cst_108 = arith.constant dense<0.000000e+00> : vector<2x512xf32>
    %348 = tpu.matmul %313, %347, %cst_108 {dimension_numbers = #tpu.dot_dimension_numbers<[1], [0], [0], [1], [0, 0, 1, 1], [], []>} : vector<2x128xf32>, vector<128x512xf32>, vector<2x512xf32> -> vector<2x512xf32>
    %349 = arith.addf %346, %348 : vector<2x512xf32>
    %350 = vector.extract_strided_slice %349 {offsets = [0, 0], sizes = [2, 128], strides = [1, 1]} : vector<2x512xf32> to vector<2x128xf32>
    %351 = arith.negf %350 : vector<2x128xf32>
    %352 = math.exp %351 : vector<2x128xf32>
    %cst_109 = arith.constant 1.000000e+00 : f32
    %353 = vector.broadcast %cst_109 : f32 to vector<2x128xf32>
    %354 = arith.addf %353, %352 : vector<2x128xf32>
    %355 = arith.divf %353, %354 : vector<2x128xf32>
    %356 = vector.extract_strided_slice %349 {offsets = [0, 128], sizes = [2, 128], strides = [1, 1]} : vector<2x512xf32> to vector<2x128xf32>
    %357 = arith.negf %356 : vector<2x128xf32>
    %358 = math.exp %357 : vector<2x128xf32>
    %cst_110 = arith.constant 1.000000e+00 : f32
    %359 = vector.broadcast %cst_110 : f32 to vector<2x128xf32>
    %360 = arith.addf %359, %358 : vector<2x128xf32>
    %361 = arith.divf %359, %360 : vector<2x128xf32>
    %362 = vector.extract_strided_slice %349 {offsets = [0, 256], sizes = [2, 128], strides = [1, 1]} : vector<2x512xf32> to vector<2x128xf32>
    %363 = math.tanh %362 : vector<2x128xf32>
    %364 = vector.extract_strided_slice %349 {offsets = [0, 384], sizes = [2, 128], strides = [1, 1]} : vector<2x512xf32> to vector<2x128xf32>
    %365 = arith.negf %364 : vector<2x128xf32>
    %366 = math.exp %365 : vector<2x128xf32>
    %cst_111 = arith.constant 1.000000e+00 : f32
    %367 = vector.broadcast %cst_111 : f32 to vector<2x128xf32>
    %368 = arith.addf %367, %366 : vector<2x128xf32>
    %369 = arith.divf %367, %368 : vector<2x128xf32>
    %370 = arith.mulf %361, %311 : vector<2x128xf32>
    %371 = arith.mulf %355, %363 : vector<2x128xf32>
    %372 = arith.addf %370, %371 : vector<2x128xf32>
    %373 = math.tanh %372 : vector<2x128xf32>
    %374 = arith.mulf %369, %373 : vector<2x128xf32>
    %375 = tpu.concatenate %374, %344 in 1 : vector<2x128xf32>, vector<2x128xf32> -> vector<2x256xf32>
    %c0_112 = arith.constant 0 : index
    %c0_113 = arith.constant 0 : index
    %376 = vector.load %arg5[%c0_112, %c0_113] : memref<256x512xf32, #tpu.memory_space<vmem>>, vector<256x512xf32>
    %cst_114 = arith.constant dense<0.000000e+00> : vector<2x512xf32>
    %377 = tpu.matmul %375, %376, %cst_114 {dimension_numbers = #tpu.dot_dimension_numbers<[1], [0], [0], [1], [0, 0, 1, 1], [], []>} : vector<2x256xf32>, vector<256x512xf32>, vector<2x512xf32> -> vector<2x512xf32>
    %c0_115 = arith.constant 0 : index
    %c0_116 = arith.constant 0 : index
    %378 = vector.load %arg6[%c0_115, %c0_116] : memref<1x512xf32, #tpu.memory_space<vmem>>, vector<1x512xf32>
    %379 = vector.broadcast %378 : vector<1x512xf32> to vector<2x512xf32>
    %380 = arith.addf %377, %379 : vector<2x512xf32>
    %381 = vector.extract_strided_slice %380 {offsets = [0, 0], sizes = [2, 128], strides = [1, 1]} : vector<2x512xf32> to vector<2x128xf32>
    %382 = arith.negf %381 : vector<2x128xf32>
    %383 = math.exp %382 : vector<2x128xf32>
    %cst_117 = arith.constant 1.000000e+00 : f32
    %384 = vector.broadcast %cst_117 : f32 to vector<2x128xf32>
    %385 = arith.addf %384, %383 : vector<2x128xf32>
    %386 = arith.divf %384, %385 : vector<2x128xf32>
    %387 = vector.extract_strided_slice %380 {offsets = [0, 128], sizes = [2, 128], strides = [1, 1]} : vector<2x512xf32> to vector<2x128xf32>
    %388 = arith.negf %387 : vector<2x128xf32>
    %389 = math.exp %388 : vector<2x128xf32>
    %cst_118 = arith.constant 1.000000e+00 : f32
    %390 = vector.broadcast %cst_118 : f32 to vector<2x128xf32>
    %391 = arith.addf %390, %389 : vector<2x128xf32>
    %392 = arith.divf %390, %391 : vector<2x128xf32>
    %393 = vector.extract_strided_slice %380 {offsets = [0, 256], sizes = [2, 128], strides = [1, 1]} : vector<2x512xf32> to vector<2x128xf32>
    %394 = math.tanh %393 : vector<2x128xf32>
    %395 = vector.extract_strided_slice %380 {offsets = [0, 384], sizes = [2, 128], strides = [1, 1]} : vector<2x512xf32> to vector<2x128xf32>
    %396 = arith.negf %395 : vector<2x128xf32>
    %397 = math.exp %396 : vector<2x128xf32>
    %cst_119 = arith.constant 1.000000e+00 : f32
    %398 = vector.broadcast %cst_119 : f32 to vector<2x128xf32>
    %399 = arith.addf %398, %397 : vector<2x128xf32>
    %400 = arith.divf %398, %399 : vector<2x128xf32>
    %401 = arith.mulf %392, %342 : vector<2x128xf32>
    %402 = arith.mulf %386, %394 : vector<2x128xf32>
    %403 = arith.addf %401, %402 : vector<2x128xf32>
    %404 = math.tanh %403 : vector<2x128xf32>
    %405 = arith.mulf %400, %404 : vector<2x128xf32>
    %c6 = arith.constant 6 : index
    %c0_120 = arith.constant 0 : index
    %c0_121 = arith.constant 0 : index
    %406 = vector.load %arg18[%c6, %c0_120, %c0_121] : memref<8x2x512xf32, #tpu.memory_space<vmem>>, vector<1x2x512xf32>
    %407 = vector.shape_cast %406 : vector<1x2x512xf32> to vector<2x512xf32>
    %c0_122 = arith.constant 0 : index
    %c0_123 = arith.constant 0 : index
    %408 = vector.load %arg4[%c0_122, %c0_123] : memref<128x512xf32, #tpu.memory_space<vmem>>, vector<128x512xf32>
    %cst_124 = arith.constant dense<0.000000e+00> : vector<2x512xf32>
    %409 = tpu.matmul %374, %408, %cst_124 {dimension_numbers = #tpu.dot_dimension_numbers<[1], [0], [0], [1], [0, 0, 1, 1], [], []>} : vector<2x128xf32>, vector<128x512xf32>, vector<2x512xf32> -> vector<2x512xf32>
    %410 = arith.addf %407, %409 : vector<2x512xf32>
    %411 = vector.extract_strided_slice %410 {offsets = [0, 0], sizes = [2, 128], strides = [1, 1]} : vector<2x512xf32> to vector<2x128xf32>
    %412 = arith.negf %411 : vector<2x128xf32>
    %413 = math.exp %412 : vector<2x128xf32>
    %cst_125 = arith.constant 1.000000e+00 : f32
    %414 = vector.broadcast %cst_125 : f32 to vector<2x128xf32>
    %415 = arith.addf %414, %413 : vector<2x128xf32>
    %416 = arith.divf %414, %415 : vector<2x128xf32>
    %417 = vector.extract_strided_slice %410 {offsets = [0, 128], sizes = [2, 128], strides = [1, 1]} : vector<2x512xf32> to vector<2x128xf32>
    %418 = arith.negf %417 : vector<2x128xf32>
    %419 = math.exp %418 : vector<2x128xf32>
    %cst_126 = arith.constant 1.000000e+00 : f32
    %420 = vector.broadcast %cst_126 : f32 to vector<2x128xf32>
    %421 = arith.addf %420, %419 : vector<2x128xf32>
    %422 = arith.divf %420, %421 : vector<2x128xf32>
    %423 = vector.extract_strided_slice %410 {offsets = [0, 256], sizes = [2, 128], strides = [1, 1]} : vector<2x512xf32> to vector<2x128xf32>
    %424 = math.tanh %423 : vector<2x128xf32>
    %425 = vector.extract_strided_slice %410 {offsets = [0, 384], sizes = [2, 128], strides = [1, 1]} : vector<2x512xf32> to vector<2x128xf32>
    %426 = arith.negf %425 : vector<2x128xf32>
    %427 = math.exp %426 : vector<2x128xf32>
    %cst_127 = arith.constant 1.000000e+00 : f32
    %428 = vector.broadcast %cst_127 : f32 to vector<2x128xf32>
    %429 = arith.addf %428, %427 : vector<2x128xf32>
    %430 = arith.divf %428, %429 : vector<2x128xf32>
    %431 = arith.mulf %422, %372 : vector<2x128xf32>
    %432 = arith.mulf %416, %424 : vector<2x128xf32>
    %433 = arith.addf %431, %432 : vector<2x128xf32>
    %434 = math.tanh %433 : vector<2x128xf32>
    %435 = arith.mulf %430, %434 : vector<2x128xf32>
    %436 = tpu.concatenate %435, %405 in 1 : vector<2x128xf32>, vector<2x128xf32> -> vector<2x256xf32>
    %c0_128 = arith.constant 0 : index
    %c0_129 = arith.constant 0 : index
    %437 = vector.load %arg5[%c0_128, %c0_129] : memref<256x512xf32, #tpu.memory_space<vmem>>, vector<256x512xf32>
    %cst_130 = arith.constant dense<0.000000e+00> : vector<2x512xf32>
    %438 = tpu.matmul %436, %437, %cst_130 {dimension_numbers = #tpu.dot_dimension_numbers<[1], [0], [0], [1], [0, 0, 1, 1], [], []>} : vector<2x256xf32>, vector<256x512xf32>, vector<2x512xf32> -> vector<2x512xf32>
    %c0_131 = arith.constant 0 : index
    %c0_132 = arith.constant 0 : index
    %439 = vector.load %arg6[%c0_131, %c0_132] : memref<1x512xf32, #tpu.memory_space<vmem>>, vector<1x512xf32>
    %440 = vector.broadcast %439 : vector<1x512xf32> to vector<2x512xf32>
    %441 = arith.addf %438, %440 : vector<2x512xf32>
    %442 = vector.extract_strided_slice %441 {offsets = [0, 0], sizes = [2, 128], strides = [1, 1]} : vector<2x512xf32> to vector<2x128xf32>
    %443 = arith.negf %442 : vector<2x128xf32>
    %444 = math.exp %443 : vector<2x128xf32>
    %cst_133 = arith.constant 1.000000e+00 : f32
    %445 = vector.broadcast %cst_133 : f32 to vector<2x128xf32>
    %446 = arith.addf %445, %444 : vector<2x128xf32>
    %447 = arith.divf %445, %446 : vector<2x128xf32>
    %448 = vector.extract_strided_slice %441 {offsets = [0, 128], sizes = [2, 128], strides = [1, 1]} : vector<2x512xf32> to vector<2x128xf32>
    %449 = arith.negf %448 : vector<2x128xf32>
    %450 = math.exp %449 : vector<2x128xf32>
    %cst_134 = arith.constant 1.000000e+00 : f32
    %451 = vector.broadcast %cst_134 : f32 to vector<2x128xf32>
    %452 = arith.addf %451, %450 : vector<2x128xf32>
    %453 = arith.divf %451, %452 : vector<2x128xf32>
    %454 = vector.extract_strided_slice %441 {offsets = [0, 256], sizes = [2, 128], strides = [1, 1]} : vector<2x512xf32> to vector<2x128xf32>
    %455 = math.tanh %454 : vector<2x128xf32>
    %456 = vector.extract_strided_slice %441 {offsets = [0, 384], sizes = [2, 128], strides = [1, 1]} : vector<2x512xf32> to vector<2x128xf32>
    %457 = arith.negf %456 : vector<2x128xf32>
    %458 = math.exp %457 : vector<2x128xf32>
    %cst_135 = arith.constant 1.000000e+00 : f32
    %459 = vector.broadcast %cst_135 : f32 to vector<2x128xf32>
    %460 = arith.addf %459, %458 : vector<2x128xf32>
    %461 = arith.divf %459, %460 : vector<2x128xf32>
    %462 = arith.mulf %453, %403 : vector<2x128xf32>
    %463 = arith.mulf %447, %455 : vector<2x128xf32>
    %464 = arith.addf %462, %463 : vector<2x128xf32>
    %465 = math.tanh %464 : vector<2x128xf32>
    %466 = arith.mulf %461, %465 : vector<2x128xf32>
    %c7 = arith.constant 7 : index
    %c0_136 = arith.constant 0 : index
    %c0_137 = arith.constant 0 : index
    %467 = vector.load %arg18[%c7, %c0_136, %c0_137] : memref<8x2x512xf32, #tpu.memory_space<vmem>>, vector<1x2x512xf32>
    %468 = vector.shape_cast %467 : vector<1x2x512xf32> to vector<2x512xf32>
    %c0_138 = arith.constant 0 : index
    %c0_139 = arith.constant 0 : index
    %469 = vector.load %arg4[%c0_138, %c0_139] : memref<128x512xf32, #tpu.memory_space<vmem>>, vector<128x512xf32>
    %cst_140 = arith.constant dense<0.000000e+00> : vector<2x512xf32>
    %470 = tpu.matmul %435, %469, %cst_140 {dimension_numbers = #tpu.dot_dimension_numbers<[1], [0], [0], [1], [0, 0, 1, 1], [], []>} : vector<2x128xf32>, vector<128x512xf32>, vector<2x512xf32> -> vector<2x512xf32>
    %471 = arith.addf %468, %470 : vector<2x512xf32>
    %472 = vector.extract_strided_slice %471 {offsets = [0, 0], sizes = [2, 128], strides = [1, 1]} : vector<2x512xf32> to vector<2x128xf32>
    %473 = arith.negf %472 : vector<2x128xf32>
    %474 = math.exp %473 : vector<2x128xf32>
    %cst_141 = arith.constant 1.000000e+00 : f32
    %475 = vector.broadcast %cst_141 : f32 to vector<2x128xf32>
    %476 = arith.addf %475, %474 : vector<2x128xf32>
    %477 = arith.divf %475, %476 : vector<2x128xf32>
    %478 = vector.extract_strided_slice %471 {offsets = [0, 128], sizes = [2, 128], strides = [1, 1]} : vector<2x512xf32> to vector<2x128xf32>
    %479 = arith.negf %478 : vector<2x128xf32>
    %480 = math.exp %479 : vector<2x128xf32>
    %cst_142 = arith.constant 1.000000e+00 : f32
    %481 = vector.broadcast %cst_142 : f32 to vector<2x128xf32>
    %482 = arith.addf %481, %480 : vector<2x128xf32>
    %483 = arith.divf %481, %482 : vector<2x128xf32>
    %484 = vector.extract_strided_slice %471 {offsets = [0, 256], sizes = [2, 128], strides = [1, 1]} : vector<2x512xf32> to vector<2x128xf32>
    %485 = math.tanh %484 : vector<2x128xf32>
    %486 = vector.extract_strided_slice %471 {offsets = [0, 384], sizes = [2, 128], strides = [1, 1]} : vector<2x512xf32> to vector<2x128xf32>
    %487 = arith.negf %486 : vector<2x128xf32>
    %488 = math.exp %487 : vector<2x128xf32>
    %cst_143 = arith.constant 1.000000e+00 : f32
    %489 = vector.broadcast %cst_143 : f32 to vector<2x128xf32>
    %490 = arith.addf %489, %488 : vector<2x128xf32>
    %491 = arith.divf %489, %490 : vector<2x128xf32>
    %492 = arith.mulf %483, %433 : vector<2x128xf32>
    %493 = arith.mulf %477, %485 : vector<2x128xf32>
    %494 = arith.addf %492, %493 : vector<2x128xf32>
    %495 = math.tanh %494 : vector<2x128xf32>
    %496 = arith.mulf %491, %495 : vector<2x128xf32>
    %497 = tpu.concatenate %496, %466 in 1 : vector<2x128xf32>, vector<2x128xf32> -> vector<2x256xf32>
    %c0_144 = arith.constant 0 : index
    %c0_145 = arith.constant 0 : index
    %498 = vector.load %arg5[%c0_144, %c0_145] : memref<256x512xf32, #tpu.memory_space<vmem>>, vector<256x512xf32>
    %cst_146 = arith.constant dense<0.000000e+00> : vector<2x512xf32>
    %499 = tpu.matmul %497, %498, %cst_146 {dimension_numbers = #tpu.dot_dimension_numbers<[1], [0], [0], [1], [0, 0, 1, 1], [], []>} : vector<2x256xf32>, vector<256x512xf32>, vector<2x512xf32> -> vector<2x512xf32>
    %c0_147 = arith.constant 0 : index
    %c0_148 = arith.constant 0 : index
    %500 = vector.load %arg6[%c0_147, %c0_148] : memref<1x512xf32, #tpu.memory_space<vmem>>, vector<1x512xf32>
    %501 = vector.broadcast %500 : vector<1x512xf32> to vector<2x512xf32>
    %502 = arith.addf %499, %501 : vector<2x512xf32>
    %503 = vector.extract_strided_slice %502 {offsets = [0, 0], sizes = [2, 128], strides = [1, 1]} : vector<2x512xf32> to vector<2x128xf32>
    %504 = arith.negf %503 : vector<2x128xf32>
    %505 = math.exp %504 : vector<2x128xf32>
    %cst_149 = arith.constant 1.000000e+00 : f32
    %506 = vector.broadcast %cst_149 : f32 to vector<2x128xf32>
    %507 = arith.addf %506, %505 : vector<2x128xf32>
    %508 = arith.divf %506, %507 : vector<2x128xf32>
    %509 = vector.extract_strided_slice %502 {offsets = [0, 128], sizes = [2, 128], strides = [1, 1]} : vector<2x512xf32> to vector<2x128xf32>
    %510 = arith.negf %509 : vector<2x128xf32>
    %511 = math.exp %510 : vector<2x128xf32>
    %cst_150 = arith.constant 1.000000e+00 : f32
    %512 = vector.broadcast %cst_150 : f32 to vector<2x128xf32>
    %513 = arith.addf %512, %511 : vector<2x128xf32>
    %514 = arith.divf %512, %513 : vector<2x128xf32>
    %515 = vector.extract_strided_slice %502 {offsets = [0, 256], sizes = [2, 128], strides = [1, 1]} : vector<2x512xf32> to vector<2x128xf32>
    %516 = math.tanh %515 : vector<2x128xf32>
    %517 = vector.extract_strided_slice %502 {offsets = [0, 384], sizes = [2, 128], strides = [1, 1]} : vector<2x512xf32> to vector<2x128xf32>
    %518 = arith.negf %517 : vector<2x128xf32>
    %519 = math.exp %518 : vector<2x128xf32>
    %cst_151 = arith.constant 1.000000e+00 : f32
    %520 = vector.broadcast %cst_151 : f32 to vector<2x128xf32>
    %521 = arith.addf %520, %519 : vector<2x128xf32>
    %522 = arith.divf %520, %521 : vector<2x128xf32>
    %523 = arith.mulf %514, %464 : vector<2x128xf32>
    %524 = arith.mulf %508, %516 : vector<2x128xf32>
    %525 = arith.addf %523, %524 : vector<2x128xf32>
    %526 = math.tanh %525 : vector<2x128xf32>
    %527 = arith.mulf %522, %526 : vector<2x128xf32>
    %c0_152 = arith.constant 0 : index
    %c0_153 = arith.constant 0 : index
    %528 = vector.load %arg19[%c0_152, %c0_153] : memref<2x128xf32, #tpu.memory_space<vmem>>, vector<2x128xf32>
    tpu.vector_store %arg19[%c0_152, %c0_153], %496 {strides = array<i32>} : memref<2x128xf32, #tpu.memory_space<vmem>>, vector<2x128xf32>,
    %c0_154 = arith.constant 0 : index
    %c0_155 = arith.constant 0 : index
    %529 = vector.load %arg20[%c0_154, %c0_155] : memref<2x128xf32, #tpu.memory_space<vmem>>, vector<2x128xf32>
    tpu.vector_store %arg20[%c0_154, %c0_155], %494 {strides = array<i32>} : memref<2x128xf32, #tpu.memory_space<vmem>>, vector<2x128xf32>,
    %c0_156 = arith.constant 0 : index
    %c0_157 = arith.constant 0 : index
    %530 = vector.load %arg21[%c0_156, %c0_157] : memref<2x128xf32, #tpu.memory_space<vmem>>, vector<2x128xf32>
    tpu.vector_store %arg21[%c0_156, %c0_157], %527 {strides = array<i32>} : memref<2x128xf32, #tpu.memory_space<vmem>>, vector<2x128xf32>,
    %c0_158 = arith.constant 0 : index
    %c0_159 = arith.constant 0 : index
    %531 = vector.load %arg22[%c0_158, %c0_159] : memref<2x128xf32, #tpu.memory_space<vmem>>, vector<2x128xf32>
    tpu.vector_store %arg22[%c0_158, %c0_159], %525 {strides = array<i32>} : memref<2x128xf32, #tpu.memory_space<vmem>>, vector<2x128xf32>,
    %c8_i32 = arith.constant 8 : i32
    %532 = arith.muli %arg0, %c8_i32 : i32
    %533 = tpu.assume_multiple %532, 8 : i32
    %534 = vector.shape_cast %100 : vector<2x128xf32> to vector<2x1x128xf32>
    %535 = vector.shape_cast %161 : vector<2x128xf32> to vector<2x1x128xf32>
    %536 = vector.shape_cast %222 : vector<2x128xf32> to vector<2x1x128xf32>
    %537 = vector.shape_cast %283 : vector<2x128xf32> to vector<2x1x128xf32>
    %538 = vector.shape_cast %344 : vector<2x128xf32> to vector<2x1x128xf32>
    %539 = vector.shape_cast %405 : vector<2x128xf32> to vector<2x1x128xf32>
    %540 = vector.shape_cast %466 : vector<2x128xf32> to vector<2x1x128xf32>
    %541 = vector.shape_cast %527 : vector<2x128xf32> to vector<2x1x128xf32>
    %542 = tpu.concatenate %534, %535, %536, %537, %538, %539, %540, %541 in 1 : vector<2x1x128xf32>, vector<2x1x128xf32>, vector<2x1x128xf32>, vector<2x1x128xf32>, vector<2x1x128xf32>, vector<2x1x128xf32>, vector<2x1x128xf32>, vector<2x1x128xf32> -> vector<2x8x128xf32>
    %c0_160 = arith.constant 0 : index
    %543 = arith.index_cast %533 : i32 to index
    %c0_161 = arith.constant 0 : index
    %544 = vector.load %arg23[%c0_160, %543, %c0_161] : memref<2x8x128xf32, #tpu.memory_space<vmem>>, vector<2x8x128xf32>
    tpu.vector_store %arg23[%c0_160, %543, %c0_161], %542 {strides = array<i32>} : memref<2x8x128xf32, #tpu.memory_space<vmem>>, vector<2x8x128xf32>,
    %c0_i32_162 = arith.constant 0 : i32
    %545 = arith.cmpi eq, %arg0, %c0_i32_162 : i32
    %546 = arith.extui %545 : i1 to i32
    %c0_i32_163 = arith.constant 0 : i32
    %547 = arith.cmpi ne, %546, %c0_i32_163 : i32
    scf.if %547 {
      %c0_164 = arith.constant 0 : index
      %c0_165 = arith.constant 0 : index
      %c0_166 = arith.constant 0 : index
      %548 = vector.load %arg23[%c0_164, %c0_165, %c0_166] : memref<2x8x128xf32, #tpu.memory_space<vmem>>, vector<2x8x128xf32>
      %cst_167 = arith.constant 0.000000e+00 : f32
      %549 = vector.broadcast %cst_167 : f32 to vector<2x1x128xf32>
      %550 = vector.extract_strided_slice %548 {offsets = [0, 0, 0], sizes = [2, 7, 128], strides = [1, 1, 1]} : vector<2x8x128xf32> to vector<2x7x128xf32>
      %551 = tpu.concatenate %549, %550 in 1 : vector<2x1x128xf32>, vector<2x7x128xf32> -> vector<2x8x128xf32>
      %552 = vector.extract_strided_slice %548 {offsets = [0, 1, 0], sizes = [2, 7, 128], strides = [1, 1, 1]} : vector<2x8x128xf32> to vector<2x7x128xf32>
      %553 = tpu.concatenate %552, %549 in 1 : vector<2x7x128xf32>, vector<2x1x128xf32> -> vector<2x8x128xf32>
      %554 = vector.shape_cast %551 : vector<2x8x128xf32> to vector<16x128xf32>
      %c0_168 = arith.constant 0 : index
      %c0_169 = arith.constant 0 : index
      %c0_170 = arith.constant 0 : index
      %555 = vector.load %arg7[%c0_168, %c0_169, %c0_170] : memref<3x128x256xf32, #tpu.memory_space<vmem>>, vector<1x128x256xf32>
      %556 = vector.shape_cast %555 : vector<1x128x256xf32> to vector<128x256xf32>
      %cst_171 = arith.constant dense<0.000000e+00> : vector<16x256xf32>
      %557 = tpu.matmul %554, %556, %cst_171 {dimension_numbers = #tpu.dot_dimension_numbers<[1], [0], [0], [1], [0, 0, 1, 1], [], []>} : vector<16x128xf32>, vector<128x256xf32>, vector<16x256xf32> -> vector<16x256xf32>
      %558 = vector.shape_cast %548 : vector<2x8x128xf32> to vector<16x128xf32>
      %c1_172 = arith.constant 1 : index
      %c0_173 = arith.constant 0 : index
      %c0_174 = arith.constant 0 : index
      %559 = vector.load %arg7[%c1_172, %c0_173, %c0_174] : memref<3x128x256xf32, #tpu.memory_space<vmem>>, vector<1x128x256xf32>
      %560 = vector.shape_cast %559 : vector<1x128x256xf32> to vector<128x256xf32>
      %cst_175 = arith.constant dense<0.000000e+00> : vector<16x256xf32>
      %561 = tpu.matmul %558, %560, %cst_175 {dimension_numbers = #tpu.dot_dimension_numbers<[1], [0], [0], [1], [0, 0, 1, 1], [], []>} : vector<16x128xf32>, vector<128x256xf32>, vector<16x256xf32> -> vector<16x256xf32>
      %562 = arith.addf %557, %561 : vector<16x256xf32>
      %563 = vector.shape_cast %553 : vector<2x8x128xf32> to vector<16x128xf32>
      %c2_176 = arith.constant 2 : index
      %c0_177 = arith.constant 0 : index
      %c0_178 = arith.constant 0 : index
      %564 = vector.load %arg7[%c2_176, %c0_177, %c0_178] : memref<3x128x256xf32, #tpu.memory_space<vmem>>, vector<1x128x256xf32>
      %565 = vector.shape_cast %564 : vector<1x128x256xf32> to vector<128x256xf32>
      %cst_179 = arith.constant dense<0.000000e+00> : vector<16x256xf32>
      %566 = tpu.matmul %563, %565, %cst_179 {dimension_numbers = #tpu.dot_dimension_numbers<[1], [0], [0], [1], [0, 0, 1, 1], [], []>} : vector<16x128xf32>, vector<128x256xf32>, vector<16x256xf32> -> vector<16x256xf32>
      %567 = arith.addf %562, %566 : vector<16x256xf32>
      %568 = vector.shape_cast %567 : vector<16x256xf32> to vector<2x8x256xf32>
      %c0_180 = arith.constant 0 : index
      %c0_181 = arith.constant 0 : index
      %569 = vector.load %arg8[%c0_180, %c0_181] : memref<1x256xf32, #tpu.memory_space<vmem>>, vector<1x256xf32>
      %570 = vector.shape_cast %569 : vector<1x256xf32> to vector<1x1x256xf32>
      %571 = vector.broadcast %570 : vector<1x1x256xf32> to vector<2x8x256xf32>
      %572 = arith.addf %568, %571 : vector<2x8x256xf32>
      %cst_182 = arith.constant dense<0.000000e+00> : vector<256xf32>
      %573 = vector.multi_reduction <add>, %572, %cst_182 [0, 1] : vector<2x8x256xf32> to vector<256xf32>
      %574 = vector.shape_cast %573 : vector<256xf32> to vector<1x1x256xf32>
      %575 = arith.mulf %572, %572 : vector<2x8x256xf32>
      %cst_183 = arith.constant dense<0.000000e+00> : vector<256xf32>
      %576 = vector.multi_reduction <add>, %575, %cst_183 [0, 1] : vector<2x8x256xf32> to vector<256xf32>
      %577 = vector.shape_cast %576 : vector<256xf32> to vector<1x1x256xf32>
      %cst_184 = arith.constant 6.250000e-02 : f32
      %578 = vector.broadcast %cst_184 : f32 to vector<1x1x256xf32>
      %579 = arith.mulf %574, %578 : vector<1x1x256xf32>
      %cst_185 = arith.constant 6.250000e-02 : f32
      %580 = vector.broadcast %cst_185 : f32 to vector<1x1x256xf32>
      %581 = arith.mulf %577, %580 : vector<1x1x256xf32>
      %582 = arith.mulf %579, %579 : vector<1x1x256xf32>
      %583 = arith.subf %581, %582 : vector<1x1x256xf32>
      %584 = vector.broadcast %579 : vector<1x1x256xf32> to vector<2x8x256xf32>
      %585 = arith.subf %572, %584 : vector<2x8x256xf32>
      %cst_186 = arith.constant 9.99999974E-6 : f32
      %586 = vector.broadcast %cst_186 : f32 to vector<1x1x256xf32>
      %587 = arith.addf %583, %586 : vector<1x1x256xf32>
      %588 = math.rsqrt %587 : vector<1x1x256xf32>
      %589 = vector.broadcast %588 : vector<1x1x256xf32> to vector<2x8x256xf32>
      %590 = arith.mulf %585, %589 : vector<2x8x256xf32>
      %c0_187 = arith.constant 0 : index
      %c0_188 = arith.constant 0 : index
      %591 = vector.load %arg9[%c0_187, %c0_188] : memref<1x256xf32, #tpu.memory_space<vmem>>, vector<1x256xf32>
      %592 = vector.shape_cast %591 : vector<1x256xf32> to vector<1x1x256xf32>
      %593 = vector.broadcast %592 : vector<1x1x256xf32> to vector<2x8x256xf32>
      %594 = arith.mulf %590, %593 : vector<2x8x256xf32>
      %c0_189 = arith.constant 0 : index
      %c0_190 = arith.constant 0 : index
      %595 = vector.load %arg10[%c0_189, %c0_190] : memref<1x256xf32, #tpu.memory_space<vmem>>, vector<1x256xf32>
      %596 = vector.shape_cast %595 : vector<1x256xf32> to vector<1x1x256xf32>
      %597 = vector.broadcast %596 : vector<1x1x256xf32> to vector<2x8x256xf32>
      %598 = arith.addf %594, %597 : vector<2x8x256xf32>
      %cst_191 = arith.constant 0.000000e+00 : f32
      %599 = vector.broadcast %cst_191 : f32 to vector<2x8x256xf32>
      %600 = arith.cmpf ogt, %598, %599 : vector<2x8x256xf32>
      %cst_192 = arith.constant 2.000000e-01 : f32
      %601 = vector.broadcast %cst_192 : f32 to vector<2x8x256xf32>
      %602 = arith.mulf %601, %598 : vector<2x8x256xf32>
      %603 = arith.select %600, %598, %602 : vector<2x8x256xi1>, vector<2x8x256xf32>
      %cst_193 = arith.constant 0.000000e+00 : f32
      %604 = vector.broadcast %cst_193 : f32 to vector<2x1x256xf32>
      %605 = vector.extract_strided_slice %603 {offsets = [0, 0, 0], sizes = [2, 7, 256], strides = [1, 1, 1]} : vector<2x8x256xf32> to vector<2x7x256xf32>
      %606 = tpu.concatenate %604, %605 in 1 : vector<2x1x256xf32>, vector<2x7x256xf32> -> vector<2x8x256xf32>
      %607 = vector.extract_strided_slice %603 {offsets = [0, 1, 0], sizes = [2, 7, 256], strides = [1, 1, 1]} : vector<2x8x256xf32> to vector<2x7x256xf32>
      %608 = tpu.concatenate %607, %604 in 1 : vector<2x7x256xf32>, vector<2x1x256xf32> -> vector<2x8x256xf32>
      %609 = vector.shape_cast %606 : vector<2x8x256xf32> to vector<16x256xf32>
      %c0_194 = arith.constant 0 : index
      %c0_195 = arith.constant 0 : index
      %c0_196 = arith.constant 0 : index
      %610 = vector.load %arg11[%c0_194, %c0_195, %c0_196] : memref<3x256x128xf32, #tpu.memory_space<vmem>>, vector<1x256x128xf32>
      %611 = vector.shape_cast %610 : vector<1x256x128xf32> to vector<256x128xf32>
      %cst_197 = arith.constant dense<0.000000e+00> : vector<16x128xf32>
      %612 = tpu.matmul %609, %611, %cst_197 {dimension_numbers = #tpu.dot_dimension_numbers<[1], [0], [0], [1], [0, 0, 1, 1], [], []>} : vector<16x256xf32>, vector<256x128xf32>, vector<16x128xf32> -> vector<16x128xf32>
      %613 = vector.shape_cast %603 : vector<2x8x256xf32> to vector<16x256xf32>
      %c1_198 = arith.constant 1 : index
      %c0_199 = arith.constant 0 : index
      %c0_200 = arith.constant 0 : index
      %614 = vector.load %arg11[%c1_198, %c0_199, %c0_200] : memref<3x256x128xf32, #tpu.memory_space<vmem>>, vector<1x256x128xf32>
      %615 = vector.shape_cast %614 : vector<1x256x128xf32> to vector<256x128xf32>
      %cst_201 = arith.constant dense<0.000000e+00> : vector<16x128xf32>
      %616 = tpu.matmul %613, %615, %cst_201 {dimension_numbers = #tpu.dot_dimension_numbers<[1], [0], [0], [1], [0, 0, 1, 1], [], []>} : vector<16x256xf32>, vector<256x128xf32>, vector<16x128xf32> -> vector<16x128xf32>
      %617 = arith.addf %612, %616 : vector<16x128xf32>
      %618 = vector.shape_cast %608 : vector<2x8x256xf32> to vector<16x256xf32>
      %c2_202 = arith.constant 2 : index
      %c0_203 = arith.constant 0 : index
      %c0_204 = arith.constant 0 : index
      %619 = vector.load %arg11[%c2_202, %c0_203, %c0_204] : memref<3x256x128xf32, #tpu.memory_space<vmem>>, vector<1x256x128xf32>
      %620 = vector.shape_cast %619 : vector<1x256x128xf32> to vector<256x128xf32>
      %cst_205 = arith.constant dense<0.000000e+00> : vector<16x128xf32>
      %621 = tpu.matmul %618, %620, %cst_205 {dimension_numbers = #tpu.dot_dimension_numbers<[1], [0], [0], [1], [0, 0, 1, 1], [], []>} : vector<16x256xf32>, vector<256x128xf32>, vector<16x128xf32> -> vector<16x128xf32>
      %622 = arith.addf %617, %621 : vector<16x128xf32>
      %623 = vector.shape_cast %622 : vector<16x128xf32> to vector<2x8x128xf32>
      %c0_206 = arith.constant 0 : index
      %c0_207 = arith.constant 0 : index
      %624 = vector.load %arg12[%c0_206, %c0_207] : memref<1x128xf32, #tpu.memory_space<vmem>>, vector<1x128xf32>
      %625 = vector.shape_cast %624 : vector<1x128xf32> to vector<1x1x128xf32>
      %626 = vector.broadcast %625 : vector<1x1x128xf32> to vector<2x8x128xf32>
      %627 = arith.addf %623, %626 : vector<2x8x128xf32>
      %cst_208 = arith.constant dense<0.000000e+00> : vector<128xf32>
      %628 = vector.multi_reduction <add>, %627, %cst_208 [0, 1] : vector<2x8x128xf32> to vector<128xf32>
      %629 = vector.shape_cast %628 : vector<128xf32> to vector<1x1x128xf32>
      %630 = arith.mulf %627, %627 : vector<2x8x128xf32>
      %cst_209 = arith.constant dense<0.000000e+00> : vector<128xf32>
      %631 = vector.multi_reduction <add>, %630, %cst_209 [0, 1] : vector<2x8x128xf32> to vector<128xf32>
      %632 = vector.shape_cast %631 : vector<128xf32> to vector<1x1x128xf32>
      %cst_210 = arith.constant 6.250000e-02 : f32
      %633 = vector.broadcast %cst_210 : f32 to vector<1x1x128xf32>
      %634 = arith.mulf %629, %633 : vector<1x1x128xf32>
      %cst_211 = arith.constant 6.250000e-02 : f32
      %635 = vector.broadcast %cst_211 : f32 to vector<1x1x128xf32>
      %636 = arith.mulf %632, %635 : vector<1x1x128xf32>
      %637 = arith.mulf %634, %634 : vector<1x1x128xf32>
      %638 = arith.subf %636, %637 : vector<1x1x128xf32>
      %639 = vector.broadcast %634 : vector<1x1x128xf32> to vector<2x8x128xf32>
      %640 = arith.subf %627, %639 : vector<2x8x128xf32>
      %cst_212 = arith.constant 9.99999974E-6 : f32
      %641 = vector.broadcast %cst_212 : f32 to vector<1x1x128xf32>
      %642 = arith.addf %638, %641 : vector<1x1x128xf32>
      %643 = math.rsqrt %642 : vector<1x1x128xf32>
      %644 = vector.broadcast %643 : vector<1x1x128xf32> to vector<2x8x128xf32>
      %645 = arith.mulf %640, %644 : vector<2x8x128xf32>
      %c0_213 = arith.constant 0 : index
      %c0_214 = arith.constant 0 : index
      %646 = vector.load %arg13[%c0_213, %c0_214] : memref<1x128xf32, #tpu.memory_space<vmem>>, vector<1x128xf32>
      %647 = vector.shape_cast %646 : vector<1x128xf32> to vector<1x1x128xf32>
      %648 = vector.broadcast %647 : vector<1x1x128xf32> to vector<2x8x128xf32>
      %649 = arith.mulf %645, %648 : vector<2x8x128xf32>
      %c0_215 = arith.constant 0 : index
      %c0_216 = arith.constant 0 : index
      %650 = vector.load %arg14[%c0_215, %c0_216] : memref<1x128xf32, #tpu.memory_space<vmem>>, vector<1x128xf32>
      %651 = vector.shape_cast %650 : vector<1x128xf32> to vector<1x1x128xf32>
      %652 = vector.broadcast %651 : vector<1x1x128xf32> to vector<2x8x128xf32>
      %653 = arith.addf %649, %652 : vector<2x8x128xf32>
      %cst_217 = arith.constant 0.000000e+00 : f32
      %654 = vector.broadcast %cst_217 : f32 to vector<2x8x128xf32>
      %655 = arith.cmpf ogt, %653, %654 : vector<2x8x128xf32>
      %cst_218 = arith.constant 2.000000e-01 : f32
      %656 = vector.broadcast %cst_218 : f32 to vector<2x8x128xf32>
      %657 = arith.mulf %656, %653 : vector<2x8x128xf32>
      %658 = arith.select %655, %653, %657 : vector<2x8x128xi1>, vector<2x8x128xf32>
      %c0_219 = arith.constant 0 : index
      %c0_220 = arith.constant 0 : index
      %659 = vector.load %arg15[%c0_219, %c0_220] : memref<1x128xf32, #tpu.memory_space<vmem>>, vector<1x128xf32>
      %660 = vector.shape_cast %659 : vector<1x128xf32> to vector<1x1x128xf32>
      %661 = vector.broadcast %660 : vector<1x1x128xf32> to vector<2x8x128xf32>
      %662 = arith.mulf %658, %661 : vector<2x8x128xf32>
      %cst_221 = arith.constant dense<0.000000e+00> : vector<2x8xf32>
      %663 = vector.multi_reduction <add>, %662, %cst_221 [2] : vector<2x8x128xf32> to vector<2x8xf32>
      %c0_222 = arith.constant 0 : index
      %c0_223 = arith.constant 0 : index
      %664 = vector.load %arg16[%c0_222, %c0_223] : memref<1x1xf32, #tpu.memory_space<vmem>>, vector<1x1xf32>
      %665 = vector.broadcast %664 : vector<1x1xf32> to vector<2x8xf32>
      %666 = arith.addf %663, %665 : vector<2x8xf32>
      %667 = arith.negf %666 : vector<2x8xf32>
      %668 = math.exp %667 : vector<2x8xf32>
      %cst_224 = arith.constant 1.000000e+00 : f32
      %669 = vector.broadcast %cst_224 : f32 to vector<2x8xf32>
      %670 = arith.addf %669, %668 : vector<2x8xf32>
      %671 = arith.divf %669, %670 : vector<2x8xf32>
      %c0_225 = arith.constant 0 : index
      %c0_226 = arith.constant 0 : index
      %672 = vector.load %arg17[%c0_225, %c0_226] : memref<2x8xf32, #tpu.memory_space<vmem>>, vector<2x8xf32>
      tpu.vector_store %arg17[%c0_225, %c0_226], %671 {strides = array<i32>} : memref<2x8xf32, #tpu.memory_space<vmem>>, vector<2x8xf32>,
    } else {
    }
    return
  }
  func.func @transform_0(%arg0: i32) -> (i32, i32, i32) {
    %c0_i32 = arith.constant 0 : i32
    %c0_i32_0 = arith.constant 0 : i32
    %c0_i32_1 = arith.constant 0 : i32
    return %arg0, %c0_i32, %c0_i32_0 : i32, i32, i32
  }
  func.func @transform_1(%arg0: i32) -> (i32, i32) {
    %c0_i32 = arith.constant 0 : i32
    %c0_i32_0 = arith.constant 0 : i32
    %c0_i32_1 = arith.constant 0 : i32
    return %c0_i32, %c0_i32_0 : i32, i32
  }
  func.func @transform_2(%arg0: i32) -> (i32, i32) {
    %c0_i32 = arith.constant 0 : i32
    %c0_i32_0 = arith.constant 0 : i32
    %c0_i32_1 = arith.constant 0 : i32
    return %c0_i32, %c0_i32_0 : i32, i32
  }
  func.func @transform_3(%arg0: i32) -> (i32, i32) {
    %c0_i32 = arith.constant 0 : i32
    %c0_i32_0 = arith.constant 0 : i32
    %c0_i32_1 = arith.constant 0 : i32
    return %c0_i32, %c0_i32_0 : i32, i32
  }
  func.func @transform_4(%arg0: i32) -> (i32, i32) {
    %c0_i32 = arith.constant 0 : i32
    %c0_i32_0 = arith.constant 0 : i32
    %c0_i32_1 = arith.constant 0 : i32
    return %c0_i32, %c0_i32_0 : i32, i32
  }
  func.func @transform_5(%arg0: i32) -> (i32, i32) {
    %c0_i32 = arith.constant 0 : i32
    %c0_i32_0 = arith.constant 0 : i32
    %c0_i32_1 = arith.constant 0 : i32
    return %c0_i32, %c0_i32_0 : i32, i32
  }
  func.func @transform_6(%arg0: i32) -> (i32, i32, i32) {
    %c0_i32 = arith.constant 0 : i32
    %c0_i32_0 = arith.constant 0 : i32
    %c0_i32_1 = arith.constant 0 : i32
    %c0_i32_2 = arith.constant 0 : i32
    return %c0_i32, %c0_i32_0, %c0_i32_1 : i32, i32, i32
  }
  func.func @transform_7(%arg0: i32) -> (i32, i32) {
    %c0_i32 = arith.constant 0 : i32
    %c0_i32_0 = arith.constant 0 : i32
    %c0_i32_1 = arith.constant 0 : i32
    return %c0_i32, %c0_i32_0 : i32, i32
  }
  func.func @transform_8(%arg0: i32) -> (i32, i32) {
    %c0_i32 = arith.constant 0 : i32
    %c0_i32_0 = arith.constant 0 : i32
    %c0_i32_1 = arith.constant 0 : i32
    return %c0_i32, %c0_i32_0 : i32, i32
  }
  func.func @transform_9(%arg0: i32) -> (i32, i32) {
    %c0_i32 = arith.constant 0 : i32
    %c0_i32_0 = arith.constant 0 : i32
    %c0_i32_1 = arith.constant 0 : i32
    return %c0_i32, %c0_i32_0 : i32, i32
  }
  func.func @transform_10(%arg0: i32) -> (i32, i32, i32) {
    %c0_i32 = arith.constant 0 : i32
    %c0_i32_0 = arith.constant 0 : i32
    %c0_i32_1 = arith.constant 0 : i32
    %c0_i32_2 = arith.constant 0 : i32
    return %c0_i32, %c0_i32_0, %c0_i32_1 : i32, i32, i32
  }
  func.func @transform_11(%arg0: i32) -> (i32, i32) {
    %c0_i32 = arith.constant 0 : i32
    %c0_i32_0 = arith.constant 0 : i32
    %c0_i32_1 = arith.constant 0 : i32
    return %c0_i32, %c0_i32_0 : i32, i32
  }
  func.func @transform_12(%arg0: i32) -> (i32, i32) {
    %c0_i32 = arith.constant 0 : i32
    %c0_i32_0 = arith.constant 0 : i32
    %c0_i32_1 = arith.constant 0 : i32
    return %c0_i32, %c0_i32_0 : i32, i32
  }
  func.func @transform_13(%arg0: i32) -> (i32, i32) {
    %c0_i32 = arith.constant 0 : i32
    %c0_i32_0 = arith.constant 0 : i32
    %c0_i32_1 = arith.constant 0 : i32
    return %c0_i32, %c0_i32_0 : i32, i32
  }
  func.func @transform_14(%arg0: i32) -> (i32, i32) {
    %c0_i32 = arith.constant 0 : i32
    %c0_i32_0 = arith.constant 0 : i32
    %c0_i32_1 = arith.constant 0 : i32
    return %c0_i32, %c0_i32_0 : i32, i32
  }
  func.func @transform_15(%arg0: i32) -> (i32, i32) {
    %c0_i32 = arith.constant 0 : i32
    %c0_i32_0 = arith.constant 0 : i32
    %c0_i32_1 = arith.constant 0 : i32
    return %c0_i32, %c0_i32_0 : i32, i32
  }
  func.func @transform_16(%arg0: i32) -> (i32, i32) {
    %c0_i32 = arith.constant 0 : i32
    %c0_i32_0 = arith.constant 0 : i32
    %c0_i32_1 = arith.constant 0 : i32
    return %c0_i32, %c0_i32_0 : i32, i32
  }
}

</mosaic_0001>

<llo_original>
// kernel: tpu_custom_call.1
$region0: #{tpu_custom_call.1}
  #allocation0 [shape = 'u32[]', space=smem, size = 0x4, offset = 0x4, fixed_abs, tag = 'smem constant byte address 0x4 - core index']
  #allocation1 [shape = 'u32[144,128]{1,0:T(1,128)}', space=vmem, size = 0x12000, scoped, tag = 'internal scratch']
  #allocation2 [shape = 'f32[8,2,512]{2,1,0:T(2,128)}', space=vmem, size = 0x8000, scoped, tag = 'scratch operand']
  #allocation3 [shape = 'f32[2,128]{1,0:T(2,128)}', space=vmem, size = 0x400, scoped, tag = 'scratch operand']
  #allocation4 [shape = 'f32[2,128]{1,0:T(2,128)}', space=vmem, size = 0x400, scoped, tag = 'scratch operand']
  #allocation5 [shape = 'f32[2,128]{1,0:T(2,128)}', space=vmem, size = 0x400, scoped, tag = 'scratch operand']
  #allocation6 [shape = 'f32[2,128]{1,0:T(2,128)}', space=vmem, size = 0x400, scoped, tag = 'scratch operand']
  #allocation7 [shape = 'f32[2,8,128]{2,1,0:T(8,128)}', space=vmem, size = 0x2000, scoped, tag = 'scratch operand']
  #allocation8 [shape = 'f32[1,1]{1,0:T(1,128)S(1)}', space=vmem, size = 0x200, scoped, tag = 'scoped memory for tpu_custom_call.1']
  %s0 = inlined_call_operand.vmem [shape: f32[8,2,4], index: 0, kind: input, shape index: {}]
  %s1 = inlined_call_operand.vmem [shape: f32[4,512], index: 1, kind: input, shape index: {}]
  %s2 = inlined_call_operand.vmem [shape: f32[1,512], index: 2, kind: input, shape index: {}]
  %s3 = inlined_call_operand.hbm [shape: f32[128,512], index: 3, kind: input, shape index: {}]
  %s4 = inlined_call_operand.hbm [shape: f32[256,512], index: 4, kind: input, shape index: {}]
  %s5 = inlined_call_operand.vmem [shape: f32[1,512], index: 5, kind: input, shape index: {}]
  %s6 = inlined_call_operand.hbm [shape: f32[3,128,256], index: 6, kind: input, shape index: {}]
  %s7 = inlined_call_operand.vmem [shape: f32[1,256], index: 7, kind: input, shape index: {}]
  %s8 = inlined_call_operand.vmem [shape: f32[1,256], index: 8, kind: input, shape index: {}]
  %s9 = inlined_call_operand.vmem [shape: f32[1,256], index: 9, kind: input, shape index: {}]
  %s10 = inlined_call_operand.hbm [shape: f32[3,256,128], index: 10, kind: input, shape index: {}]
  %s11 = inlined_call_operand.vmem [shape: f32[1,128], index: 11, kind: input, shape index: {}]
  %s12 = inlined_call_operand.vmem [shape: f32[1,128], index: 12, kind: input, shape index: {}]
  %s13 = inlined_call_operand.vmem [shape: f32[1,128], index: 13, kind: input, shape index: {}]
  %s14 = inlined_call_operand.vmem [shape: f32[1,128], index: 14, kind: input, shape index: {}]
  %s15 = inlined_call_operand.<no memory space> [shape: f32[1,1], index: 15, kind: input, shape index: {}]
  %s16 = inlined_call_operand.hbm [shape: f32[2,8], index: 16, kind: output, shape index: {}]
  %s17 = sld [smem:[#allocation0]]
  $region98: #{tpu_custom_call.1} parent=0
    _
  %s19 = ssub.s32 1, %s17
  %s20 = scalar_select 0, %s19, %s17
  %v21 = vstv %s15
  %22 = vst [vmem:[#allocation8] sm:$0x1] %v21
  $region1: #{tpu_custom_call.1} parent=0
    #allocation9 [shape = 'u8[262144]{0}', space=vmem, size = 0x40000, scoped, tag = 'input window, operand 3, single buffered']
    #allocation10 [shape = 's32[1]{0}', space=sflag, size = 0x4, scoped, tag = 'scoped memory for tpu_custom_call.1']
    #allocation11 [shape = 's32[1]{0}', space=sflag, size = 0x4, scoped, tag = 'scoped memory for tpu_custom_call.1']
    #allocation12 [shape = 'u8[524288]{0}', space=vmem, size = 0x80000, scoped, tag = 'input window, operand 4, single buffered']
    #allocation13 [shape = 's32[1]{0}', space=sflag, size = 0x4, scoped, tag = 'scoped memory for tpu_custom_call.1']
    #allocation14 [shape = 'u8[393216]{0}', space=vmem, size = 0x60000, scoped, tag = 'input window, operand 6, single buffered']
    #allocation15 [shape = 'u8[393216]{0}', space=vmem, size = 0x60000, scoped, tag = 'input window, operand 10, single buffered']
    #allocation16 [shape = 's32[1]{0}', space=sflag, size = 0x4, scoped, tag = 'scoped memory for tpu_custom_call.1']
    #allocation17 [shape = 'u8[1024]{0}', space=vmem, size = 0x400, scoped, tag = 'output window, operand 0, single buffered']
    %23 = vsyncpa [#allocation10], 0
    %24 = vsyncpa [#allocation13], 0
    %25 = vsyncpa [#allocation16], 0
    %26 = vsyncpa [#allocation11], 0
    // Predicated region
    $region2: #{tpu_custom_call.1} parent=1 // pred_check
      _
    $region3: #{tpu_custom_call.1} parent=1 // pred_check_branch
      %28 = sbr.rel (0) target = $region5
    $region4: #{tpu_custom_call.1} parent=1 // pred_region
      _
    $region5: #{tpu_custom_call.1} parent=1 // pred_fallthru
      _
    // Predicated region
    $region6: #{tpu_custom_call.1} parent=1 // pred_check
      _
    $region7: #{tpu_custom_call.1} parent=1 // pred_check_branch
      %30 = sbr.rel (0) target = $region9
    $region8: #{tpu_custom_call.1} parent=1 // pred_region
      _
    $region9: #{tpu_custom_call.1} parent=1 // pred_fallthru
      _
    // Predicated region
    $region10: #{tpu_custom_call.1} parent=1 // pred_check
      _
    $region11: #{tpu_custom_call.1} parent=1 // pred_check_branch
      %32 = sbr.rel (0) target = $region13
    $region12: #{tpu_custom_call.1} parent=1 // pred_region
      _
    $region13: #{tpu_custom_call.1} parent=1 // pred_fallthru
      _
    // Predicated region
    $region14: #{tpu_custom_call.1} parent=1 // pred_check
      _
    $region15: #{tpu_custom_call.1} parent=1 // pred_check_branch
      %34 = sbr.rel (0) target = $region17
    $region16: #{tpu_custom_call.1} parent=1 // pred_region
      %s36 = ssub.s32 8192, 8192
      %37 = vsyncadd [#allocation10], %s36
      %s38 = sshll.u32 [#allocation9], 4
      %s39 = int_to_ptr.vmem [resolvable:$true] %s38
      %44 = dma.hbm_to_vmem [thread:$0]  %s3, 8192, %s39, [#allocation10], 512, 512, 32
    $region17: #{tpu_custom_call.1} parent=1 // pred_fallthru
      _
    // Predicated region
    $region18: #{tpu_custom_call.1} parent=1 // pred_check
      _
    $region19: #{tpu_custom_call.1} parent=1 // pred_check_branch
      %46 = sbr.rel (0) target = $region21
    $region20: #{tpu_custom_call.1} parent=1 // pred_region
      %s48 = ssub.s32 16384, 16384
      %49 = vsyncadd [#allocation13], %s48
      %s50 = sshll.u32 [#allocation12], 4
      %s51 = int_to_ptr.vmem [resolvable:$true] %s50
      %56 = dma.hbm_to_vmem [thread:$0]  %s4, 16384, %s51, [#allocation13], 512, 512, 32
    $region21: #{tpu_custom_call.1} parent=1 // pred_fallthru
      _
    // Predicated region
    $region22: #{tpu_custom_call.1} parent=1 // pred_check
      _
    $region23: #{tpu_custom_call.1} parent=1 // pred_check_branch
      %58 = sbr.rel (0) target = $region25
    $region24: #{tpu_custom_call.1} parent=1 // pred_region
      _
    $region25: #{tpu_custom_call.1} parent=1 // pred_fallthru
      _
    // Predicated region
    $region26: #{tpu_custom_call.1} parent=1 // pred_check
      _
    $region27: #{tpu_custom_call.1} parent=1 // pred_check_branch
      %60 = sbr.rel (0) target = $region29
    $region28: #{tpu_custom_call.1} parent=1 // pred_region
      %s62 = ssub.s32 12288, 12288
      %63 = vsyncadd [#allocation13], %s62
      %s64 = sshll.u32 [#allocation14], 4
      %s65 = int_to_ptr.vmem [resolvable:$true] %s64
      %70 = dma.hbm_to_vmem [thread:$0]  %s6, 12288, %s65, [#allocation13], 256, 256, 16
    $region29: #{tpu_custom_call.1} parent=1 // pred_fallthru
      _
    // Predicated region
    $region30: #{tpu_custom_call.1} parent=1 // pred_check
      _
    $region31: #{tpu_custom_call.1} parent=1 // pred_check_branch
      %72 = sbr.rel (0) target = $region33
    $region32: #{tpu_custom_call.1} parent=1 // pred_region
      _
    $region33: #{tpu_custom_call.1} parent=1 // pred_fallthru
      _
    // Predicated region
    $region34: #{tpu_custom_call.1} parent=1 // pred_check
      _
    $region35: #{tpu_custom_call.1} parent=1 // pred_check_branch
      %74 = sbr.rel (0) target = $region37
    $region36: #{tpu_custom_call.1} parent=1 // pred_region
      _
    $region37: #{tpu_custom_call.1} parent=1 // pred_fallthru
      _
    // Predicated region
    $region38: #{tpu_custom_call.1} parent=1 // pred_check
      _
    $region39: #{tpu_custom_call.1} parent=1 // pred_check_branch
      %76 = sbr.rel (0) target = $region41
    $region40: #{tpu_custom_call.1} parent=1 // pred_region
      _
    $region41: #{tpu_custom_call.1} parent=1 // pred_fallthru
      _
    // Predicated region
    $region42: #{tpu_custom_call.1} parent=1 // pred_check
      _
    $region43: #{tpu_custom_call.1} parent=1 // pred_check_branch
      %78 = sbr.rel (0) target = $region45
    $region44: #{tpu_custom_call.1} parent=1 // pred_region
      %s80 = ssub.s32 12288, 12288
      %81 = vsyncadd [#allocation16], %s80
      %s82 = sshll.u32 [#allocation15], 4
      %s83 = int_to_ptr.vmem [resolvable:$true] %s82
      %88 = dma.hbm_to_vmem [thread:$0]  %s10, 12288, %s83, [#allocation16], 128, 128, 8
    $region45: #{tpu_custom_call.1} parent=1 // pred_fallthru
      _
    // Predicated region
    $region46: #{tpu_custom_call.1} parent=1 // pred_check
      _
    $region47: #{tpu_custom_call.1} parent=1 // pred_check_branch
      %90 = sbr.rel (0) target = $region49
    $region48: #{tpu_custom_call.1} parent=1 // pred_region
      _
    $region49: #{tpu_custom_call.1} parent=1 // pred_fallthru
      _
    // Predicated region
    $region50: #{tpu_custom_call.1} parent=1 // pred_check
      _
    $region51: #{tpu_custom_call.1} parent=1 // pred_check_branch
      %92 = sbr.rel (0) target = $region53
    $region52: #{tpu_custom_call.1} parent=1 // pred_region
      _
    $region53: #{tpu_custom_call.1} parent=1 // pred_fallthru
      _
    // Predicated region
    $region54: #{tpu_custom_call.1} parent=1 // pred_check
      _
    $region55: #{tpu_custom_call.1} parent=1 // pred_check_branch
      %94 = sbr.rel (0) target = $region57
    $region56: #{tpu_custom_call.1} parent=1 // pred_region
      _
    $region57: #{tpu_custom_call.1} parent=1 // pred_fallthru
      _
    // Predicated region
    $region58: #{tpu_custom_call.1} parent=1 // pred_check
      _
    $region59: #{tpu_custom_call.1} parent=1 // pred_check_branch
      %96 = sbr.rel (0) target = $region61
    $region60: #{tpu_custom_call.1} parent=1 // pred_region
      _
    $region61: #{tpu_custom_call.1} parent=1 // pred_fallthru
      _
    // Predicated region
    $region62: #{tpu_custom_call.1} parent=1 // pred_check
      _
    $region63: #{tpu_custom_call.1} parent=1 // pred_check_branch
      %98 = sbr.rel (0) target = $region65
    $region64: #{tpu_custom_call.1} parent=1 // pred_region
      _
    $region65: #{tpu_custom_call.1} parent=1 // pred_fallthru
      _
    // Predicated region
    $region66: #{tpu_custom_call.1} parent=1 // pred_check
      _
    $region67: #{tpu_custom_call.1} parent=1 // pred_check_branch
      %100 = sbr.rel (0) target = $region69
    $region68: #{tpu_custom_call.1} parent=1 // pred_region
      %101 = dma.done [#allocation10], 8192
    $region69: #{tpu_custom_call.1} parent=1 // pred_fallthru
      _
    // Predicated region
    $region70: #{tpu_custom_call.1} parent=1 // pred_check
      _
    $region71: #{tpu_custom_call.1} parent=1 // pred_check_branch
      %103 = sbr.rel (0) target = $region73
    $region72: #{tpu_custom_call.1} parent=1 // pred_region
      %104 = dma.done [#allocation13], 16384
    $region73: #{tpu_custom_call.1} parent=1 // pred_fallthru
      _
    // Predicated region
    $region74: #{tpu_custom_call.1} parent=1 // pred_check
      _
    $region75: #{tpu_custom_call.1} parent=1 // pred_check_branch
      %106 = sbr.rel (0) target = $region77
    $region76: #{tpu_custom_call.1} parent=1 // pred_region
      %107 = dma.done [#allocation13], 12288
    $region77: #{tpu_custom_call.1} parent=1 // pred_fallthru
      _
    // Predicated region
    $region78: #{tpu_custom_call.1} parent=1 // pred_check
      _
    $region79: #{tpu_custom_call.1} parent=1 // pred_check_branch
      %109 = sbr.rel (0) target = $region81
    $region80: #{tpu_custom_call.1} parent=1 // pred_region
      %110 = dma.done [#allocation16], 12288
    $region81: #{tpu_custom_call.1} parent=1 // pred_fallthru
      _
    %p111 = scmp.eq.s32.totalorder 0, 0
    // Predicated region
    $region82: #{tpu_custom_call.1} parent=1 // pred_check
      %p112 = pneg %p111
    $region83: #{tpu_custom_call.1} parent=1 // pred_check_branch
      %114 = sbr.rel (%p112) target = $region85
    $region84: #{tpu_custom_call.1} parent=1 // pred_region
      %115 = vst [vmem:[#allocation3] sm:$0x3] 0.0
      %116 = vst [vmem:[#allocation4] sm:$0x3] 0.0
      %117 = vst [vmem:[#allocation5] sm:$0x3] 0.0
      %118 = vst [vmem:[#allocation6] sm:$0x3] 0.0
    $region85: #{tpu_custom_call.1} parent=1 // pred_fallthru
      _
    %v119 = vld [vmem:[%s0] sm:$0x3]
    %v120 = vld [vmem:[%s0 + $0x2] sm:$0x3]
    %v121 = vld [vmem:[%s0 + $0x4] sm:$0x3]
    %v122 = vld [vmem:[%s0 + $0x6] sm:$0x3]
    %v123 = vld [vmem:[%s0 + $0x8] sm:$0x3]
    %v124 = vld [vmem:[%s0 + $0xa] sm:$0x3]
    %v125 = vld [vmem:[%s0 + $0xc] sm:$0x3]
    %v126 = vld [vmem:[%s0 + $0xe] sm:$0x3]
    %v127 = vld [vmem:[%s1] ss:$4 sm:$0xf]
    %129 = vset.pattern.permute.xlu0 0
    %130 = vperm.xlu0 %129, %v119
    %v131 = vpop.permute.xlu0 %130
    %134 = vset.pattern.permute.xlu0 0
    %135 = vperm.xlu0 %134, %v120
    %v136 = vpop.permute.xlu0 %135
    %139 = vset.pattern.permute.xlu0 0
    %140 = vperm.xlu0 %139, %v121
    %v141 = vpop.permute.xlu0 %140
    %144 = vset.pattern.permute.xlu0 0
    %145 = vperm.xlu0 %144, %v122
    %v146 = vpop.permute.xlu0 %145
    %149 = vset.pattern.permute.xlu0 0
    %150 = vperm.xlu0 %149, %v123
    %v151 = vpop.permute.xlu0 %150
    %154 = vset.pattern.permute.xlu0 0
    %155 = vperm.xlu0 %154, %v124
    %v156 = vpop.permute.xlu0 %155
    %159 = vset.pattern.permute.xlu0 0
    %160 = vperm.xlu0 %159, %v125
    %v161 = vpop.permute.xlu0 %160
    %164 = vset.pattern.permute.xlu0 0
    %165 = vperm.xlu0 %164, %v126
    %v166 = vpop.permute.xlu0 %165
    %v169 = vlaneseq
    %v170 = vshrl.u32 %v169, 7
    %v171 = vsub.s32 0, %v170
    %v172 = vrot.slane %v127, %v171
    %v173 = vlaneseq
    %v174 = vshrl.u32 %v173, 7
    %v175 = vsub.s32 1, %v174
    %v176 = vrot.slane %v127, %v175
    %v177 = vlaneseq
    %v178 = vshrl.u32 %v177, 7
    %v179 = vsub.s32 2, %v178
    %v180 = vrot.slane %v127, %v179
    %v181 = vlaneseq
    %v182 = vshrl.u32 %v181, 7
    %v183 = vsub.s32 3, %v182
    %v184 = vrot.slane %v127, %v183
    %v189 = vmul.f32 %v131, %v172
    %v190 = vmul.f32 %v131, %v176
    %v191 = vmul.f32 %v131, %v180
    %v192 = vmul.f32 %v131, %v184
    %v193 = vmul.f32 %v136, %v172
    %v194 = vmul.f32 %v136, %v176
    %v195 = vmul.f32 %v136, %v180
    %v196 = vmul.f32 %v136, %v184
    %v197 = vmul.f32 %v141, %v172
    %v198 = vmul.f32 %v141, %v176
    %v199 = vmul.f32 %v141, %v180
    %v200 = vmul.f32 %v141, %v184
    %v201 = vmul.f32 %v146, %v172
    %v202 = vmul.f32 %v146, %v176
    %v203 = vmul.f32 %v146, %v180
    %v204 = vmul.f32 %v146, %v184
    %v205 = vmul.f32 %v151, %v172
    %v206 = vmul.f32 %v151, %v176
    %v207 = vmul.f32 %v151, %v180
    %v208 = vmul.f32 %v151, %v184
    %v209 = vmul.f32 %v156, %v172
    %v210 = vmul.f32 %v156, %v176
    %v211 = vmul.f32 %v156, %v180
    %v212 = vmul.f32 %v156, %v184
    %v213 = vmul.f32 %v161, %v172
    %v214 = vmul.f32 %v161, %v176
    %v215 = vmul.f32 %v161, %v180
    %v216 = vmul.f32 %v161, %v184
    %v217 = vmul.f32 %v166, %v172
    %v218 = vmul.f32 %v166, %v176
    %v219 = vmul.f32 %v166, %v180
    %v220 = vmul.f32 %v166, %v184
    %s221 = scalar_lea.vmem %s1, 1
    %v222 = vld [vmem:[%s221] ss:$4 sm:$0xf]
    %223 = vset.pattern.permute.xlu0 1
    %224 = vperm.xlu0 %223, %v119
    %v225 = vpop.permute.xlu0 %224
    %227 = vset.pattern.permute.xlu0 1
    %228 = vperm.xlu0 %227, %v120
    %v229 = vpop.permute.xlu0 %228
    %231 = vset.pattern.permute.xlu0 1
    %232 = vperm.xlu0 %231, %v121
    %v233 = vpop.permute.xlu0 %232
    %235 = vset.pattern.permute.xlu0 1
    %236 = vperm.xlu0 %235, %v122
    %v237 = vpop.permute.xlu0 %236
    %239 = vset.pattern.permute.xlu0 1
    %240 = vperm.xlu0 %239, %v123
    %v241 = vpop.permute.xlu0 %240
    %243 = vset.pattern.permute.xlu0 1
    %244 = vperm.xlu0 %243, %v124
    %v245 = vpop.permute.xlu0 %244
    %247 = vset.pattern.permute.xlu0 1
    %248 = vperm.xlu0 %247, %v125
    %v249 = vpop.permute.xlu0 %248
    %251 = vset.pattern.permute.xlu0 1
    %252 = vperm.xlu0 %251, %v126
    %v253 = vpop.permute.xlu0 %252
    %v256 = vlaneseq
    %v257 = vshrl.u32 %v256, 7
    %v258 = vsub.s32 0, %v257
    %v259 = vrot.slane %v222, %v258
    %v260 = vlaneseq
    %v261 = vshrl.u32 %v260, 7
    %v262 = vsub.s32 1, %v261
    %v263 = vrot.slane %v222, %v262
    %v264 = vlaneseq
    %v265 = vshrl.u32 %v264, 7
    %v266 = vsub.s32 2, %v265
    %v267 = vrot.slane %v222, %v266
    %v268 = vlaneseq
    %v269 = vshrl.u32 %v268, 7
    %v270 = vsub.s32 3, %v269
    %v271 = vrot.slane %v222, %v270
    %v276 = vmul.f32 %v225, %v259
    %v277 = vmul.f32 %v225, %v263
    %v278 = vmul.f32 %v225, %v267
    %v279 = vmul.f32 %v225, %v271
    %v280 = vmul.f32 %v229, %v259
    %v281 = vmul.f32 %v229, %v263
    %v282 = vmul.f32 %v229, %v267
    %v283 = vmul.f32 %v229, %v271
    %v284 = vmul.f32 %v233, %v259
    %v285 = vmul.f32 %v233, %v263
    %v286 = vmul.f32 %v233, %v267
    %v287 = vmul.f32 %v233, %v271
    %v288 = vmul.f32 %v237, %v259
    %v289 = vmul.f32 %v237, %v263
    %v290 = vmul.f32 %v237, %v267
    %v291 = vmul.f32 %v237, %v271
    %v292 = vmul.f32 %v241, %v259
    %v293 = vmul.f32 %v241, %v263
    %v294 = vmul.f32 %v241, %v267
    %v295 = vmul.f32 %v241, %v271
    %v296 = vmul.f32 %v245, %v259
    %v297 = vmul.f32 %v245, %v263
    %v298 = vmul.f32 %v245, %v267
    %v299 = vmul.f32 %v245, %v271
    %v300 = vmul.f32 %v249, %v259
    %v301 = vmul.f32 %v249, %v263
    %v302 = vmul.f32 %v249, %v267
    %v303 = vmul.f32 %v249, %v271
    %v304 = vmul.f32 %v253, %v259
    %v305 = vmul.f32 %v253, %v263
    %v306 = vmul.f32 %v253, %v267
    %v307 = vmul.f32 %v253, %v271
    %v308 = vadd.f32 %v189, %v276
    %v309 = vadd.f32 %v190, %v277
    %v310 = vadd.f32 %v191, %v278
    %v311 = vadd.f32 %v192, %v279
    %v312 = vadd.f32 %v193, %v280
    %v313 = vadd.f32 %v194, %v281
    %v314 = vadd.f32 %v195, %v282
    %v315 = vadd.f32 %v196, %v283
    %v316 = vadd.f32 %v197, %v284
    %v317 = vadd.f32 %v198, %v285
    %v318 = vadd.f32 %v199, %v286
    %v319 = vadd.f32 %v200, %v287
    %v320 = vadd.f32 %v201, %v288
    %v321 = vadd.f32 %v202, %v289
    %v322 = vadd.f32 %v203, %v290
    %v323 = vadd.f32 %v204, %v291
    %v324 = vadd.f32 %v205, %v292
    %v325 = vadd.f32 %v206, %v293
    %v326 = vadd.f32 %v207, %v294
    %v327 = vadd.f32 %v208, %v295
    %v328 = vadd.f32 %v209, %v296
    %v329 = vadd.f32 %v210, %v297
    %v330 = vadd.f32 %v211, %v298
    %v331 = vadd.f32 %v212, %v299
    %v332 = vadd.f32 %v213, %v300
    %v333 = vadd.f32 %v214, %v301
    %v334 = vadd.f32 %v215, %v302
    %v335 = vadd.f32 %v216, %v303
    %v336 = vadd.f32 %v217, %v304
    %v337 = vadd.f32 %v218, %v305
    %v338 = vadd.f32 %v219, %v306
    %v339 = vadd.f32 %v220, %v307
    %s340 = scalar_lea.vmem %s1, 2
    %v341 = vld [vmem:[%s340] ss:$4 sm:$0xf]
    %342 = vset.pattern.permute.xlu0 2
    %343 = vperm.xlu0 %342, %v119
    %v344 = vpop.permute.xlu0 %343
    %346 = vset.pattern.permute.xlu0 2
    %347 = vperm.xlu0 %346, %v120
    %v348 = vpop.permute.xlu0 %347
    %350 = vset.pattern.permute.xlu0 2
    %351 = vperm.xlu0 %350, %v121
    %v352 = vpop.permute.xlu0 %351
    %354 = vset.pattern.permute.xlu0 2
    %355 = vperm.xlu0 %354, %v122
    %v356 = vpop.permute.xlu0 %355
    %358 = vset.pattern.permute.xlu0 2
    %359 = vperm.xlu0 %358, %v123
    %v360 = vpop.permute.xlu0 %359
    %362 = vset.pattern.permute.xlu0 2
    %363 = vperm.xlu0 %362, %v124
    %v364 = vpop.permute.xlu0 %363
    %366 = vset.pattern.permute.xlu0 2
    %367 = vperm.xlu0 %366, %v125
    %v368 = vpop.permute.xlu0 %367
    %370 = vset.pattern.permute.xlu0 2
    %371 = vperm.xlu0 %370, %v126
    %v372 = vpop.permute.xlu0 %371
    %v375 = vlaneseq
    %v376 = vshrl.u32 %v375, 7
    %v377 = vsub.s32 0, %v376
    %v378 = vrot.slane %v341, %v377
    %v379 = vlaneseq
    %v380 = vshrl.u32 %v379, 7
    %v381 = vsub.s32 1, %v380
    %v382 = vrot.slane %v341, %v381
    %v383 = vlaneseq
    %v384 = vshrl.u32 %v383, 7
    %v385 = vsub.s32 2, %v384
    %v386 = vrot.slane %v341, %v385
    %v387 = vlaneseq
    %v388 = vshrl.u32 %v387, 7
    %v389 = vsub.s32 3, %v388
    %v390 = vrot.slane %v341, %v389
    %v395 = vmul.f32 %v344, %v378
    %v396 = vmul.f32 %v344, %v382
    %v397 = vmul.f32 %v344, %v386
    %v398 = vmul.f32 %v344, %v390
    %v399 = vmul.f32 %v348, %v378
    %v400 = vmul.f32 %v348, %v382
    %v401 = vmul.f32 %v348, %v386
    %v402 = vmul.f32 %v348, %v390
    %v403 = vmul.f32 %v352, %v378
    %v404 = vmul.f32 %v352, %v382
    %v405 = vmul.f32 %v352, %v386
    %v406 = vmul.f32 %v352, %v390
    %v407 = vmul.f32 %v356, %v378
    %v408 = vmul.f32 %v356, %v382
    %v409 = vmul.f32 %v356, %v386
    %v410 = vmul.f32 %v356, %v390
    %v411 = vmul.f32 %v360, %v378
    %v412 = vmul.f32 %v360, %v382
    %v413 = vmul.f32 %v360, %v386
    %v414 = vmul.f32 %v360, %v390
    %v415 = vmul.f32 %v364, %v378
    %v416 = vmul.f32 %v364, %v382
    %v417 = vmul.f32 %v364, %v386
    %v418 = vmul.f32 %v364, %v390
    %v419 = vmul.f32 %v368, %v378
    %v420 = vmul.f32 %v368, %v382
    %v421 = vmul.f32 %v368, %v386
    %v422 = vmul.f32 %v368, %v390
    %v423 = vmul.f32 %v372, %v378
    %v424 = vmul.f32 %v372, %v382
    %v425 = vmul.f32 %v372, %v386
    %v426 = vmul.f32 %v372, %v390
    %v427 = vadd.f32 %v308, %v395
    %v428 = vadd.f32 %v309, %v396
    %v429 = vadd.f32 %v310, %v397
    %v430 = vadd.f32 %v311, %v398
    %v431 = vadd.f32 %v312, %v399
    %v432 = vadd.f32 %v313, %v400
    %v433 = vadd.f32 %v314, %v401
    %v434 = vadd.f32 %v315, %v402
    %v435 = vadd.f32 %v316, %v403
    %v436 = vadd.f32 %v317, %v404
    %v437 = vadd.f32 %v318, %v405
    %v438 = vadd.f32 %v319, %v406
    %v439 = vadd.f32 %v320, %v407
    %v440 = vadd.f32 %v321, %v408
    %v441 = vadd.f32 %v322, %v409
    %v442 = vadd.f32 %v323, %v410
    %v443 = vadd.f32 %v324, %v411
    %v444 = vadd.f32 %v325, %v412
    %v445 = vadd.f32 %v326, %v413
    %v446 = vadd.f32 %v327, %v414
    %v447 = vadd.f32 %v328, %v415
    %v448 = vadd.f32 %v329, %v416
    %v449 = vadd.f32 %v330, %v417
    %v450 = vadd.f32 %v331, %v418
    %v451 = vadd.f32 %v332, %v419
    %v452 = vadd.f32 %v333, %v420
    %v453 = vadd.f32 %v334, %v421
    %v454 = vadd.f32 %v335, %v422
    %v455 = vadd.f32 %v336, %v423
    %v456 = vadd.f32 %v337, %v424
    %v457 = vadd.f32 %v338, %v425
    %v458 = vadd.f32 %v339, %v426
    %s459 = scalar_lea.vmem %s1, 3
    %v460 = vld [vmem:[%s459] ss:$4 sm:$0xf]
    %461 = vset.pattern.permute.xlu0 3
    %462 = vperm.xlu0 %461, %v119
    %v463 = vpop.permute.xlu0 %462
    %465 = vset.pattern.permute.xlu0 3
    %466 = vperm.xlu0 %465, %v120
    %v467 = vpop.permute.xlu0 %466
    %469 = vset.pattern.permute.xlu0 3
    %470 = vperm.xlu0 %469, %v121
    %v471 = vpop.permute.xlu0 %470
    %473 = vset.pattern.permute.xlu0 3
    %474 = vperm.xlu0 %473, %v122
    %v475 = vpop.permute.xlu0 %474
    %477 = vset.pattern.permute.xlu0 3
    %478 = vperm.xlu0 %477, %v123
    %v479 = vpop.permute.xlu0 %478
    %481 = vset.pattern.permute.xlu0 3
    %482 = vperm.xlu0 %481, %v124
    %v483 = vpop.permute.xlu0 %482
    %485 = vset.pattern.permute.xlu0 3
    %486 = vperm.xlu0 %485, %v125
    %v487 = vpop.permute.xlu0 %486
    %489 = vset.pattern.permute.xlu0 3
    %490 = vperm.xlu0 %489, %v126
    %v491 = vpop.permute.xlu0 %490
    %v494 = vlaneseq
    %v495 = vshrl.u32 %v494, 7
    %v496 = vsub.s32 0, %v495
    %v497 = vrot.slane %v460, %v496
    %v498 = vlaneseq
    %v499 = vshrl.u32 %v498, 7
    %v500 = vsub.s32 1, %v499
    %v501 = vrot.slane %v460, %v500
    %v502 = vlaneseq
    %v503 = vshrl.u32 %v502, 7
    %v504 = vsub.s32 2, %v503
    %v505 = vrot.slane %v460, %v504
    %v506 = vlaneseq
    %v507 = vshrl.u32 %v506, 7
    %v508 = vsub.s32 3, %v507
    %v509 = vrot.slane %v460, %v508
    %v514 = vmul.f32 %v463, %v497
    %v515 = vmul.f32 %v463, %v501
    %v516 = vmul.f32 %v463, %v505
    %v517 = vmul.f32 %v463, %v509
    %v518 = vmul.f32 %v467, %v497
    %v519 = vmul.f32 %v467, %v501
    %v520 = vmul.f32 %v467, %v505
    %v521 = vmul.f32 %v467, %v509
    %v522 = vmul.f32 %v471, %v497
    %v523 = vmul.f32 %v471, %v501
    %v524 = vmul.f32 %v471, %v505
    %v525 = vmul.f32 %v471, %v509
    %v526 = vmul.f32 %v475, %v497
    %v527 = vmul.f32 %v475, %v501
    %v528 = vmul.f32 %v475, %v505
    %v529 = vmul.f32 %v475, %v509
    %v530 = vmul.f32 %v479, %v497
    %v531 = vmul.f32 %v479, %v501
    %v532 = vmul.f32 %v479, %v505
    %v533 = vmul.f32 %v479, %v509
    %v534 = vmul.f32 %v483, %v497
    %v535 = vmul.f32 %v483, %v501
    %v536 = vmul.f32 %v483, %v505
    %v537 = vmul.f32 %v483, %v509
    %v538 = vmul.f32 %v487, %v497
    %v539 = vmul.f32 %v487, %v501
    %v540 = vmul.f32 %v487, %v505
    %v541 = vmul.f32 %v487, %v509
    %v542 = vmul.f32 %v491, %v497
    %v543 = vmul.f32 %v491, %v501
    %v544 = vmul.f32 %v491, %v505
    %v545 = vmul.f32 %v491, %v509
    %v546 = vadd.f32 %v427, %v514
    %v547 = vadd.f32 %v428, %v515
    %v548 = vadd.f32 %v429, %v516
    %v549 = vadd.f32 %v430, %v517
    %v550 = vadd.f32 %v431, %v518
    %v551 = vadd.f32 %v432, %v519
    %v552 = vadd.f32 %v433, %v520
    %v553 = vadd.f32 %v434, %v521
    %v554 = vadd.f32 %v435, %v522
    %v555 = vadd.f32 %v436, %v523
    %v556 = vadd.f32 %v437, %v524
    %v557 = vadd.f32 %v438, %v525
    %v558 = vadd.f32 %v439, %v526
    %v559 = vadd.f32 %v440, %v527
    %v560 = vadd.f32 %v441, %v528
    %v561 = vadd.f32 %v442, %v529
    %v562 = vadd.f32 %v443, %v530
    %v563 = vadd.f32 %v444, %v531
    %v564 = vadd.f32 %v445, %v532
    %v565 = vadd.f32 %v446, %v533
    %v566 = vadd.f32 %v447, %v534
    %v567 = vadd.f32 %v448, %v535
    %v568 = vadd.f32 %v449, %v536
    %v569 = vadd.f32 %v450, %v537
    %v570 = vadd.f32 %v451, %v538
    %v571 = vadd.f32 %v452, %v539
    %v572 = vadd.f32 %v453, %v540
    %v573 = vadd.f32 %v454, %v541
    %v574 = vadd.f32 %v455, %v542
    %v575 = vadd.f32 %v456, %v543
    %v576 = vadd.f32 %v457, %v544
    %v577 = vadd.f32 %v458, %v545
    %v578 = vld [vmem:[%s2] sm:$0xf]
    %v580 = vlaneseq
    %v581 = vshrl.u32 %v580, 7
    %v582 = vsub.s32 0, %v581
    %v583 = vrot.slane %v578, %v582
    %v584 = vlaneseq
    %v585 = vshrl.u32 %v584, 7
    %v586 = vsub.s32 1, %v585
    %v587 = vrot.slane %v578, %v586
    %v588 = vlaneseq
    %v589 = vshrl.u32 %v588, 7
    %v590 = vsub.s32 2, %v589
    %v591 = vrot.slane %v578, %v590
    %v592 = vlaneseq
    %v593 = vshrl.u32 %v592, 7
    %v594 = vsub.s32 3, %v593
    %v595 = vrot.slane %v578, %v594
    %v600 = vadd.f32 %v546, %v583
    %v601 = vadd.f32 %v547, %v587
    %v602 = vadd.f32 %v548, %v591
    %v603 = vadd.f32 %v549, %v595
    %v604 = vadd.f32 %v550, %v583
    %v605 = vadd.f32 %v551, %v587
    %v606 = vadd.f32 %v552, %v591
    %v607 = vadd.f32 %v553, %v595
    %v608 = vadd.f32 %v554, %v583
    %v609 = vadd.f32 %v555, %v587
    %v610 = vadd.f32 %v556, %v591
    %v611 = vadd.f32 %v557, %v595
    %v612 = vadd.f32 %v558, %v583
    %v613 = vadd.f32 %v559, %v587
    %v614 = vadd.f32 %v560, %v591
    %v615 = vadd.f32 %v561, %v595
    %v616 = vadd.f32 %v562, %v583
    %v617 = vadd.f32 %v563, %v587
    %v618 = vadd.f32 %v564, %v591
    %v619 = vadd.f32 %v565, %v595
    %v620 = vadd.f32 %v566, %v583
    %v621 = vadd.f32 %v567, %v587
    %v622 = vadd.f32 %v568, %v591
    %v623 = vadd.f32 %v569, %v595
    %v624 = vadd.f32 %v570, %v583
    %v625 = vadd.f32 %v571, %v587
    %v626 = vadd.f32 %v572, %v591
    %v627 = vadd.f32 %v573, %v595
    %v628 = vadd.f32 %v574, %v583
    %v629 = vadd.f32 %v575, %v587
    %v630 = vadd.f32 %v576, %v591
    %v631 = vadd.f32 %v577, %v595
    %v664 = vcombine.low %v600, %v601
    %v665 = vcombine.low %v602, %v603
    %v667 = vunpack.c.l.s4 1983009808
    %v668 = vunpack.c.0.s8 %v667
    %v669 = vlaneseq
    %v670 = vshrl.u32 %v669, 7
    %v671 = vsub.s32 %v668, %v670
    %v672 = vrot.slane %v664, %v671
    %v674 = vunpack.c.l.s4 1983009808
    %v675 = vunpack.c.0.s8 %v674
    %v676 = vlaneseq
    %v677 = vshrl.u32 %v676, 7
    %v678 = vsub.s32 %v675, %v677
    %v679 = vrot.slane %v665, %v678
    %v680 = vcombine.low %v672, %v679
    %v681 = vcombine.low %v604, %v605
    %v682 = vcombine.low %v606, %v607
    %v684 = vunpack.c.l.s4 1983009808
    %v685 = vunpack.c.0.s8 %v684
    %v686 = vlaneseq
    %v687 = vshrl.u32 %v686, 7
    %v688 = vsub.s32 %v685, %v687
    %v689 = vrot.slane %v681, %v688
    %v691 = vunpack.c.l.s4 1983009808
    %v692 = vunpack.c.0.s8 %v691
    %v693 = vlaneseq
    %v694 = vshrl.u32 %v693, 7
    %v695 = vsub.s32 %v692, %v694
    %v696 = vrot.slane %v682, %v695
    %v697 = vcombine.low %v689, %v696
    %v698 = vcombine.low %v608, %v609
    %v699 = vcombine.low %v610, %v611
    %v701 = vunpack.c.l.s4 1983009808
    %v702 = vunpack.c.0.s8 %v701
    %v703 = vlaneseq
    %v704 = vshrl.u32 %v703, 7
    %v705 = vsub.s32 %v702, %v704
    %v706 = vrot.slane %v698, %v705
    %v708 = vunpack.c.l.s4 1983009808
    %v709 = vunpack.c.0.s8 %v708
    %v710 = vlaneseq
    %v711 = vshrl.u32 %v710, 7
    %v712 = vsub.s32 %v709, %v711
    %v713 = vrot.slane %v699, %v712
    %v714 = vcombine.low %v706, %v713
    %v715 = vcombine.low %v612, %v613
    %v716 = vcombine.low %v614, %v615
    %v718 = vunpack.c.l.s4 1983009808
    %v719 = vunpack.c.0.s8 %v718
    %v720 = vlaneseq
    %v721 = vshrl.u32 %v720, 7
    %v722 = vsub.s32 %v719, %v721
    %v723 = vrot.slane %v715, %v722
    %v725 = vunpack.c.l.s4 1983009808
    %v726 = vunpack.c.0.s8 %v725
    %v727 = vlaneseq
    %v728 = vshrl.u32 %v727, 7
    %v729 = vsub.s32 %v726, %v728
    %v730 = vrot.slane %v716, %v729
    %v731 = vcombine.low %v723, %v730
    %v732 = vcombine.low %v616, %v617
    %v733 = vcombine.low %v618, %v619
    %v735 = vunpack.c.l.s4 1983009808
    %v736 = vunpack.c.0.s8 %v735
    %v737 = vlaneseq
    %v738 = vshrl.u32 %v737, 7
    %v739 = vsub.s32 %v736, %v738
    %v740 = vrot.slane %v732, %v739
    %v742 = vunpack.c.l.s4 1983009808
    %v743 = vunpack.c.0.s8 %v742
    %v744 = vlaneseq
    %v745 = vshrl.u32 %v744, 7
    %v746 = vsub.s32 %v743, %v745
    %v747 = vrot.slane %v733, %v746
    %v748 = vcombine.low %v740, %v747
    %v749 = vcombine.low %v620, %v621
    %v750 = vcombine.low %v622, %v623
    %v752 = vunpack.c.l.s4 1983009808
    %v753 = vunpack.c.0.s8 %v752
    %v754 = vlaneseq
    %v755 = vshrl.u32 %v754, 7
    %v756 = vsub.s32 %v753, %v755
    %v757 = vrot.slane %v749, %v756
    %v759 = vunpack.c.l.s4 1983009808
    %v760 = vunpack.c.0.s8 %v759
    %v761 = vlaneseq
    %v762 = vshrl.u32 %v761, 7
    %v763 = vsub.s32 %v760, %v762
    %v764 = vrot.slane %v750, %v763
    %v765 = vcombine.low %v757, %v764
    %v766 = vcombine.low %v624, %v625
    %v767 = vcombine.low %v626, %v627
    %v769 = vunpack.c.l.s4 1983009808
    %v770 = vunpack.c.0.s8 %v769
    %v771 = vlaneseq
    %v772 = vshrl.u32 %v771, 7
    %v773 = vsub.s32 %v770, %v772
    %v774 = vrot.slane %v766, %v773
    %v776 = vunpack.c.l.s4 1983009808
    %v777 = vunpack.c.0.s8 %v776
    %v778 = vlaneseq
    %v779 = vshrl.u32 %v778, 7
    %v780 = vsub.s32 %v777, %v779
    %v781 = vrot.slane %v767, %v780
    %v782 = vcombine.low %v774, %v781
    %v783 = vcombine.low %v628, %v629
    %v784 = vcombine.low %v630, %v631
    %v786 = vunpack.c.l.s4 1983009808
    %v787 = vunpack.c.0.s8 %v786
    %v788 = vlaneseq
    %v789 = vshrl.u32 %v788, 7
    %v790 = vsub.s32 %v787, %v789
    %v791 = vrot.slane %v783, %v790
    %v793 = vunpack.c.l.s4 1983009808
    %v794 = vunpack.c.0.s8 %v793
    %v795 = vlaneseq
    %v796 = vshrl.u32 %v795, 7
    %v797 = vsub.s32 %v794, %v796
    %v798 = vrot.slane %v784, %v797
    %v799 = vcombine.low %v791, %v798
    %808 = vst [vmem:[#allocation2] sm:$0xff] %v680
    %809 = vst [vmem:[#allocation2 + $0x8] sm:$0xff] %v697
    %810 = vst [vmem:[#allocation2 + $0x10] sm:$0xff] %v714
    %811 = vst [vmem:[#allocation2 + $0x18] sm:$0xff] %v731
    %812 = vst [vmem:[#allocation2 + $0x20] sm:$0xff] %v748
    %813 = vst [vmem:[#allocation2 + $0x28] sm:$0xff] %v765
    %814 = vst [vmem:[#allocation2 + $0x30] sm:$0xff] %v782
    %815 = vst [vmem:[#allocation2 + $0x38] sm:$0xff] %v799
    %v816 = vld [vmem:[#allocation3] sm:$0x3]
    %v817 = vld [vmem:[#allocation4] sm:$0x3]
    %v818 = vld [vmem:[#allocation5] sm:$0x3]
    %v819 = vld [vmem:[#allocation6] sm:$0x3]
    %v820 = vld [vmem:[#allocation2] sm:$0xff]
    %v821 = vld [vmem:[#allocation9] sm:$0xff]
    %v822 = vld [vmem:[#allocation9 + $0x8] sm:$0xff]
    %v823 = vld [vmem:[#allocation9 + $0x10] sm:$0xff]
    %v824 = vld [vmem:[#allocation9 + $0x18] sm:$0xff]
    %v825 = vld [vmem:[#allocation9 + $0x20] sm:$0xff]
    %v826 = vld [vmem:[#allocation9 + $0x28] sm:$0xff]
    %v827 = vld [vmem:[#allocation9 + $0x30] sm:$0xff]
    %v828 = vld [vmem:[#allocation9 + $0x38] sm:$0xff]
    %v829 = vld [vmem:[#allocation9 + $0x40] sm:$0xff]
    %v830 = vld [vmem:[#allocation9 + $0x48] sm:$0xff]
    %v831 = vld [vmem:[#allocation9 + $0x50] sm:$0xff]
    %v832 = vld [vmem:[#allocation9 + $0x58] sm:$0xff]
    %v833 = vld [vmem:[#allocation9 + $0x60] sm:$0xff]
    %v834 = vld [vmem:[#allocation9 + $0x68] sm:$0xff]
    %v835 = vld [vmem:[#allocation9 + $0x70] sm:$0xff]
    %v836 = vld [vmem:[#allocation9 + $0x78] sm:$0xff]
    %v837 = vld [vmem:[#allocation9 + $0x80] sm:$0xff]
    %v838 = vld [vmem:[#allocation9 + $0x88] sm:$0xff]
    %v839 = vld [vmem:[#allocation9 + $0x90] sm:$0xff]
    %v840 = vld [vmem:[#allocation9 + $0x98] sm:$0xff]
    %v841 = vld [vmem:[#allocation9 + $0xa0] sm:$0xff]
    %v842 = vld [vmem:[#allocation9 + $0xa8] sm:$0xff]
    %v843 = vld [vmem:[#allocation9 + $0xb0] sm:$0xff]
    %v844 = vld [vmem:[#allocation9 + $0xb8] sm:$0xff]
    %v845 = vld [vmem:[#allocation9 + $0xc0] sm:$0xff]
    %v846 = vld [vmem:[#allocation9 + $0xc8] sm:$0xff]
    %v847 = vld [vmem:[#allocation9 + $0xd0] sm:$0xff]
    %v848 = vld [vmem:[#allocation9 + $0xd8] sm:$0xff]
    %v849 = vld [vmem:[#allocation9 + $0xe0] sm:$0xff]
    %v850 = vld [vmem:[#allocation9 + $0xe8] sm:$0xff]
    %v851 = vld [vmem:[#allocation9 + $0xf0] sm:$0xff]
    %v852 = vld [vmem:[#allocation9 + $0xf8] sm:$0xff]
    %v853 = vld [vmem:[#allocation9 + $0x100] sm:$0xff]
    %v854 = vld [vmem:[#allocation9 + $0x108] sm:$0xff]
    %v855 = vld [vmem:[#allocation9 + $0x110] sm:$0xff]
    %v856 = vld [vmem:[#allocation9 + $0x118] sm:$0xff]
    %v857 = vld [vmem:[#allocation9 + $0x120] sm:$0xff]
    %v858 = vld [vmem:[#allocation9 + $0x128] sm:$0xff]
    %v859 = vld [vmem:[#allocation9 + $0x130] sm:$0xff]
    %v860 = vld [vmem:[#allocation9 + $0x138] sm:$0xff]
    %v861 = vld [vmem:[#allocation9 + $0x140] sm:$0xff]
    %v862 = vld [vmem:[#allocation9 + $0x148] sm:$0xff]
    %v863 = vld [vmem:[#allocation9 + $0x150] sm:$0xff]
    %v864 = vld [vmem:[#allocation9 + $0x158] sm:$0xff]
    %v865 = vld [vmem:[#allocation9 + $0x160] sm:$0xff]
    %v866 = vld [vmem:[#allocation9 + $0x168] sm:$0xff]
    %v867 = vld [vmem:[#allocation9 + $0x170] sm:$0xff]
    %v868 = vld [vmem:[#allocation9 + $0x178] sm:$0xff]
    %v869 = vld [vmem:[#allocation9 + $0x180] sm:$0xff]
    %v870 = vld [vmem:[#allocation9 + $0x188] sm:$0xff]
    %v871 = vld [vmem:[#allocation9 + $0x190] sm:$0xff]
    %v872 = vld [vmem:[#allocation9 + $0x198] sm:$0xff]
    %v873 = vld [vmem:[#allocation9 + $0x1a0] sm:$0xff]
    %v874 = vld [vmem:[#allocation9 + $0x1a8] sm:$0xff]
    %v875 = vld [vmem:[#allocation9 + $0x1b0] sm:$0xff]
    %v876 = vld [vmem:[#allocation9 + $0x1b8] sm:$0xff]
    %v877 = vld [vmem:[#allocation9 + $0x1c0] sm:$0xff]
    %v878 = vld [vmem:[#allocation9 + $0x1c8] sm:$0xff]
    %v879 = vld [vmem:[#allocation9 + $0x1d0] sm:$0xff]
    %v880 = vld [vmem:[#allocation9 + $0x1d8] sm:$0xff]
    %v881 = vld [vmem:[#allocation9 + $0x1e0] sm:$0xff]
    %v882 = vld [vmem:[#allocation9 + $0x1e8] sm:$0xff]
    %v883 = vld [vmem:[#allocation9 + $0x1f0] sm:$0xff]
    %v884 = vld [vmem:[#allocation9 + $0x1f8] sm:$0xff]
    %885 = vmatprep.subr.mxu0 %v822
    %886 = vmatpush1.msra.mxu0 %v821
    %887 = vmatprep.subr.mxu0 %v826
    %888 = vmatpush1.msra.mxu0 %v825
    %889 = vmatprep.subr.mxu0 %v830
    %890 = vmatpush1.msra.mxu0 %v829
    %891 = vmatprep.subr.mxu0 %v834
    %892 = vmatpush1.msra.mxu0 %v833
    %893 = vmatprep.subr.mxu0 %v838
    %894 = vmatpush1.msra.mxu0 %v837
    %895 = vmatprep.subr.mxu0 %v842
    %896 = vmatpush1.msra.mxu0 %v841
    %897 = vmatprep.subr.mxu0 %v846
    %898 = vmatpush1.msra.mxu0 %v845
    %899 = vmatprep.subr.mxu0 %v850
    %900 = vmatpush1.msra.mxu0 %v849
    %901 = vmatprep.subr.mxu0 %v854
    %902 = vmatpush1.msra.mxu0 %v853
    %903 = vmatprep.subr.mxu0 %v858
    %904 = vmatpush1.msra.mxu0 %v857
    %905 = vmatprep.subr.mxu0 %v862
    %906 = vmatpush1.msra.mxu0 %v861
    %907 = vmatprep.subr.mxu0 %v866
    %908 = vmatpush1.msra.mxu0 %v865
    %909 = vmatprep.subr.mxu0 %v870
    %910 = vmatpush1.msra.mxu0 %v869
    %911 = vmatprep.subr.mxu0 %v874
    %912 = vmatpush1.msra.mxu0 %v873
    %913 = vmatprep.subr.mxu0 %v878
    %914 = vmatpush1.msra.mxu0 %v877
    %915 = vmatprep.subr.mxu0 %v882
    %916 = vmatpush1.msra.mxu0 %v881
    %917 = vmatprep.subr.mxu0 0.0
    %918 = vmatpush1.msra.mxu0 0.0
    %919 = vmatprep.subr.mxu0 0.0
    %920 = vmatpush1.msra.mxu0 0.0
    %921 = vmatprep.subr.mxu0 0.0
    %922 = vmatpush1.msra.mxu0 0.0
    %923 = vmatprep.subr.mxu0 0.0
    %924 = vmatpush1.msra.mxu0 0.0
    %925 = vmatprep.subr.mxu0 0.0
    %926 = vmatpush1.msra.mxu0 0.0
    %927 = vmatprep.subr.mxu0 0.0
    %928 = vmatpush1.msra.mxu0 0.0
    %929 = vmatprep.subr.mxu0 0.0
    %930 = vmatpush1.msra.mxu0 0.0
    %931 = vmatprep.subr.mxu0 0.0
    %932 = vmatpush1.msra.mxu0 0.0
    %933 = vmatprep.subr.mxu0 0.0
    %934 = vmatpush1.msra.mxu0 0.0
    %935 = vmatprep.subr.mxu0 0.0
    %936 = vmatpush1.msra.mxu0 0.0
    %937 = vmatprep.subr.mxu0 0.0
    %938 = vmatpush1.msra.mxu0 0.0
    %939 = vmatprep.subr.mxu0 0.0
    %940 = vmatpush1.msra.mxu0 0.0
    %941 = vmatprep.subr.mxu0 0.0
    %942 = vmatpush1.msra.mxu0 0.0
    %943 = vmatprep.subr.mxu0 0.0
    %944 = vmatpush1.msra.mxu0 0.0
    %945 = vmatprep.subr.mxu0 0.0
    %946 = vmatpush1.msra.mxu0 0.0
    %947 = vmatprep.subr.mxu0 0.0
    %948 = vmatpush1.msra.mxu0 0.0
    %949 = vmatprep.mubr.f32.mxu0 0.0
    %950 = vmatmul.mubr.f32.gmra.mrb[0].mxu0 %v816
    %v951 = vpop.f32.mrb[0].mxu0
    %v952 = vadd.f32 0.0, %v951
    %v953 = vpop.f32.mrb[0].mxu0
    %v954 = vadd.f32 0.0, %v953
    %955 = vdwg.mxu0
    %956 = vmatprep.subr.mxu0 %v824
    %957 = vmatpush1.msra.mxu0 %v823
    %958 = vmatprep.subr.mxu0 %v828
    %959 = vmatpush1.msra.mxu0 %v827
    %960 = vmatprep.subr.mxu0 %v832
    %961 = vmatpush1.msra.mxu0 %v831
    %962 = vmatprep.subr.mxu0 %v836
    %963 = vmatpush1.msra.mxu0 %v835
    %964 = vmatprep.subr.mxu0 %v840
    %965 = vmatpush1.msra.mxu0 %v839
    %966 = vmatprep.subr.mxu0 %v844
    %967 = vmatpush1.msra.mxu0 %v843
    %968 = vmatprep.subr.mxu0 %v848
    %969 = vmatpush1.msra.mxu0 %v847
    %970 = vmatprep.subr.mxu0 %v852
    %971 = vmatpush1.msra.mxu0 %v851
    %972 = vmatprep.subr.mxu0 %v856
    %973 = vmatpush1.msra.mxu0 %v855
    %974 = vmatprep.subr.mxu0 %v860
    %975 = vmatpush1.msra.mxu0 %v859
    %976 = vmatprep.subr.mxu0 %v864
    %977 = vmatpush1.msra.mxu0 %v863
    %978 = vmatprep.subr.mxu0 %v868
    %979 = vmatpush1.msra.mxu0 %v867
    %980 = vmatprep.subr.mxu0 %v872
    %981 = vmatpush1.msra.mxu0 %v871
    %982 = vmatprep.subr.mxu0 %v876
    %983 = vmatpush1.msra.mxu0 %v875
    %984 = vmatprep.subr.mxu0 %v880
    %985 = vmatpush1.msra.mxu0 %v879
    %986 = vmatprep.subr.mxu0 %v884
    %987 = vmatpush1.msra.mxu0 %v883
    %988 = vmatprep.subr.mxu0 0.0
    %989 = vmatpush1.msra.mxu0 0.0
    %990 = vmatprep.subr.mxu0 0.0
    %991 = vmatpush1.msra.mxu0 0.0
    %992 = vmatprep.subr.mxu0 0.0
    %993 = vmatpush1.msra.mxu0 0.0
    %994 = vmatprep.subr.mxu0 0.0
    %995 = vmatpush1.msra.mxu0 0.0
    %996 = vmatprep.subr.mxu0 0.0
    %997 = vmatpush1.msra.mxu0 0.0
    %998 = vmatprep.subr.mxu0 0.0
    %999 = vmatpush1.msra.mxu0 0.0
    %1000 = vmatprep.subr.mxu0 0.0
    %1001 = vmatpush1.msra.mxu0 0.0
    %1002 = vmatprep.subr.mxu0 0.0
    %1003 = vmatpush1.msra.mxu0 0.0
    %1004 = vmatprep.subr.mxu0 0.0
    %1005 = vmatpush1.msra.mxu0 0.0
    %1006 = vmatprep.subr.mxu0 0.0
    %1007 = vmatpush1.msra.mxu0 0.0
    %1008 = vmatprep.subr.mxu0 0.0
    %1009 = vmatpush1.msra.mxu0 0.0
    %1010 = vmatprep.subr.mxu0 0.0
    %1011 = vmatpush1.msra.mxu0 0.0
    %1012 = vmatprep.subr.mxu0 0.0
    %1013 = vmatpush1.msra.mxu0 0.0
    %1014 = vmatprep.subr.mxu0 0.0
    %1015 = vmatpush1.msra.mxu0 0.0
    %1016 = vmatprep.subr.mxu0 0.0
    %1017 = vmatpush1.msra.mxu0 0.0
    %1018 = vmatprep.subr.mxu0 0.0
    %1019 = vmatpush1.msra.mxu0 0.0
    %1020 = vmatprep.mubr.f32.mxu0 0.0
    %1021 = vmatmul.mubr.f32.gmra.mrb[0].mxu0 %v816
    %v1022 = vpop.f32.mrb[0].mxu0
    %v1023 = vadd.f32 0.0, %v1022
    %v1024 = vpop.f32.mrb[0].mxu0
    %v1025 = vadd.f32 0.0, %v1024
    %1026 = vdwg.mxu0
    %v1031 = vcombine.low %v952, %v954
    %v1032 = vcombine.low %v1023, %v1025
    %v1034 = vunpack.c.l.s4 1983009808
    %v1035 = vunpack.c.0.s8 %v1034
    %v1036 = vlaneseq
    %v1037 = vshrl.u32 %v1036, 7
    %v1038 = vsub.s32 %v1035, %v1037
    %v1039 = vrot.slane %v1031, %v1038
    %v1041 = vunpack.c.l.s4 1983009808
    %v1042 = vunpack.c.0.s8 %v1041
    %v1043 = vlaneseq
    %v1044 = vshrl.u32 %v1043, 7
    %v1045 = vsub.s32 %v1042, %v1044
    %v1046 = vrot.slane %v1032, %v1045
    %v1047 = vcombine.low %v1039, %v1046
    %v1049 = vadd.f32 %v820, %v1047
    %v1050 = vxor.u32 %v1049, 2147483648
    %v1051 = vmul.f32 %v1050, 1.442695
    %v1052 = vpow.pop %v1051
    %v1053 = vadd.f32 %v1052, 1.0
    %v1054 = vrcp.pop %v1053
    %v1055 = vmul.f32 1.0, %v1054
    %v1057 = vrot.slane %v1049, 2
    %v1059 = vxor.u32 %v1057, 2147483648
    %v1060 = vmul.f32 %v1059, 1.442695
    %v1061 = vpow.pop %v1060
    %v1062 = vadd.f32 %v1061, 1.0
    %v1063 = vrcp.pop %v1062
    %v1064 = vmul.f32 1.0, %v1063
    %v1065 = vrot.slane %v1049, 4
    %v1067 = vtanh.pop %v1065
    %v1068 = vrot.slane %v1049, 6
    %v1070 = vxor.u32 %v1068, 2147483648
    %v1071 = vmul.f32 %v1070, 1.442695
    %v1072 = vpow.pop %v1071
    %v1073 = vadd.f32 %v1072, 1.0
    %v1074 = vrcp.pop %v1073
    %v1075 = vmul.f32 1.0, %v1074
    %v1076 = vmul.f32 %v1064, %v817
    %v1077 = vmul.f32 %v1055, %v1067
    %v1078 = vadd.f32 %v1076, %v1077
    %v1079 = vtanh.pop %v1078
    %v1080 = vmul.f32 %v1075, %v1079
    %v1081 = vld [vmem:[#allocation12] sm:$0xff]
    %v1082 = vld [vmem:[#allocation12 + $0x8] sm:$0xff]
    %v1083 = vld [vmem:[#allocation12 + $0x10] sm:$0xff]
    %v1084 = vld [vmem:[#allocation12 + $0x18] sm:$0xff]
    %v1085 = vld [vmem:[#allocation12 + $0x20] sm:$0xff]
    %v1086 = vld [vmem:[#allocation12 + $0x28] sm:$0xff]
    %v1087 = vld [vmem:[#allocation12 + $0x30] sm:$0xff]
    %v1088 = vld [vmem:[#allocation12 + $0x38] sm:$0xff]
    %v1089 = vld [vmem:[#allocation12 + $0x40] sm:$0xff]
    %v1090 = vld [vmem:[#allocation12 + $0x48] sm:$0xff]
    %v1091 = vld [vmem:[#allocation12 + $0x50] sm:$0xff]
    %v1092 = vld [vmem:[#allocation12 + $0x58] sm:$0xff]
    %v1093 = vld [vmem:[#allocation12 + $0x60] sm:$0xff]
    %v1094 = vld [vmem:[#allocation12 + $0x68] sm:$0xff]
    %v1095 = vld [vmem:[#allocation12 + $0x70] sm:$0xff]
    %v1096 = vld [vmem:[#allocation12 + $0x78] sm:$0xff]
    %v1097 = vld [vmem:[#allocation12 + $0x80] sm:$0xff]
    %v1098 = vld [vmem:[#allocation12 + $0x88] sm:$0xff]
    %v1099 = vld [vmem:[#allocation12 + $0x90] sm:$0xff]
    %v1100 = vld [vmem:[#allocation12 + $0x98] sm:$0xff]
    %v1101 = vld [vmem:[#allocation12 + $0xa0] sm:$0xff]
    %v1102 = vld [vmem:[#allocation12 + $0xa8] sm:$0xff]
    %v1103 = vld [vmem:[#allocation12 + $0xb0] sm:$0xff]
    %v1104 = vld [vmem:[#allocation12 + $0xb8] sm:$0xff]
    %v1105 = vld [vmem:[#allocation12 + $0xc0] sm:$0xff]
    %v1106 = vld [vmem:[#allocation12 + $0xc8] sm:$0xff]
    %v1107 = vld [vmem:[#allocation12 + $0xd0] sm:$0xff]
    %v1108 = vld [vmem:[#allocation12 + $0xd8] sm:$0xff]
    %v1109 = vld [vmem:[#allocation12 + $0xe0] sm:$0xff]
    %v1110 = vld [vmem:[#allocation12 + $0xe8] sm:$0xff]
    %v1111 = vld [vmem:[#allocation12 + $0xf0] sm:$0xff]
    %v1112 = vld [vmem:[#allocation12 + $0xf8] sm:$0xff]
    %v1113 = vld [vmem:[#allocation12 + $0x100] sm:$0xff]
    %v1114 = vld [vmem:[#allocation12 + $0x108] sm:$0xff]
    %v1115 = vld [vmem:[#allocation12 + $0x110] sm:$0xff]
    %v1116 = vld [vmem:[#allocation12 + $0x118] sm:$0xff]
    %v1117 = vld [vmem:[#allocation12 + $0x120] sm:$0xff]
    %v1118 = vld [vmem:[#allocation12 + $0x128] sm:$0xff]
    %v1119 = vld [vmem:[#allocation12 + $0x130] sm:$0xff]
    %v1120 = vld [vmem:[#allocation12 + $0x138] sm:$0xff]
    %v1121 = vld [vmem:[#allocation12 + $0x140] sm:$0xff]
    %v1122 = vld [vmem:[#allocation12 + $0x148] sm:$0xff]
    %v1123 = vld [vmem:[#allocation12 + $0x150] sm:$0xff]
    %v1124 = vld [vmem:[#allocation12 + $0x158] sm:$0xff]
    %v1125 = vld [vmem:[#allocation12 + $0x160] sm:$0xff]
    %v1126 = vld [vmem:[#allocation12 + $0x168] sm:$0xff]
    %v1127 = vld [vmem:[#allocation12 + $0x170] sm:$0xff]
    %v1128 = vld [vmem:[#allocation12 + $0x178] sm:$0xff]
    %v1129 = vld [vmem:[#allocation12 + $0x180] sm:$0xff]
    %v1130 = vld [vmem:[#allocation12 + $0x188] sm:$0xff]
    %v1131 = vld [vmem:[#allocation12 + $0x190] sm:$0xff]
    %v1132 = vld [vmem:[#allocation12 + $0x198] sm:$0xff]
    %v1133 = vld [vmem:[#allocation12 + $0x1a0] sm:$0xff]
    %v1134 = vld [vmem:[#allocation12 + $0x1a8] sm:$0xff]
    %v1135 = vld [vmem:[#allocation12 + $0x1b0] sm:$0xff]
    %v1136 = vld [vmem:[#allocation12 + $0x1b8] sm:$0xff]
    %v1137 = vld [vmem:[#allocation12 + $0x1c0] sm:$0xff]
    %v1138 = vld [vmem:[#allocation12 + $0x1c8] sm:$0xff]
    %v1139 = vld [vmem:[#allocation12 + $0x1d0] sm:$0xff]
    %v1140 = vld [vmem:[#allocation12 + $0x1d8] sm:$0xff]
    %v1141 = vld [vmem:[#allocation12 + $0x1e0] sm:$0xff]
    %v1142 = vld [vmem:[#allocation12 + $0x1e8] sm:$0xff]
    %v1143 = vld [vmem:[#allocation12 + $0x1f0] sm:$0xff]
    %v1144 = vld [vmem:[#allocation12 + $0x1f8] sm:$0xff]
    %v1145 = vld [vmem:[#allocation12 + $0x200] sm:$0xff]
    %v1146 = vld [vmem:[#allocation12 + $0x208] sm:$0xff]
    %v1147 = vld [vmem:[#allocation12 + $0x210] sm:$0xff]
    %v1148 = vld [vmem:[#allocation12 + $0x218] sm:$0xff]
    %v1149 = vld [vmem:[#allocation12 + $0x220] sm:$0xff]
    %v1150 = vld [vmem:[#allocation12 + $0x228] sm:$0xff]
    %v1151 = vld [vmem:[#allocation12 + $0x230] sm:$0xff]
    %v1152 = vld [vmem:[#allocation12 + $0x238] sm:$0xff]
    %v1153 = vld [vmem:[#allocation12 + $0x240] sm:$0xff]
    %v1154 = vld [vmem:[#allocation12 + $0x248] sm:$0xff]
    %v1155 = vld [vmem:[#allocation12 + $0x250] sm:$0xff]
    %v1156 = vld [vmem:[#allocation12 + $0x258] sm:$0xff]
    %v1157 = vld [vmem:[#allocation12 + $0x260] sm:$0xff]
    %v1158 = vld [vmem:[#allocation12 + $0x268] sm:$0xff]
    %v1159 = vld [vmem:[#allocation12 + $0x270] sm:$0xff]
    %v1160 = vld [vmem:[#allocation12 + $0x278] sm:$0xff]
    %v1161 = vld [vmem:[#allocation12 + $0x280] sm:$0xff]
    %v1162 = vld [vmem:[#allocation12 + $0x288] sm:$0xff]
    %v1163 = vld [vmem:[#allocation12 + $0x290] sm:$0xff]
    %v1164 = vld [vmem:[#allocation12 + $0x298] sm:$0xff]
    %v1165 = vld [vmem:[#allocation12 + $0x2a0] sm:$0xff]
    %v1166 = vld [vmem:[#allocation12 + $0x2a8] sm:$0xff]
    %v1167 = vld [vmem:[#allocation12 + $0x2b0] sm:$0xff]
    %v1168 = vld [vmem:[#allocation12 + $0x2b8] sm:$0xff]
    %v1169 = vld [vmem:[#allocation12 + $0x2c0] sm:$0xff]
    %v1170 = vld [vmem:[#allocation12 + $0x2c8] sm:$0xff]
    %v1171 = vld [vmem:[#allocation12 + $0x2d0] sm:$0xff]
    %v1172 = vld [vmem:[#allocation12 + $0x2d8] sm:$0xff]
    %v1173 = vld [vmem:[#allocation12 + $0x2e0] sm:$0xff]
    %v1174 = vld [vmem:[#allocation12 + $0x2e8] sm:$0xff]
    %v1175 = vld [vmem:[#allocation12 + $0x2f0] sm:$0xff]
    %v1176 = vld [vmem:[#allocation12 + $0x2f8] sm:$0xff]
    %v1177 = vld [vmem:[#allocation12 + $0x300] sm:$0xff]
    %v1178 = vld [vmem:[#allocation12 + $0x308] sm:$0xff]
    %v1179 = vld [vmem:[#allocation12 + $0x310] sm:$0xff]
    %v1180 = vld [vmem:[#allocation12 + $0x318] sm:$0xff]
    %v1181 = vld [vmem:[#allocation12 + $0x320] sm:$0xff]
    %v1182 = vld [vmem:[#allocation12 + $0x328] sm:$0xff]
    %v1183 = vld [vmem:[#allocation12 + $0x330] sm:$0xff]
    %v1184 = vld [vmem:[#allocation12 + $0x338] sm:$0xff]
    %v1185 = vld [vmem:[#allocation12 + $0x340] sm:$0xff]
    %v1186 = vld [vmem:[#allocation12 + $0x348] sm:$0xff]
    %v1187 = vld [vmem:[#allocation12 + $0x350] sm:$0xff]
    %v1188 = vld [vmem:[#allocation12 + $0x358] sm:$0xff]
    %v1189 = vld [vmem:[#allocation12 + $0x360] sm:$0xff]
    %v1190 = vld [vmem:[#allocation12 + $0x368] sm:$0xff]
    %v1191 = vld [vmem:[#allocation12 + $0x370] sm:$0xff]
    %v1192 = vld [vmem:[#allocation12 + $0x378] sm:$0xff]
    %v1193 = vld [vmem:[#allocation12 + $0x380] sm:$0xff]
    %v1194 = vld [vmem:[#allocation12 + $0x388] sm:$0xff]
    %v1195 = vld [vmem:[#allocation12 + $0x390] sm:$0xff]
    %v1196 = vld [vmem:[#allocation12 + $0x398] sm:$0xff]
    %v1197 = vld [vmem:[#allocation12 + $0x3a0] sm:$0xff]
    %v1198 = vld [vmem:[#allocation12 + $0x3a8] sm:$0xff]
    %v1199 = vld [vmem:[#allocation12 + $0x3b0] sm:$0xff]
    %v1200 = vld [vmem:[#allocation12 + $0x3b8] sm:$0xff]
    %v1201 = vld [vmem:[#allocation12 + $0x3c0] sm:$0xff]
    %v1202 = vld [vmem:[#allocation12 + $0x3c8] sm:$0xff]
    %v1203 = vld [vmem:[#allocation12 + $0x3d0] sm:$0xff]
    %v1204 = vld [vmem:[#allocation12 + $0x3d8] sm:$0xff]
    %v1205 = vld [vmem:[#allocation12 + $0x3e0] sm:$0xff]
    %v1206 = vld [vmem:[#allocation12 + $0x3e8] sm:$0xff]
    %v1207 = vld [vmem:[#allocation12 + $0x3f0] sm:$0xff]
    %v1208 = vld [vmem:[#allocation12 + $0x3f8] sm:$0xff]
    %v1209 = vld [vmem:[%s5] sm:$0xf]
    %v1211 = vlaneseq
    %v1212 = vshrl.u32 %v1211, 7
    %v1213 = vsub.s32 0, %v1212
    %v1214 = vrot.slane %v1209, %v1213
    %v1215 = vlaneseq
    %v1216 = vshrl.u32 %v1215, 7
    %v1217 = vsub.s32 1, %v1216
    %v1218 = vrot.slane %v1209, %v1217
    %v1219 = vlaneseq
    %v1220 = vshrl.u32 %v1219, 7
    %v1221 = vsub.s32 2, %v1220
    %v1222 = vrot.slane %v1209, %v1221
    %v1223 = vlaneseq
    %v1224 = vshrl.u32 %v1223, 7
    %v1225 = vsub.s32 3, %v1224
    %v1226 = vrot.slane %v1209, %v1225
    %1231 = vmatprep.subr.mxu0 %v1082
    %1232 = vmatpush1.msra.mxu0 %v1081
    %1233 = vmatprep.subr.mxu0 %v1086
    %1234 = vmatpush1.msra.mxu0 %v1085
    %1235 = vmatprep.subr.mxu0 %v1090
    %1236 = vmatpush1.msra.mxu0 %v1089
    %1237 = vmatprep.subr.mxu0 %v1094
    %1238 = vmatpush1.msra.mxu0 %v1093
    %1239 = vmatprep.subr.mxu0 %v1098
    %1240 = vmatpush1.msra.mxu0 %v1097
    %1241 = vmatprep.subr.mxu0 %v1102
    %1242 = vmatpush1.msra.mxu0 %v1101
    %1243 = vmatprep.subr.mxu0 %v1106
    %1244 = vmatpush1.msra.mxu0 %v1105
    %1245 = vmatprep.subr.mxu0 %v1110
    %1246 = vmatpush1.msra.mxu0 %v1109
    %1247 = vmatprep.subr.mxu0 %v1114
    %1248 = vmatpush1.msra.mxu0 %v1113
    %1249 = vmatprep.subr.mxu0 %v1118
    %1250 = vmatpush1.msra.mxu0 %v1117
    %1251 = vmatprep.subr.mxu0 %v1122
    %1252 = vmatpush1.msra.mxu0 %v1121
    %1253 = vmatprep.subr.mxu0 %v1126
    %1254 = vmatpush1.msra.mxu0 %v1125
    %1255 = vmatprep.subr.mxu0 %v1130
    %1256 = vmatpush1.msra.mxu0 %v1129
    %1257 = vmatprep.subr.mxu0 %v1134
    %1258 = vmatpush1.msra.mxu0 %v1133
    %1259 = vmatprep.subr.mxu0 %v1138
    %1260 = vmatpush1.msra.mxu0 %v1137
    %1261 = vmatprep.subr.mxu0 %v1142
    %1262 = vmatpush1.msra.mxu0 %v1141
    %1263 = vmatprep.subr.mxu0 %v1146
    %1264 = vmatpush1.msra.mxu0 %v1145
    %1265 = vmatprep.subr.mxu0 %v1150
    %1266 = vmatpush1.msra.mxu0 %v1149
    %1267 = vmatprep.subr.mxu0 %v1154
    %1268 = vmatpush1.msra.mxu0 %v1153
    %1269 = vmatprep.subr.mxu0 %v1158
    %1270 = vmatpush1.msra.mxu0 %v1157
    %1271 = vmatprep.subr.mxu0 %v1162
    %1272 = vmatpush1.msra.mxu0 %v1161
    %1273 = vmatprep.subr.mxu0 %v1166
    %1274 = vmatpush1.msra.mxu0 %v1165
    %1275 = vmatprep.subr.mxu0 %v1170
    %1276 = vmatpush1.msra.mxu0 %v1169
    %1277 = vmatprep.subr.mxu0 %v1174
    %1278 = vmatpush1.msra.mxu0 %v1173
    %1279 = vmatprep.subr.mxu0 %v1178
    %1280 = vmatpush1.msra.mxu0 %v1177
    %1281 = vmatprep.subr.mxu0 %v1182
    %1282 = vmatpush1.msra.mxu0 %v1181
    %1283 = vmatprep.subr.mxu0 %v1186
    %1284 = vmatpush1.msra.mxu0 %v1185
    %1285 = vmatprep.subr.mxu0 %v1190
    %1286 = vmatpush1.msra.mxu0 %v1189
    %1287 = vmatprep.subr.mxu0 %v1194
    %1288 = vmatpush1.msra.mxu0 %v1193
    %1289 = vmatprep.subr.mxu0 %v1198
    %1290 = vmatpush1.msra.mxu0 %v1197
    %1291 = vmatprep.subr.mxu0 %v1202
    %1292 = vmatpush1.msra.mxu0 %v1201
    %1293 = vmatprep.subr.mxu0 %v1206
    %1294 = vmatpush1.msra.mxu0 %v1205
    %1295 = vmatprep.mubr.f32.mxu0 %v818
    %1296 = vmatmul.mubr.f32.gmra.mrb[0].mxu0 %v1080
    %v1297 = vpop.f32.mrb[0].mxu0
    %v1298 = vadd.f32 %v1214, %v1297
    %v1299 = vpop.f32.mrb[0].mxu0
    %v1300 = vadd.f32 %v1218, %v1299
    %1301 = vdwg.mxu0
    %1302 = vmatprep.subr.mxu0 %v1084
    %1303 = vmatpush1.msra.mxu0 %v1083
    %1304 = vmatprep.subr.mxu0 %v1088
    %1305 = vmatpush1.msra.mxu0 %v1087
    %1306 = vmatprep.subr.mxu0 %v1092
    %1307 = vmatpush1.msra.mxu0 %v1091
    %1308 = vmatprep.subr.mxu0 %v1096
    %1309 = vmatpush1.msra.mxu0 %v1095
    %1310 = vmatprep.subr.mxu0 %v1100
    %1311 = vmatpush1.msra.mxu0 %v1099
    %1312 = vmatprep.subr.mxu0 %v1104
    %1313 = vmatpush1.msra.mxu0 %v1103
    %1314 = vmatprep.subr.mxu0 %v1108
    %1315 = vmatpush1.msra.mxu0 %v1107
    %1316 = vmatprep.subr.mxu0 %v1112
    %1317 = vmatpush1.msra.mxu0 %v1111
    %1318 = vmatprep.subr.mxu0 %v1116
    %1319 = vmatpush1.msra.mxu0 %v1115
    %1320 = vmatprep.subr.mxu0 %v1120
    %1321 = vmatpush1.msra.mxu0 %v1119
    %1322 = vmatprep.subr.mxu0 %v1124
    %1323 = vmatpush1.msra.mxu0 %v1123
    %1324 = vmatprep.subr.mxu0 %v1128
    %1325 = vmatpush1.msra.mxu0 %v1127
    %1326 = vmatprep.subr.mxu0 %v1132
    %1327 = vmatpush1.msra.mxu0 %v1131
    %1328 = vmatprep.subr.mxu0 %v1136
    %1329 = vmatpush1.msra.mxu0 %v1135
    %1330 = vmatprep.subr.mxu0 %v1140
    %1331 = vmatpush1.msra.mxu0 %v1139
    %1332 = vmatprep.subr.mxu0 %v1144
    %1333 = vmatpush1.msra.mxu0 %v1143
    %1334 = vmatprep.subr.mxu0 %v1148
    %1335 = vmatpush1.msra.mxu0 %v1147
    %1336 = vmatprep.subr.mxu0 %v1152
    %1337 = vmatpush1.msra.mxu0 %v1151
    %1338 = vmatprep.subr.mxu0 %v1156
    %1339 = vmatpush1.msra.mxu0 %v1155
    %1340 = vmatprep.subr.mxu0 %v1160
    %1341 = vmatpush1.msra.mxu0 %v1159
    %1342 = vmatprep.subr.mxu0 %v1164
    %1343 = vmatpush1.msra.mxu0 %v1163
    %1344 = vmatprep.subr.mxu0 %v1168
    %1345 = vmatpush1.msra.mxu0 %v1167
    %1346 = vmatprep.subr.mxu0 %v1172
    %1347 = vmatpush1.msra.mxu0 %v1171
    %1348 = vmatprep.subr.mxu0 %v1176
    %1349 = vmatpush1.msra.mxu0 %v1175
    %1350 = vmatprep.subr.mxu0 %v1180
    %1351 = vmatpush1.msra.mxu0 %v1179
    %1352 = vmatprep.subr.mxu0 %v1184
    %1353 = vmatpush1.msra.mxu0 %v1183
    %1354 = vmatprep.subr.mxu0 %v1188
    %1355 = vmatpush1.msra.mxu0 %v1187
    %1356 = vmatprep.subr.mxu0 %v1192
    %1357 = vmatpush1.msra.mxu0 %v1191
    %1358 = vmatprep.subr.mxu0 %v1196
    %1359 = vmatpush1.msra.mxu0 %v1195
    %1360 = vmatprep.subr.mxu0 %v1200
    %1361 = vmatpush1.msra.mxu0 %v1199
    %1362 = vmatprep.subr.mxu0 %v1204
    %1363 = vmatpush1.msra.mxu0 %v1203
    %1364 = vmatprep.subr.mxu0 %v1208
    %1365 = vmatpush1.msra.mxu0 %v1207
    %1366 = vmatprep.mubr.f32.mxu0 %v818
    %1367 = vmatmul.mubr.f32.gmra.mrb[0].mxu0 %v1080
    %v1368 = vpop.f32.mrb[0].mxu0
    %v1369 = vadd.f32 %v1222, %v1368
    %v1370 = vpop.f32.mrb[0].mxu0
    %v1371 = vadd.f32 %v1226, %v1370
    %1372 = vdwg.mxu0
    %v1373 = vxor.u32 %v1298, 2147483648
    %v1374 = vmul.f32 %v1373, 1.442695
    %v1375 = vpow.pop %v1374
    %v1376 = vadd.f32 %v1375, 1.0
    %v1377 = vrcp.pop %v1376
    %v1378 = vmul.f32 1.0, %v1377
    %v1379 = vxor.u32 %v1300, 2147483648
    %v1380 = vmul.f32 %v1379, 1.442695
    %v1381 = vpow.pop %v1380
    %v1382 = vadd.f32 %v1381, 1.0
    %v1383 = vrcp.pop %v1382
    %v1384 = vmul.f32 1.0, %v1383
    %v1385 = vtanh.pop %v1369
    %v1386 = vxor.u32 %v1371, 2147483648
    %v1387 = vmul.f32 %v1386, 1.442695
    %v1388 = vpow.pop %v1387
    %v1389 = vadd.f32 %v1388, 1.0
    %v1390 = vrcp.pop %v1389
    %v1391 = vmul.f32 1.0, %v1390
    %v1392 = vmul.f32 %v1384, %v819
    %v1393 = vmul.f32 %v1378, %v1385
    %v1394 = vadd.f32 %v1392, %v1393
    %v1395 = vtanh.pop %v1394
    %v1396 = vmul.f32 %v1391, %v1395
    %s1397 = scalar_lea.vmem [#allocation2], 8
    %v1398 = vld [vmem:[%s1397] sm:$0xff]
    %1399 = vmatprep.subr.mxu0 %v822
    %1400 = vmatpush1.msra.mxu0 %v821
    %1401 = vmatprep.subr.mxu0 %v826
    %1402 = vmatpush1.msra.mxu0 %v825
    %1403 = vmatprep.subr.mxu0 %v830
    %1404 = vmatpush1.msra.mxu0 %v829
    %1405 = vmatprep.subr.mxu0 %v834
    %1406 = vmatpush1.msra.mxu0 %v833
    %1407 = vmatprep.subr.mxu0 %v838
    %1408 = vmatpush1.msra.mxu0 %v837
    %1409 = vmatprep.subr.mxu0 %v842
    %1410 = vmatpush1.msra.mxu0 %v841
    %1411 = vmatprep.subr.mxu0 %v846
    %1412 = vmatpush1.msra.mxu0 %v845
    %1413 = vmatprep.subr.mxu0 %v850
    %1414 = vmatpush1.msra.mxu0 %v849
    %1415 = vmatprep.subr.mxu0 %v854
    %1416 = vmatpush1.msra.mxu0 %v853
    %1417 = vmatprep.subr.mxu0 %v858
    %1418 = vmatpush1.msra.mxu0 %v857
    %1419 = vmatprep.subr.mxu0 %v862
    %1420 = vmatpush1.msra.mxu0 %v861
    %1421 = vmatprep.subr.mxu0 %v866
    %1422 = vmatpush1.msra.mxu0 %v865
    %1423 = vmatprep.subr.mxu0 %v870
    %1424 = vmatpush1.msra.mxu0 %v869
    %1425 = vmatprep.subr.mxu0 %v874
    %1426 = vmatpush1.msra.mxu0 %v873
    %1427 = vmatprep.subr.mxu0 %v878
    %1428 = vmatpush1.msra.mxu0 %v877
    %1429 = vmatprep.subr.mxu0 %v882
    %1430 = vmatpush1.msra.mxu0 %v881
    %1431 = vmatprep.subr.mxu0 0.0
    %1432 = vmatpush1.msra.mxu0 0.0
    %1433 = vmatprep.subr.mxu0 0.0
    %1434 = vmatpush1.msra.mxu0 0.0
    %1435 = vmatprep.subr.mxu0 0.0
    %1436 = vmatpush1.msra.mxu0 0.0
    %1437 = vmatprep.subr.mxu0 0.0
    %1438 = vmatpush1.msra.mxu0 0.0
    %1439 = vmatprep.subr.mxu0 0.0
    %1440 = vmatpush1.msra.mxu0 0.0
    %1441 = vmatprep.subr.mxu0 0.0
    %1442 = vmatpush1.msra.mxu0 0.0
    %1443 = vmatprep.subr.mxu0 0.0
    %1444 = vmatpush1.msra.mxu0 0.0
    %1445 = vmatprep.subr.mxu0 0.0
    %1446 = vmatpush1.msra.mxu0 0.0
    %1447 = vmatprep.subr.mxu0 0.0
    %1448 = vmatpush1.msra.mxu0 0.0
    %1449 = vmatprep.subr.mxu0 0.0
    %1450 = vmatpush1.msra.mxu0 0.0
    %1451 = vmatprep.subr.mxu0 0.0
    %1452 = vmatpush1.msra.mxu0 0.0
    %1453 = vmatprep.subr.mxu0 0.0
    %1454 = vmatpush1.msra.mxu0 0.0
    %1455 = vmatprep.subr.mxu0 0.0
    %1456 = vmatpush1.msra.mxu0 0.0
    %1457 = vmatprep.subr.mxu0 0.0
    %1458 = vmatpush1.msra.mxu0 0.0
    %1459 = vmatprep.subr.mxu0 0.0
    %1460 = vmatpush1.msra.mxu0 0.0
    %1461 = vmatprep.subr.mxu0 0.0
    %1462 = vmatpush1.msra.mxu0 0.0
    %1463 = vmatprep.mubr.f32.mxu0 0.0
    %1464 = vmatmul.mubr.f32.gmra.mrb[0].mxu0 %v1080
    %v1465 = vpop.f32.mrb[0].mxu0
    %v1466 = vadd.f32 0.0, %v1465
    %v1467 = vpop.f32.mrb[0].mxu0
    %v1468 = vadd.f32 0.0, %v1467
    %1469 = vdwg.mxu0
    %1470 = vmatprep.subr.mxu0 %v824
    %1471 = vmatpush1.msra.mxu0 %v823
    %1472 = vmatprep.subr.mxu0 %v828
    %1473 = vmatpush1.msra.mxu0 %v827
    %1474 = vmatprep.subr.mxu0 %v832
    %1475 = vmatpush1.msra.mxu0 %v831
    %1476 = vmatprep.subr.mxu0 %v836
    %1477 = vmatpush1.msra.mxu0 %v835
    %1478 = vmatprep.subr.mxu0 %v840
    %1479 = vmatpush1.msra.mxu0 %v839
    %1480 = vmatprep.subr.mxu0 %v844
    %1481 = vmatpush1.msra.mxu0 %v843
    %1482 = vmatprep.subr.mxu0 %v848
    %1483 = vmatpush1.msra.mxu0 %v847
    %1484 = vmatprep.subr.mxu0 %v852
    %1485 = vmatpush1.msra.mxu0 %v851
    %1486 = vmatprep.subr.mxu0 %v856
    %1487 = vmatpush1.msra.mxu0 %v855
    %1488 = vmatprep.subr.mxu0 %v860
    %1489 = vmatpush1.msra.mxu0 %v859
    %1490 = vmatprep.subr.mxu0 %v864
    %1491 = vmatpush1.msra.mxu0 %v863
    %1492 = vmatprep.subr.mxu0 %v868
    %1493 = vmatpush1.msra.mxu0 %v867
    %1494 = vmatprep.subr.mxu0 %v872
    %1495 = vmatpush1.msra.mxu0 %v871
    %1496 = vmatprep.subr.mxu0 %v876
    %1497 = vmatpush1.msra.mxu0 %v875
    %1498 = vmatprep.subr.mxu0 %v880
    %1499 = vmatpush1.msra.mxu0 %v879
    %1500 = vmatprep.subr.mxu0 %v884
    %1501 = vmatpush1.msra.mxu0 %v883
    %1502 = vmatprep.subr.mxu0 0.0
    %1503 = vmatpush1.msra.mxu0 0.0
    %1504 = vmatprep.subr.mxu0 0.0
    %1505 = vmatpush1.msra.mxu0 0.0
    %1506 = vmatprep.subr.mxu0 0.0
    %1507 = vmatpush1.msra.mxu0 0.0
    %1508 = vmatprep.subr.mxu0 0.0
    %1509 = vmatpush1.msra.mxu0 0.0
    %1510 = vmatprep.subr.mxu0 0.0
    %1511 = vmatpush1.msra.mxu0 0.0
    %1512 = vmatprep.subr.mxu0 0.0
    %1513 = vmatpush1.msra.mxu0 0.0
    %1514 = vmatprep.subr.mxu0 0.0
    %1515 = vmatpush1.msra.mxu0 0.0
    %1516 = vmatprep.subr.mxu0 0.0
    %1517 = vmatpush1.msra.mxu0 0.0
    %1518 = vmatprep.subr.mxu0 0.0
    %1519 = vmatpush1.msra.mxu0 0.0
    %1520 = vmatprep.subr.mxu0 0.0
    %1521 = vmatpush1.msra.mxu0 0.0
    %1522 = vmatprep.subr.mxu0 0.0
    %1523 = vmatpush1.msra.mxu0 0.0
    %1524 = vmatprep.subr.mxu0 0.0
    %1525 = vmatpush1.msra.mxu0 0.0
    %1526 = vmatprep.subr.mxu0 0.0
    %1527 = vmatpush1.msra.mxu0 0.0
    %1528 = vmatprep.subr.mxu0 0.0
    %1529 = vmatpush1.msra.mxu0 0.0
    %1530 = vmatprep.subr.mxu0 0.0
    %1531 = vmatpush1.msra.mxu0 0.0
    %1532 = vmatprep.subr.mxu0 0.0
    %1533 = vmatpush1.msra.mxu0 0.0
    %1534 = vmatprep.mubr.f32.mxu0 0.0
    %1535 = vmatmul.mubr.f32.gmra.mrb[0].mxu0 %v1080
    %v1536 = vpop.f32.mrb[0].mxu0
    %v1537 = vadd.f32 0.0, %v1536
    %v1538 = vpop.f32.mrb[0].mxu0
    %v1539 = vadd.f32 0.0, %v1538
    %1540 = vdwg.mxu0
    %v1545 = vcombine.low %v1466, %v1468
    %v1546 = vcombine.low %v1537, %v1539
    %v1548 = vunpack.c.l.s4 1983009808
    %v1549 = vunpack.c.0.s8 %v1548
    %v1550 = vlaneseq
    %v1551 = vshrl.u32 %v1550, 7
    %v1552 = vsub.s32 %v1549, %v1551
    %v1553 = vrot.slane %v1545, %v1552
    %v1555 = vunpack.c.l.s4 1983009808
    %v1556 = vunpack.c.0.s8 %v1555
    %v1557 = vlaneseq
    %v1558 = vshrl.u32 %v1557, 7
    %v1559 = vsub.s32 %v1556, %v1558
    %v1560 = vrot.slane %v1546, %v1559
    %v1561 = vcombine.low %v1553, %v1560
    %v1563 = vadd.f32 %v1398, %v1561
    %v1564 = vxor.u32 %v1563, 2147483648
    %v1565 = vmul.f32 %v1564, 1.442695
    %v1566 = vpow.pop %v1565
    %v1567 = vadd.f32 %v1566, 1.0
    %v1568 = vrcp.pop %v1567
    %v1569 = vmul.f32 1.0, %v1568
    %v1571 = vrot.slane %v1563, 2
    %v1573 = vxor.u32 %v1571, 2147483648
    %v1574 = vmul.f32 %v1573, 1.442695
    %v1575 = vpow.pop %v1574
    %v1576 = vadd.f32 %v1575, 1.0
    %v1577 = vrcp.pop %v1576
    %v1578 = vmul.f32 1.0, %v1577
    %v1579 = vrot.slane %v1563, 4
    %v1581 = vtanh.pop %v1579
    %v1582 = vrot.slane %v1563, 6
    %v1584 = vxor.u32 %v1582, 2147483648
    %v1585 = vmul.f32 %v1584, 1.442695
    %v1586 = vpow.pop %v1585
    %v1587 = vadd.f32 %v1586, 1.0
    %v1588 = vrcp.pop %v1587
    %v1589 = vmul.f32 1.0, %v1588
    %v1590 = vmul.f32 %v1578, %v1078
    %v1591 = vmul.f32 %v1569, %v1581
    %v1592 = vadd.f32 %v1590, %v1591
    %v1593 = vtanh.pop %v1592
    %v1594 = vmul.f32 %v1589, %v1593
    %1595 = vmatprep.subr.mxu0 %v1082
    %1596 = vmatpush1.msra.mxu0 %v1081
    %1597 = vmatprep.subr.mxu0 %v1086
    %1598 = vmatpush1.msra.mxu0 %v1085
    %1599 = vmatprep.subr.mxu0 %v1090
    %1600 = vmatpush1.msra.mxu0 %v1089
    %1601 = vmatprep.subr.mxu0 %v1094
    %1602 = vmatpush1.msra.mxu0 %v1093
    %1603 = vmatprep.subr.mxu0 %v1098
    %1604 = vmatpush1.msra.mxu0 %v1097
    %1605 = vmatprep.subr.mxu0 %v1102
    %1606 = vmatpush1.msra.mxu0 %v1101
    %1607 = vmatprep.subr.mxu0 %v1106
    %1608 = vmatpush1.msra.mxu0 %v1105
    %1609 = vmatprep.subr.mxu0 %v1110
    %1610 = vmatpush1.msra.mxu0 %v1109
    %1611 = vmatprep.subr.mxu0 %v1114
    %1612 = vmatpush1.msra.mxu0 %v1113
    %1613 = vmatprep.subr.mxu0 %v1118
    %1614 = vmatpush1.msra.mxu0 %v1117
    %1615 = vmatprep.subr.mxu0 %v1122
    %1616 = vmatpush1.msra.mxu0 %v1121
    %1617 = vmatprep.subr.mxu0 %v1126
    %1618 = vmatpush1.msra.mxu0 %v1125
    %1619 = vmatprep.subr.mxu0 %v1130
    %1620 = vmatpush1.msra.mxu0 %v1129
    %1621 = vmatprep.subr.mxu0 %v1134
    %1622 = vmatpush1.msra.mxu0 %v1133
    %1623 = vmatprep.subr.mxu0 %v1138
    %1624 = vmatpush1.msra.mxu0 %v1137
    %1625 = vmatprep.subr.mxu0 %v1142
    %1626 = vmatpush1.msra.mxu0 %v1141
    %1627 = vmatprep.subr.mxu0 %v1146
    %1628 = vmatpush1.msra.mxu0 %v1145
    %1629 = vmatprep.subr.mxu0 %v1150
    %1630 = vmatpush1.msra.mxu0 %v1149
    %1631 = vmatprep.subr.mxu0 %v1154
    %1632 = vmatpush1.msra.mxu0 %v1153
    %1633 = vmatprep.subr.mxu0 %v1158
    %1634 = vmatpush1.msra.mxu0 %v1157
    %1635 = vmatprep.subr.mxu0 %v1162
    %1636 = vmatpush1.msra.mxu0 %v1161
    %1637 = vmatprep.subr.mxu0 %v1166
    %1638 = vmatpush1.msra.mxu0 %v1165
    %1639 = vmatprep.subr.mxu0 %v1170
    %1640 = vmatpush1.msra.mxu0 %v1169
    %1641 = vmatprep.subr.mxu0 %v1174
    %1642 = vmatpush1.msra.mxu0 %v1173
    %1643 = vmatprep.subr.mxu0 %v1178
    %1644 = vmatpush1.msra.mxu0 %v1177
    %1645 = vmatprep.subr.mxu0 %v1182
    %1646 = vmatpush1.msra.mxu0 %v1181
    %1647 = vmatprep.subr.mxu0 %v1186
    %1648 = vmatpush1.msra.mxu0 %v1185
    %1649 = vmatprep.subr.mxu0 %v1190
    %1650 = vmatpush1.msra.mxu0 %v1189
    %1651 = vmatprep.subr.mxu0 %v1194
    %1652 = vmatpush1.msra.mxu0 %v1193
    %1653 = vmatprep.subr.mxu0 %v1198
    %1654 = vmatpush1.msra.mxu0 %v1197
    %1655 = vmatprep.subr.mxu0 %v1202
    %1656 = vmatpush1.msra.mxu0 %v1201
    %1657 = vmatprep.subr.mxu0 %v1206
    %1658 = vmatpush1.msra.mxu0 %v1205
    %1659 = vmatprep.mubr.f32.mxu0 %v1396
    %1660 = vmatmul.mubr.f32.gmra.mrb[0].mxu0 %v1594
    %v1661 = vpop.f32.mrb[0].mxu0
    %v1662 = vadd.f32 %v1214, %v1661
    %v1663 = vpop.f32.mrb[0].mxu0
    %v1664 = vadd.f32 %v1218, %v1663
    %1665 = vdwg.mxu0
    %1666 = vmatprep.subr.mxu0 %v1084
    %1667 = vmatpush1.msra.mxu0 %v1083
    %1668 = vmatprep.subr.mxu0 %v1088
    %1669 = vmatpush1.msra.mxu0 %v1087
    %1670 = vmatprep.subr.mxu0 %v1092
    %1671 = vmatpush1.msra.mxu0 %v1091
    %1672 = vmatprep.subr.mxu0 %v1096
    %1673 = vmatpush1.msra.mxu0 %v1095
    %1674 = vmatprep.subr.mxu0 %v1100
    %1675 = vmatpush1.msra.mxu0 %v1099
    %1676 = vmatprep.subr.mxu0 %v1104
    %1677 = vmatpush1.msra.mxu0 %v1103
    %1678 = vmatprep.subr.mxu0 %v1108
    %1679 = vmatpush1.msra.mxu0 %v1107
    %1680 = vmatprep.subr.mxu0 %v1112
    %1681 = vmatpush1.msra.mxu0 %v1111
    %1682 = vmatprep.subr.mxu0 %v1116
    %1683 = vmatpush1.msra.mxu0 %v1115
    %1684 = vmatprep.subr.mxu0 %v1120
    %1685 = vmatpush1.msra.mxu0 %v1119
    %1686 = vmatprep.subr.mxu0 %v1124
    %1687 = vmatpush1.msra.mxu0 %v1123
    %1688 = vmatprep.subr.mxu0 %v1128
    %1689 = vmatpush1.msra.mxu0 %v1127
    %1690 = vmatprep.subr.mxu0 %v1132
    %1691 = vmatpush1.msra.mxu0 %v1131
    %1692 = vmatprep.subr.mxu0 %v1136
    %1693 = vmatpush1.msra.mxu0 %v1135
    %1694 = vmatprep.subr.mxu0 %v1140
    %1695 = vmatpush1.msra.mxu0 %v1139
    %1696 = vmatprep.subr.mxu0 %v1144
    %1697 = vmatpush1.msra.mxu0 %v1143
    %1698 = vmatprep.subr.mxu0 %v1148
    %1699 = vmatpush1.msra.mxu0 %v1147
    %1700 = vmatprep.subr.mxu0 %v1152
    %1701 = vmatpush1.msra.mxu0 %v1151
    %1702 = vmatprep.subr.mxu0 %v1156
    %1703 = vmatpush1.msra.mxu0 %v1155
    %1704 = vmatprep.subr.mxu0 %v1160
    %1705 = vmatpush1.msra.mxu0 %v1159
    %1706 = vmatprep.subr.mxu0 %v1164
    %1707 = vmatpush1.msra.mxu0 %v1163
    %1708 = vmatprep.subr.mxu0 %v1168
    %1709 = vmatpush1.msra.mxu0 %v1167
    %1710 = vmatprep.subr.mxu0 %v1172
    %1711 = vmatpush1.msra.mxu0 %v1171
    %1712 = vmatprep.subr.mxu0 %v1176
    %1713 = vmatpush1.msra.mxu0 %v1175
    %1714 = vmatprep.subr.mxu0 %v1180
    %1715 = vmatpush1.msra.mxu0 %v1179
    %1716 = vmatprep.subr.mxu0 %v1184
    %1717 = vmatpush1.msra.mxu0 %v1183
    %1718 = vmatprep.subr.mxu0 %v1188
    %1719 = vmatpush1.msra.mxu0 %v1187
    %1720 = vmatprep.subr.mxu0 %v1192
    %1721 = vmatpush1.msra.mxu0 %v1191
    %1722 = vmatprep.subr.mxu0 %v1196
    %1723 = vmatpush1.msra.mxu0 %v1195
    %1724 = vmatprep.subr.mxu0 %v1200
    %1725 = vmatpush1.msra.mxu0 %v1199
    %1726 = vmatprep.subr.mxu0 %v1204
    %1727 = vmatpush1.msra.mxu0 %v1203
    %1728 = vmatprep.subr.mxu0 %v1208
    %1729 = vmatpush1.msra.mxu0 %v1207
    %1730 = vmatprep.mubr.f32.mxu0 %v1396
    %1731 = vmatmul.mubr.f32.gmra.mrb[0].mxu0 %v1594
    %v1732 = vpop.f32.mrb[0].mxu0
    %v1733 = vadd.f32 %v1222, %v1732
    %v1734 = vpop.f32.mrb[0].mxu0
    %v1735 = vadd.f32 %v1226, %v1734
    %1736 = vdwg.mxu0
    %v1737 = vxor.u32 %v1662, 2147483648
    %v1738 = vmul.f32 %v1737, 1.442695
    %v1739 = vpow.pop %v1738
    %v1740 = vadd.f32 %v1739, 1.0
    %v1741 = vrcp.pop %v1740
    %v1742 = vmul.f32 1.0, %v1741
    %v1743 = vxor.u32 %v1664, 2147483648
    %v1744 = vmul.f32 %v1743, 1.442695
    %v1745 = vpow.pop %v1744
    %v1746 = vadd.f32 %v1745, 1.0
    %v1747 = vrcp.pop %v1746
    %v1748 = vmul.f32 1.0, %v1747
    %v1749 = vtanh.pop %v1733
    %v1750 = vxor.u32 %v1735, 2147483648
    %v1751 = vmul.f32 %v1750, 1.442695
    %v1752 = vpow.pop %v1751
    %v1753 = vadd.f32 %v1752, 1.0
    %v1754 = vrcp.pop %v1753
    %v1755 = vmul.f32 1.0, %v1754
    %v1756 = vmul.f32 %v1748, %v1394
    %v1757 = vmul.f32 %v1742, %v1749
    %v1758 = vadd.f32 %v1756, %v1757
    %v1759 = vtanh.pop %v1758
    %v1760 = vmul.f32 %v1755, %v1759
    %s1761 = scalar_lea.vmem [#allocation2], 16
    %v1762 = vld [vmem:[%s1761] sm:$0xff]
    %1763 = vmatprep.subr.mxu0 %v822
    %1764 = vmatpush1.msra.mxu0 %v821
    %1765 = vmatprep.subr.mxu0 %v826
    %1766 = vmatpush1.msra.mxu0 %v825
    %1767 = vmatprep.subr.mxu0 %v830
    %1768 = vmatpush1.msra.mxu0 %v829
    %1769 = vmatprep.subr.mxu0 %v834
    %1770 = vmatpush1.msra.mxu0 %v833
    %1771 = vmatprep.subr.mxu0 %v838
    %1772 = vmatpush1.msra.mxu0 %v837
    %1773 = vmatprep.subr.mxu0 %v842
    %1774 = vmatpush1.msra.mxu0 %v841
    %1775 = vmatprep.subr.mxu0 %v846
    %1776 = vmatpush1.msra.mxu0 %v845
    %1777 = vmatprep.subr.mxu0 %v850
    %1778 = vmatpush1.msra.mxu0 %v849
    %1779 = vmatprep.subr.mxu0 %v854
    %1780 = vmatpush1.msra.mxu0 %v853
    %1781 = vmatprep.subr.mxu0 %v858
    %1782 = vmatpush1.msra.mxu0 %v857
    %1783 = vmatprep.subr.mxu0 %v862
    %1784 = vmatpush1.msra.mxu0 %v861
    %1785 = vmatprep.subr.mxu0 %v866
    %1786 = vmatpush1.msra.mxu0 %v865
    %1787 = vmatprep.subr.mxu0 %v870
    %1788 = vmatpush1.msra.mxu0 %v869
    %1789 = vmatprep.subr.mxu0 %v874
    %1790 = vmatpush1.msra.mxu0 %v873
    %1791 = vmatprep.subr.mxu0 %v878
    %1792 = vmatpush1.msra.mxu0 %v877
    %1793 = vmatprep.subr.mxu0 %v882
    %1794 = vmatpush1.msra.mxu0 %v881
    %1795 = vmatprep.subr.mxu0 0.0
    %1796 = vmatpush1.msra.mxu0 0.0
    %1797 = vmatprep.subr.mxu0 0.0
    %1798 = vmatpush1.msra.mxu0 0.0
    %1799 = vmatprep.subr.mxu0 0.0
    %1800 = vmatpush1.msra.mxu0 0.0
    %1801 = vmatprep.subr.mxu0 0.0
    %1802 = vmatpush1.msra.mxu0 0.0
    %1803 = vmatprep.subr.mxu0 0.0
    %1804 = vmatpush1.msra.mxu0 0.0
    %1805 = vmatprep.subr.mxu0 0.0
    %1806 = vmatpush1.msra.mxu0 0.0
    %1807 = vmatprep.subr.mxu0 0.0
    %1808 = vmatpush1.msra.mxu0 0.0
    %1809 = vmatprep.subr.mxu0 0.0
    %1810 = vmatpush1.msra.mxu0 0.0
    %1811 = vmatprep.subr.mxu0 0.0
    %1812 = vmatpush1.msra.mxu0 0.0
    %1813 = vmatprep.subr.mxu0 0.0
    %1814 = vmatpush1.msra.mxu0 0.0
    %1815 = vmatprep.subr.mxu0 0.0
    %1816 = vmatpush1.msra.mxu0 0.0
    %1817 = vmatprep.subr.mxu0 0.0
    %1818 = vmatpush1.msra.mxu0 0.0
    %1819 = vmatprep.subr.mxu0 0.0
    %1820 = vmatpush1.msra.mxu0 0.0
    %1821 = vmatprep.subr.mxu0 0.0
    %1822 = vmatpush1.msra.mxu0 0.0
    %1823 = vmatprep.subr.mxu0 0.0
    %1824 = vmatpush1.msra.mxu0 0.0
    %1825 = vmatprep.subr.mxu0 0.0
    %1826 = vmatpush1.msra.mxu0 0.0
    %1827 = vmatprep.mubr.f32.mxu0 0.0
    %1828 = vmatmul.mubr.f32.gmra.mrb[0].mxu0 %v1594
    %v1829 = vpop.f32.mrb[0].mxu0
    %v1830 = vadd.f32 0.0, %v1829
    %v1831 = vpop.f32.mrb[0].mxu0
    %v1832 = vadd.f32 0.0, %v1831
    %1833 = vdwg.mxu0
    %1834 = vmatprep.subr.mxu0 %v824
    %1835 = vmatpush1.msra.mxu0 %v823
    %1836 = vmatprep.subr.mxu0 %v828
    %1837 = vmatpush1.msra.mxu0 %v827
    %1838 = vmatprep.subr.mxu0 %v832
    %1839 = vmatpush1.msra.mxu0 %v831
    %1840 = vmatprep.subr.mxu0 %v836
    %1841 = vmatpush1.msra.mxu0 %v835
    %1842 = vmatprep.subr.mxu0 %v840
    %1843 = vmatpush1.msra.mxu0 %v839
    %1844 = vmatprep.subr.mxu0 %v844
    %1845 = vmatpush1.msra.mxu0 %v843
    %1846 = vmatprep.subr.mxu0 %v848
    %1847 = vmatpush1.msra.mxu0 %v847
    %1848 = vmatprep.subr.mxu0 %v852
    %1849 = vmatpush1.msra.mxu0 %v851
    %1850 = vmatprep.subr.mxu0 %v856
    %1851 = vmatpush1.msra.mxu0 %v855
    %1852 = vmatprep.subr.mxu0 %v860
    %1853 = vmatpush1.msra.mxu0 %v859
    %1854 = vmatprep.subr.mxu0 %v864
    %1855 = vmatpush1.msra.mxu0 %v863
    %1856 = vmatprep.subr.mxu0 %v868
    %1857 = vmatpush1.msra.mxu0 %v867
    %1858 = vmatprep.subr.mxu0 %v872
    %1859 = vmatpush1.msra.mxu0 %v871
    %1860 = vmatprep.subr.mxu0 %v876
    %1861 = vmatpush1.msra.mxu0 %v875
    %1862 = vmatprep.subr.mxu0 %v880
    %1863 = vmatpush1.msra.mxu0 %v879
    %1864 = vmatprep.subr.mxu0 %v884
    %1865 = vmatpush1.msra.mxu0 %v883
    %1866 = vmatprep.subr.mxu0 0.0
    %1867 = vmatpush1.msra.mxu0 0.0
    %1868 = vmatprep.subr.mxu0 0.0
    %1869 = vmatpush1.msra.mxu0 0.0
    %1870 = vmatprep.subr.mxu0 0.0
    %1871 = vmatpush1.msra.mxu0 0.0
    %1872 = vmatprep.subr.mxu0 0.0
    %1873 = vmatpush1.msra.mxu0 0.0
    %1874 = vmatprep.subr.mxu0 0.0
    %1875 = vmatpush1.msra.mxu0 0.0
    %1876 = vmatprep.subr.mxu0 0.0
    %1877 = vmatpush1.msra.mxu0 0.0
    %1878 = vmatprep.subr.mxu0 0.0
    %1879 = vmatpush1.msra.mxu0 0.0
    %1880 = vmatprep.subr.mxu0 0.0
    %1881 = vmatpush1.msra.mxu0 0.0
    %1882 = vmatprep.subr.mxu0 0.0
    %1883 = vmatpush1.msra.mxu0 0.0
    %1884 = vmatprep.subr.mxu0 0.0
    %1885 = vmatpush1.msra.mxu0 0.0
    %1886 = vmatprep.subr.mxu0 0.0
    %1887 = vmatpush1.msra.mxu0 0.0
    %1888 = vmatprep.subr.mxu0 0.0
    %1889 = vmatpush1.msra.mxu0 0.0
    %1890 = vmatprep.subr.mxu0 0.0
    %1891 = vmatpush1.msra.mxu0 0.0
    %1892 = vmatprep.subr.mxu0 0.0
    %1893 = vmatpush1.msra.mxu0 0.0
    %1894 = vmatprep.subr.mxu0 0.0
    %1895 = vmatpush1.msra.mxu0 0.0
    %1896 = vmatprep.subr.mxu0 0.0
    %1897 = vmatpush1.msra.mxu0 0.0
    %1898 = vmatprep.mubr.f32.mxu0 0.0
    %1899 = vmatmul.mubr.f32.gmra.mrb[0].mxu0 %v1594
    %v1900 = vpop.f32.mrb[0].mxu0
    %v1901 = vadd.f32 0.0, %v1900
    %v1902 = vpop.f32.mrb[0].mxu0
    %v1903 = vadd.f32 0.0, %v1902
    %1904 = vdwg.mxu0
    %v1909 = vcombine.low %v1830, %v1832
    %v1910 = vcombine.low %v1901, %v1903
    %v1912 = vunpack.c.l.s4 1983009808
    %v1913 = vunpack.c.0.s8 %v1912
    %v1914 = vlaneseq
    %v1915 = vshrl.u32 %v1914, 7
    %v1916 = vsub.s32 %v1913, %v1915
    %v1917 = vrot.slane %v1909, %v1916
    %v1919 = vunpack.c.l.s4 1983009808
    %v1920 = vunpack.c.0.s8 %v1919
    %v1921 = vlaneseq
    %v1922 = vshrl.u32 %v1921, 7
    %v1923 = vsub.s32 %v1920, %v1922
    %v1924 = vrot.slane %v1910, %v1923
    %v1925 = vcombine.low %v1917, %v1924
    %v1927 = vadd.f32 %v1762, %v1925
    %v1928 = vxor.u32 %v1927, 2147483648
    %v1929 = vmul.f32 %v1928, 1.442695
    %v1930 = vpow.pop %v1929
    %v1931 = vadd.f32 %v1930, 1.0
    %v1932 = vrcp.pop %v1931
    %v1933 = vmul.f32 1.0, %v1932
    %v1935 = vrot.slane %v1927, 2
    %v1937 = vxor.u32 %v1935, 2147483648
    %v1938 = vmul.f32 %v1937, 1.442695
    %v1939 = vpow.pop %v1938
    %v1940 = vadd.f32 %v1939, 1.0
    %v1941 = vrcp.pop %v1940
    %v1942 = vmul.f32 1.0, %v1941
    %v1943 = vrot.slane %v1927, 4
    %v1945 = vtanh.pop %v1943
    %v1946 = vrot.slane %v1927, 6
    %v1948 = vxor.u32 %v1946, 2147483648
    %v1949 = vmul.f32 %v1948, 1.442695
    %v1950 = vpow.pop %v1949
    %v1951 = vadd.f32 %v1950, 1.0
    %v1952 = vrcp.pop %v1951
    %v1953 = vmul.f32 1.0, %v1952
    %v1954 = vmul.f32 %v1942, %v1592
    %v1955 = vmul.f32 %v1933, %v1945
    %v1956 = vadd.f32 %v1954, %v1955
    %v1957 = vtanh.pop %v1956
    %v1958 = vmul.f32 %v1953, %v1957
    %1959 = vmatprep.subr.mxu0 %v1082
    %1960 = vmatpush1.msra.mxu0 %v1081
    %1961 = vmatprep.subr.mxu0 %v1086
    %1962 = vmatpush1.msra.mxu0 %v1085
    %1963 = vmatprep.subr.mxu0 %v1090
    %1964 = vmatpush1.msra.mxu0 %v1089
    %1965 = vmatprep.subr.mxu0 %v1094
    %1966 = vmatpush1.msra.mxu0 %v1093
    %1967 = vmatprep.subr.mxu0 %v1098
    %1968 = vmatpush1.msra.mxu0 %v1097
    %1969 = vmatprep.subr.mxu0 %v1102
    %1970 = vmatpush1.msra.mxu0 %v1101
    %1971 = vmatprep.subr.mxu0 %v1106
    %1972 = vmatpush1.msra.mxu0 %v1105
    %1973 = vmatprep.subr.mxu0 %v1110
    %1974 = vmatpush1.msra.mxu0 %v1109
    %1975 = vmatprep.subr.mxu0 %v1114
    %1976 = vmatpush1.msra.mxu0 %v1113
    %1977 = vmatprep.subr.mxu0 %v1118
    %1978 = vmatpush1.msra.mxu0 %v1117
    %1979 = vmatprep.subr.mxu0 %v1122
    %1980 = vmatpush1.msra.mxu0 %v1121
    %1981 = vmatprep.subr.mxu0 %v1126
    %1982 = vmatpush1.msra.mxu0 %v1125
    %1983 = vmatprep.subr.mxu0 %v1130
    %1984 = vmatpush1.msra.mxu0 %v1129
    %1985 = vmatprep.subr.mxu0 %v1134
    %1986 = vmatpush1.msra.mxu0 %v1133
    %1987 = vmatprep.subr.mxu0 %v1138
    %1988 = vmatpush1.msra.mxu0 %v1137
    %1989 = vmatprep.subr.mxu0 %v1142
    %1990 = vmatpush1.msra.mxu0 %v1141
    %1991 = vmatprep.subr.mxu0 %v1146
    %1992 = vmatpush1.msra.mxu0 %v1145
    %1993 = vmatprep.subr.mxu0 %v1150
    %1994 = vmatpush1.msra.mxu0 %v1149
    %1995 = vmatprep.subr.mxu0 %v1154
    %1996 = vmatpush1.msra.mxu0 %v1153
    %1997 = vmatprep.subr.mxu0 %v1158
    %1998 = vmatpush1.msra.mxu0 %v1157
    %1999 = vmatprep.subr.mxu0 %v1162
    %2000 = vmatpush1.msra.mxu0 %v1161
    %2001 = vmatprep.subr.mxu0 %v1166
    %2002 = vmatpush1.msra.mxu0 %v1165
    %2003 = vmatprep.subr.mxu0 %v1170
    %2004 = vmatpush1.msra.mxu0 %v1169
    %2005 = vmatprep.subr.mxu0 %v1174
    %2006 = vmatpush1.msra.mxu0 %v1173
    %2007 = vmatprep.subr.mxu0 %v1178
    %2008 = vmatpush1.msra.mxu0 %v1177
    %2009 = vmatprep.subr.mxu0 %v1182
    %2010 = vmatpush1.msra.mxu0 %v1181
    %2011 = vmatprep.subr.mxu0 %v1186
    %2012 = vmatpush1.msra.mxu0 %v1185
    %2013 = vmatprep.subr.mxu0 %v1190
    %2014 = vmatpush1.msra.mxu0 %v1189
    %2015 = vmatprep.subr.mxu0 %v1194
    %2016 = vmatpush1.msra.mxu0 %v1193
    %2017 = vmatprep.subr.mxu0 %v1198
    %2018 = vmatpush1.msra.mxu0 %v1197
    %2019 = vmatprep.subr.mxu0 %v1202
    %2020 = vmatpush1.msra.mxu0 %v1201
    %2021 = vmatprep.subr.mxu0 %v1206
    %2022 = vmatpush1.msra.mxu0 %v1205
    %2023 = vmatprep.mubr.f32.mxu0 %v1760
    %2024 = vmatmul.mubr.f32.gmra.mrb[0].mxu0 %v1958
    %v2025 = vpop.f32.mrb[0].mxu0
    %v2026 = vadd.f32 %v1214, %v2025
    %v2027 = vpop.f32.mrb[0].mxu0
    %v2028 = vadd.f32 %v1218, %v2027
    %2029 = vdwg.mxu0
    %2030 = vmatprep.subr.mxu0 %v1084
    %2031 = vmatpush1.msra.mxu0 %v1083
    %2032 = vmatprep.subr.mxu0 %v1088
    %2033 = vmatpush1.msra.mxu0 %v1087
    %2034 = vmatprep.subr.mxu0 %v1092
    %2035 = vmatpush1.msra.mxu0 %v1091
    %2036 = vmatprep.subr.mxu0 %v1096
    %2037 = vmatpush1.msra.mxu0 %v1095
    %2038 = vmatprep.subr.mxu0 %v1100
    %2039 = vmatpush1.msra.mxu0 %v1099
    %2040 = vmatprep.subr.mxu0 %v1104
    %2041 = vmatpush1.msra.mxu0 %v1103
    %2042 = vmatprep.subr.mxu0 %v1108
    %2043 = vmatpush1.msra.mxu0 %v1107
    %2044 = vmatprep.subr.mxu0 %v1112
    %2045 = vmatpush1.msra.mxu0 %v1111
    %2046 = vmatprep.subr.mxu0 %v1116
    %2047 = vmatpush1.msra.mxu0 %v1115
    %2048 = vmatprep.subr.mxu0 %v1120
    %2049 = vmatpush1.msra.mxu0 %v1119
    %2050 = vmatprep.subr.mxu0 %v1124
    %2051 = vmatpush1.msra.mxu0 %v1123
    %2052 = vmatprep.subr.mxu0 %v1128
    %2053 = vmatpush1.msra.mxu0 %v1127
    %2054 = vmatprep.subr.mxu0 %v1132
    %2055 = vmatpush1.msra.mxu0 %v1131
    %2056 = vmatprep.subr.mxu0 %v1136
    %2057 = vmatpush1.msra.mxu0 %v1135
    %2058 = vmatprep.subr.mxu0 %v1140
    %2059 = vmatpush1.msra.mxu0 %v1139
    %2060 = vmatprep.subr.mxu0 %v1144
    %2061 = vmatpush1.msra.mxu0 %v1143
    %2062 = vmatprep.subr.mxu0 %v1148
    %2063 = vmatpush1.msra.mxu0 %v1147
    %2064 = vmatprep.subr.mxu0 %v1152
    %2065 = vmatpush1.msra.mxu0 %v1151
    %2066 = vmatprep.subr.mxu0 %v1156
    %2067 = vmatpush1.msra.mxu0 %v1155
    %2068 = vmatprep.subr.mxu0 %v1160
    %2069 = vmatpush1.msra.mxu0 %v1159
    %2070 = vmatprep.subr.mxu0 %v1164
    %2071 = vmatpush1.msra.mxu0 %v1163
    %2072 = vmatprep.subr.mxu0 %v1168
    %2073 = vmatpush1.msra.mxu0 %v1167
    %2074 = vmatprep.subr.mxu0 %v1172
    %2075 = vmatpush1.msra.mxu0 %v1171
    %2076 = vmatprep.subr.mxu0 %v1176
    %2077 = vmatpush1.msra.mxu0 %v1175
    %2078 = vmatprep.subr.mxu0 %v1180
    %2079 = vmatpush1.msra.mxu0 %v1179
    %2080 = vmatprep.subr.mxu0 %v1184
    %2081 = vmatpush1.msra.mxu0 %v1183
    %2082 = vmatprep.subr.mxu0 %v1188
    %2083 = vmatpush1.msra.mxu0 %v1187
    %2084 = vmatprep.subr.mxu0 %v1192
    %2085 = vmatpush1.msra.mxu0 %v1191
    %2086 = vmatprep.subr.mxu0 %v1196
    %2087 = vmatpush1.msra.mxu0 %v1195
    %2088 = vmatprep.subr.mxu0 %v1200
    %2089 = vmatpush1.msra.mxu0 %v1199
    %2090 = vmatprep.subr.mxu0 %v1204
    %2091 = vmatpush1.msra.mxu0 %v1203
    %2092 = vmatprep.subr.mxu0 %v1208
    %2093 = vmatpush1.msra.mxu0 %v1207
    %2094 = vmatprep.mubr.f32.mxu0 %v1760
    %2095 = vmatmul.mubr.f32.gmra.mrb[0].mxu0 %v1958
    %v2096 = vpop.f32.mrb[0].mxu0
    %v2097 = vadd.f32 %v1222, %v2096
    %v2098 = vpop.f32.mrb[0].mxu0
    %v2099 = vadd.f32 %v1226, %v2098
    %2100 = vdwg.mxu0
    %v2101 = vxor.u32 %v2026, 2147483648
    %v2102 = vmul.f32 %v2101, 1.442695
    %v2103 = vpow.pop %v2102
    %v2104 = vadd.f32 %v2103, 1.0
    %v2105 = vrcp.pop %v2104
    %v2106 = vmul.f32 1.0, %v2105
    %v2107 = vxor.u32 %v2028, 2147483648
    %v2108 = vmul.f32 %v2107, 1.442695
    %v2109 = vpow.pop %v2108
    %v2110 = vadd.f32 %v2109, 1.0
    %v2111 = vrcp.pop %v2110
    %v2112 = vmul.f32 1.0, %v2111
    %v2113 = vtanh.pop %v2097
    %v2114 = vxor.u32 %v2099, 2147483648
    %v2115 = vmul.f32 %v2114, 1.442695
    %v2116 = vpow.pop %v2115
    %v2117 = vadd.f32 %v2116, 1.0
    %v2118 = vrcp.pop %v2117
    %v2119 = vmul.f32 1.0, %v2118
    %v2120 = vmul.f32 %v2112, %v1758
    %v2121 = vmul.f32 %v2106, %v2113
    %v2122 = vadd.f32 %v2120, %v2121
    %v2123 = vtanh.pop %v2122
    %v2124 = vmul.f32 %v2119, %v2123
    %s2125 = scalar_lea.vmem [#allocation2], 24
    %v2126 = vld [vmem:[%s2125] sm:$0xff]
    %2127 = vmatprep.subr.mxu0 %v822
    %2128 = vmatpush1.msra.mxu0 %v821
    %2129 = vmatprep.subr.mxu0 %v826
    %2130 = vmatpush1.msra.mxu0 %v825
    %2131 = vmatprep.subr.mxu0 %v830
    %2132 = vmatpush1.msra.mxu0 %v829
    %2133 = vmatprep.subr.mxu0 %v834
    %2134 = vmatpush1.msra.mxu0 %v833
    %2135 = vmatprep.subr.mxu0 %v838
    %2136 = vmatpush1.msra.mxu0 %v837
    %2137 = vmatprep.subr.mxu0 %v842
    %2138 = vmatpush1.msra.mxu0 %v841
    %2139 = vmatprep.subr.mxu0 %v846
    %2140 = vmatpush1.msra.mxu0 %v845
    %2141 = vmatprep.subr.mxu0 %v850
    %2142 = vmatpush1.msra.mxu0 %v849
    %2143 = vmatprep.subr.mxu0 %v854
    %2144 = vmatpush1.msra.mxu0 %v853
    %2145 = vmatprep.subr.mxu0 %v858
    %2146 = vmatpush1.msra.mxu0 %v857
    %2147 = vmatprep.subr.mxu0 %v862
    %2148 = vmatpush1.msra.mxu0 %v861
    %2149 = vmatprep.subr.mxu0 %v866
    %2150 = vmatpush1.msra.mxu0 %v865
    %2151 = vmatprep.subr.mxu0 %v870
    %2152 = vmatpush1.msra.mxu0 %v869
    %2153 = vmatprep.subr.mxu0 %v874
    %2154 = vmatpush1.msra.mxu0 %v873
    %2155 = vmatprep.subr.mxu0 %v878
    %2156 = vmatpush1.msra.mxu0 %v877
    %2157 = vmatprep.subr.mxu0 %v882
    %2158 = vmatpush1.msra.mxu0 %v881
    %2159 = vmatprep.subr.mxu0 0.0
    %2160 = vmatpush1.msra.mxu0 0.0
    %2161 = vmatprep.subr.mxu0 0.0
    %2162 = vmatpush1.msra.mxu0 0.0
    %2163 = vmatprep.subr.mxu0 0.0
    %2164 = vmatpush1.msra.mxu0 0.0
    %2165 = vmatprep.subr.mxu0 0.0
    %2166 = vmatpush1.msra.mxu0 0.0
    %2167 = vmatprep.subr.mxu0 0.0
    %2168 = vmatpush1.msra.mxu0 0.0
    %2169 = vmatprep.subr.mxu0 0.0
    %2170 = vmatpush1.msra.mxu0 0.0
    %2171 = vmatprep.subr.mxu0 0.0
    %2172 = vmatpush1.msra.mxu0 0.0
    %2173 = vmatprep.subr.mxu0 0.0
    %2174 = vmatpush1.msra.mxu0 0.0
    %2175 = vmatprep.subr.mxu0 0.0
    %2176 = vmatpush1.msra.mxu0 0.0
    %2177 = vmatprep.subr.mxu0 0.0
    %2178 = vmatpush1.msra.mxu0 0.0
    %2179 = vmatprep.subr.mxu0 0.0
    %2180 = vmatpush1.msra.mxu0 0.0
    %2181 = vmatprep.subr.mxu0 0.0
    %2182 = vmatpush1.msra.mxu0 0.0
    %2183 = vmatprep.subr.mxu0 0.0
    %2184 = vmatpush1.msra.mxu0 0.0
    %2185 = vmatprep.subr.mxu0 0.0
    %2186 = vmatpush1.msra.mxu0 0.0
    %2187 = vmatprep.subr.mxu0 0.0
    %2188 = vmatpush1.msra.mxu0 0.0
    %2189 = vmatprep.subr.mxu0 0.0
    %2190 = vmatpush1.msra.mxu0 0.0
    %2191 = vmatprep.mubr.f32.mxu0 0.0
    %2192 = vmatmul.mubr.f32.gmra.mrb[0].mxu0 %v1958
    %v2193 = vpop.f32.mrb[0].mxu0
    %v2194 = vadd.f32 0.0, %v2193
    %v2195 = vpop.f32.mrb[0].mxu0
    %v2196 = vadd.f32 0.0, %v2195
    %2197 = vdwg.mxu0
    %2198 = vmatprep.subr.mxu0 %v824
    %2199 = vmatpush1.msra.mxu0 %v823
    %2200 = vmatprep.subr.mxu0 %v828
    %2201 = vmatpush1.msra.mxu0 %v827
    %2202 = vmatprep.subr.mxu0 %v832
    %2203 = vmatpush1.msra.mxu0 %v831
    %2204 = vmatprep.subr.mxu0 %v836
    %2205 = vmatpush1.msra.mxu0 %v835
    %2206 = vmatprep.subr.mxu0 %v840
    %2207 = vmatpush1.msra.mxu0 %v839
    %2208 = vmatprep.subr.mxu0 %v844
    %2209 = vmatpush1.msra.mxu0 %v843
    %2210 = vmatprep.subr.mxu0 %v848
    %2211 = vmatpush1.msra.mxu0 %v847
    %2212 = vmatprep.subr.mxu0 %v852
    %2213 = vmatpush1.msra.mxu0 %v851
    %2214 = vmatprep.subr.mxu0 %v856
    %2215 = vmatpush1.msra.mxu0 %v855
    %2216 = vmatprep.subr.mxu0 %v860
    %2217 = vmatpush1.msra.mxu0 %v859
    %2218 = vmatprep.subr.mxu0 %v864
    %2219 = vmatpush1.msra.mxu0 %v863
    %2220 = vmatprep.subr.mxu0 %v868
    %2221 = vmatpush1.msra.mxu0 %v867
    %2222 = vmatprep.subr.mxu0 %v872
    %2223 = vmatpush1.msra.mxu0 %v871
    %2224 = vmatprep.subr.mxu0 %v876
    %2225 = vmatpush1.msra.mxu0 %v875
    %2226 = vmatprep.subr.mxu0 %v880
    %2227 = vmatpush1.msra.mxu0 %v879
    %2228 = vmatprep.subr.mxu0 %v884
    %2229 = vmatpush1.msra.mxu0 %v883
    %2230 = vmatprep.subr.mxu0 0.0
    %2231 = vmatpush1.msra.mxu0 0.0
    %2232 = vmatprep.subr.mxu0 0.0
    %2233 = vmatpush1.msra.mxu0 0.0
    %2234 = vmatprep.subr.mxu0 0.0
    %2235 = vmatpush1.msra.mxu0 0.0
    %2236 = vmatprep.subr.mxu0 0.0
    %2237 = vmatpush1.msra.mxu0 0.0
    %2238 = vmatprep.subr.mxu0 0.0
    %2239 = vmatpush1.msra.mxu0 0.0
    %2240 = vmatprep.subr.mxu0 0.0
    %2241 = vmatpush1.msra.mxu0 0.0
    %2242 = vmatprep.subr.mxu0 0.0
    %2243 = vmatpush1.msra.mxu0 0.0
    %2244 = vmatprep.subr.mxu0 0.0
    %2245 = vmatpush1.msra.mxu0 0.0
    %2246 = vmatprep.subr.mxu0 0.0
    %2247 = vmatpush1.msra.mxu0 0.0
    %2248 = vmatprep.subr.mxu0 0.0
    %2249 = vmatpush1.msra.mxu0 0.0
    %2250 = vmatprep.subr.mxu0 0.0
    %2251 = vmatpush1.msra.mxu0 0.0
    %2252 = vmatprep.subr.mxu0 0.0
    %2253 = vmatpush1.msra.mxu0 0.0
    %2254 = vmatprep.subr.mxu0 0.0
    %2255 = vmatpush1.msra.mxu0 0.0
    %2256 = vmatprep.subr.mxu0 0.0
    %2257 = vmatpush1.msra.mxu0 0.0
    %2258 = vmatprep.subr.mxu0 0.0
    %2259 = vmatpush1.msra.mxu0 0.0
    %2260 = vmatprep.subr.mxu0 0.0
    %2261 = vmatpush1.msra.mxu0 0.0
    %2262 = vmatprep.mubr.f32.mxu0 0.0
    %2263 = vmatmul.mubr.f32.gmra.mrb[0].mxu0 %v1958
    %v2264 = vpop.f32.mrb[0].mxu0
    %v2265 = vadd.f32 0.0, %v2264
    %v2266 = vpop.f32.mrb[0].mxu0
    %v2267 = vadd.f32 0.0, %v2266
    %2268 = vdwg.mxu0
    %v2273 = vcombine.low %v2194, %v2196
    %v2274 = vcombine.low %v2265, %v2267
    %v2276 = vunpack.c.l.s4 1983009808
    %v2277 = vunpack.c.0.s8 %v2276
    %v2278 = vlaneseq
    %v2279 = vshrl.u32 %v2278, 7
    %v2280 = vsub.s32 %v2277, %v2279
    %v2281 = vrot.slane %v2273, %v2280
    %v2283 = vunpack.c.l.s4 1983009808
    %v2284 = vunpack.c.0.s8 %v2283
    %v2285 = vlaneseq
    %v2286 = vshrl.u32 %v2285, 7
    %v2287 = vsub.s32 %v2284, %v2286
    %v2288 = vrot.slane %v2274, %v2287
    %v2289 = vcombine.low %v2281, %v2288
    %v2291 = vadd.f32 %v2126, %v2289
    %v2292 = vxor.u32 %v2291, 2147483648
    %v2293 = vmul.f32 %v2292, 1.442695
    %v2294 = vpow.pop %v2293
    %v2295 = vadd.f32 %v2294, 1.0
    %v2296 = vrcp.pop %v2295
    %v2297 = vmul.f32 1.0, %v2296
    %v2299 = vrot.slane %v2291, 2
    %v2301 = vxor.u32 %v2299, 2147483648
    %v2302 = vmul.f32 %v2301, 1.442695
    %v2303 = vpow.pop %v2302
    %v2304 = vadd.f32 %v2303, 1.0
    %v2305 = vrcp.pop %v2304
    %v2306 = vmul.f32 1.0, %v2305
    %v2307 = vrot.slane %v2291, 4
    %v2309 = vtanh.pop %v2307
    %v2310 = vrot.slane %v2291, 6
    %v2312 = vxor.u32 %v2310, 2147483648
    %v2313 = vmul.f32 %v2312, 1.442695
    %v2314 = vpow.pop %v2313
    %v2315 = vadd.f32 %v2314, 1.0
    %v2316 = vrcp.pop %v2315
    %v2317 = vmul.f32 1.0, %v2316
    %v2318 = vmul.f32 %v2306, %v1956
    %v2319 = vmul.f32 %v2297, %v2309
    %v2320 = vadd.f32 %v2318, %v2319
    %v2321 = vtanh.pop %v2320
    %v2322 = vmul.f32 %v2317, %v2321
    %2323 = vmatprep.subr.mxu0 %v1082
    %2324 = vmatpush1.msra.mxu0 %v1081
    %2325 = vmatprep.subr.mxu0 %v1086
    %2326 = vmatpush1.msra.mxu0 %v1085
    %2327 = vmatprep.subr.mxu0 %v1090
    %2328 = vmatpush1.msra.mxu0 %v1089
    %2329 = vmatprep.subr.mxu0 %v1094
    %2330 = vmatpush1.msra.mxu0 %v1093
    %2331 = vmatprep.subr.mxu0 %v1098
    %2332 = vmatpush1.msra.mxu0 %v1097
    %2333 = vmatprep.subr.mxu0 %v1102
    %2334 = vmatpush1.msra.mxu0 %v1101
    %2335 = vmatprep.subr.mxu0 %v1106
    %2336 = vmatpush1.msra.mxu0 %v1105
    %2337 = vmatprep.subr.mxu0 %v1110
    %2338 = vmatpush1.msra.mxu0 %v1109
    %2339 = vmatprep.subr.mxu0 %v1114
    %2340 = vmatpush1.msra.mxu0 %v1113
    %2341 = vmatprep.subr.mxu0 %v1118
    %2342 = vmatpush1.msra.mxu0 %v1117
    %2343 = vmatprep.subr.mxu0 %v1122
    %2344 = vmatpush1.msra.mxu0 %v1121
    %2345 = vmatprep.subr.mxu0 %v1126
    %2346 = vmatpush1.msra.mxu0 %v1125
    %2347 = vmatprep.subr.mxu0 %v1130
    %2348 = vmatpush1.msra.mxu0 %v1129
    %2349 = vmatprep.subr.mxu0 %v1134
    %2350 = vmatpush1.msra.mxu0 %v1133
    %2351 = vmatprep.subr.mxu0 %v1138
    %2352 = vmatpush1.msra.mxu0 %v1137
    %2353 = vmatprep.subr.mxu0 %v1142
    %2354 = vmatpush1.msra.mxu0 %v1141
    %2355 = vmatprep.subr.mxu0 %v1146
    %2356 = vmatpush1.msra.mxu0 %v1145
    %2357 = vmatprep.subr.mxu0 %v1150
    %2358 = vmatpush1.msra.mxu0 %v1149
    %2359 = vmatprep.subr.mxu0 %v1154
    %2360 = vmatpush1.msra.mxu0 %v1153
    %2361 = vmatprep.subr.mxu0 %v1158
    %2362 = vmatpush1.msra.mxu0 %v1157
    %2363 = vmatprep.subr.mxu0 %v1162
    %2364 = vmatpush1.msra.mxu0 %v1161
    %2365 = vmatprep.subr.mxu0 %v1166
    %2366 = vmatpush1.msra.mxu0 %v1165
    %2367 = vmatprep.subr.mxu0 %v1170
    %2368 = vmatpush1.msra.mxu0 %v1169
    %2369 = vmatprep.subr.mxu0 %v1174
    %2370 = vmatpush1.msra.mxu0 %v1173
    %2371 = vmatprep.subr.mxu0 %v1178
    %2372 = vmatpush1.msra.mxu0 %v1177
    %2373 = vmatprep.subr.mxu0 %v1182
    %2374 = vmatpush1.msra.mxu0 %v1181
    %2375 = vmatprep.subr.mxu0 %v1186
    %2376 = vmatpush1.msra.mxu0 %v1185
    %2377 = vmatprep.subr.mxu0 %v1190
    %2378 = vmatpush1.msra.mxu0 %v1189
    %2379 = vmatprep.subr.mxu0 %v1194
    %2380 = vmatpush1.msra.mxu0 %v1193
    %2381 = vmatprep.subr.mxu0 %v1198
    %2382 = vmatpush1.msra.mxu0 %v1197
    %2383 = vmatprep.subr.mxu0 %v1202
    %2384 = vmatpush1.msra.mxu0 %v1201
    %2385 = vmatprep.subr.mxu0 %v1206
    %2386 = vmatpush1.msra.mxu0 %v1205
    %2387 = vmatprep.mubr.f32.mxu0 %v2124
    %2388 = vmatmul.mubr.f32.gmra.mrb[0].mxu0 %v2322
    %v2389 = vpop.f32.mrb[0].mxu0
    %v2390 = vadd.f32 %v1214, %v2389
    %v2391 = vpop.f32.mrb[0].mxu0
    %v2392 = vadd.f32 %v1218, %v2391
    %2393 = vdwg.mxu0
    %2394 = vmatprep.subr.mxu0 %v1084
    %2395 = vmatpush1.msra.mxu0 %v1083
    %2396 = vmatprep.subr.mxu0 %v1088
    %2397 = vmatpush1.msra.mxu0 %v1087
    %2398 = vmatprep.subr.mxu0 %v1092
    %2399 = vmatpush1.msra.mxu0 %v1091
    %2400 = vmatprep.subr.mxu0 %v1096
    %2401 = vmatpush1.msra.mxu0 %v1095
    %2402 = vmatprep.subr.mxu0 %v1100
    %2403 = vmatpush1.msra.mxu0 %v1099
    %2404 = vmatprep.subr.mxu0 %v1104
    %2405 = vmatpush1.msra.mxu0 %v1103
    %2406 = vmatprep.subr.mxu0 %v1108
    %2407 = vmatpush1.msra.mxu0 %v1107
    %2408 = vmatprep.subr.mxu0 %v1112
    %2409 = vmatpush1.msra.mxu0 %v1111
    %2410 = vmatprep.subr.mxu0 %v1116
    %2411 = vmatpush1.msra.mxu0 %v1115
    %2412 = vmatprep.subr.mxu0 %v1120
    %2413 = vmatpush1.msra.mxu0 %v1119
    %2414 = vmatprep.subr.mxu0 %v1124
    %2415 = vmatpush1.msra.mxu0 %v1123
    %2416 = vmatprep.subr.mxu0 %v1128
    %2417 = vmatpush1.msra.mxu0 %v1127
    %2418 = vmatprep.subr.mxu0 %v1132
    %2419 = vmatpush1.msra.mxu0 %v1131
    %2420 = vmatprep.subr.mxu0 %v1136
    %2421 = vmatpush1.msra.mxu0 %v1135
    %2422 = vmatprep.subr.mxu0 %v1140
    %2423 = vmatpush1.msra.mxu0 %v1139
    %2424 = vmatprep.subr.mxu0 %v1144
    %2425 = vmatpush1.msra.mxu0 %v1143
    %2426 = vmatprep.subr.mxu0 %v1148
    %2427 = vmatpush1.msra.mxu0 %v1147
    %2428 = vmatprep.subr.mxu0 %v1152
    %2429 = vmatpush1.msra.mxu0 %v1151
    %2430 = vmatprep.subr.mxu0 %v1156
    %2431 = vmatpush1.msra.mxu0 %v1155
    %2432 = vmatprep.subr.mxu0 %v1160
    %2433 = vmatpush1.msra.mxu0 %v1159
    %2434 = vmatprep.subr.mxu0 %v1164
    %2435 = vmatpush1.msra.mxu0 %v1163
    %2436 = vmatprep.subr.mxu0 %v1168
    %2437 = vmatpush1.msra.mxu0 %v1167
    %2438 = vmatprep.subr.mxu0 %v1172
    %2439 = vmatpush1.msra.mxu0 %v1171
    %2440 = vmatprep.subr.mxu0 %v1176
    %2441 = vmatpush1.msra.mxu0 %v1175
    %2442 = vmatprep.subr.mxu0 %v1180
    %2443 = vmatpush1.msra.mxu0 %v1179
    %2444 = vmatprep.subr.mxu0 %v1184
    %2445 = vmatpush1.msra.mxu0 %v1183
    %2446 = vmatprep.subr.mxu0 %v1188
    %2447 = vmatpush1.msra.mxu0 %v1187
    %2448 = vmatprep.subr.mxu0 %v1192
    %2449 = vmatpush1.msra.mxu0 %v1191
    %2450 = vmatprep.subr.mxu0 %v1196
    %2451 = vmatpush1.msra.mxu0 %v1195
    %2452 = vmatprep.subr.mxu0 %v1200
    %2453 = vmatpush1.msra.mxu0 %v1199
    %2454 = vmatprep.subr.mxu0 %v1204
    %2455 = vmatpush1.msra.mxu0 %v1203
    %2456 = vmatprep.subr.mxu0 %v1208
    %2457 = vmatpush1.msra.mxu0 %v1207
    %2458 = vmatprep.mubr.f32.mxu0 %v2124
    %2459 = vmatmul.mubr.f32.gmra.mrb[0].mxu0 %v2322
    %v2460 = vpop.f32.mrb[0].mxu0
    %v2461 = vadd.f32 %v1222, %v2460
    %v2462 = vpop.f32.mrb[0].mxu0
    %v2463 = vadd.f32 %v1226, %v2462
    %2464 = vdwg.mxu0
    %v2465 = vxor.u32 %v2390, 2147483648
    %v2466 = vmul.f32 %v2465, 1.442695
    %v2467 = vpow.pop %v2466
    %v2468 = vadd.f32 %v2467, 1.0
    %v2469 = vrcp.pop %v2468
    %v2470 = vmul.f32 1.0, %v2469
    %v2471 = vxor.u32 %v2392, 2147483648
    %v2472 = vmul.f32 %v2471, 1.442695
    %v2473 = vpow.pop %v2472
    %v2474 = vadd.f32 %v2473, 1.0
    %v2475 = vrcp.pop %v2474
    %v2476 = vmul.f32 1.0, %v2475
    %v2477 = vtanh.pop %v2461
    %v2478 = vxor.u32 %v2463, 2147483648
    %v2479 = vmul.f32 %v2478, 1.442695
    %v2480 = vpow.pop %v2479
    %v2481 = vadd.f32 %v2480, 1.0
    %v2482 = vrcp.pop %v2481
    %v2483 = vmul.f32 1.0, %v2482
    %v2484 = vmul.f32 %v2476, %v2122
    %v2485 = vmul.f32 %v2470, %v2477
    %v2486 = vadd.f32 %v2484, %v2485
    %v2487 = vtanh.pop %v2486
    %v2488 = vmul.f32 %v2483, %v2487
    %s2489 = scalar_lea.vmem [#allocation2], 32
    %v2490 = vld [vmem:[%s2489] sm:$0xff]
    %2491 = vmatprep.subr.mxu0 %v822
    %2492 = vmatpush1.msra.mxu0 %v821
    %2493 = vmatprep.subr.mxu0 %v826
    %2494 = vmatpush1.msra.mxu0 %v825
    %2495 = vmatprep.subr.mxu0 %v830
    %2496 = vmatpush1.msra.mxu0 %v829
    %2497 = vmatprep.subr.mxu0 %v834
    %2498 = vmatpush1.msra.mxu0 %v833
    %2499 = vmatprep.subr.mxu0 %v838
    %2500 = vmatpush1.msra.mxu0 %v837
    %2501 = vmatprep.subr.mxu0 %v842
    %2502 = vmatpush1.msra.mxu0 %v841
    %2503 = vmatprep.subr.mxu0 %v846
    %2504 = vmatpush1.msra.mxu0 %v845
    %2505 = vmatprep.subr.mxu0 %v850
    %2506 = vmatpush1.msra.mxu0 %v849
    %2507 = vmatprep.subr.mxu0 %v854
    %2508 = vmatpush1.msra.mxu0 %v853
    %2509 = vmatprep.subr.mxu0 %v858
    %2510 = vmatpush1.msra.mxu0 %v857
    %2511 = vmatprep.subr.mxu0 %v862
    %2512 = vmatpush1.msra.mxu0 %v861
    %2513 = vmatprep.subr.mxu0 %v866
    %2514 = vmatpush1.msra.mxu0 %v865
    %2515 = vmatprep.subr.mxu0 %v870
    %2516 = vmatpush1.msra.mxu0 %v869
    %2517 = vmatprep.subr.mxu0 %v874
    %2518 = vmatpush1.msra.mxu0 %v873
    %2519 = vmatprep.subr.mxu0 %v878
    %2520 = vmatpush1.msra.mxu0 %v877
    %2521 = vmatprep.subr.mxu0 %v882
    %2522 = vmatpush1.msra.mxu0 %v881
    %2523 = vmatprep.subr.mxu0 0.0
    %2524 = vmatpush1.msra.mxu0 0.0
    %2525 = vmatprep.subr.mxu0 0.0
    %2526 = vmatpush1.msra.mxu0 0.0
    %2527 = vmatprep.subr.mxu0 0.0
    %2528 = vmatpush1.msra.mxu0 0.0
    %2529 = vmatprep.subr.mxu0 0.0
    %2530 = vmatpush1.msra.mxu0 0.0
    %2531 = vmatprep.subr.mxu0 0.0
    %2532 = vmatpush1.msra.mxu0 0.0
    %2533 = vmatprep.subr.mxu0 0.0
    %2534 = vmatpush1.msra.mxu0 0.0
    %2535 = vmatprep.subr.mxu0 0.0
    %2536 = vmatpush1.msra.mxu0 0.0
    %2537 = vmatprep.subr.mxu0 0.0
    %2538 = vmatpush1.msra.mxu0 0.0
    %2539 = vmatprep.subr.mxu0 0.0
    %2540 = vmatpush1.msra.mxu0 0.0
    %2541 = vmatprep.subr.mxu0 0.0
    %2542 = vmatpush1.msra.mxu0 0.0
    %2543 = vmatprep.subr.mxu0 0.0
    %2544 = vmatpush1.msra.mxu0 0.0
    %2545 = vmatprep.subr.mxu0 0.0
    %2546 = vmatpush1.msra.mxu0 0.0
    %2547 = vmatprep.subr.mxu0 0.0
    %2548 = vmatpush1.msra.mxu0 0.0
    %2549 = vmatprep.subr.mxu0 0.0
    %2550 = vmatpush1.msra.mxu0 0.0
    %2551 = vmatprep.subr.mxu0 0.0
    %2552 = vmatpush1.msra.mxu0 0.0
    %2553 = vmatprep.subr.mxu0 0.0
    %2554 = vmatpush1.msra.mxu0 0.0
    %2555 = vmatprep.mubr.f32.mxu0 0.0
    %2556 = vmatmul.mubr.f32.gmra.mrb[0].mxu0 %v2322
    %v2557 = vpop.f32.mrb[0].mxu0
    %v2558 = vadd.f32 0.0, %v2557
    %v2559 = vpop.f32.mrb[0].mxu0
    %v2560 = vadd.f32 0.0, %v2559
    %2561 = vdwg.mxu0
    %2562 = vmatprep.subr.mxu0 %v824
    %2563 = vmatpush1.msra.mxu0 %v823
    %2564 = vmatprep.subr.mxu0 %v828
    %2565 = vmatpush1.msra.mxu0 %v827
    %2566 = vmatprep.subr.mxu0 %v832
    %2567 = vmatpush1.msra.mxu0 %v831
    %2568 = vmatprep.subr.mxu0 %v836
    %2569 = vmatpush1.msra.mxu0 %v835
    %2570 = vmatprep.subr.mxu0 %v840
    %2571 = vmatpush1.msra.mxu0 %v839
    %2572 = vmatprep.subr.mxu0 %v844
    %2573 = vmatpush1.msra.mxu0 %v843
    %2574 = vmatprep.subr.mxu0 %v848
    %2575 = vmatpush1.msra.mxu0 %v847
    %2576 = vmatprep.subr.mxu0 %v852
    %2577 = vmatpush1.msra.mxu0 %v851
    %2578 = vmatprep.subr.mxu0 %v856
    %2579 = vmatpush1.msra.mxu0 %v855
    %2580 = vmatprep.subr.mxu0 %v860
    %2581 = vmatpush1.msra.mxu0 %v859
    %2582 = vmatprep.subr.mxu0 %v864
    %2583 = vmatpush1.msra.mxu0 %v863
    %2584 = vmatprep.subr.mxu0 %v868
    %2585 = vmatpush1.msra.mxu0 %v867
    %2586 = vmatprep.subr.mxu0 %v872
    %2587 = vmatpush1.msra.mxu0 %v871
    %2588 = vmatprep.subr.mxu0 %v876
    %2589 = vmatpush1.msra.mxu0 %v875
    %2590 = vmatprep.subr.mxu0 %v880
    %2591 = vmatpush1.msra.mxu0 %v879
    %2592 = vmatprep.subr.mxu0 %v884
    %2593 = vmatpush1.msra.mxu0 %v883
    %2594 = vmatprep.subr.mxu0 0.0
    %2595 = vmatpush1.msra.mxu0 0.0
    %2596 = vmatprep.subr.mxu0 0.0
    %2597 = vmatpush1.msra.mxu0 0.0
    %2598 = vmatprep.subr.mxu0 0.0
    %2599 = vmatpush1.msra.mxu0 0.0
    %2600 = vmatprep.subr.mxu0 0.0
    %2601 = vmatpush1.msra.mxu0 0.0
    %2602 = vmatprep.subr.mxu0 0.0
    %2603 = vmatpush1.msra.mxu0 0.0
    %2604 = vmatprep.subr.mxu0 0.0
    %2605 = vmatpush1.msra.mxu0 0.0
    %2606 = vmatprep.subr.mxu0 0.0
    %2607 = vmatpush1.msra.mxu0 0.0
    %2608 = vmatprep.subr.mxu0 0.0
    %2609 = vmatpush1.msra.mxu0 0.0
    %2610 = vmatprep.subr.mxu0 0.0
    %2611 = vmatpush1.msra.mxu0 0.0
    %2612 = vmatprep.subr.mxu0 0.0
    %2613 = vmatpush1.msra.mxu0 0.0
    %2614 = vmatprep.subr.mxu0 0.0
    %2615 = vmatpush1.msra.mxu0 0.0
    %2616 = vmatprep.subr.mxu0 0.0
    %2617 = vmatpush1.msra.mxu0 0.0
    %2618 = vmatprep.subr.mxu0 0.0
    %2619 = vmatpush1.msra.mxu0 0.0
    %2620 = vmatprep.subr.mxu0 0.0
    %2621 = vmatpush1.msra.mxu0 0.0
    %2622 = vmatprep.subr.mxu0 0.0
    %2623 = vmatpush1.msra.mxu0 0.0
    %2624 = vmatprep.subr.mxu0 0.0
    %2625 = vmatpush1.msra.mxu0 0.0
    %2626 = vmatprep.mubr.f32.mxu0 0.0
    %2627 = vmatmul.mubr.f32.gmra.mrb[0].mxu0 %v2322
    %v2628 = vpop.f32.mrb[0].mxu0
    %v2629 = vadd.f32 0.0, %v2628
    %v2630 = vpop.f32.mrb[0].mxu0
    %v2631 = vadd.f32 0.0, %v2630
    %2632 = vdwg.mxu0
    %v2637 = vcombine.low %v2558, %v2560
    %v2638 = vcombine.low %v2629, %v2631
    %v2640 = vunpack.c.l.s4 1983009808
    %v2641 = vunpack.c.0.s8 %v2640
    %v2642 = vlaneseq
    %v2643 = vshrl.u32 %v2642, 7
    %v2644 = vsub.s32 %v2641, %v2643
    %v2645 = vrot.slane %v2637, %v2644
    %v2647 = vunpack.c.l.s4 1983009808
    %v2648 = vunpack.c.0.s8 %v2647
    %v2649 = vlaneseq
    %v2650 = vshrl.u32 %v2649, 7
    %v2651 = vsub.s32 %v2648, %v2650
    %v2652 = vrot.slane %v2638, %v2651
    %v2653 = vcombine.low %v2645, %v2652
    %v2655 = vadd.f32 %v2490, %v2653
    %v2656 = vxor.u32 %v2655, 2147483648
    %v2657 = vmul.f32 %v2656, 1.442695
    %v2658 = vpow.pop %v2657
    %v2659 = vadd.f32 %v2658, 1.0
    %v2660 = vrcp.pop %v2659
    %v2661 = vmul.f32 1.0, %v2660
    %v2663 = vrot.slane %v2655, 2
    %v2665 = vxor.u32 %v2663, 2147483648
    %v2666 = vmul.f32 %v2665, 1.442695
    %v2667 = vpow.pop %v2666
    %v2668 = vadd.f32 %v2667, 1.0
    %v2669 = vrcp.pop %v2668
    %v2670 = vmul.f32 1.0, %v2669
    %v2671 = vrot.slane %v2655, 4
    %v2673 = vtanh.pop %v2671
    %v2674 = vrot.slane %v2655, 6
    %v2676 = vxor.u32 %v2674, 2147483648
    %v2677 = vmul.f32 %v2676, 1.442695
    %v2678 = vpow.pop %v2677
    %v2679 = vadd.f32 %v2678, 1.0
    %v2680 = vrcp.pop %v2679
    %v2681 = vmul.f32 1.0, %v2680
    %v2682 = vmul.f32 %v2670, %v2320
    %v2683 = vmul.f32 %v2661, %v2673
    %v2684 = vadd.f32 %v2682, %v2683
    %v2685 = vtanh.pop %v2684
    %v2686 = vmul.f32 %v2681, %v2685
    %2687 = vmatprep.subr.mxu0 %v1082
    %2688 = vmatpush1.msra.mxu0 %v1081
    %2689 = vmatprep.subr.mxu0 %v1086
    %2690 = vmatpush1.msra.mxu0 %v1085
    %2691 = vmatprep.subr.mxu0 %v1090
    %2692 = vmatpush1.msra.mxu0 %v1089
    %2693 = vmatprep.subr.mxu0 %v1094
    %2694 = vmatpush1.msra.mxu0 %v1093
    %2695 = vmatprep.subr.mxu0 %v1098
    %2696 = vmatpush1.msra.mxu0 %v1097
    %2697 = vmatprep.subr.mxu0 %v1102
    %2698 = vmatpush1.msra.mxu0 %v1101
    %2699 = vmatprep.subr.mxu0 %v1106
    %2700 = vmatpush1.msra.mxu0 %v1105
    %2701 = vmatprep.subr.mxu0 %v1110
    %2702 = vmatpush1.msra.mxu0 %v1109
    %2703 = vmatprep.subr.mxu0 %v1114
    %2704 = vmatpush1.msra.mxu0 %v1113
    %2705 = vmatprep.subr.mxu0 %v1118
    %2706 = vmatpush1.msra.mxu0 %v1117
    %2707 = vmatprep.subr.mxu0 %v1122
    %2708 = vmatpush1.msra.mxu0 %v1121
    %2709 = vmatprep.subr.mxu0 %v1126
    %2710 = vmatpush1.msra.mxu0 %v1125
    %2711 = vmatprep.subr.mxu0 %v1130
    %2712 = vmatpush1.msra.mxu0 %v1129
    %2713 = vmatprep.subr.mxu0 %v1134
    %2714 = vmatpush1.msra.mxu0 %v1133
    %2715 = vmatprep.subr.mxu0 %v1138
    %2716 = vmatpush1.msra.mxu0 %v1137
    %2717 = vmatprep.subr.mxu0 %v1142
    %2718 = vmatpush1.msra.mxu0 %v1141
    %2719 = vmatprep.subr.mxu0 %v1146
    %2720 = vmatpush1.msra.mxu0 %v1145
    %2721 = vmatprep.subr.mxu0 %v1150
    %2722 = vmatpush1.msra.mxu0 %v1149
    %2723 = vmatprep.subr.mxu0 %v1154
    %2724 = vmatpush1.msra.mxu0 %v1153
    %2725 = vmatprep.subr.mxu0 %v1158
    %2726 = vmatpush1.msra.mxu0 %v1157
    %2727 = vmatprep.subr.mxu0 %v1162
    %2728 = vmatpush1.msra.mxu0 %v1161
    %2729 = vmatprep.subr.mxu0 %v1166
    %2730 = vmatpush1.msra.mxu0 %v1165
    %2731 = vmatprep.subr.mxu0 %v1170
    %2732 = vmatpush1.msra.mxu0 %v1169
    %2733 = vmatprep.subr.mxu0 %v1174
    %2734 = vmatpush1.msra.mxu0 %v1173
    %2735 = vmatprep.subr.mxu0 %v1178
    %2736 = vmatpush1.msra.mxu0 %v1177
    %2737 = vmatprep.subr.mxu0 %v1182
    %2738 = vmatpush1.msra.mxu0 %v1181
    %2739 = vmatprep.subr.mxu0 %v1186
    %2740 = vmatpush1.msra.mxu0 %v1185
    %2741 = vmatprep.subr.mxu0 %v1190
    %2742 = vmatpush1.msra.mxu0 %v1189
    %2743 = vmatprep.subr.mxu0 %v1194
    %2744 = vmatpush1.msra.mxu0 %v1193
    %2745 = vmatprep.subr.mxu0 %v1198
    %2746 = vmatpush1.msra.mxu0 %v1197
    %2747 = vmatprep.subr.mxu0 %v1202
    %2748 = vmatpush1.msra.mxu0 %v1201
    %2749 = vmatprep.subr.mxu0 %v1206
    %2750 = vmatpush1.msra.mxu0 %v1205
    %2751 = vmatprep.mubr.f32.mxu0 %v2488
    %2752 = vmatmul.mubr.f32.gmra.mrb[0].mxu0 %v2686
    %v2753 = vpop.f32.mrb[0].mxu0
    %v2754 = vadd.f32 %v1214, %v2753
    %v2755 = vpop.f32.mrb[0].mxu0
    %v2756 = vadd.f32 %v1218, %v2755
    %2757 = vdwg.mxu0
    %2758 = vmatprep.subr.mxu0 %v1084
    %2759 = vmatpush1.msra.mxu0 %v1083
    %2760 = vmatprep.subr.mxu0 %v1088
    %2761 = vmatpush1.msra.mxu0 %v1087
    %2762 = vmatprep.subr.mxu0 %v1092
    %2763 = vmatpush1.msra.mxu0 %v1091
    %2764 = vmatprep.subr.mxu0 %v1096
    %2765 = vmatpush1.msra.mxu0 %v1095
    %2766 = vmatprep.subr.mxu0 %v1100
    %2767 = vmatpush1.msra.mxu0 %v1099
    %2768 = vmatprep.subr.mxu0 %v1104
    %2769 = vmatpush1.msra.mxu0 %v1103
    %2770 = vmatprep.subr.mxu0 %v1108
    %2771 = vmatpush1.msra.mxu0 %v1107
    %2772 = vmatprep.subr.mxu0 %v1112
    %2773 = vmatpush1.msra.mxu0 %v1111
    %2774 = vmatprep.subr.mxu0 %v1116
    %2775 = vmatpush1.msra.mxu0 %v1115
    %2776 = vmatprep.subr.mxu0 %v1120
    %2777 = vmatpush1.msra.mxu0 %v1119
    %2778 = vmatprep.subr.mxu0 %v1124
    %2779 = vmatpush1.msra.mxu0 %v1123
    %2780 = vmatprep.subr.mxu0 %v1128
    %2781 = vmatpush1.msra.mxu0 %v1127
    %2782 = vmatprep.subr.mxu0 %v1132
    %2783 = vmatpush1.msra.mxu0 %v1131
    %2784 = vmatprep.subr.mxu0 %v1136
    %2785 = vmatpush1.msra.mxu0 %v1135
    %2786 = vmatprep.subr.mxu0 %v1140
    %2787 = vmatpush1.msra.mxu0 %v1139
    %2788 = vmatprep.subr.mxu0 %v1144
    %2789 = vmatpush1.msra.mxu0 %v1143
    %2790 = vmatprep.subr.mxu0 %v1148
    %2791 = vmatpush1.msra.mxu0 %v1147
    %2792 = vmatprep.subr.mxu0 %v1152
    %2793 = vmatpush1.msra.mxu0 %v1151
    %2794 = vmatprep.subr.mxu0 %v1156
    %2795 = vmatpush1.msra.mxu0 %v1155
    %2796 = vmatprep.subr.mxu0 %v1160
    %2797 = vmatpush1.msra.mxu0 %v1159
    %2798 = vmatprep.subr.mxu0 %v1164
    %2799 = vmatpush1.msra.mxu0 %v1163
    %2800 = vmatprep.subr.mxu0 %v1168
    %2801 = vmatpush1.msra.mxu0 %v1167
    %2802 = vmatprep.subr.mxu0 %v1172
    %2803 = vmatpush1.msra.mxu0 %v1171
    %2804 = vmatprep.subr.mxu0 %v1176
    %2805 = vmatpush1.msra.mxu0 %v1175
    %2806 = vmatprep.subr.mxu0 %v1180
    %2807 = vmatpush1.msra.mxu0 %v1179
    %2808 = vmatprep.subr.mxu0 %v1184
    %2809 = vmatpush1.msra.mxu0 %v1183
    %2810 = vmatprep.subr.mxu0 %v1188
    %2811 = vmatpush1.msra.mxu0 %v1187
    %2812 = vmatprep.subr.mxu0 %v1192
    %2813 = vmatpush1.msra.mxu0 %v1191
    %2814 = vmatprep.subr.mxu0 %v1196
    %2815 = vmatpush1.msra.mxu0 %v1195
    %2816 = vmatprep.subr.mxu0 %v1200
    %2817 = vmatpush1.msra.mxu0 %v1199
    %2818 = vmatprep.subr.mxu0 %v1204
    %2819 = vmatpush1.msra.mxu0 %v1203
    %2820 = vmatprep.subr.mxu0 %v1208
    %2821 = vmatpush1.msra.mxu0 %v1207
    %2822 = vmatprep.mubr.f32.mxu0 %v2488
    %2823 = vmatmul.mubr.f32.gmra.mrb[0].mxu0 %v2686
    %v2824 = vpop.f32.mrb[0].mxu0
    %v2825 = vadd.f32 %v1222, %v2824
    %v2826 = vpop.f32.mrb[0].mxu0
    %v2827 = vadd.f32 %v1226, %v2826
    %2828 = vdwg.mxu0
    %v2829 = vxor.u32 %v2754, 2147483648
    %v2830 = vmul.f32 %v2829, 1.442695
    %v2831 = vpow.pop %v2830
    %v2832 = vadd.f32 %v2831, 1.0
    %v2833 = vrcp.pop %v2832
    %v2834 = vmul.f32 1.0, %v2833
    %v2835 = vxor.u32 %v2756, 2147483648
    %v2836 = vmul.f32 %v2835, 1.442695
    %v2837 = vpow.pop %v2836
    %v2838 = vadd.f32 %v2837, 1.0
    %v2839 = vrcp.pop %v2838
    %v2840 = vmul.f32 1.0, %v2839
    %v2841 = vtanh.pop %v2825
    %v2842 = vxor.u32 %v2827, 2147483648
    %v2843 = vmul.f32 %v2842, 1.442695
    %v2844 = vpow.pop %v2843
    %v2845 = vadd.f32 %v2844, 1.0
    %v2846 = vrcp.pop %v2845
    %v2847 = vmul.f32 1.0, %v2846
    %v2848 = vmul.f32 %v2840, %v2486
    %v2849 = vmul.f32 %v2834, %v2841
    %v2850 = vadd.f32 %v2848, %v2849
    %v2851 = vtanh.pop %v2850
    %v2852 = vmul.f32 %v2847, %v2851
    %s2853 = scalar_lea.vmem [#allocation2], 40
    %v2854 = vld [vmem:[%s2853] sm:$0xff]
    %2855 = vmatprep.subr.mxu0 %v822
    %2856 = vmatpush1.msra.mxu0 %v821
    %2857 = vmatprep.subr.mxu0 %v826
    %2858 = vmatpush1.msra.mxu0 %v825
    %2859 = vmatprep.subr.mxu0 %v830
    %2860 = vmatpush1.msra.mxu0 %v829
    %2861 = vmatprep.subr.mxu0 %v834
    %2862 = vmatpush1.msra.mxu0 %v833
    %2863 = vmatprep.subr.mxu0 %v838
    %2864 = vmatpush1.msra.mxu0 %v837
    %2865 = vmatprep.subr.mxu0 %v842
    %2866 = vmatpush1.msra.mxu0 %v841
    %2867 = vmatprep.subr.mxu0 %v846
    %2868 = vmatpush1.msra.mxu0 %v845
    %2869 = vmatprep.subr.mxu0 %v850
    %2870 = vmatpush1.msra.mxu0 %v849
    %2871 = vmatprep.subr.mxu0 %v854
    %2872 = vmatpush1.msra.mxu0 %v853
    %2873 = vmatprep.subr.mxu0 %v858
    %2874 = vmatpush1.msra.mxu0 %v857
    %2875 = vmatprep.subr.mxu0 %v862
    %2876 = vmatpush1.msra.mxu0 %v861
    %2877 = vmatprep.subr.mxu0 %v866
    %2878 = vmatpush1.msra.mxu0 %v865
    %2879 = vmatprep.subr.mxu0 %v870
    %2880 = vmatpush1.msra.mxu0 %v869
    %2881 = vmatprep.subr.mxu0 %v874
    %2882 = vmatpush1.msra.mxu0 %v873
    %2883 = vmatprep.subr.mxu0 %v878
    %2884 = vmatpush1.msra.mxu0 %v877
    %2885 = vmatprep.subr.mxu0 %v882
    %2886 = vmatpush1.msra.mxu0 %v881
    %2887 = vmatprep.subr.mxu0 0.0
    %2888 = vmatpush1.msra.mxu0 0.0
    %2889 = vmatprep.subr.mxu0 0.0
    %2890 = vmatpush1.msra.mxu0 0.0
    %2891 = vmatprep.subr.mxu0 0.0
    %2892 = vmatpush1.msra.mxu0 0.0
    %2893 = vmatprep.subr.mxu0 0.0
    %2894 = vmatpush1.msra.mxu0 0.0
    %2895 = vmatprep.subr.mxu0 0.0
    %2896 = vmatpush1.msra.mxu0 0.0
    %2897 = vmatprep.subr.mxu0 0.0
    %2898 = vmatpush1.msra.mxu0 0.0
    %2899 = vmatprep.subr.mxu0 0.0
    %2900 = vmatpush1.msra.mxu0 0.0
    %2901 = vmatprep.subr.mxu0 0.0
    %2902 = vmatpush1.msra.mxu0 0.0
    %2903 = vmatprep.subr.mxu0 0.0
    %2904 = vmatpush1.msra.mxu0 0.0
    %2905 = vmatprep.subr.mxu0 0.0
    %2906 = vmatpush1.msra.mxu0 0.0
    %2907 = vmatprep.subr.mxu0 0.0
    %2908 = vmatpush1.msra.mxu0 0.0
    %2909 = vmatprep.subr.mxu0 0.0
    %2910 = vmatpush1.msra.mxu0 0.0
    %2911 = vmatprep.subr.mxu0 0.0
    %2912 = vmatpush1.msra.mxu0 0.0
    %2913 = vmatprep.subr.mxu0 0.0
    %2914 = vmatpush1.msra.mxu0 0.0
    %2915 = vmatprep.subr.mxu0 0.0
    %2916 = vmatpush1.msra.mxu0 0.0
    %2917 = vmatprep.subr.mxu0 0.0
    %2918 = vmatpush1.msra.mxu0 0.0
    %2919 = vmatprep.mubr.f32.mxu0 0.0
    %2920 = vmatmul.mubr.f32.gmra.mrb[0].mxu0 %v2686
    %v2921 = vpop.f32.mrb[0].mxu0
    %v2922 = vadd.f32 0.0, %v2921
    %v2923 = vpop.f32.mrb[0].mxu0
    %v2924 = vadd.f32 0.0, %v2923
    %2925 = vdwg.mxu0
    %2926 = vmatprep.subr.mxu0 %v824
    %2927 = vmatpush1.msra.mxu0 %v823
    %2928 = vmatprep.subr.mxu0 %v828
    %2929 = vmatpush1.msra.mxu0 %v827
    %2930 = vmatprep.subr.mxu0 %v832
    %2931 = vmatpush1.msra.mxu0 %v831
    %2932 = vmatprep.subr.mxu0 %v836
    %2933 = vmatpush1.msra.mxu0 %v835
    %2934 = vmatprep.subr.mxu0 %v840
    %2935 = vmatpush1.msra.mxu0 %v839
    %2936 = vmatprep.subr.mxu0 %v844
    %2937 = vmatpush1.msra.mxu0 %v843
    %2938 = vmatprep.subr.mxu0 %v848
    %2939 = vmatpush1.msra.mxu0 %v847
    %2940 = vmatprep.subr.mxu0 %v852
    %2941 = vmatpush1.msra.mxu0 %v851
    %2942 = vmatprep.subr.mxu0 %v856
    %2943 = vmatpush1.msra.mxu0 %v855
    %2944 = vmatprep.subr.mxu0 %v860
    %2945 = vmatpush1.msra.mxu0 %v859
    %2946 = vmatprep.subr.mxu0 %v864
    %2947 = vmatpush1.msra.mxu0 %v863
    %2948 = vmatprep.subr.mxu0 %v868
    %2949 = vmatpush1.msra.mxu0 %v867
    %2950 = vmatprep.subr.mxu0 %v872
    %2951 = vmatpush1.msra.mxu0 %v871
    %2952 = vmatprep.subr.mxu0 %v876
    %2953 = vmatpush1.msra.mxu0 %v875
    %2954 = vmatprep.subr.mxu0 %v880
    %2955 = vmatpush1.msra.mxu0 %v879
    %2956 = vmatprep.subr.mxu0 %v884
    %2957 = vmatpush1.msra.mxu0 %v883
    %2958 = vmatprep.subr.mxu0 0.0
    %2959 = vmatpush1.msra.mxu0 0.0
    %2960 = vmatprep.subr.mxu0 0.0
    %2961 = vmatpush1.msra.mxu0 0.0
    %2962 = vmatprep.subr.mxu0 0.0
    %2963 = vmatpush1.msra.mxu0 0.0
    %2964 = vmatprep.subr.mxu0 0.0
    %2965 = vmatpush1.msra.mxu0 0.0
    %2966 = vmatprep.subr.mxu0 0.0
    %2967 = vmatpush1.msra.mxu0 0.0
    %2968 = vmatprep.subr.mxu0 0.0
    %2969 = vmatpush1.msra.mxu0 0.0
    %2970 = vmatprep.subr.mxu0 0.0
    %2971 = vmatpush1.msra.mxu0 0.0
    %2972 = vmatprep.subr.mxu0 0.0
    %2973 = vmatpush1.msra.mxu0 0.0
    %2974 = vmatprep.subr.mxu0 0.0
    %2975 = vmatpush1.msra.mxu0 0.0
    %2976 = vmatprep.subr.mxu0 0.0
    %2977 = vmatpush1.msra.mxu0 0.0
    %2978 = vmatprep.subr.mxu0 0.0
    %2979 = vmatpush1.msra.mxu0 0.0
    %2980 = vmatprep.subr.mxu0 0.0
    %2981 = vmatpush1.msra.mxu0 0.0
    %2982 = vmatprep.subr.mxu0 0.0
    %2983 = vmatpush1.msra.mxu0 0.0
    %2984 = vmatprep.subr.mxu0 0.0
    %2985 = vmatpush1.msra.mxu0 0.0
    %2986 = vmatprep.subr.mxu0 0.0
    %2987 = vmatpush1.msra.mxu0 0.0
    %2988 = vmatprep.subr.mxu0 0.0
    %2989 = vmatpush1.msra.mxu0 0.0
    %2990 = vmatprep.mubr.f32.mxu0 0.0
    %2991 = vmatmul.mubr.f32.gmra.mrb[0].mxu0 %v2686
    %v2992 = vpop.f32.mrb[0].mxu0
    %v2993 = vadd.f32 0.0, %v2992
    %v2994 = vpop.f32.mrb[0].mxu0
    %v2995 = vadd.f32 0.0, %v2994
    %2996 = vdwg.mxu0
    %v3001 = vcombine.low %v2922, %v2924
    %v3002 = vcombine.low %v2993, %v2995
    %v3004 = vunpack.c.l.s4 1983009808
    %v3005 = vunpack.c.0.s8 %v3004
    %v3006 = vlaneseq
    %v3007 = vshrl.u32 %v3006, 7
    %v3008 = vsub.s32 %v3005, %v3007
    %v3009 = vrot.slane %v3001, %v3008
    %v3011 = vunpack.c.l.s4 1983009808
    %v3012 = vunpack.c.0.s8 %v3011
    %v3013 = vlaneseq
    %v3014 = vshrl.u32 %v3013, 7
    %v3015 = vsub.s32 %v3012, %v3014
    %v3016 = vrot.slane %v3002, %v3015
    %v3017 = vcombine.low %v3009, %v3016
    %v3019 = vadd.f32 %v2854, %v3017
    %v3020 = vxor.u32 %v3019, 2147483648
    %v3021 = vmul.f32 %v3020, 1.442695
    %v3022 = vpow.pop %v3021
    %v3023 = vadd.f32 %v3022, 1.0
    %v3024 = vrcp.pop %v3023
    %v3025 = vmul.f32 1.0, %v3024
    %v3027 = vrot.slane %v3019, 2
    %v3029 = vxor.u32 %v3027, 2147483648
    %v3030 = vmul.f32 %v3029, 1.442695
    %v3031 = vpow.pop %v3030
    %v3032 = vadd.f32 %v3031, 1.0
    %v3033 = vrcp.pop %v3032
    %v3034 = vmul.f32 1.0, %v3033
    %v3035 = vrot.slane %v3019, 4
    %v3037 = vtanh.pop %v3035
    %v3038 = vrot.slane %v3019, 6
    %v3040 = vxor.u32 %v3038, 2147483648
    %v3041 = vmul.f32 %v3040, 1.442695
    %v3042 = vpow.pop %v3041
    %v3043 = vadd.f32 %v3042, 1.0
    %v3044 = vrcp.pop %v3043
    %v3045 = vmul.f32 1.0, %v3044
    %v3046 = vmul.f32 %v3034, %v2684
    %v3047 = vmul.f32 %v3025, %v3037
    %v3048 = vadd.f32 %v3046, %v3047
    %v3049 = vtanh.pop %v3048
    %v3050 = vmul.f32 %v3045, %v3049
    %3051 = vmatprep.subr.mxu0 %v1082
    %3052 = vmatpush1.msra.mxu0 %v1081
    %3053 = vmatprep.subr.mxu0 %v1086
    %3054 = vmatpush1.msra.mxu0 %v1085
    %3055 = vmatprep.subr.mxu0 %v1090
    %3056 = vmatpush1.msra.mxu0 %v1089
    %3057 = vmatprep.subr.mxu0 %v1094
    %3058 = vmatpush1.msra.mxu0 %v1093
    %3059 = vmatprep.subr.mxu0 %v1098
    %3060 = vmatpush1.msra.mxu0 %v1097
    %3061 = vmatprep.subr.mxu0 %v1102
    %3062 = vmatpush1.msra.mxu0 %v1101
    %3063 = vmatprep.subr.mxu0 %v1106
    %3064 = vmatpush1.msra.mxu0 %v1105
    %3065 = vmatprep.subr.mxu0 %v1110
    %3066 = vmatpush1.msra.mxu0 %v1109
    %3067 = vmatprep.subr.mxu0 %v1114
    %3068 = vmatpush1.msra.mxu0 %v1113
    %3069 = vmatprep.subr.mxu0 %v1118
    %3070 = vmatpush1.msra.mxu0 %v1117
    %3071 = vmatprep.subr.mxu0 %v1122
    %3072 = vmatpush1.msra.mxu0 %v1121
    %3073 = vmatprep.subr.mxu0 %v1126
    %3074 = vmatpush1.msra.mxu0 %v1125
    %3075 = vmatprep.subr.mxu0 %v1130
    %3076 = vmatpush1.msra.mxu0 %v1129
    %3077 = vmatprep.subr.mxu0 %v1134
    %3078 = vmatpush1.msra.mxu0 %v1133
    %3079 = vmatprep.subr.mxu0 %v1138
    %3080 = vmatpush1.msra.mxu0 %v1137
    %3081 = vmatprep.subr.mxu0 %v1142
    %3082 = vmatpush1.msra.mxu0 %v1141
    %3083 = vmatprep.subr.mxu0 %v1146
    %3084 = vmatpush1.msra.mxu0 %v1145
    %3085 = vmatprep.subr.mxu0 %v1150
    %3086 = vmatpush1.msra.mxu0 %v1149
    %3087 = vmatprep.subr.mxu0 %v1154
    %3088 = vmatpush1.msra.mxu0 %v1153
    %3089 = vmatprep.subr.mxu0 %v1158
    %3090 = vmatpush1.msra.mxu0 %v1157
    %3091 = vmatprep.subr.mxu0 %v1162
    %3092 = vmatpush1.msra.mxu0 %v1161
    %3093 = vmatprep.subr.mxu0 %v1166
    %3094 = vmatpush1.msra.mxu0 %v1165
    %3095 = vmatprep.subr.mxu0 %v1170
    %3096 = vmatpush1.msra.mxu0 %v1169
    %3097 = vmatprep.subr.mxu0 %v1174
    %3098 = vmatpush1.msra.mxu0 %v1173
    %3099 = vmatprep.subr.mxu0 %v1178
    %3100 = vmatpush1.msra.mxu0 %v1177
    %3101 = vmatprep.subr.mxu0 %v1182
    %3102 = vmatpush1.msra.mxu0 %v1181
    %3103 = vmatprep.subr.mxu0 %v1186
    %3104 = vmatpush1.msra.mxu0 %v1185
    %3105 = vmatprep.subr.mxu0 %v1190
    %3106 = vmatpush1.msra.mxu0 %v1189
    %3107 = vmatprep.subr.mxu0 %v1194
    %3108 = vmatpush1.msra.mxu0 %v1193
    %3109 = vmatprep.subr.mxu0 %v1198
    %3110 = vmatpush1.msra.mxu0 %v1197
    %3111 = vmatprep.subr.mxu0 %v1202
    %3112 = vmatpush1.msra.mxu0 %v1201
    %3113 = vmatprep.subr.mxu0 %v1206
    %3114 = vmatpush1.msra.mxu0 %v1205
    %3115 = vmatprep.mubr.f32.mxu0 %v2852
    %3116 = vmatmul.mubr.f32.gmra.mrb[0].mxu0 %v3050
    %v3117 = vpop.f32.mrb[0].mxu0
    %v3118 = vadd.f32 %v1214, %v3117
    %v3119 = vpop.f32.mrb[0].mxu0
    %v3120 = vadd.f32 %v1218, %v3119
    %3121 = vdwg.mxu0
    %3122 = vmatprep.subr.mxu0 %v1084
    %3123 = vmatpush1.msra.mxu0 %v1083
    %3124 = vmatprep.subr.mxu0 %v1088
    %3125 = vmatpush1.msra.mxu0 %v1087
    %3126 = vmatprep.subr.mxu0 %v1092
    %3127 = vmatpush1.msra.mxu0 %v1091
    %3128 = vmatprep.subr.mxu0 %v1096
    %3129 = vmatpush1.msra.mxu0 %v1095
    %3130 = vmatprep.subr.mxu0 %v1100
    %3131 = vmatpush1.msra.mxu0 %v1099
    %3132 = vmatprep.subr.mxu0 %v1104
    %3133 = vmatpush1.msra.mxu0 %v1103
    %3134 = vmatprep.subr.mxu0 %v1108
    %3135 = vmatpush1.msra.mxu0 %v1107
    %3136 = vmatprep.subr.mxu0 %v1112
    %3137 = vmatpush1.msra.mxu0 %v1111
    %3138 = vmatprep.subr.mxu0 %v1116
    %3139 = vmatpush1.msra.mxu0 %v1115
    %3140 = vmatprep.subr.mxu0 %v1120
    %3141 = vmatpush1.msra.mxu0 %v1119
    %3142 = vmatprep.subr.mxu0 %v1124
    %3143 = vmatpush1.msra.mxu0 %v1123
    %3144 = vmatprep.subr.mxu0 %v1128
    %3145 = vmatpush1.msra.mxu0 %v1127
    %3146 = vmatprep.subr.mxu0 %v1132
    %3147 = vmatpush1.msra.mxu0 %v1131
    %3148 = vmatprep.subr.mxu0 %v1136
    %3149 = vmatpush1.msra.mxu0 %v1135
    %3150 = vmatprep.subr.mxu0 %v1140
    %3151 = vmatpush1.msra.mxu0 %v1139
    %3152 = vmatprep.subr.mxu0 %v1144
    %3153 = vmatpush1.msra.mxu0 %v1143
    %3154 = vmatprep.subr.mxu0 %v1148
    %3155 = vmatpush1.msra.mxu0 %v1147
    %3156 = vmatprep.subr.mxu0 %v1152
    %3157 = vmatpush1.msra.mxu0 %v1151
    %3158 = vmatprep.subr.mxu0 %v1156
    %3159 = vmatpush1.msra.mxu0 %v1155
    %3160 = vmatprep.subr.mxu0 %v1160
    %3161 = vmatpush1.msra.mxu0 %v1159
    %3162 = vmatprep.subr.mxu0 %v1164
    %3163 = vmatpush1.msra.mxu0 %v1163
    %3164 = vmatprep.subr.mxu0 %v1168
    %3165 = vmatpush1.msra.mxu0 %v1167
    %3166 = vmatprep.subr.mxu0 %v1172
    %3167 = vmatpush1.msra.mxu0 %v1171
    %3168 = vmatprep.subr.mxu0 %v1176
    %3169 = vmatpush1.msra.mxu0 %v1175
    %3170 = vmatprep.subr.mxu0 %v1180
    %3171 = vmatpush1.msra.mxu0 %v1179
    %3172 = vmatprep.subr.mxu0 %v1184
    %3173 = vmatpush1.msra.mxu0 %v1183
    %3174 = vmatprep.subr.mxu0 %v1188
    %3175 = vmatpush1.msra.mxu0 %v1187
    %3176 = vmatprep.subr.mxu0 %v1192
    %3177 = vmatpush1.msra.mxu0 %v1191
    %3178 = vmatprep.subr.mxu0 %v1196
    %3179 = vmatpush1.msra.mxu0 %v1195
    %3180 = vmatprep.subr.mxu0 %v1200
    %3181 = vmatpush1.msra.mxu0 %v1199
    %3182 = vmatprep.subr.mxu0 %v1204
    %3183 = vmatpush1.msra.mxu0 %v1203
    %3184 = vmatprep.subr.mxu0 %v1208
    %3185 = vmatpush1.msra.mxu0 %v1207
    %3186 = vmatprep.mubr.f32.mxu0 %v2852
    %3187 = vmatmul.mubr.f32.gmra.mrb[0].mxu0 %v3050
    %v3188 = vpop.f32.mrb[0].mxu0
    %v3189 = vadd.f32 %v1222, %v3188
    %v3190 = vpop.f32.mrb[0].mxu0
    %v3191 = vadd.f32 %v1226, %v3190
    %3192 = vdwg.mxu0
    %v3193 = vxor.u32 %v3118, 2147483648
    %v3194 = vmul.f32 %v3193, 1.442695
    %v3195 = vpow.pop %v3194
    %v3196 = vadd.f32 %v3195, 1.0
    %v3197 = vrcp.pop %v3196
    %v3198 = vmul.f32 1.0, %v3197
    %v3199 = vxor.u32 %v3120, 2147483648
    %v3200 = vmul.f32 %v3199, 1.442695
    %v3201 = vpow.pop %v3200
    %v3202 = vadd.f32 %v3201, 1.0
    %v3203 = vrcp.pop %v3202
    %v3204 = vmul.f32 1.0, %v3203
    %v3205 = vtanh.pop %v3189
    %v3206 = vxor.u32 %v3191, 2147483648
    %v3207 = vmul.f32 %v3206, 1.442695
    %v3208 = vpow.pop %v3207
    %v3209 = vadd.f32 %v3208, 1.0
    %v3210 = vrcp.pop %v3209
    %v3211 = vmul.f32 1.0, %v3210
    %v3212 = vmul.f32 %v3204, %v2850
    %v3213 = vmul.f32 %v3198, %v3205
    %v3214 = vadd.f32 %v3212, %v3213
    %v3215 = vtanh.pop %v3214
    %v3216 = vmul.f32 %v3211, %v3215
    %s3217 = scalar_lea.vmem [#allocation2], 48
    %v3218 = vld [vmem:[%s3217] sm:$0xff]
    %3219 = vmatprep.subr.mxu0 %v822
    %3220 = vmatpush1.msra.mxu0 %v821
    %3221 = vmatprep.subr.mxu0 %v826
    %3222 = vmatpush1.msra.mxu0 %v825
    %3223 = vmatprep.subr.mxu0 %v830
    %3224 = vmatpush1.msra.mxu0 %v829
    %3225 = vmatprep.subr.mxu0 %v834
    %3226 = vmatpush1.msra.mxu0 %v833
    %3227 = vmatprep.subr.mxu0 %v838
    %3228 = vmatpush1.msra.mxu0 %v837
    %3229 = vmatprep.subr.mxu0 %v842
    %3230 = vmatpush1.msra.mxu0 %v841
    %3231 = vmatprep.subr.mxu0 %v846
    %3232 = vmatpush1.msra.mxu0 %v845
    %3233 = vmatprep.subr.mxu0 %v850
    %3234 = vmatpush1.msra.mxu0 %v849
    %3235 = vmatprep.subr.mxu0 %v854
    %3236 = vmatpush1.msra.mxu0 %v853
    %3237 = vmatprep.subr.mxu0 %v858
    %3238 = vmatpush1.msra.mxu0 %v857
    %3239 = vmatprep.subr.mxu0 %v862
    %3240 = vmatpush1.msra.mxu0 %v861
    %3241 = vmatprep.subr.mxu0 %v866
    %3242 = vmatpush1.msra.mxu0 %v865
    %3243 = vmatprep.subr.mxu0 %v870
    %3244 = vmatpush1.msra.mxu0 %v869
    %3245 = vmatprep.subr.mxu0 %v874
    %3246 = vmatpush1.msra.mxu0 %v873
    %3247 = vmatprep.subr.mxu0 %v878
    %3248 = vmatpush1.msra.mxu0 %v877
    %3249 = vmatprep.subr.mxu0 %v882
    %3250 = vmatpush1.msra.mxu0 %v881
    %3251 = vmatprep.subr.mxu0 0.0
    %3252 = vmatpush1.msra.mxu0 0.0
    %3253 = vmatprep.subr.mxu0 0.0
    %3254 = vmatpush1.msra.mxu0 0.0
    %3255 = vmatprep.subr.mxu0 0.0
    %3256 = vmatpush1.msra.mxu0 0.0
    %3257 = vmatprep.subr.mxu0 0.0
    %3258 = vmatpush1.msra.mxu0 0.0
    %3259 = vmatprep.subr.mxu0 0.0
    %3260 = vmatpush1.msra.mxu0 0.0
    %3261 = vmatprep.subr.mxu0 0.0
    %3262 = vmatpush1.msra.mxu0 0.0
    %3263 = vmatprep.subr.mxu0 0.0
    %3264 = vmatpush1.msra.mxu0 0.0
    %3265 = vmatprep.subr.mxu0 0.0
    %3266 = vmatpush1.msra.mxu0 0.0
    %3267 = vmatprep.subr.mxu0 0.0
    %3268 = vmatpush1.msra.mxu0 0.0
    %3269 = vmatprep.subr.mxu0 0.0
    %3270 = vmatpush1.msra.mxu0 0.0
    %3271 = vmatprep.subr.mxu0 0.0
    %3272 = vmatpush1.msra.mxu0 0.0
    %3273 = vmatprep.subr.mxu0 0.0
    %3274 = vmatpush1.msra.mxu0 0.0
    %3275 = vmatprep.subr.mxu0 0.0
    %3276 = vmatpush1.msra.mxu0 0.0
    %3277 = vmatprep.subr.mxu0 0.0
    %3278 = vmatpush1.msra.mxu0 0.0
    %3279 = vmatprep.subr.mxu0 0.0
    %3280 = vmatpush1.msra.mxu0 0.0
    %3281 = vmatprep.subr.mxu0 0.0
    %3282 = vmatpush1.msra.mxu0 0.0
    %3283 = vmatprep.mubr.f32.mxu0 0.0
    %3284 = vmatmul.mubr.f32.gmra.mrb[0].mxu0 %v3050
    %v3285 = vpop.f32.mrb[0].mxu0
    %v3286 = vadd.f32 0.0, %v3285
    %v3287 = vpop.f32.mrb[0].mxu0
    %v3288 = vadd.f32 0.0, %v3287
    %3289 = vdwg.mxu0
    %3290 = vmatprep.subr.mxu0 %v824
    %3291 = vmatpush1.msra.mxu0 %v823
    %3292 = vmatprep.subr.mxu0 %v828
    %3293 = vmatpush1.msra.mxu0 %v827
    %3294 = vmatprep.subr.mxu0 %v832
    %3295 = vmatpush1.msra.mxu0 %v831
    %3296 = vmatprep.subr.mxu0 %v836
    %3297 = vmatpush1.msra.mxu0 %v835
    %3298 = vmatprep.subr.mxu0 %v840
    %3299 = vmatpush1.msra.mxu0 %v839
    %3300 = vmatprep.subr.mxu0 %v844
    %3301 = vmatpush1.msra.mxu0 %v843
    %3302 = vmatprep.subr.mxu0 %v848
    %3303 = vmatpush1.msra.mxu0 %v847
    %3304 = vmatprep.subr.mxu0 %v852
    %3305 = vmatpush1.msra.mxu0 %v851
    %3306 = vmatprep.subr.mxu0 %v856
    %3307 = vmatpush1.msra.mxu0 %v855
    %3308 = vmatprep.subr.mxu0 %v860
    %3309 = vmatpush1.msra.mxu0 %v859
    %3310 = vmatprep.subr.mxu0 %v864
    %3311 = vmatpush1.msra.mxu0 %v863
    %3312 = vmatprep.subr.mxu0 %v868
    %3313 = vmatpush1.msra.mxu0 %v867
    %3314 = vmatprep.subr.mxu0 %v872
    %3315 = vmatpush1.msra.mxu0 %v871
    %3316 = vmatprep.subr.mxu0 %v876
    %3317 = vmatpush1.msra.mxu0 %v875
    %3318 = vmatprep.subr.mxu0 %v880
    %3319 = vmatpush1.msra.mxu0 %v879
    %3320 = vmatprep.subr.mxu0 %v884
    %3321 = vmatpush1.msra.mxu0 %v883
    %3322 = vmatprep.subr.mxu0 0.0
    %3323 = vmatpush1.msra.mxu0 0.0
    %3324 = vmatprep.subr.mxu0 0.0
    %3325 = vmatpush1.msra.mxu0 0.0
    %3326 = vmatprep.subr.mxu0 0.0
    %3327 = vmatpush1.msra.mxu0 0.0
    %3328 = vmatprep.subr.mxu0 0.0
    %3329 = vmatpush1.msra.mxu0 0.0
    %3330 = vmatprep.subr.mxu0 0.0
    %3331 = vmatpush1.msra.mxu0 0.0
    %3332 = vmatprep.subr.mxu0 0.0
    %3333 = vmatpush1.msra.mxu0 0.0
    %3334 = vmatprep.subr.mxu0 0.0
    %3335 = vmatpush1.msra.mxu0 0.0
    %3336 = vmatprep.subr.mxu0 0.0
    %3337 = vmatpush1.msra.mxu0 0.0
    %3338 = vmatprep.subr.mxu0 0.0
    %3339 = vmatpush1.msra.mxu0 0.0
    %3340 = vmatprep.subr.mxu0 0.0
    %3341 = vmatpush1.msra.mxu0 0.0
    %3342 = vmatprep.subr.mxu0 0.0
    %3343 = vmatpush1.msra.mxu0 0.0
    %3344 = vmatprep.subr.mxu0 0.0
    %3345 = vmatpush1.msra.mxu0 0.0
    %3346 = vmatprep.subr.mxu0 0.0
    %3347 = vmatpush1.msra.mxu0 0.0
    %3348 = vmatprep.subr.mxu0 0.0
    %3349 = vmatpush1.msra.mxu0 0.0
    %3350 = vmatprep.subr.mxu0 0.0
    %3351 = vmatpush1.msra.mxu0 0.0
    %3352 = vmatprep.subr.mxu0 0.0
    %3353 = vmatpush1.msra.mxu0 0.0
    %3354 = vmatprep.mubr.f32.mxu0 0.0
    %3355 = vmatmul.mubr.f32.gmra.mrb[0].mxu0 %v3050
    %v3356 = vpop.f32.mrb[0].mxu0
    %v3357 = vadd.f32 0.0, %v3356
    %v3358 = vpop.f32.mrb[0].mxu0
    %v3359 = vadd.f32 0.0, %v3358
    %3360 = vdwg.mxu0
    %v3365 = vcombine.low %v3286, %v3288
    %v3366 = vcombine.low %v3357, %v3359
    %v3368 = vunpack.c.l.s4 1983009808
    %v3369 = vunpack.c.0.s8 %v3368
    %v3370 = vlaneseq
    %v3371 = vshrl.u32 %v3370, 7
    %v3372 = vsub.s32 %v3369, %v3371
    %v3373 = vrot.slane %v3365, %v3372
    %v3375 = vunpack.c.l.s4 1983009808
    %v3376 = vunpack.c.0.s8 %v3375
    %v3377 = vlaneseq
    %v3378 = vshrl.u32 %v3377, 7
    %v3379 = vsub.s32 %v3376, %v3378
    %v3380 = vrot.slane %v3366, %v3379
    %v3381 = vcombine.low %v3373, %v3380
    %v3383 = vadd.f32 %v3218, %v3381
    %v3384 = vxor.u32 %v3383, 2147483648
    %v3385 = vmul.f32 %v3384, 1.442695
    %v3386 = vpow.pop %v3385
    %v3387 = vadd.f32 %v3386, 1.0
    %v3388 = vrcp.pop %v3387
    %v3389 = vmul.f32 1.0, %v3388
    %v3391 = vrot.slane %v3383, 2
    %v3393 = vxor.u32 %v3391, 2147483648
    %v3394 = vmul.f32 %v3393, 1.442695
    %v3395 = vpow.pop %v3394
    %v3396 = vadd.f32 %v3395, 1.0
    %v3397 = vrcp.pop %v3396
    %v3398 = vmul.f32 1.0, %v3397
    %v3399 = vrot.slane %v3383, 4
    %v3401 = vtanh.pop %v3399
    %v3402 = vrot.slane %v3383, 6
    %v3404 = vxor.u32 %v3402, 2147483648
    %v3405 = vmul.f32 %v3404, 1.442695
    %v3406 = vpow.pop %v3405
    %v3407 = vadd.f32 %v3406, 1.0
    %v3408 = vrcp.pop %v3407
    %v3409 = vmul.f32 1.0, %v3408
    %v3410 = vmul.f32 %v3398, %v3048
    %v3411 = vmul.f32 %v3389, %v3401
    %v3412 = vadd.f32 %v3410, %v3411
    %v3413 = vtanh.pop %v3412
    %v3414 = vmul.f32 %v3409, %v3413
    %3415 = vmatprep.subr.mxu0 %v1082
    %3416 = vmatpush1.msra.mxu0 %v1081
    %3417 = vmatprep.subr.mxu0 %v1086
    %3418 = vmatpush1.msra.mxu0 %v1085
    %3419 = vmatprep.subr.mxu0 %v1090
    %3420 = vmatpush1.msra.mxu0 %v1089
    %3421 = vmatprep.subr.mxu0 %v1094
    %3422 = vmatpush1.msra.mxu0 %v1093
    %3423 = vmatprep.subr.mxu0 %v1098
    %3424 = vmatpush1.msra.mxu0 %v1097
    %3425 = vmatprep.subr.mxu0 %v1102
    %3426 = vmatpush1.msra.mxu0 %v1101
    %3427 = vmatprep.subr.mxu0 %v1106
    %3428 = vmatpush1.msra.mxu0 %v1105
    %3429 = vmatprep.subr.mxu0 %v1110
    %3430 = vmatpush1.msra.mxu0 %v1109
    %3431 = vmatprep.subr.mxu0 %v1114
    %3432 = vmatpush1.msra.mxu0 %v1113
    %3433 = vmatprep.subr.mxu0 %v1118
    %3434 = vmatpush1.msra.mxu0 %v1117
    %3435 = vmatprep.subr.mxu0 %v1122
    %3436 = vmatpush1.msra.mxu0 %v1121
    %3437 = vmatprep.subr.mxu0 %v1126
    %3438 = vmatpush1.msra.mxu0 %v1125
    %3439 = vmatprep.subr.mxu0 %v1130
    %3440 = vmatpush1.msra.mxu0 %v1129
    %3441 = vmatprep.subr.mxu0 %v1134
    %3442 = vmatpush1.msra.mxu0 %v1133
    %3443 = vmatprep.subr.mxu0 %v1138
    %3444 = vmatpush1.msra.mxu0 %v1137
    %3445 = vmatprep.subr.mxu0 %v1142
    %3446 = vmatpush1.msra.mxu0 %v1141
    %3447 = vmatprep.subr.mxu0 %v1146
    %3448 = vmatpush1.msra.mxu0 %v1145
    %3449 = vmatprep.subr.mxu0 %v1150
    %3450 = vmatpush1.msra.mxu0 %v1149
    %3451 = vmatprep.subr.mxu0 %v1154
    %3452 = vmatpush1.msra.mxu0 %v1153
    %3453 = vmatprep.subr.mxu0 %v1158
    %3454 = vmatpush1.msra.mxu0 %v1157
    %3455 = vmatprep.subr.mxu0 %v1162
    %3456 = vmatpush1.msra.mxu0 %v1161
    %3457 = vmatprep.subr.mxu0 %v1166
    %3458 = vmatpush1.msra.mxu0 %v1165
    %3459 = vmatprep.subr.mxu0 %v1170
    %3460 = vmatpush1.msra.mxu0 %v1169
    %3461 = vmatprep.subr.mxu0 %v1174
    %3462 = vmatpush1.msra.mxu0 %v1173
    %3463 = vmatprep.subr.mxu0 %v1178
    %3464 = vmatpush1.msra.mxu0 %v1177
    %3465 = vmatprep.subr.mxu0 %v1182
    %3466 = vmatpush1.msra.mxu0 %v1181
    %3467 = vmatprep.subr.mxu0 %v1186
    %3468 = vmatpush1.msra.mxu0 %v1185
    %3469 = vmatprep.subr.mxu0 %v1190
    %3470 = vmatpush1.msra.mxu0 %v1189
    %3471 = vmatprep.subr.mxu0 %v1194
    %3472 = vmatpush1.msra.mxu0 %v1193
    %3473 = vmatprep.subr.mxu0 %v1198
    %3474 = vmatpush1.msra.mxu0 %v1197
    %3475 = vmatprep.subr.mxu0 %v1202
    %3476 = vmatpush1.msra.mxu0 %v1201
    %3477 = vmatprep.subr.mxu0 %v1206
    %3478 = vmatpush1.msra.mxu0 %v1205
    %3479 = vmatprep.mubr.f32.mxu0 %v3216
    %3480 = vmatmul.mubr.f32.gmra.mrb[0].mxu0 %v3414
    %v3481 = vpop.f32.mrb[0].mxu0
    %v3482 = vadd.f32 %v1214, %v3481
    %v3483 = vpop.f32.mrb[0].mxu0
    %v3484 = vadd.f32 %v1218, %v3483
    %3485 = vdwg.mxu0
    %3486 = vmatprep.subr.mxu0 %v1084
    %3487 = vmatpush1.msra.mxu0 %v1083
    %3488 = vmatprep.subr.mxu0 %v1088
    %3489 = vmatpush1.msra.mxu0 %v1087
    %3490 = vmatprep.subr.mxu0 %v1092
    %3491 = vmatpush1.msra.mxu0 %v1091
    %3492 = vmatprep.subr.mxu0 %v1096
    %3493 = vmatpush1.msra.mxu0 %v1095
    %3494 = vmatprep.subr.mxu0 %v1100
    %3495 = vmatpush1.msra.mxu0 %v1099
    %3496 = vmatprep.subr.mxu0 %v1104
    %3497 = vmatpush1.msra.mxu0 %v1103
    %3498 = vmatprep.subr.mxu0 %v1108
    %3499 = vmatpush1.msra.mxu0 %v1107
    %3500 = vmatprep.subr.mxu0 %v1112
    %3501 = vmatpush1.msra.mxu0 %v1111
    %3502 = vmatprep.subr.mxu0 %v1116
    %3503 = vmatpush1.msra.mxu0 %v1115
    %3504 = vmatprep.subr.mxu0 %v1120
    %3505 = vmatpush1.msra.mxu0 %v1119
    %3506 = vmatprep.subr.mxu0 %v1124
    %3507 = vmatpush1.msra.mxu0 %v1123
    %3508 = vmatprep.subr.mxu0 %v1128
    %3509 = vmatpush1.msra.mxu0 %v1127
    %3510 = vmatprep.subr.mxu0 %v1132
    %3511 = vmatpush1.msra.mxu0 %v1131
    %3512 = vmatprep.subr.mxu0 %v1136
    %3513 = vmatpush1.msra.mxu0 %v1135
    %3514 = vmatprep.subr.mxu0 %v1140
    %3515 = vmatpush1.msra.mxu0 %v1139
    %3516 = vmatprep.subr.mxu0 %v1144
    %3517 = vmatpush1.msra.mxu0 %v1143
    %3518 = vmatprep.subr.mxu0 %v1148
    %3519 = vmatpush1.msra.mxu0 %v1147
    %3520 = vmatprep.subr.mxu0 %v1152
    %3521 = vmatpush1.msra.mxu0 %v1151
    %3522 = vmatprep.subr.mxu0 %v1156
    %3523 = vmatpush1.msra.mxu0 %v1155
    %3524 = vmatprep.subr.mxu0 %v1160
    %3525 = vmatpush1.msra.mxu0 %v1159
    %3526 = vmatprep.subr.mxu0 %v1164
    %3527 = vmatpush1.msra.mxu0 %v1163
    %3528 = vmatprep.subr.mxu0 %v1168
    %3529 = vmatpush1.msra.mxu0 %v1167
    %3530 = vmatprep.subr.mxu0 %v1172
    %3531 = vmatpush1.msra.mxu0 %v1171
    %3532 = vmatprep.subr.mxu0 %v1176
    %3533 = vmatpush1.msra.mxu0 %v1175
    %3534 = vmatprep.subr.mxu0 %v1180
    %3535 = vmatpush1.msra.mxu0 %v1179
    %3536 = vmatprep.subr.mxu0 %v1184
    %3537 = vmatpush1.msra.mxu0 %v1183
    %3538 = vmatprep.subr.mxu0 %v1188
    %3539 = vmatpush1.msra.mxu0 %v1187
    %3540 = vmatprep.subr.mxu0 %v1192
    %3541 = vmatpush1.msra.mxu0 %v1191
    %3542 = vmatprep.subr.mxu0 %v1196
    %3543 = vmatpush1.msra.mxu0 %v1195
    %3544 = vmatprep.subr.mxu0 %v1200
    %3545 = vmatpush1.msra.mxu0 %v1199
    %3546 = vmatprep.subr.mxu0 %v1204
    %3547 = vmatpush1.msra.mxu0 %v1203
    %3548 = vmatprep.subr.mxu0 %v1208
    %3549 = vmatpush1.msra.mxu0 %v1207
    %3550 = vmatprep.mubr.f32.mxu0 %v3216
    %3551 = vmatmul.mubr.f32.gmra.mrb[0].mxu0 %v3414
    %v3552 = vpop.f32.mrb[0].mxu0
    %v3553 = vadd.f32 %v1222, %v3552
    %v3554 = vpop.f32.mrb[0].mxu0
    %v3555 = vadd.f32 %v1226, %v3554
    %3556 = vdwg.mxu0
    %v3557 = vxor.u32 %v3482, 2147483648
    %v3558 = vmul.f32 %v3557, 1.442695
    %v3559 = vpow.pop %v3558
    %v3560 = vadd.f32 %v3559, 1.0
    %v3561 = vrcp.pop %v3560
    %v3562 = vmul.f32 1.0, %v3561
    %v3563 = vxor.u32 %v3484, 2147483648
    %v3564 = vmul.f32 %v3563, 1.442695
    %v3565 = vpow.pop %v3564
    %v3566 = vadd.f32 %v3565, 1.0
    %v3567 = vrcp.pop %v3566
    %v3568 = vmul.f32 1.0, %v3567
    %v3569 = vtanh.pop %v3553
    %v3570 = vxor.u32 %v3555, 2147483648
    %v3571 = vmul.f32 %v3570, 1.442695
    %v3572 = vpow.pop %v3571
    %v3573 = vadd.f32 %v3572, 1.0
    %v3574 = vrcp.pop %v3573
    %v3575 = vmul.f32 1.0, %v3574
    %v3576 = vmul.f32 %v3568, %v3214
    %v3577 = vmul.f32 %v3562, %v3569
    %v3578 = vadd.f32 %v3576, %v3577
    %v3579 = vtanh.pop %v3578
    %v3580 = vmul.f32 %v3575, %v3579
    %s3581 = scalar_lea.vmem [#allocation2], 56
    %v3582 = vld [vmem:[%s3581] sm:$0xff]
    %3583 = vmatprep.subr.mxu0 %v822
    %3584 = vmatpush1.msra.mxu0 %v821
    %3585 = vmatprep.subr.mxu0 %v826
    %3586 = vmatpush1.msra.mxu0 %v825
    %3587 = vmatprep.subr.mxu0 %v830
    %3588 = vmatpush1.msra.mxu0 %v829
    %3589 = vmatprep.subr.mxu0 %v834
    %3590 = vmatpush1.msra.mxu0 %v833
    %3591 = vmatprep.subr.mxu0 %v838
    %3592 = vmatpush1.msra.mxu0 %v837
    %3593 = vmatprep.subr.mxu0 %v842
    %3594 = vmatpush1.msra.mxu0 %v841
    %3595 = vmatprep.subr.mxu0 %v846
    %3596 = vmatpush1.msra.mxu0 %v845
    %3597 = vmatprep.subr.mxu0 %v850
    %3598 = vmatpush1.msra.mxu0 %v849
    %3599 = vmatprep.subr.mxu0 %v854
    %3600 = vmatpush1.msra.mxu0 %v853
    %3601 = vmatprep.subr.mxu0 %v858
    %3602 = vmatpush1.msra.mxu0 %v857
    %3603 = vmatprep.subr.mxu0 %v862
    %3604 = vmatpush1.msra.mxu0 %v861
    %3605 = vmatprep.subr.mxu0 %v866
    %3606 = vmatpush1.msra.mxu0 %v865
    %3607 = vmatprep.subr.mxu0 %v870
    %3608 = vmatpush1.msra.mxu0 %v869
    %3609 = vmatprep.subr.mxu0 %v874
    %3610 = vmatpush1.msra.mxu0 %v873
    %3611 = vmatprep.subr.mxu0 %v878
    %3612 = vmatpush1.msra.mxu0 %v877
    %3613 = vmatprep.subr.mxu0 %v882
    %3614 = vmatpush1.msra.mxu0 %v881
    %3615 = vmatprep.subr.mxu0 0.0
    %3616 = vmatpush1.msra.mxu0 0.0
    %3617 = vmatprep.subr.mxu0 0.0
    %3618 = vmatpush1.msra.mxu0 0.0
    %3619 = vmatprep.subr.mxu0 0.0
    %3620 = vmatpush1.msra.mxu0 0.0
    %3621 = vmatprep.subr.mxu0 0.0
    %3622 = vmatpush1.msra.mxu0 0.0
    %3623 = vmatprep.subr.mxu0 0.0
    %3624 = vmatpush1.msra.mxu0 0.0
    %3625 = vmatprep.subr.mxu0 0.0
    %3626 = vmatpush1.msra.mxu0 0.0
    %3627 = vmatprep.subr.mxu0 0.0
    %3628 = vmatpush1.msra.mxu0 0.0
    %3629 = vmatprep.subr.mxu0 0.0
    %3630 = vmatpush1.msra.mxu0 0.0
    %3631 = vmatprep.subr.mxu0 0.0
    %3632 = vmatpush1.msra.mxu0 0.0
    %3633 = vmatprep.subr.mxu0 0.0
    %3634 = vmatpush1.msra.mxu0 0.0
    %3635 = vmatprep.subr.mxu0 0.0
    %3636 = vmatpush1.msra.mxu0 0.0
    %3637 = vmatprep.subr.mxu0 0.0
    %3638 = vmatpush1.msra.mxu0 0.0
    %3639 = vmatprep.subr.mxu0 0.0
    %3640 = vmatpush1.msra.mxu0 0.0
    %3641 = vmatprep.subr.mxu0 0.0
    %3642 = vmatpush1.msra.mxu0 0.0
    %3643 = vmatprep.subr.mxu0 0.0
    %3644 = vmatpush1.msra.mxu0 0.0
    %3645 = vmatprep.subr.mxu0 0.0
    %3646 = vmatpush1.msra.mxu0 0.0
    %3647 = vmatprep.mubr.f32.mxu0 0.0
    %3648 = vmatmul.mubr.f32.gmra.mrb[0].mxu0 %v3414
    %v3649 = vpop.f32.mrb[0].mxu0
    %v3650 = vadd.f32 0.0, %v3649
    %v3651 = vpop.f32.mrb[0].mxu0
    %v3652 = vadd.f32 0.0, %v3651
    %3653 = vdwg.mxu0
    %3654 = vmatprep.subr.mxu0 %v824
    %3655 = vmatpush1.msra.mxu0 %v823
    %3656 = vmatprep.subr.mxu0 %v828
    %3657 = vmatpush1.msra.mxu0 %v827
    %3658 = vmatprep.subr.mxu0 %v832
    %3659 = vmatpush1.msra.mxu0 %v831
    %3660 = vmatprep.subr.mxu0 %v836
    %3661 = vmatpush1.msra.mxu0 %v835
    %3662 = vmatprep.subr.mxu0 %v840
    %3663 = vmatpush1.msra.mxu0 %v839
    %3664 = vmatprep.subr.mxu0 %v844
    %3665 = vmatpush1.msra.mxu0 %v843
    %3666 = vmatprep.subr.mxu0 %v848
    %3667 = vmatpush1.msra.mxu0 %v847
    %3668 = vmatprep.subr.mxu0 %v852
    %3669 = vmatpush1.msra.mxu0 %v851
    %3670 = vmatprep.subr.mxu0 %v856
    %3671 = vmatpush1.msra.mxu0 %v855
    %3672 = vmatprep.subr.mxu0 %v860
    %3673 = vmatpush1.msra.mxu0 %v859
    %3674 = vmatprep.subr.mxu0 %v864
    %3675 = vmatpush1.msra.mxu0 %v863
    %3676 = vmatprep.subr.mxu0 %v868
    %3677 = vmatpush1.msra.mxu0 %v867
    %3678 = vmatprep.subr.mxu0 %v872
    %3679 = vmatpush1.msra.mxu0 %v871
    %3680 = vmatprep.subr.mxu0 %v876
    %3681 = vmatpush1.msra.mxu0 %v875
    %3682 = vmatprep.subr.mxu0 %v880
    %3683 = vmatpush1.msra.mxu0 %v879
    %3684 = vmatprep.subr.mxu0 %v884
    %3685 = vmatpush1.msra.mxu0 %v883
    %3686 = vmatprep.subr.mxu0 0.0
    %3687 = vmatpush1.msra.mxu0 0.0
    %3688 = vmatprep.subr.mxu0 0.0
    %3689 = vmatpush1.msra.mxu0 0.0
    %3690 = vmatprep.subr.mxu0 0.0
    %3691 = vmatpush1.msra.mxu0 0.0
    %3692 = vmatprep.subr.mxu0 0.0
    %3693 = vmatpush1.msra.mxu0 0.0
    %3694 = vmatprep.subr.mxu0 0.0
    %3695 = vmatpush1.msra.mxu0 0.0
    %3696 = vmatprep.subr.mxu0 0.0
    %3697 = vmatpush1.msra.mxu0 0.0
    %3698 = vmatprep.subr.mxu0 0.0
    %3699 = vmatpush1.msra.mxu0 0.0
    %3700 = vmatprep.subr.mxu0 0.0
    %3701 = vmatpush1.msra.mxu0 0.0
    %3702 = vmatprep.subr.mxu0 0.0
    %3703 = vmatpush1.msra.mxu0 0.0
    %3704 = vmatprep.subr.mxu0 0.0
    %3705 = vmatpush1.msra.mxu0 0.0
    %3706 = vmatprep.subr.mxu0 0.0
    %3707 = vmatpush1.msra.mxu0 0.0
    %3708 = vmatprep.subr.mxu0 0.0
    %3709 = vmatpush1.msra.mxu0 0.0
    %3710 = vmatprep.subr.mxu0 0.0
    %3711 = vmatpush1.msra.mxu0 0.0
    %3712 = vmatprep.subr.mxu0 0.0
    %3713 = vmatpush1.msra.mxu0 0.0
    %3714 = vmatprep.subr.mxu0 0.0
    %3715 = vmatpush1.msra.mxu0 0.0
    %3716 = vmatprep.subr.mxu0 0.0
    %3717 = vmatpush1.msra.mxu0 0.0
    %3718 = vmatprep.mubr.f32.mxu0 0.0
    %3719 = vmatmul.mubr.f32.gmra.mrb[0].mxu0 %v3414
    %v3720 = vpop.f32.mrb[0].mxu0
    %v3721 = vadd.f32 0.0, %v3720
    %v3722 = vpop.f32.mrb[0].mxu0
    %v3723 = vadd.f32 0.0, %v3722
    %3724 = vdwg.mxu0
    %v3729 = vcombine.low %v3650, %v3652
    %v3730 = vcombine.low %v3721, %v3723
    %v3732 = vunpack.c.l.s4 1983009808
    %v3733 = vunpack.c.0.s8 %v3732
    %v3734 = vlaneseq
    %v3735 = vshrl.u32 %v3734, 7
    %v3736 = vsub.s32 %v3733, %v3735
    %v3737 = vrot.slane %v3729, %v3736
    %v3739 = vunpack.c.l.s4 1983009808
    %v3740 = vunpack.c.0.s8 %v3739
    %v3741 = vlaneseq
    %v3742 = vshrl.u32 %v3741, 7
    %v3743 = vsub.s32 %v3740, %v3742
    %v3744 = vrot.slane %v3730, %v3743
    %v3745 = vcombine.low %v3737, %v3744
    %v3747 = vadd.f32 %v3582, %v3745
    %v3748 = vxor.u32 %v3747, 2147483648
    %v3749 = vmul.f32 %v3748, 1.442695
    %v3750 = vpow.pop %v3749
    %v3751 = vadd.f32 %v3750, 1.0
    %v3752 = vrcp.pop %v3751
    %v3753 = vmul.f32 1.0, %v3752
    %v3755 = vrot.slane %v3747, 2
    %v3757 = vxor.u32 %v3755, 2147483648
    %v3758 = vmul.f32 %v3757, 1.442695
    %v3759 = vpow.pop %v3758
    %v3760 = vadd.f32 %v3759, 1.0
    %v3761 = vrcp.pop %v3760
    %v3762 = vmul.f32 1.0, %v3761
    %v3763 = vrot.slane %v3747, 4
    %v3765 = vtanh.pop %v3763
    %v3766 = vrot.slane %v3747, 6
    %v3768 = vxor.u32 %v3766, 2147483648
    %v3769 = vmul.f32 %v3768, 1.442695
    %v3770 = vpow.pop %v3769
    %v3771 = vadd.f32 %v3770, 1.0
    %v3772 = vrcp.pop %v3771
    %v3773 = vmul.f32 1.0, %v3772
    %v3774 = vmul.f32 %v3762, %v3412
    %v3775 = vmul.f32 %v3753, %v3765
    %v3776 = vadd.f32 %v3774, %v3775
    %v3777 = vtanh.pop %v3776
    %v3778 = vmul.f32 %v3773, %v3777
    %3779 = vmatprep.subr.mxu0 %v1082
    %3780 = vmatpush1.msra.mxu0 %v1081
    %3781 = vmatprep.subr.mxu0 %v1086
    %3782 = vmatpush1.msra.mxu0 %v1085
    %3783 = vmatprep.subr.mxu0 %v1090
    %3784 = vmatpush1.msra.mxu0 %v1089
    %3785 = vmatprep.subr.mxu0 %v1094
    %3786 = vmatpush1.msra.mxu0 %v1093
    %3787 = vmatprep.subr.mxu0 %v1098
    %3788 = vmatpush1.msra.mxu0 %v1097
    %3789 = vmatprep.subr.mxu0 %v1102
    %3790 = vmatpush1.msra.mxu0 %v1101
    %3791 = vmatprep.subr.mxu0 %v1106
    %3792 = vmatpush1.msra.mxu0 %v1105
    %3793 = vmatprep.subr.mxu0 %v1110
    %3794 = vmatpush1.msra.mxu0 %v1109
    %3795 = vmatprep.subr.mxu0 %v1114
    %3796 = vmatpush1.msra.mxu0 %v1113
    %3797 = vmatprep.subr.mxu0 %v1118
    %3798 = vmatpush1.msra.mxu0 %v1117
    %3799 = vmatprep.subr.mxu0 %v1122
    %3800 = vmatpush1.msra.mxu0 %v1121
    %3801 = vmatprep.subr.mxu0 %v1126
    %3802 = vmatpush1.msra.mxu0 %v1125
    %3803 = vmatprep.subr.mxu0 %v1130
    %3804 = vmatpush1.msra.mxu0 %v1129
    %3805 = vmatprep.subr.mxu0 %v1134
    %3806 = vmatpush1.msra.mxu0 %v1133
    %3807 = vmatprep.subr.mxu0 %v1138
    %3808 = vmatpush1.msra.mxu0 %v1137
    %3809 = vmatprep.subr.mxu0 %v1142
    %3810 = vmatpush1.msra.mxu0 %v1141
    %3811 = vmatprep.subr.mxu0 %v1146
    %3812 = vmatpush1.msra.mxu0 %v1145
    %3813 = vmatprep.subr.mxu0 %v1150
    %3814 = vmatpush1.msra.mxu0 %v1149
    %3815 = vmatprep.subr.mxu0 %v1154
    %3816 = vmatpush1.msra.mxu0 %v1153
    %3817 = vmatprep.subr.mxu0 %v1158
    %3818 = vmatpush1.msra.mxu0 %v1157
    %3819 = vmatprep.subr.mxu0 %v1162
    %3820 = vmatpush1.msra.mxu0 %v1161
    %3821 = vmatprep.subr.mxu0 %v1166
    %3822 = vmatpush1.msra.mxu0 %v1165
    %3823 = vmatprep.subr.mxu0 %v1170
    %3824 = vmatpush1.msra.mxu0 %v1169
    %3825 = vmatprep.subr.mxu0 %v1174
    %3826 = vmatpush1.msra.mxu0 %v1173
    %3827 = vmatprep.subr.mxu0 %v1178
    %3828 = vmatpush1.msra.mxu0 %v1177
    %3829 = vmatprep.subr.mxu0 %v1182
    %3830 = vmatpush1.msra.mxu0 %v1181
    %3831 = vmatprep.subr.mxu0 %v1186
    %3832 = vmatpush1.msra.mxu0 %v1185
    %3833 = vmatprep.subr.mxu0 %v1190
    %3834 = vmatpush1.msra.mxu0 %v1189
    %3835 = vmatprep.subr.mxu0 %v1194
    %3836 = vmatpush1.msra.mxu0 %v1193
    %3837 = vmatprep.subr.mxu0 %v1198
    %3838 = vmatpush1.msra.mxu0 %v1197
    %3839 = vmatprep.subr.mxu0 %v1202
    %3840 = vmatpush1.msra.mxu0 %v1201
    %3841 = vmatprep.subr.mxu0 %v1206
    %3842 = vmatpush1.msra.mxu0 %v1205
    %3843 = vmatprep.mubr.f32.mxu0 %v3580
    %3844 = vmatmul.mubr.f32.gmra.mrb[0].mxu0 %v3778
    %v3845 = vpop.f32.mrb[0].mxu0
    %v3846 = vadd.f32 %v1214, %v3845
    %v3847 = vpop.f32.mrb[0].mxu0
    %v3848 = vadd.f32 %v1218, %v3847
    %3849 = vdwg.mxu0
    %3850 = vmatprep.subr.mxu0 %v1084
    %3851 = vmatpush1.msra.mxu0 %v1083
    %3852 = vmatprep.subr.mxu0 %v1088
    %3853 = vmatpush1.msra.mxu0 %v1087
    %3854 = vmatprep.subr.mxu0 %v1092
    %3855 = vmatpush1.msra.mxu0 %v1091
    %3856 = vmatprep.subr.mxu0 %v1096
    %3857 = vmatpush1.msra.mxu0 %v1095
    %3858 = vmatprep.subr.mxu0 %v1100
    %3859 = vmatpush1.msra.mxu0 %v1099
    %3860 = vmatprep.subr.mxu0 %v1104
    %3861 = vmatpush1.msra.mxu0 %v1103
    %3862 = vmatprep.subr.mxu0 %v1108
    %3863 = vmatpush1.msra.mxu0 %v1107
    %3864 = vmatprep.subr.mxu0 %v1112
    %3865 = vmatpush1.msra.mxu0 %v1111
    %3866 = vmatprep.subr.mxu0 %v1116
    %3867 = vmatpush1.msra.mxu0 %v1115
    %3868 = vmatprep.subr.mxu0 %v1120
    %3869 = vmatpush1.msra.mxu0 %v1119
    %3870 = vmatprep.subr.mxu0 %v1124
    %3871 = vmatpush1.msra.mxu0 %v1123
    %3872 = vmatprep.subr.mxu0 %v1128
    %3873 = vmatpush1.msra.mxu0 %v1127
    %3874 = vmatprep.subr.mxu0 %v1132
    %3875 = vmatpush1.msra.mxu0 %v1131
    %3876 = vmatprep.subr.mxu0 %v1136
    %3877 = vmatpush1.msra.mxu0 %v1135
    %3878 = vmatprep.subr.mxu0 %v1140
    %3879 = vmatpush1.msra.mxu0 %v1139
    %3880 = vmatprep.subr.mxu0 %v1144
    %3881 = vmatpush1.msra.mxu0 %v1143
    %3882 = vmatprep.subr.mxu0 %v1148
    %3883 = vmatpush1.msra.mxu0 %v1147
    %3884 = vmatprep.subr.mxu0 %v1152
    %3885 = vmatpush1.msra.mxu0 %v1151
    %3886 = vmatprep.subr.mxu0 %v1156
    %3887 = vmatpush1.msra.mxu0 %v1155
    %3888 = vmatprep.subr.mxu0 %v1160
    %3889 = vmatpush1.msra.mxu0 %v1159
    %3890 = vmatprep.subr.mxu0 %v1164
    %3891 = vmatpush1.msra.mxu0 %v1163
    %3892 = vmatprep.subr.mxu0 %v1168
    %3893 = vmatpush1.msra.mxu0 %v1167
    %3894 = vmatprep.subr.mxu0 %v1172
    %3895 = vmatpush1.msra.mxu0 %v1171
    %3896 = vmatprep.subr.mxu0 %v1176
    %3897 = vmatpush1.msra.mxu0 %v1175
    %3898 = vmatprep.subr.mxu0 %v1180
    %3899 = vmatpush1.msra.mxu0 %v1179
    %3900 = vmatprep.subr.mxu0 %v1184
    %3901 = vmatpush1.msra.mxu0 %v1183
    %3902 = vmatprep.subr.mxu0 %v1188
    %3903 = vmatpush1.msra.mxu0 %v1187
    %3904 = vmatprep.subr.mxu0 %v1192
    %3905 = vmatpush1.msra.mxu0 %v1191
    %3906 = vmatprep.subr.mxu0 %v1196
    %3907 = vmatpush1.msra.mxu0 %v1195
    %3908 = vmatprep.subr.mxu0 %v1200
    %3909 = vmatpush1.msra.mxu0 %v1199
    %3910 = vmatprep.subr.mxu0 %v1204
    %3911 = vmatpush1.msra.mxu0 %v1203
    %3912 = vmatprep.subr.mxu0 %v1208
    %3913 = vmatpush1.msra.mxu0 %v1207
    %3914 = vmatprep.mubr.f32.mxu0 %v3580
    %3915 = vmatmul.mubr.f32.gmra.mrb[0].mxu0 %v3778
    %v3916 = vpop.f32.mrb[0].mxu0
    %v3917 = vadd.f32 %v1222, %v3916
    %v3918 = vpop.f32.mrb[0].mxu0
    %v3919 = vadd.f32 %v1226, %v3918
    %3920 = vdwg.mxu0
    %v3921 = vxor.u32 %v3846, 2147483648
    %v3922 = vmul.f32 %v3921, 1.442695
    %v3923 = vpow.pop %v3922
    %v3924 = vadd.f32 %v3923, 1.0
    %v3925 = vrcp.pop %v3924
    %v3926 = vmul.f32 1.0, %v3925
    %v3927 = vxor.u32 %v3848, 2147483648
    %v3928 = vmul.f32 %v3927, 1.442695
    %v3929 = vpow.pop %v3928
    %v3930 = vadd.f32 %v3929, 1.0
    %v3931 = vrcp.pop %v3930
    %v3932 = vmul.f32 1.0, %v3931
    %v3933 = vtanh.pop %v3917
    %v3934 = vxor.u32 %v3919, 2147483648
    %v3935 = vmul.f32 %v3934, 1.442695
    %v3936 = vpow.pop %v3935
    %v3937 = vadd.f32 %v3936, 1.0
    %v3938 = vrcp.pop %v3937
    %v3939 = vmul.f32 1.0, %v3938
    %v3940 = vmul.f32 %v3932, %v3578
    %v3941 = vmul.f32 %v3926, %v3933
    %v3942 = vadd.f32 %v3940, %v3941
    %v3943 = vtanh.pop %v3942
    %v3944 = vmul.f32 %v3939, %v3943
    %3945 = vst [vmem:[#allocation3] sm:$0x3] %v3778
    %3946 = vst [vmem:[#allocation4] sm:$0x3] %v3776
    %3947 = vst [vmem:[#allocation5] sm:$0x3] %v3944
    %3948 = vst [vmem:[#allocation6] sm:$0x3] %v3942
    %s3949 = smul.u32 0, 8
    %v3952 = vunpack.c.l.s4 1966171168
    %v3953 = vunpack.c.0.s8 %v3952
    %v3954 = vlaneseq
    %v3955 = vshrl.u32 %v3954, 7
    %v3956 = vsub.s32 %v3953, %v3955
    %v3957 = vrot.slane %v1396, %v3956
    %v3958 = vcombine.high %v3957, %v3957
    %v3960 = vunpack.c.l.s4 1966171168
    %v3961 = vunpack.c.0.s8 %v3960
    %v3962 = vlaneseq
    %v3963 = vshrl.u32 %v3962, 7
    %v3964 = vsub.s32 %v3961, %v3963
    %v3965 = vrot.slane %v3957, %v3964
    %v3967 = vunpack.c.l.s4 1966171168
    %v3968 = vunpack.c.0.s8 %v3967
    %v3969 = vlaneseq
    %v3970 = vshrl.u32 %v3969, 7
    %v3971 = vsub.s32 %v3968, %v3970
    %v3972 = vrot.slane %v3958, %v3971
    %v3977 = vunpack.c.l.s4 1966171168
    %v3978 = vunpack.c.0.s8 %v3977
    %v3979 = vlaneseq
    %v3980 = vshrl.u32 %v3979, 7
    %v3981 = vsub.s32 %v3978, %v3980
    %v3982 = vrot.slane %v1760, %v3981
    %v3983 = vcombine.high %v3982, %v3982
    %v3985 = vunpack.c.l.s4 1966171168
    %v3986 = vunpack.c.0.s8 %v3985
    %v3987 = vlaneseq
    %v3988 = vshrl.u32 %v3987, 7
    %v3989 = vsub.s32 %v3986, %v3988
    %v3990 = vrot.slane %v3982, %v3989
    %v3992 = vunpack.c.l.s4 1966171168
    %v3993 = vunpack.c.0.s8 %v3992
    %v3994 = vlaneseq
    %v3995 = vshrl.u32 %v3994, 7
    %v3996 = vsub.s32 %v3993, %v3995
    %v3997 = vrot.slane %v3983, %v3996
    %v4000 = vunpack.c.l.s4 1966171168
    %v4001 = vunpack.c.0.s8 %v4000
    %v4002 = vlaneseq
    %v4003 = vshrl.u32 %v4002, 7
    %v4004 = vsub.s32 %v4001, %v4003
    %v4005 = vrot.slane %v2124, %v4004
    %v4006 = vcombine.high %v4005, %v4005
    %v4008 = vunpack.c.l.s4 1966171168
    %v4009 = vunpack.c.0.s8 %v4008
    %v4010 = vlaneseq
    %v4011 = vshrl.u32 %v4010, 7
    %v4012 = vsub.s32 %v4009, %v4011
    %v4013 = vrot.slane %v4005, %v4012
    %v4015 = vunpack.c.l.s4 1966171168
    %v4016 = vunpack.c.0.s8 %v4015
    %v4017 = vlaneseq
    %v4018 = vshrl.u32 %v4017, 7
    %v4019 = vsub.s32 %v4016, %v4018
    %v4020 = vrot.slane %v4006, %v4019
    %v4023 = vunpack.c.l.s4 1966171168
    %v4024 = vunpack.c.0.s8 %v4023
    %v4025 = vlaneseq
    %v4026 = vshrl.u32 %v4025, 7
    %v4027 = vsub.s32 %v4024, %v4026
    %v4028 = vrot.slane %v2488, %v4027
    %v4029 = vcombine.high %v4028, %v4028
    %v4031 = vunpack.c.l.s4 1966171168
    %v4032 = vunpack.c.0.s8 %v4031
    %v4033 = vlaneseq
    %v4034 = vshrl.u32 %v4033, 7
    %v4035 = vsub.s32 %v4032, %v4034
    %v4036 = vrot.slane %v4028, %v4035
    %v4038 = vunpack.c.l.s4 1966171168
    %v4039 = vunpack.c.0.s8 %v4038
    %v4040 = vlaneseq
    %v4041 = vshrl.u32 %v4040, 7
    %v4042 = vsub.s32 %v4039, %v4041
    %v4043 = vrot.slane %v4029, %v4042
    %v4046 = vunpack.c.l.s4 1966171168
    %v4047 = vunpack.c.0.s8 %v4046
    %v4048 = vlaneseq
    %v4049 = vshrl.u32 %v4048, 7
    %v4050 = vsub.s32 %v4047, %v4049
    %v4051 = vrot.slane %v2852, %v4050
    %v4052 = vcombine.high %v4051, %v4051
    %v4054 = vunpack.c.l.s4 1966171168
    %v4055 = vunpack.c.0.s8 %v4054
    %v4056 = vlaneseq
    %v4057 = vshrl.u32 %v4056, 7
    %v4058 = vsub.s32 %v4055, %v4057
    %v4059 = vrot.slane %v4051, %v4058
    %v4061 = vunpack.c.l.s4 1966171168
    %v4062 = vunpack.c.0.s8 %v4061
    %v4063 = vlaneseq
    %v4064 = vshrl.u32 %v4063, 7
    %v4065 = vsub.s32 %v4062, %v4064
    %v4066 = vrot.slane %v4052, %v4065
    %v4069 = vunpack.c.l.s4 1966171168
    %v4070 = vunpack.c.0.s8 %v4069
    %v4071 = vlaneseq
    %v4072 = vshrl.u32 %v4071, 7
    %v4073 = vsub.s32 %v4070, %v4072
    %v4074 = vrot.slane %v3216, %v4073
    %v4075 = vcombine.high %v4074, %v4074
    %v4077 = vunpack.c.l.s4 1966171168
    %v4078 = vunpack.c.0.s8 %v4077
    %v4079 = vlaneseq
    %v4080 = vshrl.u32 %v4079, 7
    %v4081 = vsub.s32 %v4078, %v4080
    %v4082 = vrot.slane %v4074, %v4081
    %v4084 = vunpack.c.l.s4 1966171168
    %v4085 = vunpack.c.0.s8 %v4084
    %v4086 = vlaneseq
    %v4087 = vshrl.u32 %v4086, 7
    %v4088 = vsub.s32 %v4085, %v4087
    %v4089 = vrot.slane %v4075, %v4088
    %v4092 = vunpack.c.l.s4 1966171168
    %v4093 = vunpack.c.0.s8 %v4092
    %v4094 = vlaneseq
    %v4095 = vshrl.u32 %v4094, 7
    %v4096 = vsub.s32 %v4093, %v4095
    %v4097 = vrot.slane %v3580, %v4096
    %v4098 = vcombine.high %v4097, %v4097
    %v4100 = vunpack.c.l.s4 1966171168
    %v4101 = vunpack.c.0.s8 %v4100
    %v4102 = vlaneseq
    %v4103 = vshrl.u32 %v4102, 7
    %v4104 = vsub.s32 %v4101, %v4103
    %v4105 = vrot.slane %v4097, %v4104
    %v4107 = vunpack.c.l.s4 1966171168
    %v4108 = vunpack.c.0.s8 %v4107
    %v4109 = vlaneseq
    %v4110 = vshrl.u32 %v4109, 7
    %v4111 = vsub.s32 %v4108, %v4110
    %v4112 = vrot.slane %v4098, %v4111
    %v4115 = vunpack.c.l.s4 1966171168
    %v4116 = vunpack.c.0.s8 %v4115
    %v4117 = vlaneseq
    %v4118 = vshrl.u32 %v4117, 7
    %v4119 = vsub.s32 %v4116, %v4118
    %v4120 = vrot.slane %v3944, %v4119
    %v4121 = vcombine.high %v4120, %v4120
    %v4123 = vunpack.c.l.s4 1966171168
    %v4124 = vunpack.c.0.s8 %v4123
    %v4125 = vlaneseq
    %v4126 = vshrl.u32 %v4125, 7
    %v4127 = vsub.s32 %v4124, %v4126
    %v4128 = vrot.slane %v4120, %v4127
    %v4130 = vunpack.c.l.s4 1966171168
    %v4131 = vunpack.c.0.s8 %v4130
    %v4132 = vlaneseq
    %v4133 = vshrl.u32 %v4132, 7
    %v4134 = vsub.s32 %v4131, %v4133
    %v4135 = vrot.slane %v4121, %v4134
    %v4136 = vlaneseq
    %v4137 = vshrl.u32 %v4136, 7
    %v4138 = vsub.s32 0, %v4137
    %v4139 = vrot.slane %v3990, %v4138
    %v4140 = vlaneseq
    %v4141 = vshrl.u32 %v4140, 7
    %v4142 = vsub.s32 0, %v4141
    %v4143 = vrot.slane %v3997, %v4142
    %v4146 = vlaneseq
    %v4147 = vshrl.u32 %v4146, 7
    %v4148 = vsub.s32 0, %v4147
    %v4149 = vrot.slane %v4013, %v4148
    %v4150 = vlaneseq
    %v4151 = vshrl.u32 %v4150, 7
    %v4152 = vsub.s32 0, %v4151
    %v4153 = vrot.slane %v4020, %v4152
    %v4156 = vlaneseq
    %v4157 = vshrl.u32 %v4156, 7
    %v4158 = vsub.s32 0, %v4157
    %v4159 = vrot.slane %v4036, %v4158
    %v4160 = vlaneseq
    %v4161 = vshrl.u32 %v4160, 7
    %v4162 = vsub.s32 0, %v4161
    %v4163 = vrot.slane %v4043, %v4162
    %v4166 = vlaneseq
    %v4167 = vshrl.u32 %v4166, 7
    %v4168 = vsub.s32 0, %v4167
    %v4169 = vrot.slane %v4059, %v4168
    %v4170 = vlaneseq
    %v4171 = vshrl.u32 %v4170, 7
    %v4172 = vsub.s32 0, %v4171
    %v4173 = vrot.slane %v4066, %v4172
    %v4176 = vlaneseq
    %v4177 = vshrl.u32 %v4176, 7
    %v4178 = vsub.s32 0, %v4177
    %v4179 = vrot.slane %v4082, %v4178
    %v4180 = vlaneseq
    %v4181 = vshrl.u32 %v4180, 7
    %v4182 = vsub.s32 0, %v4181
    %v4183 = vrot.slane %v4089, %v4182
    %v4186 = vlaneseq
    %v4187 = vshrl.u32 %v4186, 7
    %v4188 = vsub.s32 0, %v4187
    %v4189 = vrot.slane %v4105, %v4188
    %v4190 = vlaneseq
    %v4191 = vshrl.u32 %v4190, 7
    %v4192 = vsub.s32 0, %v4191
    %v4193 = vrot.slane %v4112, %v4192
    %v4196 = vlaneseq
    %v4197 = vshrl.u32 %v4196, 7
    %v4198 = vsub.s32 0, %v4197
    %v4199 = vrot.slane %v4128, %v4198
    %v4200 = vlaneseq
    %v4201 = vshrl.u32 %v4200, 7
    %v4202 = vsub.s32 0, %v4201
    %v4203 = vrot.slane %v4135, %v4202
    %vm4206 = vcmask 1040384
    %v4207 = vsel %vm4206, %v3965, %v4139
    %v4208 = vsel %vm4206, %v3972, %v4143
    %vm4209 = vcmask 1041408
    %v4210 = vsel %vm4209, %v4207, %v4149
    %v4211 = vsel %vm4209, %v4208, %v4153
    %vm4212 = vcmask 1042432
    %v4213 = vsel %vm4212, %v4210, %v4159
    %v4214 = vsel %vm4212, %v4211, %v4163
    %vm4215 = vcmask 1043456
    %v4216 = vsel %vm4215, %v4213, %v4169
    %v4217 = vsel %vm4215, %v4214, %v4173
    %vm4218 = vcmask 1044480
    %v4219 = vsel %vm4218, %v4216, %v4179
    %v4220 = vsel %vm4218, %v4217, %v4183
    %vm4221 = vcmask 1045504
    %v4222 = vsel %vm4221, %v4219, %v4189
    %v4223 = vsel %vm4221, %v4220, %v4193
    %vm4224 = vcmask 1046528
    %v4225 = vsel %vm4224, %v4222, %v4199
    %v4226 = vsel %vm4224, %v4223, %v4203
    %s4227 = scalar_lea.vmem [#allocation7], %s3949
    %4228 = vst [vmem:[%s4227] sm:$0xff] %v4225
    %4229 = vst [vmem:[%s4227 + $0x8] sm:$0xff] %v4226
    // Predicated region
    $region86: #{tpu_custom_call.1} parent=1 // pred_check
      %p4230 = pneg %p111
    $region87: #{tpu_custom_call.1} parent=1 // pred_check_branch
      %4232 = sbr.rel (%p4230) target = $region89
    $region88: #{tpu_custom_call.1} parent=1 // pred_region
      %v4233 = vld [vmem:[#allocation7] sm:$0xff]
      %v4234 = vld [vmem:[#allocation7 + $0x8] sm:$0xff]
      %v4237 = vrot.slane %v4233, 7
      %v4238 = vrot.slane %v4234, 7
      %v4241 = vsel %vm4206, 0.0, %v4237
      %v4242 = vsel %vm4206, 0.0, %v4238
      %v4243 = vrot.slane %v4233, 1
      %v4244 = vrot.slane %v4234, 1
      %v4247 = vsel %vm4224, %v4243, 0.0
      %v4248 = vsel %vm4224, %v4244, 0.0
      %v4249 = vld [vmem:[#allocation14] sm:$0xff]
      %v4250 = vld [vmem:[#allocation14 + $0x8] sm:$0xff]
      %v4251 = vld [vmem:[#allocation14 + $0x10] sm:$0xff]
      %v4252 = vld [vmem:[#allocation14 + $0x18] sm:$0xff]
      %v4253 = vld [vmem:[#allocation14 + $0x20] sm:$0xff]
      %v4254 = vld [vmem:[#allocation14 + $0x28] sm:$0xff]
      %v4255 = vld [vmem:[#allocation14 + $0x30] sm:$0xff]
      %v4256 = vld [vmem:[#allocation14 + $0x38] sm:$0xff]
      %v4257 = vld [vmem:[#allocation14 + $0x40] sm:$0xff]
      %v4258 = vld [vmem:[#allocation14 + $0x48] sm:$0xff]
      %v4259 = vld [vmem:[#allocation14 + $0x50] sm:$0xff]
      %v4260 = vld [vmem:[#allocation14 + $0x58] sm:$0xff]
      %v4261 = vld [vmem:[#allocation14 + $0x60] sm:$0xff]
      %v4262 = vld [vmem:[#allocation14 + $0x68] sm:$0xff]
      %v4263 = vld [vmem:[#allocation14 + $0x70] sm:$0xff]
      %v4264 = vld [vmem:[#allocation14 + $0x78] sm:$0xff]
      %v4265 = vld [vmem:[#allocation14 + $0x80] sm:$0xff]
      %v4266 = vld [vmem:[#allocation14 + $0x88] sm:$0xff]
      %v4267 = vld [vmem:[#allocation14 + $0x90] sm:$0xff]
      %v4268 = vld [vmem:[#allocation14 + $0x98] sm:$0xff]
      %v4269 = vld [vmem:[#allocation14 + $0xa0] sm:$0xff]
      %v4270 = vld [vmem:[#allocation14 + $0xa8] sm:$0xff]
      %v4271 = vld [vmem:[#allocation14 + $0xb0] sm:$0xff]
      %v4272 = vld [vmem:[#allocation14 + $0xb8] sm:$0xff]
      %v4273 = vld [vmem:[#allocation14 + $0xc0] sm:$0xff]
      %v4274 = vld [vmem:[#allocation14 + $0xc8] sm:$0xff]
      %v4275 = vld [vmem:[#allocation14 + $0xd0] sm:$0xff]
      %v4276 = vld [vmem:[#allocation14 + $0xd8] sm:$0xff]
      %v4277 = vld [vmem:[#allocation14 + $0xe0] sm:$0xff]
      %v4278 = vld [vmem:[#allocation14 + $0xe8] sm:$0xff]
      %v4279 = vld [vmem:[#allocation14 + $0xf0] sm:$0xff]
      %v4280 = vld [vmem:[#allocation14 + $0xf8] sm:$0xff]
      %s4281 = scalar_lea.vmem [#allocation14], 256
      %v4282 = vld [vmem:[%s4281] sm:$0xff]
      %v4283 = vld [vmem:[%s4281 + $0x8] sm:$0xff]
      %v4284 = vld [vmem:[%s4281 + $0x10] sm:$0xff]
      %v4285 = vld [vmem:[%s4281 + $0x18] sm:$0xff]
      %v4286 = vld [vmem:[%s4281 + $0x20] sm:$0xff]
      %v4287 = vld [vmem:[%s4281 + $0x28] sm:$0xff]
      %v4288 = vld [vmem:[%s4281 + $0x30] sm:$0xff]
      %v4289 = vld [vmem:[%s4281 + $0x38] sm:$0xff]
      %v4290 = vld [vmem:[%s4281 + $0x40] sm:$0xff]
      %v4291 = vld [vmem:[%s4281 + $0x48] sm:$0xff]
      %v4292 = vld [vmem:[%s4281 + $0x50] sm:$0xff]
      %v4293 = vld [vmem:[%s4281 + $0x58] sm:$0xff]
      %v4294 = vld [vmem:[%s4281 + $0x60] sm:$0xff]
      %v4295 = vld [vmem:[%s4281 + $0x68] sm:$0xff]
      %v4296 = vld [vmem:[%s4281 + $0x70] sm:$0xff]
      %v4297 = vld [vmem:[%s4281 + $0x78] sm:$0xff]
      %v4298 = vld [vmem:[%s4281 + $0x80] sm:$0xff]
      %v4299 = vld [vmem:[%s4281 + $0x88] sm:$0xff]
      %v4300 = vld [vmem:[%s4281 + $0x90] sm:$0xff]
      %v4301 = vld [vmem:[%s4281 + $0x98] sm:$0xff]
      %v4302 = vld [vmem:[%s4281 + $0xa0] sm:$0xff]
      %v4303 = vld [vmem:[%s4281 + $0xa8] sm:$0xff]
      %v4304 = vld [vmem:[%s4281 + $0xb0] sm:$0xff]
      %v4305 = vld [vmem:[%s4281 + $0xb8] sm:$0xff]
      %v4306 = vld [vmem:[%s4281 + $0xc0] sm:$0xff]
      %v4307 = vld [vmem:[%s4281 + $0xc8] sm:$0xff]
      %v4308 = vld [vmem:[%s4281 + $0xd0] sm:$0xff]
      %v4309 = vld [vmem:[%s4281 + $0xd8] sm:$0xff]
      %v4310 = vld [vmem:[%s4281 + $0xe0] sm:$0xff]
      %v4311 = vld [vmem:[%s4281 + $0xe8] sm:$0xff]
      %v4312 = vld [vmem:[%s4281 + $0xf0] sm:$0xff]
      %v4313 = vld [vmem:[%s4281 + $0xf8] sm:$0xff]
      %4314 = vmatprep.subr.mxu0 %v4283
      %4315 = vmatpush1.msra.mxu0 %v4282
      %4316 = vmatprep.subr.mxu0 %v4285
      %4317 = vmatpush1.msra.mxu0 %v4284
      %4318 = vmatprep.subr.mxu0 %v4287
      %4319 = vmatpush1.msra.mxu0 %v4286
      %4320 = vmatprep.subr.mxu0 %v4289
      %4321 = vmatpush1.msra.mxu0 %v4288
      %4322 = vmatprep.subr.mxu0 %v4291
      %4323 = vmatpush1.msra.mxu0 %v4290
      %4324 = vmatprep.subr.mxu0 %v4293
      %4325 = vmatpush1.msra.mxu0 %v4292
      %4326 = vmatprep.subr.mxu0 %v4295
      %4327 = vmatpush1.msra.mxu0 %v4294
      %4328 = vmatprep.subr.mxu0 %v4297
      %4329 = vmatpush1.msra.mxu0 %v4296
      %4330 = vmatprep.subr.mxu0 %v4299
      %4331 = vmatpush1.msra.mxu0 %v4298
      %4332 = vmatprep.subr.mxu0 %v4301
      %4333 = vmatpush1.msra.mxu0 %v4300
      %4334 = vmatprep.subr.mxu0 %v4303
      %4335 = vmatpush1.msra.mxu0 %v4302
      %4336 = vmatprep.subr.mxu0 %v4305
      %4337 = vmatpush1.msra.mxu0 %v4304
      %4338 = vmatprep.subr.mxu0 %v4307
      %4339 = vmatpush1.msra.mxu0 %v4306
      %4340 = vmatprep.subr.mxu0 %v4309
      %4341 = vmatpush1.msra.mxu0 %v4308
      %4342 = vmatprep.subr.mxu0 %v4311
      %4343 = vmatpush1.msra.mxu0 %v4310
      %4344 = vmatprep.subr.mxu0 %v4313
      %4345 = vmatpush1.msra.mxu0 %v4312
      %4346 = vmatprep.subr.mxu0 0.0
      %4347 = vmatpush1.msra.mxu0 0.0
      %4348 = vmatprep.subr.mxu0 0.0
      %4349 = vmatpush1.msra.mxu0 0.0
      %4350 = vmatprep.subr.mxu0 0.0
      %4351 = vmatpush1.msra.mxu0 0.0
      %4352 = vmatprep.subr.mxu0 0.0
      %4353 = vmatpush1.msra.mxu0 0.0
      %4354 = vmatprep.subr.mxu0 0.0
      %4355 = vmatpush1.msra.mxu0 0.0
      %4356 = vmatprep.subr.mxu0 0.0
      %4357 = vmatpush1.msra.mxu0 0.0
      %4358 = vmatprep.subr.mxu0 0.0
      %4359 = vmatpush1.msra.mxu0 0.0
      %4360 = vmatprep.subr.mxu0 0.0
      %4361 = vmatpush1.msra.mxu0 0.0
      %4362 = vmatprep.subr.mxu0 0.0
      %4363 = vmatpush1.msra.mxu0 0.0
      %4364 = vmatprep.subr.mxu0 0.0
      %4365 = vmatpush1.msra.mxu0 0.0
      %4366 = vmatprep.subr.mxu0 0.0
      %4367 = vmatpush1.msra.mxu0 0.0
      %4368 = vmatprep.subr.mxu0 0.0
      %4369 = vmatpush1.msra.mxu0 0.0
      %4370 = vmatprep.subr.mxu0 0.0
      %4371 = vmatpush1.msra.mxu0 0.0
      %4372 = vmatprep.subr.mxu0 0.0
      %4373 = vmatpush1.msra.mxu0 0.0
      %4374 = vmatprep.subr.mxu0 0.0
      %4375 = vmatpush1.msra.mxu0 0.0
      %4376 = vmatprep.subr.mxu0 0.0
      %4377 = vmatpush1.msra.mxu0 0.0
      %4378 = vmatprep.mubr.f32.mxu0 0.0
      %4379 = vmatmul.mubr.f32.gmra.mrb[0].mxu0 %v4233
      %v4380 = vpop.f32.mrb[0].mxu0
      %v4381 = vadd.f32 0.0, %v4380
      %v4382 = vpop.f32.mrb[0].mxu0
      %v4383 = vadd.f32 0.0, %v4382
      %4384 = vmatprep.mubr.f32.mxu0 0.0
      %4385 = vmatmul.mubr.f32.gmra.mrb[0].mxu0 %v4234
      %v4386 = vpop.f32.mrb[0].mxu0
      %v4387 = vadd.f32 0.0, %v4386
      %v4388 = vpop.f32.mrb[0].mxu0
      %v4389 = vadd.f32 0.0, %v4388
      %4390 = vdwg.mxu0
      %4391 = vmatprep.subr.mxu0 %v4250
      %4392 = vmatpush1.msra.mxu0 %v4249
      %4393 = vmatprep.subr.mxu0 %v4252
      %4394 = vmatpush1.msra.mxu0 %v4251
      %4395 = vmatprep.subr.mxu0 %v4254
      %4396 = vmatpush1.msra.mxu0 %v4253
      %4397 = vmatprep.subr.mxu0 %v4256
      %4398 = vmatpush1.msra.mxu0 %v4255
      %4399 = vmatprep.subr.mxu0 %v4258
      %4400 = vmatpush1.msra.mxu0 %v4257
      %4401 = vmatprep.subr.mxu0 %v4260
      %4402 = vmatpush1.msra.mxu0 %v4259
      %4403 = vmatprep.subr.mxu0 %v4262
      %4404 = vmatpush1.msra.mxu0 %v4261
      %4405 = vmatprep.subr.mxu0 %v4264
      %4406 = vmatpush1.msra.mxu0 %v4263
      %4407 = vmatprep.subr.mxu0 %v4266
      %4408 = vmatpush1.msra.mxu0 %v4265
      %4409 = vmatprep.subr.mxu0 %v4268
      %4410 = vmatpush1.msra.mxu0 %v4267
      %4411 = vmatprep.subr.mxu0 %v4270
      %4412 = vmatpush1.msra.mxu0 %v4269
      %4413 = vmatprep.subr.mxu0 %v4272
      %4414 = vmatpush1.msra.mxu0 %v4271
      %4415 = vmatprep.subr.mxu0 %v4274
      %4416 = vmatpush1.msra.mxu0 %v4273
      %4417 = vmatprep.subr.mxu0 %v4276
      %4418 = vmatpush1.msra.mxu0 %v4275
      %4419 = vmatprep.subr.mxu0 %v4278
      %4420 = vmatpush1.msra.mxu0 %v4277
      %4421 = vmatprep.subr.mxu0 %v4280
      %4422 = vmatpush1.msra.mxu0 %v4279
      %4423 = vmatprep.subr.mxu0 0.0
      %4424 = vmatpush1.msra.mxu0 0.0
      %4425 = vmatprep.subr.mxu0 0.0
      %4426 = vmatpush1.msra.mxu0 0.0
      %4427 = vmatprep.subr.mxu0 0.0
      %4428 = vmatpush1.msra.mxu0 0.0
      %4429 = vmatprep.subr.mxu0 0.0
      %4430 = vmatpush1.msra.mxu0 0.0
      %4431 = vmatprep.subr.mxu0 0.0
      %4432 = vmatpush1.msra.mxu0 0.0
      %4433 = vmatprep.subr.mxu0 0.0
      %4434 = vmatpush1.msra.mxu0 0.0
      %4435 = vmatprep.subr.mxu0 0.0
      %4436 = vmatpush1.msra.mxu0 0.0
      %4437 = vmatprep.subr.mxu0 0.0
      %4438 = vmatpush1.msra.mxu0 0.0
      %4439 = vmatprep.subr.mxu0 0.0
      %4440 = vmatpush1.msra.mxu0 0.0
      %4441 = vmatprep.subr.mxu0 0.0
      %4442 = vmatpush1.msra.mxu0 0.0
      %4443 = vmatprep.subr.mxu0 0.0
      %4444 = vmatpush1.msra.mxu0 0.0
      %4445 = vmatprep.subr.mxu0 0.0
      %4446 = vmatpush1.msra.mxu0 0.0
      %4447 = vmatprep.subr.mxu0 0.0
      %4448 = vmatpush1.msra.mxu0 0.0
      %4449 = vmatprep.subr.mxu0 0.0
      %4450 = vmatpush1.msra.mxu0 0.0
      %4451 = vmatprep.subr.mxu0 0.0
      %4452 = vmatpush1.msra.mxu0 0.0
      %4453 = vmatprep.subr.mxu0 0.0
      %4454 = vmatpush1.msra.mxu0 0.0
      %4455 = vmatprep.mubr.f32.mxu0 0.0
      %4456 = vmatmul.mubr.f32.gmra.mrb[0].mxu0 %v4241
      %v4457 = vpop.f32.mrb[0].mxu0
      %v4458 = vadd.f32 %v4381, %v4457
      %v4459 = vpop.f32.mrb[0].mxu0
      %v4460 = vadd.f32 %v4383, %v4459
      %4461 = vmatprep.mubr.f32.mxu0 0.0
      %4462 = vmatmul.mubr.f32.gmra.mrb[0].mxu0 %v4242
      %v4463 = vpop.f32.mrb[0].mxu0
      %v4464 = vadd.f32 %v4387, %v4463
      %v4465 = vpop.f32.mrb[0].mxu0
      %v4466 = vadd.f32 %v4389, %v4465
      %4467 = vdwg.mxu0
      %s4468 = scalar_lea.vmem [#allocation14], 512
      %v4469 = vld [vmem:[%s4468] sm:$0xff]
      %v4470 = vld [vmem:[%s4468 + $0x8] sm:$0xff]
      %v4471 = vld [vmem:[%s4468 + $0x10] sm:$0xff]
      %v4472 = vld [vmem:[%s4468 + $0x18] sm:$0xff]
      %v4473 = vld [vmem:[%s4468 + $0x20] sm:$0xff]
      %v4474 = vld [vmem:[%s4468 + $0x28] sm:$0xff]
      %v4475 = vld [vmem:[%s4468 + $0x30] sm:$0xff]
      %v4476 = vld [vmem:[%s4468 + $0x38] sm:$0xff]
      %v4477 = vld [vmem:[%s4468 + $0x40] sm:$0xff]
      %v4478 = vld [vmem:[%s4468 + $0x48] sm:$0xff]
      %v4479 = vld [vmem:[%s4468 + $0x50] sm:$0xff]
      %v4480 = vld [vmem:[%s4468 + $0x58] sm:$0xff]
      %v4481 = vld [vmem:[%s4468 + $0x60] sm:$0xff]
      %v4482 = vld [vmem:[%s4468 + $0x68] sm:$0xff]
      %v4483 = vld [vmem:[%s4468 + $0x70] sm:$0xff]
      %v4484 = vld [vmem:[%s4468 + $0x78] sm:$0xff]
      %v4485 = vld [vmem:[%s4468 + $0x80] sm:$0xff]
      %v4486 = vld [vmem:[%s4468 + $0x88] sm:$0xff]
      %v4487 = vld [vmem:[%s4468 + $0x90] sm:$0xff]
      %v4488 = vld [vmem:[%s4468 + $0x98] sm:$0xff]
      %v4489 = vld [vmem:[%s4468 + $0xa0] sm:$0xff]
      %v4490 = vld [vmem:[%s4468 + $0xa8] sm:$0xff]
      %v4491 = vld [vmem:[%s4468 + $0xb0] sm:$0xff]
      %v4492 = vld [vmem:[%s4468 + $0xb8] sm:$0xff]
      %v4493 = vld [vmem:[%s4468 + $0xc0] sm:$0xff]
      %v4494 = vld [vmem:[%s4468 + $0xc8] sm:$0xff]
      %v4495 = vld [vmem:[%s4468 + $0xd0] sm:$0xff]
      %v4496 = vld [vmem:[%s4468 + $0xd8] sm:$0xff]
      %v4497 = vld [vmem:[%s4468 + $0xe0] sm:$0xff]
      %v4498 = vld [vmem:[%s4468 + $0xe8] sm:$0xff]
      %v4499 = vld [vmem:[%s4468 + $0xf0] sm:$0xff]
      %v4500 = vld [vmem:[%s4468 + $0xf8] sm:$0xff]
      %4501 = vmatprep.subr.mxu0 %v4470
      %4502 = vmatpush1.msra.mxu0 %v4469
      %4503 = vmatprep.subr.mxu0 %v4472
      %4504 = vmatpush1.msra.mxu0 %v4471
      %4505 = vmatprep.subr.mxu0 %v4474
      %4506 = vmatpush1.msra.mxu0 %v4473
      %4507 = vmatprep.subr.mxu0 %v4476
      %4508 = vmatpush1.msra.mxu0 %v4475
      %4509 = vmatprep.subr.mxu0 %v4478
      %4510 = vmatpush1.msra.mxu0 %v4477
      %4511 = vmatprep.subr.mxu0 %v4480
      %4512 = vmatpush1.msra.mxu0 %v4479
      %4513 = vmatprep.subr.mxu0 %v4482
      %4514 = vmatpush1.msra.mxu0 %v4481
      %4515 = vmatprep.subr.mxu0 %v4484
      %4516 = vmatpush1.msra.mxu0 %v4483
      %4517 = vmatprep.subr.mxu0 %v4486
      %4518 = vmatpush1.msra.mxu0 %v4485
      %4519 = vmatprep.subr.mxu0 %v4488
      %4520 = vmatpush1.msra.mxu0 %v4487
      %4521 = vmatprep.subr.mxu0 %v4490
      %4522 = vmatpush1.msra.mxu0 %v4489
      %4523 = vmatprep.subr.mxu0 %v4492
      %4524 = vmatpush1.msra.mxu0 %v4491
      %4525 = vmatprep.subr.mxu0 %v4494
      %4526 = vmatpush1.msra.mxu0 %v4493
      %4527 = vmatprep.subr.mxu0 %v4496
      %4528 = vmatpush1.msra.mxu0 %v4495
      %4529 = vmatprep.subr.mxu0 %v4498
      %4530 = vmatpush1.msra.mxu0 %v4497
      %4531 = vmatprep.subr.mxu0 %v4500
      %4532 = vmatpush1.msra.mxu0 %v4499
      %4533 = vmatprep.subr.mxu0 0.0
      %4534 = vmatpush1.msra.mxu0 0.0
      %4535 = vmatprep.subr.mxu0 0.0
      %4536 = vmatpush1.msra.mxu0 0.0
      %4537 = vmatprep.subr.mxu0 0.0
      %4538 = vmatpush1.msra.mxu0 0.0
      %4539 = vmatprep.subr.mxu0 0.0
      %4540 = vmatpush1.msra.mxu0 0.0
      %4541 = vmatprep.subr.mxu0 0.0
      %4542 = vmatpush1.msra.mxu0 0.0
      %4543 = vmatprep.subr.mxu0 0.0
      %4544 = vmatpush1.msra.mxu0 0.0
      %4545 = vmatprep.subr.mxu0 0.0
      %4546 = vmatpush1.msra.mxu0 0.0
      %4547 = vmatprep.subr.mxu0 0.0
      %4548 = vmatpush1.msra.mxu0 0.0
      %4549 = vmatprep.subr.mxu0 0.0
      %4550 = vmatpush1.msra.mxu0 0.0
      %4551 = vmatprep.subr.mxu0 0.0
      %4552 = vmatpush1.msra.mxu0 0.0
      %4553 = vmatprep.subr.mxu0 0.0
      %4554 = vmatpush1.msra.mxu0 0.0
      %4555 = vmatprep.subr.mxu0 0.0
      %4556 = vmatpush1.msra.mxu0 0.0
      %4557 = vmatprep.subr.mxu0 0.0
      %4558 = vmatpush1.msra.mxu0 0.0
      %4559 = vmatprep.subr.mxu0 0.0
      %4560 = vmatpush1.msra.mxu0 0.0
      %4561 = vmatprep.subr.mxu0 0.0
      %4562 = vmatpush1.msra.mxu0 0.0
      %4563 = vmatprep.subr.mxu0 0.0
      %4564 = vmatpush1.msra.mxu0 0.0
      %4565 = vmatprep.mubr.f32.mxu0 0.0
      %4566 = vmatmul.mubr.f32.gmra.mrb[0].mxu0 %v4247
      %v4567 = vpop.f32.mrb[0].mxu0
      %v4568 = vadd.f32 0.0, %v4567
      %v4569 = vpop.f32.mrb[0].mxu0
      %v4570 = vadd.f32 0.0, %v4569
      %4571 = vmatprep.mubr.f32.mxu0 0.0
      %4572 = vmatmul.mubr.f32.gmra.mrb[0].mxu0 %v4248
      %v4573 = vpop.f32.mrb[0].mxu0
      %v4574 = vadd.f32 0.0, %v4573
      %v4575 = vpop.f32.mrb[0].mxu0
      %v4576 = vadd.f32 0.0, %v4575
      %4577 = vdwg.mxu0
      %v4578 = vadd.f32 %v4458, %v4568
      %v4579 = vadd.f32 %v4460, %v4570
      %v4580 = vadd.f32 %v4464, %v4574
      %v4581 = vadd.f32 %v4466, %v4576
      %v4582 = vld [vmem:[%s7] sm:$0x3]
      %v4584 = vlaneseq
      %v4585 = vshrl.u32 %v4584, 7
      %v4586 = vsub.s32 0, %v4585
      %v4587 = vrot.slane %v4582, %v4586
      %v4588 = vlaneseq
      %v4589 = vshrl.u32 %v4588, 7
      %v4590 = vsub.s32 1, %v4589
      %v4591 = vrot.slane %v4582, %v4590
      %v4594 = vadd.f32 %v4578, %v4587
      %v4595 = vadd.f32 %v4579, %v4591
      %v4596 = vadd.f32 %v4580, %v4587
      %v4597 = vadd.f32 %v4581, %v4591
      %v4598 = vadd.f32 %v4594, %v4596
      %v4599 = vrot.slane %v4598, 4
      %v4600 = vadd.f32 %v4598, %v4599
      %v4601 = vrot.slane %v4600, 2
      %v4602 = vadd.f32 %v4600, %v4601
      %v4603 = vrot.slane %v4602, 1
      %v4604 = vadd.f32 %v4602, %v4603
      %v4605 = vadd.f32 %v4595, %v4597
      %v4606 = vrot.slane %v4605, 4
      %v4607 = vadd.f32 %v4605, %v4606
      %v4608 = vrot.slane %v4607, 2
      %v4609 = vadd.f32 %v4607, %v4608
      %v4610 = vrot.slane %v4609, 1
      %v4611 = vadd.f32 %v4609, %v4610
      %v4612 = vmul.f32 %v4594, %v4594
      %v4613 = vmul.f32 %v4595, %v4595
      %v4614 = vmul.f32 %v4596, %v4596
      %v4615 = vmul.f32 %v4597, %v4597
      %v4616 = vadd.f32 %v4612, %v4614
      %v4617 = vrot.slane %v4616, 4
      %v4618 = vadd.f32 %v4616, %v4617
      %v4619 = vrot.slane %v4618, 2
      %v4620 = vadd.f32 %v4618, %v4619
      %v4621 = vrot.slane %v4620, 1
      %v4622 = vadd.f32 %v4620, %v4621
      %v4623 = vadd.f32 %v4613, %v4615
      %v4624 = vrot.slane %v4623, 4
      %v4625 = vadd.f32 %v4623, %v4624
      %v4626 = vrot.slane %v4625, 2
      %v4627 = vadd.f32 %v4625, %v4626
      %v4628 = vrot.slane %v4627, 1
      %v4629 = vadd.f32 %v4627, %v4628
      %v4630 = vmul.f32 %v4604, 0.0625
      %v4631 = vmul.f32 %v4611, 0.0625
      %v4632 = vmul.f32 %v4622, 0.0625
      %v4633 = vmul.f32 %v4629, 0.0625
      %v4634 = vmul.f32 %v4630, %v4630
      %v4635 = vmul.f32 %v4631, %v4631
      %v4636 = vsub.f32 %v4632, %v4634
      %v4637 = vsub.f32 %v4633, %v4635
      %v4638 = vsub.f32 %v4594, %v4630
      %v4639 = vsub.f32 %v4595, %v4631
      %v4640 = vsub.f32 %v4596, %v4630
      %v4641 = vsub.f32 %v4597, %v4631
      %v4642 = vadd.f32 %v4636, 1e-05
      %v4643 = vadd.f32 %v4637, 1e-05
      %v4644 = vrsqrt.pop %v4642
      %v4645 = vrsqrt.pop %v4643
      %v4646 = vmul.f32 %v4638, %v4644
      %v4647 = vmul.f32 %v4639, %v4645
      %v4648 = vmul.f32 %v4640, %v4644
      %v4649 = vmul.f32 %v4641, %v4645
      %v4650 = vld [vmem:[%s8] sm:$0x3]
      %v4652 = vlaneseq
      %v4653 = vshrl.u32 %v4652, 7
      %v4654 = vsub.s32 0, %v4653
      %v4655 = vrot.slane %v4650, %v4654
      %v4656 = vlaneseq
      %v4657 = vshrl.u32 %v4656, 7
      %v4658 = vsub.s32 1, %v4657
      %v4659 = vrot.slane %v4650, %v4658
      %v4662 = vmul.f32 %v4646, %v4655
      %v4663 = vmul.f32 %v4647, %v4659
      %v4664 = vmul.f32 %v4648, %v4655
      %v4665 = vmul.f32 %v4649, %v4659
      %v4666 = vld [vmem:[%s9] sm:$0x3]
      %v4668 = vlaneseq
      %v4669 = vshrl.u32 %v4668, 7
      %v4670 = vsub.s32 0, %v4669
      %v4671 = vrot.slane %v4666, %v4670
      %v4672 = vlaneseq
      %v4673 = vshrl.u32 %v4672, 7
      %v4674 = vsub.s32 1, %v4673
      %v4675 = vrot.slane %v4666, %v4674
      %v4678 = vadd.f32 %v4662, %v4671
      %v4679 = vadd.f32 %v4663, %v4675
      %v4680 = vadd.f32 %v4664, %v4671
      %v4681 = vadd.f32 %v4665, %v4675
      %vm4682 = vcmp.gt.f32.partialorder %v4678, 0.0
      %vm4683 = vcmp.gt.f32.partialorder %v4679, 0.0
      %vm4684 = vcmp.gt.f32.partialorder %v4680, 0.0
      %vm4685 = vcmp.gt.f32.partialorder %v4681, 0.0
      %v4686 = vmul.f32 %v4678, 0.2
      %v4687 = vmul.f32 %v4679, 0.2
      %v4688 = vmul.f32 %v4680, 0.2
      %v4689 = vmul.f32 %v4681, 0.2
      %v4690 = vsel %vm4682, %v4678, %v4686
      %v4691 = vsel %vm4683, %v4679, %v4687
      %v4692 = vsel %vm4684, %v4680, %v4688
      %v4693 = vsel %vm4685, %v4681, %v4689
      %v4698 = vrot.slane %v4690, 7
      %v4699 = vrot.slane %v4691, 7
      %v4700 = vrot.slane %v4692, 7
      %v4701 = vrot.slane %v4693, 7
      %v4706 = vsel %vm4206, 0.0, %v4698
      %v4707 = vsel %vm4206, 0.0, %v4699
      %v4708 = vsel %vm4206, 0.0, %v4700
      %v4709 = vsel %vm4206, 0.0, %v4701
      %v4710 = vrot.slane %v4690, 1
      %v4711 = vrot.slane %v4691, 1
      %v4712 = vrot.slane %v4692, 1
      %v4713 = vrot.slane %v4693, 1
      %v4718 = vsel %vm4224, %v4710, 0.0
      %v4719 = vsel %vm4224, %v4711, 0.0
      %v4720 = vsel %vm4224, %v4712, 0.0
      %v4721 = vsel %vm4224, %v4713, 0.0
      %v4722 = vld [vmem:[#allocation15] sm:$0xff]
      %v4723 = vld [vmem:[#allocation15 + $0x8] sm:$0xff]
      %v4724 = vld [vmem:[#allocation15 + $0x10] sm:$0xff]
      %v4725 = vld [vmem:[#allocation15 + $0x18] sm:$0xff]
      %v4726 = vld [vmem:[#allocation15 + $0x20] sm:$0xff]
      %v4727 = vld [vmem:[#allocation15 + $0x28] sm:$0xff]
      %v4728 = vld [vmem:[#allocation15 + $0x30] sm:$0xff]
      %v4729 = vld [vmem:[#allocation15 + $0x38] sm:$0xff]
      %v4730 = vld [vmem:[#allocation15 + $0x40] sm:$0xff]
      %v4731 = vld [vmem:[#allocation15 + $0x48] sm:$0xff]
      %v4732 = vld [vmem:[#allocation15 + $0x50] sm:$0xff]
      %v4733 = vld [vmem:[#allocation15 + $0x58] sm:$0xff]
      %v4734 = vld [vmem:[#allocation15 + $0x60] sm:$0xff]
      %v4735 = vld [vmem:[#allocation15 + $0x68] sm:$0xff]
      %v4736 = vld [vmem:[#allocation15 + $0x70] sm:$0xff]
      %v4737 = vld [vmem:[#allocation15 + $0x78] sm:$0xff]
      %v4738 = vld [vmem:[#allocation15 + $0x80] sm:$0xff]
      %v4739 = vld [vmem:[#allocation15 + $0x88] sm:$0xff]
      %v4740 = vld [vmem:[#allocation15 + $0x90] sm:$0xff]
      %v4741 = vld [vmem:[#allocation15 + $0x98] sm:$0xff]
      %v4742 = vld [vmem:[#allocation15 + $0xa0] sm:$0xff]
      %v4743 = vld [vmem:[#allocation15 + $0xa8] sm:$0xff]
      %v4744 = vld [vmem:[#allocation15 + $0xb0] sm:$0xff]
      %v4745 = vld [vmem:[#allocation15 + $0xb8] sm:$0xff]
      %v4746 = vld [vmem:[#allocation15 + $0xc0] sm:$0xff]
      %v4747 = vld [vmem:[#allocation15 + $0xc8] sm:$0xff]
      %v4748 = vld [vmem:[#allocation15 + $0xd0] sm:$0xff]
      %v4749 = vld [vmem:[#allocation15 + $0xd8] sm:$0xff]
      %v4750 = vld [vmem:[#allocation15 + $0xe0] sm:$0xff]
      %v4751 = vld [vmem:[#allocation15 + $0xe8] sm:$0xff]
      %v4752 = vld [vmem:[#allocation15 + $0xf0] sm:$0xff]
      %v4753 = vld [vmem:[#allocation15 + $0xf8] sm:$0xff]
      %s4754 = scalar_lea.vmem [#allocation15], 256
      %v4755 = vld [vmem:[%s4754] sm:$0xff]
      %v4756 = vld [vmem:[%s4754 + $0x8] sm:$0xff]
      %v4757 = vld [vmem:[%s4754 + $0x10] sm:$0xff]
      %v4758 = vld [vmem:[%s4754 + $0x18] sm:$0xff]
      %v4759 = vld [vmem:[%s4754 + $0x20] sm:$0xff]
      %v4760 = vld [vmem:[%s4754 + $0x28] sm:$0xff]
      %v4761 = vld [vmem:[%s4754 + $0x30] sm:$0xff]
      %v4762 = vld [vmem:[%s4754 + $0x38] sm:$0xff]
      %v4763 = vld [vmem:[%s4754 + $0x40] sm:$0xff]
      %v4764 = vld [vmem:[%s4754 + $0x48] sm:$0xff]
      %v4765 = vld [vmem:[%s4754 + $0x50] sm:$0xff]
      %v4766 = vld [vmem:[%s4754 + $0x58] sm:$0xff]
      %v4767 = vld [vmem:[%s4754 + $0x60] sm:$0xff]
      %v4768 = vld [vmem:[%s4754 + $0x68] sm:$0xff]
      %v4769 = vld [vmem:[%s4754 + $0x70] sm:$0xff]
      %v4770 = vld [vmem:[%s4754 + $0x78] sm:$0xff]
      %v4771 = vld [vmem:[%s4754 + $0x80] sm:$0xff]
      %v4772 = vld [vmem:[%s4754 + $0x88] sm:$0xff]
      %v4773 = vld [vmem:[%s4754 + $0x90] sm:$0xff]
      %v4774 = vld [vmem:[%s4754 + $0x98] sm:$0xff]
      %v4775 = vld [vmem:[%s4754 + $0xa0] sm:$0xff]
      %v4776 = vld [vmem:[%s4754 + $0xa8] sm:$0xff]
      %v4777 = vld [vmem:[%s4754 + $0xb0] sm:$0xff]
      %v4778 = vld [vmem:[%s4754 + $0xb8] sm:$0xff]
      %v4779 = vld [vmem:[%s4754 + $0xc0] sm:$0xff]
      %v4780 = vld [vmem:[%s4754 + $0xc8] sm:$0xff]
      %v4781 = vld [vmem:[%s4754 + $0xd0] sm:$0xff]
      %v4782 = vld [vmem:[%s4754 + $0xd8] sm:$0xff]
      %v4783 = vld [vmem:[%s4754 + $0xe0] sm:$0xff]
      %v4784 = vld [vmem:[%s4754 + $0xe8] sm:$0xff]
      %v4785 = vld [vmem:[%s4754 + $0xf0] sm:$0xff]
      %v4786 = vld [vmem:[%s4754 + $0xf8] sm:$0xff]
      %4787 = vmatprep.subr.mxu0 0.0
      %4788 = vmatpush1.msra.mxu0 %v4755
      %4789 = vmatprep.subr.mxu0 0.0
      %4790 = vmatpush1.msra.mxu0 %v4756
      %4791 = vmatprep.subr.mxu0 0.0
      %4792 = vmatpush1.msra.mxu0 %v4757
      %4793 = vmatprep.subr.mxu0 0.0
      %4794 = vmatpush1.msra.mxu0 %v4758
      %4795 = vmatprep.subr.mxu0 0.0
      %4796 = vmatpush1.msra.mxu0 %v4759
      %4797 = vmatprep.subr.mxu0 0.0
      %4798 = vmatpush1.msra.mxu0 %v4760
      %4799 = vmatprep.subr.mxu0 0.0
      %4800 = vmatpush1.msra.mxu0 %v4761
      %4801 = vmatprep.subr.mxu0 0.0
      %4802 = vmatpush1.msra.mxu0 %v4762
      %4803 = vmatprep.subr.mxu0 0.0
      %4804 = vmatpush1.msra.mxu0 %v4763
      %4805 = vmatprep.subr.mxu0 0.0
      %4806 = vmatpush1.msra.mxu0 %v4764
      %4807 = vmatprep.subr.mxu0 0.0
      %4808 = vmatpush1.msra.mxu0 %v4765
      %4809 = vmatprep.subr.mxu0 0.0
      %4810 = vmatpush1.msra.mxu0 %v4766
      %4811 = vmatprep.subr.mxu0 0.0
      %4812 = vmatpush1.msra.mxu0 %v4767
      %4813 = vmatprep.subr.mxu0 0.0
      %4814 = vmatpush1.msra.mxu0 %v4768
      %4815 = vmatprep.subr.mxu0 0.0
      %4816 = vmatpush1.msra.mxu0 %v4769
      %4817 = vmatprep.subr.mxu0 0.0
      %4818 = vmatpush1.msra.mxu0 %v4770
      %4819 = vmatprep.subr.mxu0 0.0
      %4820 = vmatpush1.msra.mxu0 %v4771
      %4821 = vmatprep.subr.mxu0 0.0
      %4822 = vmatpush1.msra.mxu0 %v4772
      %4823 = vmatprep.subr.mxu0 0.0
      %4824 = vmatpush1.msra.mxu0 %v4773
      %4825 = vmatprep.subr.mxu0 0.0
      %4826 = vmatpush1.msra.mxu0 %v4774
      %4827 = vmatprep.subr.mxu0 0.0
      %4828 = vmatpush1.msra.mxu0 %v4775
      %4829 = vmatprep.subr.mxu0 0.0
      %4830 = vmatpush1.msra.mxu0 %v4776
      %4831 = vmatprep.subr.mxu0 0.0
      %4832 = vmatpush1.msra.mxu0 %v4777
      %4833 = vmatprep.subr.mxu0 0.0
      %4834 = vmatpush1.msra.mxu0 %v4778
      %4835 = vmatprep.subr.mxu0 0.0
      %4836 = vmatpush1.msra.mxu0 %v4779
      %4837 = vmatprep.subr.mxu0 0.0
      %4838 = vmatpush1.msra.mxu0 %v4780
      %4839 = vmatprep.subr.mxu0 0.0
      %4840 = vmatpush1.msra.mxu0 %v4781
      %4841 = vmatprep.subr.mxu0 0.0
      %4842 = vmatpush1.msra.mxu0 %v4782
      %4843 = vmatprep.subr.mxu0 0.0
      %4844 = vmatpush1.msra.mxu0 %v4783
      %4845 = vmatprep.subr.mxu0 0.0
      %4846 = vmatpush1.msra.mxu0 %v4784
      %4847 = vmatprep.subr.mxu0 0.0
      %4848 = vmatpush1.msra.mxu0 %v4785
      %4849 = vmatprep.subr.mxu0 0.0
      %4850 = vmatpush1.msra.mxu0 %v4786
      %4851 = vmatprep.mubr.f32.mxu0 %v4691
      %4852 = vmatmul.mubr.f32.gmra.mrb[0].mxu0 %v4690
      %v4853 = vpop.f32.mrb[0].mxu0
      %v4854 = vadd.f32 0.0, %v4853
      %v4855 = vpop.f32.mrb[0].mxu0
      %4856 = vmatprep.mubr.f32.mxu0 %v4693
      %4857 = vmatmul.mubr.f32.gmra.mrb[0].mxu0 %v4692
      %v4858 = vpop.f32.mrb[0].mxu0
      %v4859 = vadd.f32 0.0, %v4858
      %v4860 = vpop.f32.mrb[0].mxu0
      %4861 = vdwg.mxu0
      %4862 = vmatprep.subr.mxu0 0.0
      %4863 = vmatpush1.msra.mxu0 %v4722
      %4864 = vmatprep.subr.mxu0 0.0
      %4865 = vmatpush1.msra.mxu0 %v4723
      %4866 = vmatprep.subr.mxu0 0.0
      %4867 = vmatpush1.msra.mxu0 %v4724
      %4868 = vmatprep.subr.mxu0 0.0
      %4869 = vmatpush1.msra.mxu0 %v4725
      %4870 = vmatprep.subr.mxu0 0.0
      %4871 = vmatpush1.msra.mxu0 %v4726
      %4872 = vmatprep.subr.mxu0 0.0
      %4873 = vmatpush1.msra.mxu0 %v4727
      %4874 = vmatprep.subr.mxu0 0.0
      %4875 = vmatpush1.msra.mxu0 %v4728
      %4876 = vmatprep.subr.mxu0 0.0
      %4877 = vmatpush1.msra.mxu0 %v4729
      %4878 = vmatprep.subr.mxu0 0.0
      %4879 = vmatpush1.msra.mxu0 %v4730
      %4880 = vmatprep.subr.mxu0 0.0
      %4881 = vmatpush1.msra.mxu0 %v4731
      %4882 = vmatprep.subr.mxu0 0.0
      %4883 = vmatpush1.msra.mxu0 %v4732
      %4884 = vmatprep.subr.mxu0 0.0
      %4885 = vmatpush1.msra.mxu0 %v4733
      %4886 = vmatprep.subr.mxu0 0.0
      %4887 = vmatpush1.msra.mxu0 %v4734
      %4888 = vmatprep.subr.mxu0 0.0
      %4889 = vmatpush1.msra.mxu0 %v4735
      %4890 = vmatprep.subr.mxu0 0.0
      %4891 = vmatpush1.msra.mxu0 %v4736
      %4892 = vmatprep.subr.mxu0 0.0
      %4893 = vmatpush1.msra.mxu0 %v4737
      %4894 = vmatprep.subr.mxu0 0.0
      %4895 = vmatpush1.msra.mxu0 %v4738
      %4896 = vmatprep.subr.mxu0 0.0
      %4897 = vmatpush1.msra.mxu0 %v4739
      %4898 = vmatprep.subr.mxu0 0.0
      %4899 = vmatpush1.msra.mxu0 %v4740
      %4900 = vmatprep.subr.mxu0 0.0
      %4901 = vmatpush1.msra.mxu0 %v4741
      %4902 = vmatprep.subr.mxu0 0.0
      %4903 = vmatpush1.msra.mxu0 %v4742
      %4904 = vmatprep.subr.mxu0 0.0
      %4905 = vmatpush1.msra.mxu0 %v4743
      %4906 = vmatprep.subr.mxu0 0.0
      %4907 = vmatpush1.msra.mxu0 %v4744
      %4908 = vmatprep.subr.mxu0 0.0
      %4909 = vmatpush1.msra.mxu0 %v4745
      %4910 = vmatprep.subr.mxu0 0.0
      %4911 = vmatpush1.msra.mxu0 %v4746
      %4912 = vmatprep.subr.mxu0 0.0
      %4913 = vmatpush1.msra.mxu0 %v4747
      %4914 = vmatprep.subr.mxu0 0.0
      %4915 = vmatpush1.msra.mxu0 %v4748
      %4916 = vmatprep.subr.mxu0 0.0
      %4917 = vmatpush1.msra.mxu0 %v4749
      %4918 = vmatprep.subr.mxu0 0.0
      %4919 = vmatpush1.msra.mxu0 %v4750
      %4920 = vmatprep.subr.mxu0 0.0
      %4921 = vmatpush1.msra.mxu0 %v4751
      %4922 = vmatprep.subr.mxu0 0.0
      %4923 = vmatpush1.msra.mxu0 %v4752
      %4924 = vmatprep.subr.mxu0 0.0
      %4925 = vmatpush1.msra.mxu0 %v4753
      %4926 = vmatprep.mubr.f32.mxu0 %v4707
      %4927 = vmatmul.mubr.f32.gmra.mrb[0].mxu0 %v4706
      %v4928 = vpop.f32.mrb[0].mxu0
      %v4929 = vadd.f32 %v4854, %v4928
      %v4930 = vpop.f32.mrb[0].mxu0
      %4931 = vmatprep.mubr.f32.mxu0 %v4709
      %4932 = vmatmul.mubr.f32.gmra.mrb[0].mxu0 %v4708
      %v4933 = vpop.f32.mrb[0].mxu0
      %v4934 = vadd.f32 %v4859, %v4933
      %v4935 = vpop.f32.mrb[0].mxu0
      %4936 = vdwg.mxu0
      %s4937 = scalar_lea.vmem [#allocation15], 512
      %v4938 = vld [vmem:[%s4937] sm:$0xff]
      %v4939 = vld [vmem:[%s4937 + $0x8] sm:$0xff]
      %v4940 = vld [vmem:[%s4937 + $0x10] sm:$0xff]
      %v4941 = vld [vmem:[%s4937 + $0x18] sm:$0xff]
      %v4942 = vld [vmem:[%s4937 + $0x20] sm:$0xff]
      %v4943 = vld [vmem:[%s4937 + $0x28] sm:$0xff]
      %v4944 = vld [vmem:[%s4937 + $0x30] sm:$0xff]
      %v4945 = vld [vmem:[%s4937 + $0x38] sm:$0xff]
      %v4946 = vld [vmem:[%s4937 + $0x40] sm:$0xff]
      %v4947 = vld [vmem:[%s4937 + $0x48] sm:$0xff]
      %v4948 = vld [vmem:[%s4937 + $0x50] sm:$0xff]
      %v4949 = vld [vmem:[%s4937 + $0x58] sm:$0xff]
      %v4950 = vld [vmem:[%s4937 + $0x60] sm:$0xff]
      %v4951 = vld [vmem:[%s4937 + $0x68] sm:$0xff]
      %v4952 = vld [vmem:[%s4937 + $0x70] sm:$0xff]
      %v4953 = vld [vmem:[%s4937 + $0x78] sm:$0xff]
      %v4954 = vld [vmem:[%s4937 + $0x80] sm:$0xff]
      %v4955 = vld [vmem:[%s4937 + $0x88] sm:$0xff]
      %v4956 = vld [vmem:[%s4937 + $0x90] sm:$0xff]
      %v4957 = vld [vmem:[%s4937 + $0x98] sm:$0xff]
      %v4958 = vld [vmem:[%s4937 + $0xa0] sm:$0xff]
      %v4959 = vld [vmem:[%s4937 + $0xa8] sm:$0xff]
      %v4960 = vld [vmem:[%s4937 + $0xb0] sm:$0xff]
      %v4961 = vld [vmem:[%s4937 + $0xb8] sm:$0xff]
      %v4962 = vld [vmem:[%s4937 + $0xc0] sm:$0xff]
      %v4963 = vld [vmem:[%s4937 + $0xc8] sm:$0xff]
      %v4964 = vld [vmem:[%s4937 + $0xd0] sm:$0xff]
      %v4965 = vld [vmem:[%s4937 + $0xd8] sm:$0xff]
      %v4966 = vld [vmem:[%s4937 + $0xe0] sm:$0xff]
      %v4967 = vld [vmem:[%s4937 + $0xe8] sm:$0xff]
      %v4968 = vld [vmem:[%s4937 + $0xf0] sm:$0xff]
      %v4969 = vld [vmem:[%s4937 + $0xf8] sm:$0xff]
      %4970 = vmatprep.subr.mxu0 0.0
      %4971 = vmatpush1.msra.mxu0 %v4938
      %4972 = vmatprep.subr.mxu0 0.0
      %4973 = vmatpush1.msra.mxu0 %v4939
      %4974 = vmatprep.subr.mxu0 0.0
      %4975 = vmatpush1.msra.mxu0 %v4940
      %4976 = vmatprep.subr.mxu0 0.0
      %4977 = vmatpush1.msra.mxu0 %v4941
      %4978 = vmatprep.subr.mxu0 0.0
      %4979 = vmatpush1.msra.mxu0 %v4942
      %4980 = vmatprep.subr.mxu0 0.0
      %4981 = vmatpush1.msra.mxu0 %v4943
      %4982 = vmatprep.subr.mxu0 0.0
      %4983 = vmatpush1.msra.mxu0 %v4944
      %4984 = vmatprep.subr.mxu0 0.0
      %4985 = vmatpush1.msra.mxu0 %v4945
      %4986 = vmatprep.subr.mxu0 0.0
      %4987 = vmatpush1.msra.mxu0 %v4946
      %4988 = vmatprep.subr.mxu0 0.0
      %4989 = vmatpush1.msra.mxu0 %v4947
      %4990 = vmatprep.subr.mxu0 0.0
      %4991 = vmatpush1.msra.mxu0 %v4948
      %4992 = vmatprep.subr.mxu0 0.0
      %4993 = vmatpush1.msra.mxu0 %v4949
      %4994 = vmatprep.subr.mxu0 0.0
      %4995 = vmatpush1.msra.mxu0 %v4950
      %4996 = vmatprep.subr.mxu0 0.0
      %4997 = vmatpush1.msra.mxu0 %v4951
      %4998 = vmatprep.subr.mxu0 0.0
      %4999 = vmatpush1.msra.mxu0 %v4952
      %5000 = vmatprep.subr.mxu0 0.0
      %5001 = vmatpush1.msra.mxu0 %v4953
      %5002 = vmatprep.subr.mxu0 0.0
      %5003 = vmatpush1.msra.mxu0 %v4954
      %5004 = vmatprep.subr.mxu0 0.0
      %5005 = vmatpush1.msra.mxu0 %v4955
      %5006 = vmatprep.subr.mxu0 0.0
      %5007 = vmatpush1.msra.mxu0 %v4956
      %5008 = vmatprep.subr.mxu0 0.0
      %5009 = vmatpush1.msra.mxu0 %v4957
      %5010 = vmatprep.subr.mxu0 0.0
      %5011 = vmatpush1.msra.mxu0 %v4958
      %5012 = vmatprep.subr.mxu0 0.0
      %5013 = vmatpush1.msra.mxu0 %v4959
      %5014 = vmatprep.subr.mxu0 0.0
      %5015 = vmatpush1.msra.mxu0 %v4960
      %5016 = vmatprep.subr.mxu0 0.0
      %5017 = vmatpush1.msra.mxu0 %v4961
      %5018 = vmatprep.subr.mxu0 0.0
      %5019 = vmatpush1.msra.mxu0 %v4962
      %5020 = vmatprep.subr.mxu0 0.0
      %5021 = vmatpush1.msra.mxu0 %v4963
      %5022 = vmatprep.subr.mxu0 0.0
      %5023 = vmatpush1.msra.mxu0 %v4964
      %5024 = vmatprep.subr.mxu0 0.0
      %5025 = vmatpush1.msra.mxu0 %v4965
      %5026 = vmatprep.subr.mxu0 0.0
      %5027 = vmatpush1.msra.mxu0 %v4966
      %5028 = vmatprep.subr.mxu0 0.0
      %5029 = vmatpush1.msra.mxu0 %v4967
      %5030 = vmatprep.subr.mxu0 0.0
      %5031 = vmatpush1.msra.mxu0 %v4968
      %5032 = vmatprep.subr.mxu0 0.0
      %5033 = vmatpush1.msra.mxu0 %v4969
      %5034 = vmatprep.mubr.f32.mxu0 %v4719
      %5035 = vmatmul.mubr.f32.gmra.mrb[0].mxu0 %v4718
      %v5036 = vpop.f32.mrb[0].mxu0
      %v5037 = vadd.f32 0.0, %v5036
      %v5038 = vpop.f32.mrb[0].mxu0
      %5039 = vmatprep.mubr.f32.mxu0 %v4721
      %5040 = vmatmul.mubr.f32.gmra.mrb[0].mxu0 %v4720
      %v5041 = vpop.f32.mrb[0].mxu0
      %v5042 = vadd.f32 0.0, %v5041
      %v5043 = vpop.f32.mrb[0].mxu0
      %5044 = vdwg.mxu0
      %v5045 = vadd.f32 %v4929, %v5037
      %v5046 = vadd.f32 %v4934, %v5042
      %v5047 = vld [vmem:[%s11] sm:$0x1]
      %v5049 = vlaneseq
      %v5050 = vshrl.u32 %v5049, 7
      %v5051 = vsub.s32 0, %v5050
      %v5052 = vrot.slane %v5047, %v5051
      %v5054 = vadd.f32 %v5045, %v5052
      %v5055 = vadd.f32 %v5046, %v5052
      %v5056 = vadd.f32 %v5054, %v5055
      %v5057 = vrot.slane %v5056, 4
      %v5058 = vadd.f32 %v5056, %v5057
      %v5059 = vrot.slane %v5058, 2
      %v5060 = vadd.f32 %v5058, %v5059
      %v5061 = vrot.slane %v5060, 1
      %v5062 = vadd.f32 %v5060, %v5061
      %v5063 = vmul.f32 %v5054, %v5054
      %v5064 = vmul.f32 %v5055, %v5055
      %v5065 = vadd.f32 %v5063, %v5064
      %v5066 = vrot.slane %v5065, 4
      %v5067 = vadd.f32 %v5065, %v5066
      %v5068 = vrot.slane %v5067, 2
      %v5069 = vadd.f32 %v5067, %v5068
      %v5070 = vrot.slane %v5069, 1
      %v5071 = vadd.f32 %v5069, %v5070
      %v5072 = vmul.f32 %v5062, 0.0625
      %v5073 = vmul.f32 %v5071, 0.0625
      %v5074 = vmul.f32 %v5072, %v5072
      %v5075 = vsub.f32 %v5073, %v5074
      %v5076 = vsub.f32 %v5054, %v5072
      %v5077 = vsub.f32 %v5055, %v5072
      %v5078 = vadd.f32 %v5075, 1e-05
      %v5079 = vrsqrt.pop %v5078
      %v5080 = vmul.f32 %v5076, %v5079
      %v5081 = vmul.f32 %v5077, %v5079
      %v5082 = vld [vmem:[%s12] sm:$0x1]
      %v5084 = vlaneseq
      %v5085 = vshrl.u32 %v5084, 7
      %v5086 = vsub.s32 0, %v5085
      %v5087 = vrot.slane %v5082, %v5086
      %v5089 = vmul.f32 %v5080, %v5087
      %v5090 = vmul.f32 %v5081, %v5087
      %v5091 = vld [vmem:[%s13] sm:$0x1]
      %v5093 = vlaneseq
      %v5094 = vshrl.u32 %v5093, 7
      %v5095 = vsub.s32 0, %v5094
      %v5096 = vrot.slane %v5091, %v5095
      %v5098 = vadd.f32 %v5089, %v5096
      %v5099 = vadd.f32 %v5090, %v5096
      %vm5100 = vcmp.gt.f32.partialorder %v5098, 0.0
      %vm5101 = vcmp.gt.f32.partialorder %v5099, 0.0
      %v5102 = vmul.f32 %v5098, 0.2
      %v5103 = vmul.f32 %v5099, 0.2
      %v5104 = vsel %vm5100, %v5098, %v5102
      %v5105 = vsel %vm5101, %v5099, %v5103
      %v5106 = vld [vmem:[%s14] sm:$0x1]
      %v5108 = vlaneseq
      %v5109 = vshrl.u32 %v5108, 7
      %v5110 = vsub.s32 0, %v5109
      %v5111 = vrot.slane %v5106, %v5110
      %v5113 = vmul.f32 %v5104, %v5111
      %v5114 = vmul.f32 %v5105, %v5111
      %5115 = vadd.xlane.f32.xlu0 %v5113
      %v5116 = vpop.xlane.xlu0 %5115
      %5117 = vadd.xlane.f32.xlu0 %v5114
      %v5118 = vpop.xlane.xlu0 %5117
      %v5119 = vld [vmem:[#allocation8] sm:$0x1]
      %v5121 = vlaneseq
      %v5122 = vshrl.u32 %v5121, 7
      %v5123 = vsub.s32 0, %v5122
      %v5124 = vrot.slane %v5119, %v5123
      %5125 = vset.pattern.permute.xlu0 0
      %5126 = vperm.xlu0 %5125, %v5124
      %v5127 = vpop.permute.xlu0 %5126
      %v5129 = vadd.f32 %v5116, %v5127
      %v5130 = vadd.f32 %v5118, %v5127
      %v5131 = vxor.u32 %v5129, 2147483648
      %v5132 = vxor.u32 %v5130, 2147483648
      %v5133 = vmul.f32 %v5131, 1.442695
      %v5134 = vpow.pop %v5133
      %v5135 = vmul.f32 %v5132, 1.442695
      %v5136 = vpow.pop %v5135
      %v5137 = vadd.f32 %v5134, 1.0
      %v5138 = vadd.f32 %v5136, 1.0
      %v5139 = vrcp.pop %v5137
      %v5140 = vmul.f32 1.0, %v5139
      %v5141 = vrcp.pop %v5138
      %v5142 = vmul.f32 1.0, %v5141
      %v5145 = vlaneseq
      %v5146 = vand.u32 %v5145, 127
      %v5147 = vlaneseq
      %v5148 = vshrl.u32 %v5147, 7
      %v5149 = vsub.s32 %v5146, %v5148
      %v5150 = vrot.slane %v5140, %v5149
      %v5151 = vlaneseq
      %v5152 = vshrl.u32 %v5151, 7
      %v5153 = vsub.s32 %v5146, %v5152
      %v5154 = vrot.slane %v5142, %v5153
      %vm5155 = vcmask 1041409
      %v5156 = vsel %vm5155, %v5154, %v5150
      %vm5158 = vcmask 58368
      %5159 = vst.msk [vmem:[#allocation17] sm:$0x3] %vm5158, %v5156
    $region89: #{tpu_custom_call.1} parent=1 // pred_fallthru
      _
    // Predicated region
    $region90: #{tpu_custom_call.1} parent=1 // pred_check
      _
    $region91: #{tpu_custom_call.1} parent=1 // pred_check_branch
      %5161 = sbr.rel (0) target = $region93
    $region92: #{tpu_custom_call.1} parent=1 // pred_region
      %s5163 = ssub.s32 32, 32
      %5164 = vsyncadd [#allocation11], %s5163
      %s5166 = sshll.u32 [#allocation17], 4
      %s5167 = int_to_ptr.vmem [resolvable:$true] %s5166
      %5169 = dma.vmem_to_hbm [thread:$0]  %s5167, 32, %s16, [#allocation11]
    $region93: #{tpu_custom_call.1} parent=1 // pred_fallthru
      _
    // Predicated region
    $region94: #{tpu_custom_call.1} parent=1 // pred_check
      _
    $region95: #{tpu_custom_call.1} parent=1 // pred_check_branch
      %5171 = sbr.rel (0) target = $region97
    $region96: #{tpu_custom_call.1} parent=1 // pred_region
      %5172 = dma.done [#allocation11], 32
    $region97: #{tpu_custom_call.1} parent=1 // pred_fallthru
      _
    %5173 = vsyncpa [#allocation10], 1
    %5174 = vsyncpa [#allocation13], 1
    %5175 = vsyncpa [#allocation16], 1
    %5176 = vsyncpa [#allocation11], 1

</llo_original>
